<compile_context>
chip_gen: v7x
topology: tpu7x:2x2x1
jax: 0.10.0
libtpu: 0.0.40
codegen_flags: <defaults>
</compile_context>

<pallas_src>
import functools
import numpy as np

import jax
import jax.numpy as jnp
from jax.experimental import pallas as pl
from jax.experimental.pallas import tpu as pltpu


# ----------------------------------------------------------------------------
# Pallas helpers
# ----------------------------------------------------------------------------
def _full_spec(shape):
    """Whole-array block (no grid, so index_map takes no grid args)."""
    nd = len(shape)
    return pl.BlockSpec(tuple(shape), lambda *a, _nd=nd: (0,) * _nd)


def _sigmoid(x):
    # sigmoid via EUP exp + approx EUP reciprocal (keeps the divide off the VALU).
    e = jnp.exp(-x)
    return pl.reciprocal(1.0 + e, approx=True)


# ----------------------------------------------------------------------------
# Fused multi-layer LSTM + packed-seq mask + decoder kernel.
#   x_ref    : (T*Npad, Din_pad) bf16, time-major flattened (row t*Npad + n)
#   len_ref  : (Npad, 1) int32 sequence lengths (padded rows = 0)
#   weights  : layer0: wi0 (Din_pad,4H), wh0 (H,4H), b0 (1,4H)   [b_ih+b_hh folded]
#              layer l>=1: wcat_l (2H,4H) = [wi_l; wh_l], b_l (1,4H)
#   dec_w    : (H, A_pad) bf16 (zero-padded cols), dec_b (1, A_pad) f32
#   outputs  : states (T*Npad,H) f32 time-major, scores (T*Npad,A_pad) f32,
#              hN (L,Npad,H), cN (L,Npad,H)
#   scratch  : gi0_scr (T*Npad, 4H) f32
#   PyTorch gate order: (i, f, g, o).
# ----------------------------------------------------------------------------
def _navrnn_lstm_kernel(x_ref, len_ref, *refs, num_layers, T, Npad, H):
    n_w = 3 + 2 * (num_layers - 1)
    w = refs[:n_w]
    dec_w_ref, dec_b_ref = refs[n_w], refs[n_w + 1]
    states_ref, scores_ref, hN_ref, cN_ref = refs[n_w + 2:n_w + 6]
    gi0_scr = refs[n_w + 6]

    wi0_ref, wh0_ref, b0_ref = w[0], w[1], w[2]
    lengths = len_ref[...]                                    # (Npad, 1) int32

    # Hoisted layer-0 input projection for ALL timesteps -> VMEM scratch.
    gi0_scr[...] = (jnp.dot(x_ref[...], wi0_ref[...],
                            preferred_element_type=jnp.float32) + b0_ref[...])

    # Hoisted bias broadcasts for upper layers.
    b_bc = [jnp.broadcast_to(w[3 + 2 * (l - 1) + 1][...], (Npad, 4 * H))
            for l in range(1, num_layers)]

    h = [jnp.zeros((Npad, H), jnp.float32) for _ in range(num_layers)]
    c = [jnp.zeros((Npad, H), jnp.float32) for _ in range(num_layers)]

    for t in range(T):                                        # static unroll (T small)
        valid = lengths > t                                   # (Npad, 1) bool
        below = None
        for l in range(num_layers):
            if l == 0:
                # per-step rows of the hoisted projection: 8-sublane aligned slice
                g = (gi0_scr[t * Npad:(t + 1) * Npad, :]
                     + jnp.dot(h[0].astype(jnp.bfloat16), wh0_ref[...],
                               preferred_element_type=jnp.float32))
            else:
                # fused [input ; hidden] projection: single 256-deep contraction
                wcat_ref = w[3 + 2 * (l - 1)]
                xin = jnp.concatenate([below, h[l]], axis=-1).astype(jnp.bfloat16)
                g = (jnp.dot(xin, wcat_ref[...],
                             preferred_element_type=jnp.float32) + b_bc[l - 1])
            i_g = _sigmoid(g[:, 0 * H:1 * H])                 # 128-lane aligned gate slices
            f_g = _sigmoid(g[:, 1 * H:2 * H])
            g_g = jnp.tanh(g[:, 2 * H:3 * H])
            o_g = _sigmoid(g[:, 3 * H:4 * H])
            c_new = f_g * c[l] + i_g * g_g
            h_new = o_g * jnp.tanh(c_new)
            # packed-sequence semantics: freeze state once past the seq length
            h[l] = jnp.where(valid, h_new, h[l])
            c[l] = jnp.where(valid, c_new, c[l])
            below = h[l]
        # pad_packed zero-pads invalid steps; dense 8-row aligned, lane-dense store
        states_ref[t * Npad:(t + 1) * Npad, :] = jnp.where(valid, h[num_layers - 1], 0.0)

    for l in range(num_layers):
        hN_ref[l, :, :] = h[l]
        cN_ref[l, :, :] = c[l]

    # Decoder hoisted out of the time loop: one bulk matmul over the states slab
    # (read back from the already-written output VMEM buffer).
    scores_ref[...] = (jnp.dot(states_ref[...].astype(jnp.bfloat16), dec_w_ref[...],
                               preferred_element_type=jnp.float32) + dec_b_ref[...])


# ----------------------------------------------------------------------------
# Fused multi-layer GRU + packed-seq mask + decoder kernel.
#   weights  : layer0: wi0 (Din_pad,3H), wh0 (H,3H), bi0 (1,3H), bh0 (1,3H)
#              layer l>=1: wcat_l (2H,3H) = [wi_l ; wh_l with n-cols zeroed],
#                          whn_l (H,H), bfused_l (1,3H) = [bi_rz+bh_rz | bi_n],
#                          bhn_l (1,H)
#   PyTorch gate order: (r, z, n); b_hn stays inside r*(.).
# ----------------------------------------------------------------------------
def _navrnn_gru_kernel(x_ref, len_ref, *refs, num_layers, T, Npad, H):
    n_w = 4 * num_layers
    w = refs[:n_w]
    dec_w_ref, dec_b_ref = refs[n_w], refs[n_w + 1]
    states_ref, scores_ref, hN_ref = refs[n_w + 2:n_w + 5]
    gi0_scr = refs[n_w + 5]

    wi0_ref, wh0_ref, bi0_ref, bh0_ref = w[0:4]
    lengths = len_ref[...]                                    # (Npad, 1) int32

    gi0_scr[...] = (jnp.dot(x_ref[...], wi0_ref[...],
                            preferred_element_type=jnp.float32) + bi0_ref[...])

    # Hoisted bias broadcasts.
    bh0_bc = jnp.broadcast_to(bh0_ref[...], (Npad, 3 * H))
    bfused_bc = [jnp.broadcast_to(w[4 * l + 2][...], (Npad, 3 * H))
                 for l in range(1, num_layers)]
    bhn_bc = [jnp.broadcast_to(w[4 * l + 3][...], (Npad, H))
              for l in range(1, num_layers)]

    h = [jnp.zeros((Npad, H), jnp.float32) for _ in range(num_layers)]

    for t in range(T):
        valid = lengths > t
        below = None
        for l in range(num_layers):
            if l == 0:
                gi = gi0_scr[t * Npad:(t + 1) * Npad, :]
                gh = (jnp.dot(h[0].astype(jnp.bfloat16), wh0_ref[...],
                              preferred_element_type=jnp.float32) + bh0_bc)
                r = _sigmoid(gi[:, 0 * H:1 * H] + gh[:, 0 * H:1 * H])
                z = _sigmoid(gi[:, 1 * H:2 * H] + gh[:, 1 * H:2 * H])
                n = jnp.tanh(gi[:, 2 * H:3 * H] + r * gh[:, 2 * H:3 * H])
            else:
                wcat_ref, whn_ref = w[4 * l], w[4 * l + 1]
                xin = jnp.concatenate([below, h[l]], axis=-1).astype(jnp.bfloat16)
                fused = (jnp.dot(xin, wcat_ref[...],
                                 preferred_element_type=jnp.float32) + bfused_bc[l - 1])
                gh_n = (jnp.dot(h[l].astype(jnp.bfloat16), whn_ref[...],
                                preferred_element_type=jnp.float32) + bhn_bc[l - 1])
                r = _sigmoid(fused[:, 0 * H:1 * H])
                z = _sigmoid(fused[:, 1 * H:2 * H])
                n = jnp.tanh(fused[:, 2 * H:3 * H] + r * gh_n)
            h_new = (1.0 - z) * n + z * h[l]
            h[l] = jnp.where(valid, h_new, h[l])
            below = h[l]
        states_ref[t * Npad:(t + 1) * Npad, :] = jnp.where(valid, h[num_layers - 1], 0.0)

    for l in range(num_layers):
        hN_ref[l, :, :] = h[l]

    scores_ref[...] = (jnp.dot(states_ref[...].astype(jnp.bfloat16), dec_w_ref[...],
                               preferred_element_type=jnp.float32) + dec_b_ref[...])


# ----------------------------------------------------------------------------
# pallas_call wrapper (single full-block call, no grid; working set < 2 MiB).
# ----------------------------------------------------------------------------
def _navrnn_pallas(x_tm2d, lengths, params, *, t_out, Npad):
    rnn_type = params['rnn_type']
    L, H = params['num_layers'], params['hidden_dim']
    a_pad = params['a_pad']
    G = 4 if rnn_type == 'LSTM' else 3

    ins = ([x_tm2d, lengths] + list(params['kernel_weights'])
           + [params['dec_w_pad'], params['dec_b_pad']])

    if rnn_type == 'LSTM':
        kernel = functools.partial(_navrnn_lstm_kernel,
                                   num_layers=L, T=t_out, Npad=Npad, H=H)
        out_shapes = (jax.ShapeDtypeStruct((t_out * Npad, H), jnp.float32),
                      jax.ShapeDtypeStruct((t_out * Npad, a_pad), jnp.float32),
                      jax.ShapeDtypeStruct((L, Npad, H), jnp.float32),
                      jax.ShapeDtypeStruct((L, Npad, H), jnp.float32))
    elif rnn_type == 'GRU':
        kernel = functools.partial(_navrnn_gru_kernel,
                                   num_layers=L, T=t_out, Npad=Npad, H=H)
        out_shapes = (jax.ShapeDtypeStruct((t_out * Npad, H), jnp.float32),
                      jax.ShapeDtypeStruct((t_out * Npad, a_pad), jnp.float32),
                      jax.ShapeDtypeStruct((L, Npad, H), jnp.float32))
    else:
        raise ValueError(f"unsupported rnn_type: {rnn_type}")

    return pl.pallas_call(
        kernel,
        out_shape=out_shapes,
        in_specs=[_full_spec(a.shape) for a in ins],
        out_specs=tuple(_full_spec(s.shape) for s in out_shapes),
        scratch_shapes=[pltpu.VMEM((t_out * Npad, G * H), jnp.float32)],
    )(*ins)


# ----------------------------------------------------------------------------
# Parameter construction (deterministic, synthetic). Kernel weights bf16,
# biases f32; a pure-f32 copy ('layers') is kept for the numpy reference.
# Host-side weight fusion (upper-layer [W_ih; W_hh] concat, decoder padding)
# is done ONCE here, not per call.
# ----------------------------------------------------------------------------
def init_navrnn_params(key, *, image_input=True, image_feat_dim=128,
                       question_input=True, question_embed_dim=128,
                       action_input=True, action_embed_dim=32, num_actions=4,
                       rnn_type='LSTM', rnn_hidden_dim=128, rnn_num_layers=2):
    rnn_input_dim = 0
    if image_input:
        rnn_input_dim += image_feat_dim
    if question_input:
        rnn_input_dim += question_embed_dim
    if action_input:
        rnn_input_dim += action_embed_dim
    in_pad = ((rnn_input_dim + 127) // 128) * 128             # lane-aligned contraction dim
    G = 4 if rnn_type == 'LSTM' else 3
    H = rnn_hidden_dim
    A = num_actions
    a_pad = ((A + 127) // 128) * 128                          # lane-dense scores output

    keys = iter(jax.random.split(key, 4 * rnn_num_layers + 4))

    def u(shape, s=0.08):
        return jax.random.uniform(next(keys), shape, jnp.float32, -s, s)

    p = dict(rnn_type=rnn_type, num_layers=rnn_num_layers, hidden_dim=H,
             num_actions=A, a_pad=a_pad, rnn_input_dim=rnn_input_dim,
             in_dim_pad=in_pad, image_input=image_input,
             question_input=question_input, action_input=action_input)
    if action_input:
        p['action_embed'] = u((num_actions, action_embed_dim), 0.1)

    layers = []
    kernel_weights = []
    for l in range(rnn_num_layers):
        din = rnn_input_dim if l == 0 else H
        # bf16-quantize once; the f32 reference uses the same quantized values.
        wi = u((din, G * H)).astype(jnp.bfloat16)
        wh = u((H, G * H)).astype(jnp.bfloat16)
        bi = u((1, G * H))
        bh = u((1, G * H))
        layers.append(dict(wi=wi.astype(jnp.float32), wh=wh.astype(jnp.float32),
                           bi=bi, bh=bh))
        if rnn_type == 'LSTM':
            if l == 0:
                wi_k = jnp.pad(wi, ((0, in_pad - din), (0, 0))) if in_pad != din else wi
                kernel_weights += [wi_k, wh, bi + bh]         # b_ih + b_hh folded
            else:
                kernel_weights += [jnp.concatenate([wi, wh], axis=0), bi + bh]
        else:  # GRU
            if l == 0:
                wi_k = jnp.pad(wi, ((0, in_pad - din), (0, 0))) if in_pad != din else wi
                kernel_weights += [wi_k, wh, bi, bh]
            else:
                wh_rz, wh_n = wh[:, :2 * H], wh[:, 2 * H:]
                wcat = jnp.concatenate(
                    [wi, jnp.concatenate([wh_rz, jnp.zeros_like(wh_n)], axis=1)], axis=0)
                bfused = jnp.concatenate(
                    [bi[:, :2 * H] + bh[:, :2 * H], bi[:, 2 * H:]], axis=1)
                kernel_weights += [wcat, wh_n, bfused, bh[:, 2 * H:]]
    p['layers'] = layers
    p['kernel_weights'] = kernel_weights

    dec_w = u((H, A)).astype(jnp.bfloat16)
    dec_b = u((1, A))
    p['dec_w_f32'] = dec_w.astype(jnp.float32)
    p['dec_b_f32'] = dec_b
    p['dec_w_pad'] = jnp.pad(dec_w, ((0, 0), (0, a_pad - A)))
    p['dec_b_pad'] = jnp.pad(dec_b, ((0, 0), (0, a_pad - A)))
    return p


# ----------------------------------------------------------------------------
# Input feature concat (glue): [image | question repeated over T | action embed]
# ----------------------------------------------------------------------------
def _build_input_feats(params, img_feats, question_feats, actions_in):
    feats = []
    T = None
    if params['image_input']:
        _, T, _ = img_feats.shape
        feats.append(img_feats)
    if params['question_input']:
        N, Dq = question_feats.shape
        if T is None:
            T = actions_in.shape[1]
        feats.append(jnp.broadcast_to(question_feats[:, None, :], (N, T, Dq)))
    if params['action_input']:
        if T is None:
            T = actions_in.shape[1]
        feats.append(jnp.take(params['action_embed'], actions_in, axis=0))
    return jnp.concatenate(feats, axis=2) if len(feats) > 1 else feats[0]


# ----------------------------------------------------------------------------
# NavRnn.forward
# ----------------------------------------------------------------------------
def nav_rnn_forward(params, img_feats, question_feats, actions_in, action_lengths,
                    return_states=False, t_out=None):
    H, A = params['hidden_dim'], params['num_actions']
    x = _build_input_feats(params, img_feats, question_feats, actions_in)  # (N, T, Din)
    N = x.shape[0]

    if t_out is None:
        # pack_padded_sequence's max length is host-side in PyTorch too; pass a
        # static bucket t_out explicitly to keep the whole forward jittable.
        t_out = int(np.max(np.asarray(action_lengths)))
    x = x[:, :t_out]

    din, in_pad = x.shape[-1], params['in_dim_pad']
    Npad = max(8, ((N + 7) // 8) * 8)             # 8-sublane tile alignment in-kernel
    x = jnp.pad(x, ((0, Npad - N), (0, 0), (0, in_pad - din)))
    # tiny time-major flatten so every per-step kernel slice is an aligned full tile
    x_tm2d = jnp.transpose(x, (1, 0, 2)).reshape(t_out * Npad, in_pad).astype(jnp.bfloat16)
    # padded batch rows get length 0 -> state stays frozen at zero, rows dropped below
    lengths = jnp.zeros((Npad, 1), jnp.int32).at[:N, 0].set(
        jnp.asarray(action_lengths, jnp.int32))

    outs = _navrnn_pallas(x_tm2d, lengths, params, t_out=t_out, Npad=Npad)
    if params['rnn_type'] == 'LSTM':
        states_tm, scores_tm, h_n, c_n = outs
        hidden = (h_n[:, :N, :], c_n[:, :N, :])
    else:
        states_tm, scores_tm, h_n = outs
        hidden = h_n[:, :N, :]

    # un-scramble the tiny time-major slabs outside the kernel
    rnn_output = states_tm.reshape(t_out, Npad, H).transpose(1, 0, 2)[:N]            # (N, T, H)
    scores = (scores_tm.reshape(t_out, Npad, params['a_pad'])
              .transpose(1, 0, 2)[:N, :, :A].reshape(N * t_out, A))                  # (N*T, A)
    if return_states:
        return rnn_output, scores, hidden
    return scores, hidden


# ----------------------------------------------------------------------------
# Pure-numpy reference (PyTorch packed-sequence semantics) for validation.
# ----------------------------------------------------------------------------
def nav_rnn_reference(params, img_feats, question_feats, actions_in, action_lengths,
                      t_out=None):
    H, L = params['hidden_dim'], params['num_layers']
    x = _build_input_feats(params, img_feats, question_feats, actions_in)
    N = x.shape[0]
    if t_out is None:
        t_out = int(np.max(np.asarray(action_lengths)))
    x = np.asarray(x[:, :t_out], np.float32)
    lengths = np.asarray(action_lengths)

    def sigmoid(v):
        return 1.0 / (1.0 + np.exp(-v))

    h = [np.zeros((N, H), np.float32) for _ in range(L)]
    c = [np.zeros((N, H), np.float32) for _ in range(L)]
    outs = []
    for t in range(t_out):
        valid = (lengths > t)[:, None]
        below = x[:, t, :]
        for l in range(L):
            lp = params['layers'][l]
            wi, wh = np.asarray(lp['wi']), np.asarray(lp['wh'])
            bi, bh = np.asarray(lp['bi']), np.asarray(lp['bh'])
            if params['rnn_type'] == 'LSTM':
                g = below @ wi + bi + h[l] @ wh + bh
                i = sigmoid(g[:, :H]); f = sigmoid(g[:, H:2 * H])
                gg = np.tanh(g[:, 2 * H:3 * H]); o = sigmoid(g[:, 3 * H:])
                c_new = f * c[l] + i * gg
                h_new = o * np.tanh(c_new)
                c[l] = np.where(valid, c_new, c[l])
            else:
                gi = below @ wi + bi
                gh = h[l] @ wh + bh
                r = sigmoid(gi[:, :H] + gh[:, :H])
                z = sigmoid(gi[:, H:2 * H] + gh[:, H:2 * H])
                n = np.tanh(gi[:, 2 * H:] + r * gh[:, 2 * H:])
                h_new = (1.0 - z) * n + z * h[l]
            h[l] = np.where(valid, h_new, h[l])
            below = h[l]
        outs.append(np.where(valid, h[L - 1], 0.0))
    rnn_out = np.stack(outs, axis=1)                                 # (N, T, H)
    scores = (rnn_out.reshape(N * t_out, H) @ np.asarray(params['dec_w_f32'])
              + np.asarray(params['dec_b_f32']))
    return rnn_out, scores, np.stack(h, 0), np.stack(c, 0)


# ----------------------------------------------------------------------------
if __name__ == "__main__":
    key = jax.random.PRNGKey(0)
    k_img, k_q, k_act, kp1, kp2 = jax.random.split(key, 5)

    N, T = 2, 8
    IMG_D, Q_D, H, A = 128, 128, 128, 4

    img_feats = jax.random.normal(k_img, (N, T, IMG_D), jnp.float32)
    question_feats = jax.random.normal(k_q, (N, Q_D), jnp.float32)
    actions_in = jax.random.randint(k_act, (N, T), 0, A)
    action_lengths = np.array([8, 5], dtype=np.int32)          # sorted desc (pack_padded)

    # Default NavRnn config: 2-layer LSTM, hidden 128, return_states=True.
    lstm_params = init_navrnn_params(kp1, rnn_type='LSTM', rnn_num_layers=2,
                                     rnn_hidden_dim=H, image_feat_dim=IMG_D,
                                     question_embed_dim=Q_D, num_actions=A)
    rnn_out, scores, (h_n, c_n) = nav_rnn_forward(
        lstm_params, img_feats, question_feats, actions_in, action_lengths,
        return_states=True)

    # GRU config (2 layers, exercises the fused upper-layer path too).
    gru_params = init_navrnn_params(kp2, rnn_type='GRU', rnn_num_layers=2,
                                    rnn_hidden_dim=H, image_feat_dim=IMG_D,
                                    question_embed_dim=Q_D, num_actions=A)
    g_rnn_out, g_scores, g_h_n = nav_rnn_forward(
        gru_params, img_feats, question_feats, actions_in, action_lengths,
        return_states=True)

    jax.block_until_ready((rnn_out, scores, h_n, c_n, g_rnn_out, g_scores, g_h_n))

    T_out = int(np.max(action_lengths))
    assert rnn_out.shape == (N, T_out, H)
    assert scores.shape == (N * T_out, A)
    assert h_n.shape == (2, N, H) and c_n.shape == (2, N, H)
    assert g_rnn_out.shape == (N, T_out, H)
    assert g_scores.shape == (N * T_out, A) and g_h_n.shape == (2, N, H)

    # Numerical check vs. pure-f32 reference (bf16 weights/activations + approx
    # reciprocal in-kernel -> loose tolerance).
    ref = nav_rnn_reference(lstm_params, img_feats, question_feats, actions_in, action_lengths)
    np.testing.assert_allclose(np.asarray(rnn_out), ref[0], atol=5e-2, rtol=5e-2)
    np.testing.assert_allclose(np.asarray(scores), ref[1], atol=5e-2, rtol=5e-2)
    np.testing.assert_allclose(np.asarray(h_n), ref[2], atol=5e-2, rtol=5e-2)
    np.testing.assert_allclose(np.asarray(c_n), ref[3], atol=5e-2, rtol=5e-2)

    gref = nav_rnn_reference(gru_params, img_feats, question_feats, actions_in, action_lengths)
    np.testing.assert_allclose(np.asarray(g_rnn_out), gref[0], atol=5e-2, rtol=5e-2)
    np.testing.assert_allclose(np.asarray(g_scores), gref[1], atol=5e-2, rtol=5e-2)
    np.testing.assert_allclose(np.asarray(g_h_n), gref[2], atol=5e-2, rtol=5e-2)

    print("KERNEL_OK")
</pallas_src>

<mosaic_0001>
module attributes {stable_mosaic.version = 11 : i64} {
  func.func @_navrnn_lstm_kernel(%arg0: memref<64x384xbf16, #tpu.memory_space<vmem>>, %arg1: memref<8x1xi32, #tpu.memory_space<vmem>>, %arg2: memref<384x512xbf16, #tpu.memory_space<vmem>>, %arg3: memref<128x512xbf16, #tpu.memory_space<vmem>>, %arg4: memref<1x512xf32, #tpu.memory_space<vmem>>, %arg5: memref<256x512xbf16, #tpu.memory_space<vmem>>, %arg6: memref<1x512xf32, #tpu.memory_space<vmem>>, %arg7: memref<128x128xbf16, #tpu.memory_space<vmem>>, %arg8: memref<1x128xf32, #tpu.memory_space<vmem>>, %arg9: memref<64x128xf32, #tpu.memory_space<vmem>>, %arg10: memref<64x128xf32, #tpu.memory_space<vmem>>, %arg11: memref<2x8x128xf32, #tpu.memory_space<vmem>>, %arg12: memref<2x8x128xf32, #tpu.memory_space<vmem>>, %arg13: memref<64x512xf32, #tpu.memory_space<vmem>>) attributes {dimension_semantics = [], scalar_prefetch = 0 : i64, scratch_operands = 1 : i64, tpu.core_type = #tpu.core_type<tc>} {
    %c0 = arith.constant 0 : index
    %c0_0 = arith.constant 0 : index
    %0 = vector.load %arg1[%c0, %c0_0] : memref<8x1xi32, #tpu.memory_space<vmem>>, vector<8x1xi32>
    %c0_1 = arith.constant 0 : index
    %c0_2 = arith.constant 0 : index
    %1 = vector.load %arg0[%c0_1, %c0_2] : memref<64x384xbf16, #tpu.memory_space<vmem>>, vector<64x384xbf16>
    %c0_3 = arith.constant 0 : index
    %c0_4 = arith.constant 0 : index
    %2 = vector.load %arg2[%c0_3, %c0_4] : memref<384x512xbf16, #tpu.memory_space<vmem>>, vector<384x512xbf16>
    %cst = arith.constant dense<0.000000e+00> : vector<64x512xf32>
    %3 = tpu.matmul %1, %2, %cst {dimension_numbers = #tpu.dot_dimension_numbers<[1], [0], [0], [1], [0, 0, 1, 1], [], []>} : vector<64x384xbf16>, vector<384x512xbf16>, vector<64x512xf32> -> vector<64x512xf32>
    %c0_5 = arith.constant 0 : index
    %c0_6 = arith.constant 0 : index
    %4 = vector.load %arg4[%c0_5, %c0_6] : memref<1x512xf32, #tpu.memory_space<vmem>>, vector<1x512xf32>
    %5 = vector.broadcast %4 : vector<1x512xf32> to vector<64x512xf32>
    %6 = arith.addf %3, %5 : vector<64x512xf32>
    %c0_7 = arith.constant 0 : index
    %c0_8 = arith.constant 0 : index
    %7 = vector.load %arg13[%c0_7, %c0_8] : memref<64x512xf32, #tpu.memory_space<vmem>>, vector<64x512xf32>
    tpu.vector_store %arg13[%c0_7, %c0_8], %6 {strides = array<i32>} : memref<64x512xf32, #tpu.memory_space<vmem>>, vector<64x512xf32>,
    %c0_9 = arith.constant 0 : index
    %c0_10 = arith.constant 0 : index
    %8 = vector.load %arg6[%c0_9, %c0_10] : memref<1x512xf32, #tpu.memory_space<vmem>>, vector<1x512xf32>
    %9 = vector.shape_cast %8 : vector<1x512xf32> to vector<1x512xf32>
    %10 = vector.broadcast %9 : vector<1x512xf32> to vector<8x512xf32>
    %cst_11 = arith.constant 0.000000e+00 : f32
    %11 = vector.broadcast %cst_11 : f32 to vector<8x128xf32>
    %cst_12 = arith.constant 0.000000e+00 : f32
    %12 = vector.broadcast %cst_12 : f32 to vector<8x128xf32>
    %cst_13 = arith.constant 0.000000e+00 : f32
    %13 = vector.broadcast %cst_13 : f32 to vector<8x128xf32>
    %cst_14 = arith.constant 0.000000e+00 : f32
    %14 = vector.broadcast %cst_14 : f32 to vector<8x128xf32>
    %c0_i32 = arith.constant 0 : i32
    %15 = vector.broadcast %c0_i32 : i32 to vector<8x1xi32>
    %16 = arith.cmpi sgt, %0, %15 : vector<8x1xi32>
    %c0_15 = arith.constant 0 : index
    %c0_16 = arith.constant 0 : index
    %17 = vector.load %arg13[%c0_15, %c0_16] : memref<64x512xf32, #tpu.memory_space<vmem>>, vector<8x512xf32>
    %18 = arith.truncf %11 : vector<8x128xf32> to vector<8x128xbf16>
    %c0_17 = arith.constant 0 : index
    %c0_18 = arith.constant 0 : index
    %19 = vector.load %arg3[%c0_17, %c0_18] : memref<128x512xbf16, #tpu.memory_space<vmem>>, vector<128x512xbf16>
    %cst_19 = arith.constant dense<0.000000e+00> : vector<8x512xf32>
    %20 = tpu.matmul %18, %19, %cst_19 {dimension_numbers = #tpu.dot_dimension_numbers<[1], [0], [0], [1], [0, 0, 1, 1], [], []>} : vector<8x128xbf16>, vector<128x512xbf16>, vector<8x512xf32> -> vector<8x512xf32>
    %21 = arith.addf %17, %20 : vector<8x512xf32>
    %22 = vector.extract_strided_slice %21 {offsets = [0, 0], sizes = [8, 128], strides = [1, 1]} : vector<8x512xf32> to vector<8x128xf32>
    %cst_20 = arith.constant 0.000000e+00 : f32
    %23 = vector.broadcast %cst_20 : f32 to vector<8x128xf32>
    %24 = arith.subf %23, %22 : vector<8x128xf32>
    %25 = math.exp %24 : vector<8x128xf32>
    %cst_21 = arith.constant 1.000000e+00 : f32
    %26 = vector.broadcast %cst_21 : f32 to vector<8x128xf32>
    %27 = arith.addf %26, %25 : vector<8x128xf32>
    %28 = tpu.reciprocal %27 {approx = true} : vector<8x128xf32> -> vector<8x128xf32>
    %29 = vector.extract_strided_slice %21 {offsets = [0, 128], sizes = [8, 128], strides = [1, 1]} : vector<8x512xf32> to vector<8x128xf32>
    %cst_22 = arith.constant 0.000000e+00 : f32
    %30 = vector.broadcast %cst_22 : f32 to vector<8x128xf32>
    %31 = arith.subf %30, %29 : vector<8x128xf32>
    %32 = math.exp %31 : vector<8x128xf32>
    %cst_23 = arith.constant 1.000000e+00 : f32
    %33 = vector.broadcast %cst_23 : f32 to vector<8x128xf32>
    %34 = arith.addf %33, %32 : vector<8x128xf32>
    %35 = tpu.reciprocal %34 {approx = true} : vector<8x128xf32> -> vector<8x128xf32>
    %36 = vector.extract_strided_slice %21 {offsets = [0, 256], sizes = [8, 128], strides = [1, 1]} : vector<8x512xf32> to vector<8x128xf32>
    %37 = math.tanh %36 : vector<8x128xf32>
    %38 = vector.extract_strided_slice %21 {offsets = [0, 384], sizes = [8, 128], strides = [1, 1]} : vector<8x512xf32> to vector<8x128xf32>
    %cst_24 = arith.constant 0.000000e+00 : f32
    %39 = vector.broadcast %cst_24 : f32 to vector<8x128xf32>
    %40 = arith.subf %39, %38 : vector<8x128xf32>
    %41 = math.exp %40 : vector<8x128xf32>
    %cst_25 = arith.constant 1.000000e+00 : f32
    %42 = vector.broadcast %cst_25 : f32 to vector<8x128xf32>
    %43 = arith.addf %42, %41 : vector<8x128xf32>
    %44 = tpu.reciprocal %43 {approx = true} : vector<8x128xf32> -> vector<8x128xf32>
    %45 = arith.mulf %35, %13 : vector<8x128xf32>
    %46 = arith.mulf %28, %37 : vector<8x128xf32>
    %47 = arith.addf %45, %46 : vector<8x128xf32>
    %48 = math.tanh %47 : vector<8x128xf32>
    %49 = arith.mulf %44, %48 : vector<8x128xf32>
    %50 = vector.shape_cast %16 : vector<8x1xi1> to vector<8x1xi1>
    %51 = vector.broadcast %50 : vector<8x1xi1> to vector<8x128xi1>
    %52 = arith.select %51, %49, %11 : vector<8x128xi1>, vector<8x128xf32>
    %53 = vector.shape_cast %16 : vector<8x1xi1> to vector<8x1xi1>
    %54 = vector.broadcast %53 : vector<8x1xi1> to vector<8x128xi1>
    %55 = arith.select %54, %47, %13 : vector<8x128xi1>, vector<8x128xf32>
    %56 = tpu.concatenate %52, %12 in 1 : vector<8x128xf32>, vector<8x128xf32> -> vector<8x256xf32>
    %57 = arith.truncf %56 : vector<8x256xf32> to vector<8x256xbf16>
    %c0_26 = arith.constant 0 : index
    %c0_27 = arith.constant 0 : index
    %58 = vector.load %arg5[%c0_26, %c0_27] : memref<256x512xbf16, #tpu.memory_space<vmem>>, vector<256x512xbf16>
    %cst_28 = arith.constant dense<0.000000e+00> : vector<8x512xf32>
    %59 = tpu.matmul %57, %58, %cst_28 {dimension_numbers = #tpu.dot_dimension_numbers<[1], [0], [0], [1], [0, 0, 1, 1], [], []>} : vector<8x256xbf16>, vector<256x512xbf16>, vector<8x512xf32> -> vector<8x512xf32>
    %60 = arith.addf %59, %10 : vector<8x512xf32>
    %61 = vector.extract_strided_slice %60 {offsets = [0, 0], sizes = [8, 128], strides = [1, 1]} : vector<8x512xf32> to vector<8x128xf32>
    %cst_29 = arith.constant 0.000000e+00 : f32
    %62 = vector.broadcast %cst_29 : f32 to vector<8x128xf32>
    %63 = arith.subf %62, %61 : vector<8x128xf32>
    %64 = math.exp %63 : vector<8x128xf32>
    %cst_30 = arith.constant 1.000000e+00 : f32
    %65 = vector.broadcast %cst_30 : f32 to vector<8x128xf32>
    %66 = arith.addf %65, %64 : vector<8x128xf32>
    %67 = tpu.reciprocal %66 {approx = true} : vector<8x128xf32> -> vector<8x128xf32>
    %68 = vector.extract_strided_slice %60 {offsets = [0, 128], sizes = [8, 128], strides = [1, 1]} : vector<8x512xf32> to vector<8x128xf32>
    %cst_31 = arith.constant 0.000000e+00 : f32
    %69 = vector.broadcast %cst_31 : f32 to vector<8x128xf32>
    %70 = arith.subf %69, %68 : vector<8x128xf32>
    %71 = math.exp %70 : vector<8x128xf32>
    %cst_32 = arith.constant 1.000000e+00 : f32
    %72 = vector.broadcast %cst_32 : f32 to vector<8x128xf32>
    %73 = arith.addf %72, %71 : vector<8x128xf32>
    %74 = tpu.reciprocal %73 {approx = true} : vector<8x128xf32> -> vector<8x128xf32>
    %75 = vector.extract_strided_slice %60 {offsets = [0, 256], sizes = [8, 128], strides = [1, 1]} : vector<8x512xf32> to vector<8x128xf32>
    %76 = math.tanh %75 : vector<8x128xf32>
    %77 = vector.extract_strided_slice %60 {offsets = [0, 384], sizes = [8, 128], strides = [1, 1]} : vector<8x512xf32> to vector<8x128xf32>
    %cst_33 = arith.constant 0.000000e+00 : f32
    %78 = vector.broadcast %cst_33 : f32 to vector<8x128xf32>
    %79 = arith.subf %78, %77 : vector<8x128xf32>
    %80 = math.exp %79 : vector<8x128xf32>
    %cst_34 = arith.constant 1.000000e+00 : f32
    %81 = vector.broadcast %cst_34 : f32 to vector<8x128xf32>
    %82 = arith.addf %81, %80 : vector<8x128xf32>
    %83 = tpu.reciprocal %82 {approx = true} : vector<8x128xf32> -> vector<8x128xf32>
    %84 = arith.mulf %74, %14 : vector<8x128xf32>
    %85 = arith.mulf %67, %76 : vector<8x128xf32>
    %86 = arith.addf %84, %85 : vector<8x128xf32>
    %87 = math.tanh %86 : vector<8x128xf32>
    %88 = arith.mulf %83, %87 : vector<8x128xf32>
    %89 = vector.shape_cast %16 : vector<8x1xi1> to vector<8x1xi1>
    %90 = vector.broadcast %89 : vector<8x1xi1> to vector<8x128xi1>
    %91 = arith.select %90, %88, %12 : vector<8x128xi1>, vector<8x128xf32>
    %92 = vector.shape_cast %16 : vector<8x1xi1> to vector<8x1xi1>
    %93 = vector.broadcast %92 : vector<8x1xi1> to vector<8x128xi1>
    %94 = arith.select %93, %86, %14 : vector<8x128xi1>, vector<8x128xf32>
    %cst_35 = arith.constant 0.000000e+00 : f32
    %95 = vector.shape_cast %16 : vector<8x1xi1> to vector<8x1xi1>
    %96 = vector.broadcast %95 : vector<8x1xi1> to vector<8x128xi1>
    %97 = vector.broadcast %cst_35 : f32 to vector<8x128xf32>
    %98 = arith.select %96, %91, %97 : vector<8x128xi1>, vector<8x128xf32>
    %c0_36 = arith.constant 0 : index
    %c0_37 = arith.constant 0 : index
    %99 = vector.load %arg9[%c0_36, %c0_37] : memref<64x128xf32, #tpu.memory_space<vmem>>, vector<8x128xf32>
    tpu.vector_store %arg9[%c0_36, %c0_37], %98 {strides = array<i32>} : memref<64x128xf32, #tpu.memory_space<vmem>>, vector<8x128xf32>,
    %c1_i32 = arith.constant 1 : i32
    %100 = vector.broadcast %c1_i32 : i32 to vector<8x1xi32>
    %101 = arith.cmpi sgt, %0, %100 : vector<8x1xi32>
    %c8 = arith.constant 8 : index
    %c0_38 = arith.constant 0 : index
    %102 = vector.load %arg13[%c8, %c0_38] : memref<64x512xf32, #tpu.memory_space<vmem>>, vector<8x512xf32>
    %103 = arith.truncf %52 : vector<8x128xf32> to vector<8x128xbf16>
    %c0_39 = arith.constant 0 : index
    %c0_40 = arith.constant 0 : index
    %104 = vector.load %arg3[%c0_39, %c0_40] : memref<128x512xbf16, #tpu.memory_space<vmem>>, vector<128x512xbf16>
    %cst_41 = arith.constant dense<0.000000e+00> : vector<8x512xf32>
    %105 = tpu.matmul %103, %104, %cst_41 {dimension_numbers = #tpu.dot_dimension_numbers<[1], [0], [0], [1], [0, 0, 1, 1], [], []>} : vector<8x128xbf16>, vector<128x512xbf16>, vector<8x512xf32> -> vector<8x512xf32>
    %106 = arith.addf %102, %105 : vector<8x512xf32>
    %107 = vector.extract_strided_slice %106 {offsets = [0, 0], sizes = [8, 128], strides = [1, 1]} : vector<8x512xf32> to vector<8x128xf32>
    %cst_42 = arith.constant 0.000000e+00 : f32
    %108 = vector.broadcast %cst_42 : f32 to vector<8x128xf32>
    %109 = arith.subf %108, %107 : vector<8x128xf32>
    %110 = math.exp %109 : vector<8x128xf32>
    %cst_43 = arith.constant 1.000000e+00 : f32
    %111 = vector.broadcast %cst_43 : f32 to vector<8x128xf32>
    %112 = arith.addf %111, %110 : vector<8x128xf32>
    %113 = tpu.reciprocal %112 {approx = true} : vector<8x128xf32> -> vector<8x128xf32>
    %114 = vector.extract_strided_slice %106 {offsets = [0, 128], sizes = [8, 128], strides = [1, 1]} : vector<8x512xf32> to vector<8x128xf32>
    %cst_44 = arith.constant 0.000000e+00 : f32
    %115 = vector.broadcast %cst_44 : f32 to vector<8x128xf32>
    %116 = arith.subf %115, %114 : vector<8x128xf32>
    %117 = math.exp %116 : vector<8x128xf32>
    %cst_45 = arith.constant 1.000000e+00 : f32
    %118 = vector.broadcast %cst_45 : f32 to vector<8x128xf32>
    %119 = arith.addf %118, %117 : vector<8x128xf32>
    %120 = tpu.reciprocal %119 {approx = true} : vector<8x128xf32> -> vector<8x128xf32>
    %121 = vector.extract_strided_slice %106 {offsets = [0, 256], sizes = [8, 128], strides = [1, 1]} : vector<8x512xf32> to vector<8x128xf32>
    %122 = math.tanh %121 : vector<8x128xf32>
    %123 = vector.extract_strided_slice %106 {offsets = [0, 384], sizes = [8, 128], strides = [1, 1]} : vector<8x512xf32> to vector<8x128xf32>
    %cst_46 = arith.constant 0.000000e+00 : f32
    %124 = vector.broadcast %cst_46 : f32 to vector<8x128xf32>
    %125 = arith.subf %124, %123 : vector<8x128xf32>
    %126 = math.exp %125 : vector<8x128xf32>
    %cst_47 = arith.constant 1.000000e+00 : f32
    %127 = vector.broadcast %cst_47 : f32 to vector<8x128xf32>
    %128 = arith.addf %127, %126 : vector<8x128xf32>
    %129 = tpu.reciprocal %128 {approx = true} : vector<8x128xf32> -> vector<8x128xf32>
    %130 = arith.mulf %120, %55 : vector<8x128xf32>
    %131 = arith.mulf %113, %122 : vector<8x128xf32>
    %132 = arith.addf %130, %131 : vector<8x128xf32>
    %133 = math.tanh %132 : vector<8x128xf32>
    %134 = arith.mulf %129, %133 : vector<8x128xf32>
    %135 = vector.shape_cast %101 : vector<8x1xi1> to vector<8x1xi1>
    %136 = vector.broadcast %135 : vector<8x1xi1> to vector<8x128xi1>
    %137 = arith.select %136, %134, %52 : vector<8x128xi1>, vector<8x128xf32>
    %138 = vector.shape_cast %101 : vector<8x1xi1> to vector<8x1xi1>
    %139 = vector.broadcast %138 : vector<8x1xi1> to vector<8x128xi1>
    %140 = arith.select %139, %132, %55 : vector<8x128xi1>, vector<8x128xf32>
    %141 = tpu.concatenate %137, %91 in 1 : vector<8x128xf32>, vector<8x128xf32> -> vector<8x256xf32>
    %142 = arith.truncf %141 : vector<8x256xf32> to vector<8x256xbf16>
    %c0_48 = arith.constant 0 : index
    %c0_49 = arith.constant 0 : index
    %143 = vector.load %arg5[%c0_48, %c0_49] : memref<256x512xbf16, #tpu.memory_space<vmem>>, vector<256x512xbf16>
    %cst_50 = arith.constant dense<0.000000e+00> : vector<8x512xf32>
    %144 = tpu.matmul %142, %143, %cst_50 {dimension_numbers = #tpu.dot_dimension_numbers<[1], [0], [0], [1], [0, 0, 1, 1], [], []>} : vector<8x256xbf16>, vector<256x512xbf16>, vector<8x512xf32> -> vector<8x512xf32>
    %145 = arith.addf %144, %10 : vector<8x512xf32>
    %146 = vector.extract_strided_slice %145 {offsets = [0, 0], sizes = [8, 128], strides = [1, 1]} : vector<8x512xf32> to vector<8x128xf32>
    %cst_51 = arith.constant 0.000000e+00 : f32
    %147 = vector.broadcast %cst_51 : f32 to vector<8x128xf32>
    %148 = arith.subf %147, %146 : vector<8x128xf32>
    %149 = math.exp %148 : vector<8x128xf32>
    %cst_52 = arith.constant 1.000000e+00 : f32
    %150 = vector.broadcast %cst_52 : f32 to vector<8x128xf32>
    %151 = arith.addf %150, %149 : vector<8x128xf32>
    %152 = tpu.reciprocal %151 {approx = true} : vector<8x128xf32> -> vector<8x128xf32>
    %153 = vector.extract_strided_slice %145 {offsets = [0, 128], sizes = [8, 128], strides = [1, 1]} : vector<8x512xf32> to vector<8x128xf32>
    %cst_53 = arith.constant 0.000000e+00 : f32
    %154 = vector.broadcast %cst_53 : f32 to vector<8x128xf32>
    %155 = arith.subf %154, %153 : vector<8x128xf32>
    %156 = math.exp %155 : vector<8x128xf32>
    %cst_54 = arith.constant 1.000000e+00 : f32
    %157 = vector.broadcast %cst_54 : f32 to vector<8x128xf32>
    %158 = arith.addf %157, %156 : vector<8x128xf32>
    %159 = tpu.reciprocal %158 {approx = true} : vector<8x128xf32> -> vector<8x128xf32>
    %160 = vector.extract_strided_slice %145 {offsets = [0, 256], sizes = [8, 128], strides = [1, 1]} : vector<8x512xf32> to vector<8x128xf32>
    %161 = math.tanh %160 : vector<8x128xf32>
    %162 = vector.extract_strided_slice %145 {offsets = [0, 384], sizes = [8, 128], strides = [1, 1]} : vector<8x512xf32> to vector<8x128xf32>
    %cst_55 = arith.constant 0.000000e+00 : f32
    %163 = vector.broadcast %cst_55 : f32 to vector<8x128xf32>
    %164 = arith.subf %163, %162 : vector<8x128xf32>
    %165 = math.exp %164 : vector<8x128xf32>
    %cst_56 = arith.constant 1.000000e+00 : f32
    %166 = vector.broadcast %cst_56 : f32 to vector<8x128xf32>
    %167 = arith.addf %166, %165 : vector<8x128xf32>
    %168 = tpu.reciprocal %167 {approx = true} : vector<8x128xf32> -> vector<8x128xf32>
    %169 = arith.mulf %159, %94 : vector<8x128xf32>
    %170 = arith.mulf %152, %161 : vector<8x128xf32>
    %171 = arith.addf %169, %170 : vector<8x128xf32>
    %172 = math.tanh %171 : vector<8x128xf32>
    %173 = arith.mulf %168, %172 : vector<8x128xf32>
    %174 = vector.shape_cast %101 : vector<8x1xi1> to vector<8x1xi1>
    %175 = vector.broadcast %174 : vector<8x1xi1> to vector<8x128xi1>
    %176 = arith.select %175, %173, %91 : vector<8x128xi1>, vector<8x128xf32>
    %177 = vector.shape_cast %101 : vector<8x1xi1> to vector<8x1xi1>
    %178 = vector.broadcast %177 : vector<8x1xi1> to vector<8x128xi1>
    %179 = arith.select %178, %171, %94 : vector<8x128xi1>, vector<8x128xf32>
    %cst_57 = arith.constant 0.000000e+00 : f32
    %180 = vector.shape_cast %101 : vector<8x1xi1> to vector<8x1xi1>
    %181 = vector.broadcast %180 : vector<8x1xi1> to vector<8x128xi1>
    %182 = vector.broadcast %cst_57 : f32 to vector<8x128xf32>
    %183 = arith.select %181, %176, %182 : vector<8x128xi1>, vector<8x128xf32>
    %c8_58 = arith.constant 8 : index
    %c0_59 = arith.constant 0 : index
    %184 = vector.load %arg9[%c8_58, %c0_59] : memref<64x128xf32, #tpu.memory_space<vmem>>, vector<8x128xf32>
    tpu.vector_store %arg9[%c8_58, %c0_59], %183 {strides = array<i32>} : memref<64x128xf32, #tpu.memory_space<vmem>>, vector<8x128xf32>,
    %c2_i32 = arith.constant 2 : i32
    %185 = vector.broadcast %c2_i32 : i32 to vector<8x1xi32>
    %186 = arith.cmpi sgt, %0, %185 : vector<8x1xi32>
    %c16 = arith.constant 16 : index
    %c0_60 = arith.constant 0 : index
    %187 = vector.load %arg13[%c16, %c0_60] : memref<64x512xf32, #tpu.memory_space<vmem>>, vector<8x512xf32>
    %188 = arith.truncf %137 : vector<8x128xf32> to vector<8x128xbf16>
    %c0_61 = arith.constant 0 : index
    %c0_62 = arith.constant 0 : index
    %189 = vector.load %arg3[%c0_61, %c0_62] : memref<128x512xbf16, #tpu.memory_space<vmem>>, vector<128x512xbf16>
    %cst_63 = arith.constant dense<0.000000e+00> : vector<8x512xf32>
    %190 = tpu.matmul %188, %189, %cst_63 {dimension_numbers = #tpu.dot_dimension_numbers<[1], [0], [0], [1], [0, 0, 1, 1], [], []>} : vector<8x128xbf16>, vector<128x512xbf16>, vector<8x512xf32> -> vector<8x512xf32>
    %191 = arith.addf %187, %190 : vector<8x512xf32>
    %192 = vector.extract_strided_slice %191 {offsets = [0, 0], sizes = [8, 128], strides = [1, 1]} : vector<8x512xf32> to vector<8x128xf32>
    %cst_64 = arith.constant 0.000000e+00 : f32
    %193 = vector.broadcast %cst_64 : f32 to vector<8x128xf32>
    %194 = arith.subf %193, %192 : vector<8x128xf32>
    %195 = math.exp %194 : vector<8x128xf32>
    %cst_65 = arith.constant 1.000000e+00 : f32
    %196 = vector.broadcast %cst_65 : f32 to vector<8x128xf32>
    %197 = arith.addf %196, %195 : vector<8x128xf32>
    %198 = tpu.reciprocal %197 {approx = true} : vector<8x128xf32> -> vector<8x128xf32>
    %199 = vector.extract_strided_slice %191 {offsets = [0, 128], sizes = [8, 128], strides = [1, 1]} : vector<8x512xf32> to vector<8x128xf32>
    %cst_66 = arith.constant 0.000000e+00 : f32
    %200 = vector.broadcast %cst_66 : f32 to vector<8x128xf32>
    %201 = arith.subf %200, %199 : vector<8x128xf32>
    %202 = math.exp %201 : vector<8x128xf32>
    %cst_67 = arith.constant 1.000000e+00 : f32
    %203 = vector.broadcast %cst_67 : f32 to vector<8x128xf32>
    %204 = arith.addf %203, %202 : vector<8x128xf32>
    %205 = tpu.reciprocal %204 {approx = true} : vector<8x128xf32> -> vector<8x128xf32>
    %206 = vector.extract_strided_slice %191 {offsets = [0, 256], sizes = [8, 128], strides = [1, 1]} : vector<8x512xf32> to vector<8x128xf32>
    %207 = math.tanh %206 : vector<8x128xf32>
    %208 = vector.extract_strided_slice %191 {offsets = [0, 384], sizes = [8, 128], strides = [1, 1]} : vector<8x512xf32> to vector<8x128xf32>
    %cst_68 = arith.constant 0.000000e+00 : f32
    %209 = vector.broadcast %cst_68 : f32 to vector<8x128xf32>
    %210 = arith.subf %209, %208 : vector<8x128xf32>
    %211 = math.exp %210 : vector<8x128xf32>
    %cst_69 = arith.constant 1.000000e+00 : f32
    %212 = vector.broadcast %cst_69 : f32 to vector<8x128xf32>
    %213 = arith.addf %212, %211 : vector<8x128xf32>
    %214 = tpu.reciprocal %213 {approx = true} : vector<8x128xf32> -> vector<8x128xf32>
    %215 = arith.mulf %205, %140 : vector<8x128xf32>
    %216 = arith.mulf %198, %207 : vector<8x128xf32>
    %217 = arith.addf %215, %216 : vector<8x128xf32>
    %218 = math.tanh %217 : vector<8x128xf32>
    %219 = arith.mulf %214, %218 : vector<8x128xf32>
    %220 = vector.shape_cast %186 : vector<8x1xi1> to vector<8x1xi1>
    %221 = vector.broadcast %220 : vector<8x1xi1> to vector<8x128xi1>
    %222 = arith.select %221, %219, %137 : vector<8x128xi1>, vector<8x128xf32>
    %223 = vector.shape_cast %186 : vector<8x1xi1> to vector<8x1xi1>
    %224 = vector.broadcast %223 : vector<8x1xi1> to vector<8x128xi1>
    %225 = arith.select %224, %217, %140 : vector<8x128xi1>, vector<8x128xf32>
    %226 = tpu.concatenate %222, %176 in 1 : vector<8x128xf32>, vector<8x128xf32> -> vector<8x256xf32>
    %227 = arith.truncf %226 : vector<8x256xf32> to vector<8x256xbf16>
    %c0_70 = arith.constant 0 : index
    %c0_71 = arith.constant 0 : index
    %228 = vector.load %arg5[%c0_70, %c0_71] : memref<256x512xbf16, #tpu.memory_space<vmem>>, vector<256x512xbf16>
    %cst_72 = arith.constant dense<0.000000e+00> : vector<8x512xf32>
    %229 = tpu.matmul %227, %228, %cst_72 {dimension_numbers = #tpu.dot_dimension_numbers<[1], [0], [0], [1], [0, 0, 1, 1], [], []>} : vector<8x256xbf16>, vector<256x512xbf16>, vector<8x512xf32> -> vector<8x512xf32>
    %230 = arith.addf %229, %10 : vector<8x512xf32>
    %231 = vector.extract_strided_slice %230 {offsets = [0, 0], sizes = [8, 128], strides = [1, 1]} : vector<8x512xf32> to vector<8x128xf32>
    %cst_73 = arith.constant 0.000000e+00 : f32
    %232 = vector.broadcast %cst_73 : f32 to vector<8x128xf32>
    %233 = arith.subf %232, %231 : vector<8x128xf32>
    %234 = math.exp %233 : vector<8x128xf32>
    %cst_74 = arith.constant 1.000000e+00 : f32
    %235 = vector.broadcast %cst_74 : f32 to vector<8x128xf32>
    %236 = arith.addf %235, %234 : vector<8x128xf32>
    %237 = tpu.reciprocal %236 {approx = true} : vector<8x128xf32> -> vector<8x128xf32>
    %238 = vector.extract_strided_slice %230 {offsets = [0, 128], sizes = [8, 128], strides = [1, 1]} : vector<8x512xf32> to vector<8x128xf32>
    %cst_75 = arith.constant 0.000000e+00 : f32
    %239 = vector.broadcast %cst_75 : f32 to vector<8x128xf32>
    %240 = arith.subf %239, %238 : vector<8x128xf32>
    %241 = math.exp %240 : vector<8x128xf32>
    %cst_76 = arith.constant 1.000000e+00 : f32
    %242 = vector.broadcast %cst_76 : f32 to vector<8x128xf32>
    %243 = arith.addf %242, %241 : vector<8x128xf32>
    %244 = tpu.reciprocal %243 {approx = true} : vector<8x128xf32> -> vector<8x128xf32>
    %245 = vector.extract_strided_slice %230 {offsets = [0, 256], sizes = [8, 128], strides = [1, 1]} : vector<8x512xf32> to vector<8x128xf32>
    %246 = math.tanh %245 : vector<8x128xf32>
    %247 = vector.extract_strided_slice %230 {offsets = [0, 384], sizes = [8, 128], strides = [1, 1]} : vector<8x512xf32> to vector<8x128xf32>
    %cst_77 = arith.constant 0.000000e+00 : f32
    %248 = vector.broadcast %cst_77 : f32 to vector<8x128xf32>
    %249 = arith.subf %248, %247 : vector<8x128xf32>
    %250 = math.exp %249 : vector<8x128xf32>
    %cst_78 = arith.constant 1.000000e+00 : f32
    %251 = vector.broadcast %cst_78 : f32 to vector<8x128xf32>
    %252 = arith.addf %251, %250 : vector<8x128xf32>
    %253 = tpu.reciprocal %252 {approx = true} : vector<8x128xf32> -> vector<8x128xf32>
    %254 = arith.mulf %244, %179 : vector<8x128xf32>
    %255 = arith.mulf %237, %246 : vector<8x128xf32>
    %256 = arith.addf %254, %255 : vector<8x128xf32>
    %257 = math.tanh %256 : vector<8x128xf32>
    %258 = arith.mulf %253, %257 : vector<8x128xf32>
    %259 = vector.shape_cast %186 : vector<8x1xi1> to vector<8x1xi1>
    %260 = vector.broadcast %259 : vector<8x1xi1> to vector<8x128xi1>
    %261 = arith.select %260, %258, %176 : vector<8x128xi1>, vector<8x128xf32>
    %262 = vector.shape_cast %186 : vector<8x1xi1> to vector<8x1xi1>
    %263 = vector.broadcast %262 : vector<8x1xi1> to vector<8x128xi1>
    %264 = arith.select %263, %256, %179 : vector<8x128xi1>, vector<8x128xf32>
    %cst_79 = arith.constant 0.000000e+00 : f32
    %265 = vector.shape_cast %186 : vector<8x1xi1> to vector<8x1xi1>
    %266 = vector.broadcast %265 : vector<8x1xi1> to vector<8x128xi1>
    %267 = vector.broadcast %cst_79 : f32 to vector<8x128xf32>
    %268 = arith.select %266, %261, %267 : vector<8x128xi1>, vector<8x128xf32>
    %c16_80 = arith.constant 16 : index
    %c0_81 = arith.constant 0 : index
    %269 = vector.load %arg9[%c16_80, %c0_81] : memref<64x128xf32, #tpu.memory_space<vmem>>, vector<8x128xf32>
    tpu.vector_store %arg9[%c16_80, %c0_81], %268 {strides = array<i32>} : memref<64x128xf32, #tpu.memory_space<vmem>>, vector<8x128xf32>,
    %c3_i32 = arith.constant 3 : i32
    %270 = vector.broadcast %c3_i32 : i32 to vector<8x1xi32>
    %271 = arith.cmpi sgt, %0, %270 : vector<8x1xi32>
    %c24 = arith.constant 24 : index
    %c0_82 = arith.constant 0 : index
    %272 = vector.load %arg13[%c24, %c0_82] : memref<64x512xf32, #tpu.memory_space<vmem>>, vector<8x512xf32>
    %273 = arith.truncf %222 : vector<8x128xf32> to vector<8x128xbf16>
    %c0_83 = arith.constant 0 : index
    %c0_84 = arith.constant 0 : index
    %274 = vector.load %arg3[%c0_83, %c0_84] : memref<128x512xbf16, #tpu.memory_space<vmem>>, vector<128x512xbf16>
    %cst_85 = arith.constant dense<0.000000e+00> : vector<8x512xf32>
    %275 = tpu.matmul %273, %274, %cst_85 {dimension_numbers = #tpu.dot_dimension_numbers<[1], [0], [0], [1], [0, 0, 1, 1], [], []>} : vector<8x128xbf16>, vector<128x512xbf16>, vector<8x512xf32> -> vector<8x512xf32>
    %276 = arith.addf %272, %275 : vector<8x512xf32>
    %277 = vector.extract_strided_slice %276 {offsets = [0, 0], sizes = [8, 128], strides = [1, 1]} : vector<8x512xf32> to vector<8x128xf32>
    %cst_86 = arith.constant 0.000000e+00 : f32
    %278 = vector.broadcast %cst_86 : f32 to vector<8x128xf32>
    %279 = arith.subf %278, %277 : vector<8x128xf32>
    %280 = math.exp %279 : vector<8x128xf32>
    %cst_87 = arith.constant 1.000000e+00 : f32
    %281 = vector.broadcast %cst_87 : f32 to vector<8x128xf32>
    %282 = arith.addf %281, %280 : vector<8x128xf32>
    %283 = tpu.reciprocal %282 {approx = true} : vector<8x128xf32> -> vector<8x128xf32>
    %284 = vector.extract_strided_slice %276 {offsets = [0, 128], sizes = [8, 128], strides = [1, 1]} : vector<8x512xf32> to vector<8x128xf32>
    %cst_88 = arith.constant 0.000000e+00 : f32
    %285 = vector.broadcast %cst_88 : f32 to vector<8x128xf32>
    %286 = arith.subf %285, %284 : vector<8x128xf32>
    %287 = math.exp %286 : vector<8x128xf32>
    %cst_89 = arith.constant 1.000000e+00 : f32
    %288 = vector.broadcast %cst_89 : f32 to vector<8x128xf32>
    %289 = arith.addf %288, %287 : vector<8x128xf32>
    %290 = tpu.reciprocal %289 {approx = true} : vector<8x128xf32> -> vector<8x128xf32>
    %291 = vector.extract_strided_slice %276 {offsets = [0, 256], sizes = [8, 128], strides = [1, 1]} : vector<8x512xf32> to vector<8x128xf32>
    %292 = math.tanh %291 : vector<8x128xf32>
    %293 = vector.extract_strided_slice %276 {offsets = [0, 384], sizes = [8, 128], strides = [1, 1]} : vector<8x512xf32> to vector<8x128xf32>
    %cst_90 = arith.constant 0.000000e+00 : f32
    %294 = vector.broadcast %cst_90 : f32 to vector<8x128xf32>
    %295 = arith.subf %294, %293 : vector<8x128xf32>
    %296 = math.exp %295 : vector<8x128xf32>
    %cst_91 = arith.constant 1.000000e+00 : f32
    %297 = vector.broadcast %cst_91 : f32 to vector<8x128xf32>
    %298 = arith.addf %297, %296 : vector<8x128xf32>
    %299 = tpu.reciprocal %298 {approx = true} : vector<8x128xf32> -> vector<8x128xf32>
    %300 = arith.mulf %290, %225 : vector<8x128xf32>
    %301 = arith.mulf %283, %292 : vector<8x128xf32>
    %302 = arith.addf %300, %301 : vector<8x128xf32>
    %303 = math.tanh %302 : vector<8x128xf32>
    %304 = arith.mulf %299, %303 : vector<8x128xf32>
    %305 = vector.shape_cast %271 : vector<8x1xi1> to vector<8x1xi1>
    %306 = vector.broadcast %305 : vector<8x1xi1> to vector<8x128xi1>
    %307 = arith.select %306, %304, %222 : vector<8x128xi1>, vector<8x128xf32>
    %308 = vector.shape_cast %271 : vector<8x1xi1> to vector<8x1xi1>
    %309 = vector.broadcast %308 : vector<8x1xi1> to vector<8x128xi1>
    %310 = arith.select %309, %302, %225 : vector<8x128xi1>, vector<8x128xf32>
    %311 = tpu.concatenate %307, %261 in 1 : vector<8x128xf32>, vector<8x128xf32> -> vector<8x256xf32>
    %312 = arith.truncf %311 : vector<8x256xf32> to vector<8x256xbf16>
    %c0_92 = arith.constant 0 : index
    %c0_93 = arith.constant 0 : index
    %313 = vector.load %arg5[%c0_92, %c0_93] : memref<256x512xbf16, #tpu.memory_space<vmem>>, vector<256x512xbf16>
    %cst_94 = arith.constant dense<0.000000e+00> : vector<8x512xf32>
    %314 = tpu.matmul %312, %313, %cst_94 {dimension_numbers = #tpu.dot_dimension_numbers<[1], [0], [0], [1], [0, 0, 1, 1], [], []>} : vector<8x256xbf16>, vector<256x512xbf16>, vector<8x512xf32> -> vector<8x512xf32>
    %315 = arith.addf %314, %10 : vector<8x512xf32>
    %316 = vector.extract_strided_slice %315 {offsets = [0, 0], sizes = [8, 128], strides = [1, 1]} : vector<8x512xf32> to vector<8x128xf32>
    %cst_95 = arith.constant 0.000000e+00 : f32
    %317 = vector.broadcast %cst_95 : f32 to vector<8x128xf32>
    %318 = arith.subf %317, %316 : vector<8x128xf32>
    %319 = math.exp %318 : vector<8x128xf32>
    %cst_96 = arith.constant 1.000000e+00 : f32
    %320 = vector.broadcast %cst_96 : f32 to vector<8x128xf32>
    %321 = arith.addf %320, %319 : vector<8x128xf32>
    %322 = tpu.reciprocal %321 {approx = true} : vector<8x128xf32> -> vector<8x128xf32>
    %323 = vector.extract_strided_slice %315 {offsets = [0, 128], sizes = [8, 128], strides = [1, 1]} : vector<8x512xf32> to vector<8x128xf32>
    %cst_97 = arith.constant 0.000000e+00 : f32
    %324 = vector.broadcast %cst_97 : f32 to vector<8x128xf32>
    %325 = arith.subf %324, %323 : vector<8x128xf32>
    %326 = math.exp %325 : vector<8x128xf32>
    %cst_98 = arith.constant 1.000000e+00 : f32
    %327 = vector.broadcast %cst_98 : f32 to vector<8x128xf32>
    %328 = arith.addf %327, %326 : vector<8x128xf32>
    %329 = tpu.reciprocal %328 {approx = true} : vector<8x128xf32> -> vector<8x128xf32>
    %330 = vector.extract_strided_slice %315 {offsets = [0, 256], sizes = [8, 128], strides = [1, 1]} : vector<8x512xf32> to vector<8x128xf32>
    %331 = math.tanh %330 : vector<8x128xf32>
    %332 = vector.extract_strided_slice %315 {offsets = [0, 384], sizes = [8, 128], strides = [1, 1]} : vector<8x512xf32> to vector<8x128xf32>
    %cst_99 = arith.constant 0.000000e+00 : f32
    %333 = vector.broadcast %cst_99 : f32 to vector<8x128xf32>
    %334 = arith.subf %333, %332 : vector<8x128xf32>
    %335 = math.exp %334 : vector<8x128xf32>
    %cst_100 = arith.constant 1.000000e+00 : f32
    %336 = vector.broadcast %cst_100 : f32 to vector<8x128xf32>
    %337 = arith.addf %336, %335 : vector<8x128xf32>
    %338 = tpu.reciprocal %337 {approx = true} : vector<8x128xf32> -> vector<8x128xf32>
    %339 = arith.mulf %329, %264 : vector<8x128xf32>
    %340 = arith.mulf %322, %331 : vector<8x128xf32>
    %341 = arith.addf %339, %340 : vector<8x128xf32>
    %342 = math.tanh %341 : vector<8x128xf32>
    %343 = arith.mulf %338, %342 : vector<8x128xf32>
    %344 = vector.shape_cast %271 : vector<8x1xi1> to vector<8x1xi1>
    %345 = vector.broadcast %344 : vector<8x1xi1> to vector<8x128xi1>
    %346 = arith.select %345, %343, %261 : vector<8x128xi1>, vector<8x128xf32>
    %347 = vector.shape_cast %271 : vector<8x1xi1> to vector<8x1xi1>
    %348 = vector.broadcast %347 : vector<8x1xi1> to vector<8x128xi1>
    %349 = arith.select %348, %341, %264 : vector<8x128xi1>, vector<8x128xf32>
    %cst_101 = arith.constant 0.000000e+00 : f32
    %350 = vector.shape_cast %271 : vector<8x1xi1> to vector<8x1xi1>
    %351 = vector.broadcast %350 : vector<8x1xi1> to vector<8x128xi1>
    %352 = vector.broadcast %cst_101 : f32 to vector<8x128xf32>
    %353 = arith.select %351, %346, %352 : vector<8x128xi1>, vector<8x128xf32>
    %c24_102 = arith.constant 24 : index
    %c0_103 = arith.constant 0 : index
    %354 = vector.load %arg9[%c24_102, %c0_103] : memref<64x128xf32, #tpu.memory_space<vmem>>, vector<8x128xf32>
    tpu.vector_store %arg9[%c24_102, %c0_103], %353 {strides = array<i32>} : memref<64x128xf32, #tpu.memory_space<vmem>>, vector<8x128xf32>,
    %c4_i32 = arith.constant 4 : i32
    %355 = vector.broadcast %c4_i32 : i32 to vector<8x1xi32>
    %356 = arith.cmpi sgt, %0, %355 : vector<8x1xi32>
    %c32 = arith.constant 32 : index
    %c0_104 = arith.constant 0 : index
    %357 = vector.load %arg13[%c32, %c0_104] : memref<64x512xf32, #tpu.memory_space<vmem>>, vector<8x512xf32>
    %358 = arith.truncf %307 : vector<8x128xf32> to vector<8x128xbf16>
    %c0_105 = arith.constant 0 : index
    %c0_106 = arith.constant 0 : index
    %359 = vector.load %arg3[%c0_105, %c0_106] : memref<128x512xbf16, #tpu.memory_space<vmem>>, vector<128x512xbf16>
    %cst_107 = arith.constant dense<0.000000e+00> : vector<8x512xf32>
    %360 = tpu.matmul %358, %359, %cst_107 {dimension_numbers = #tpu.dot_dimension_numbers<[1], [0], [0], [1], [0, 0, 1, 1], [], []>} : vector<8x128xbf16>, vector<128x512xbf16>, vector<8x512xf32> -> vector<8x512xf32>
    %361 = arith.addf %357, %360 : vector<8x512xf32>
    %362 = vector.extract_strided_slice %361 {offsets = [0, 0], sizes = [8, 128], strides = [1, 1]} : vector<8x512xf32> to vector<8x128xf32>
    %cst_108 = arith.constant 0.000000e+00 : f32
    %363 = vector.broadcast %cst_108 : f32 to vector<8x128xf32>
    %364 = arith.subf %363, %362 : vector<8x128xf32>
    %365 = math.exp %364 : vector<8x128xf32>
    %cst_109 = arith.constant 1.000000e+00 : f32
    %366 = vector.broadcast %cst_109 : f32 to vector<8x128xf32>
    %367 = arith.addf %366, %365 : vector<8x128xf32>
    %368 = tpu.reciprocal %367 {approx = true} : vector<8x128xf32> -> vector<8x128xf32>
    %369 = vector.extract_strided_slice %361 {offsets = [0, 128], sizes = [8, 128], strides = [1, 1]} : vector<8x512xf32> to vector<8x128xf32>
    %cst_110 = arith.constant 0.000000e+00 : f32
    %370 = vector.broadcast %cst_110 : f32 to vector<8x128xf32>
    %371 = arith.subf %370, %369 : vector<8x128xf32>
    %372 = math.exp %371 : vector<8x128xf32>
    %cst_111 = arith.constant 1.000000e+00 : f32
    %373 = vector.broadcast %cst_111 : f32 to vector<8x128xf32>
    %374 = arith.addf %373, %372 : vector<8x128xf32>
    %375 = tpu.reciprocal %374 {approx = true} : vector<8x128xf32> -> vector<8x128xf32>
    %376 = vector.extract_strided_slice %361 {offsets = [0, 256], sizes = [8, 128], strides = [1, 1]} : vector<8x512xf32> to vector<8x128xf32>
    %377 = math.tanh %376 : vector<8x128xf32>
    %378 = vector.extract_strided_slice %361 {offsets = [0, 384], sizes = [8, 128], strides = [1, 1]} : vector<8x512xf32> to vector<8x128xf32>
    %cst_112 = arith.constant 0.000000e+00 : f32
    %379 = vector.broadcast %cst_112 : f32 to vector<8x128xf32>
    %380 = arith.subf %379, %378 : vector<8x128xf32>
    %381 = math.exp %380 : vector<8x128xf32>
    %cst_113 = arith.constant 1.000000e+00 : f32
    %382 = vector.broadcast %cst_113 : f32 to vector<8x128xf32>
    %383 = arith.addf %382, %381 : vector<8x128xf32>
    %384 = tpu.reciprocal %383 {approx = true} : vector<8x128xf32> -> vector<8x128xf32>
    %385 = arith.mulf %375, %310 : vector<8x128xf32>
    %386 = arith.mulf %368, %377 : vector<8x128xf32>
    %387 = arith.addf %385, %386 : vector<8x128xf32>
    %388 = math.tanh %387 : vector<8x128xf32>
    %389 = arith.mulf %384, %388 : vector<8x128xf32>
    %390 = vector.shape_cast %356 : vector<8x1xi1> to vector<8x1xi1>
    %391 = vector.broadcast %390 : vector<8x1xi1> to vector<8x128xi1>
    %392 = arith.select %391, %389, %307 : vector<8x128xi1>, vector<8x128xf32>
    %393 = vector.shape_cast %356 : vector<8x1xi1> to vector<8x1xi1>
    %394 = vector.broadcast %393 : vector<8x1xi1> to vector<8x128xi1>
    %395 = arith.select %394, %387, %310 : vector<8x128xi1>, vector<8x128xf32>
    %396 = tpu.concatenate %392, %346 in 1 : vector<8x128xf32>, vector<8x128xf32> -> vector<8x256xf32>
    %397 = arith.truncf %396 : vector<8x256xf32> to vector<8x256xbf16>
    %c0_114 = arith.constant 0 : index
    %c0_115 = arith.constant 0 : index
    %398 = vector.load %arg5[%c0_114, %c0_115] : memref<256x512xbf16, #tpu.memory_space<vmem>>, vector<256x512xbf16>
    %cst_116 = arith.constant dense<0.000000e+00> : vector<8x512xf32>
    %399 = tpu.matmul %397, %398, %cst_116 {dimension_numbers = #tpu.dot_dimension_numbers<[1], [0], [0], [1], [0, 0, 1, 1], [], []>} : vector<8x256xbf16>, vector<256x512xbf16>, vector<8x512xf32> -> vector<8x512xf32>
    %400 = arith.addf %399, %10 : vector<8x512xf32>
    %401 = vector.extract_strided_slice %400 {offsets = [0, 0], sizes = [8, 128], strides = [1, 1]} : vector<8x512xf32> to vector<8x128xf32>
    %cst_117 = arith.constant 0.000000e+00 : f32
    %402 = vector.broadcast %cst_117 : f32 to vector<8x128xf32>
    %403 = arith.subf %402, %401 : vector<8x128xf32>
    %404 = math.exp %403 : vector<8x128xf32>
    %cst_118 = arith.constant 1.000000e+00 : f32
    %405 = vector.broadcast %cst_118 : f32 to vector<8x128xf32>
    %406 = arith.addf %405, %404 : vector<8x128xf32>
    %407 = tpu.reciprocal %406 {approx = true} : vector<8x128xf32> -> vector<8x128xf32>
    %408 = vector.extract_strided_slice %400 {offsets = [0, 128], sizes = [8, 128], strides = [1, 1]} : vector<8x512xf32> to vector<8x128xf32>
    %cst_119 = arith.constant 0.000000e+00 : f32
    %409 = vector.broadcast %cst_119 : f32 to vector<8x128xf32>
    %410 = arith.subf %409, %408 : vector<8x128xf32>
    %411 = math.exp %410 : vector<8x128xf32>
    %cst_120 = arith.constant 1.000000e+00 : f32
    %412 = vector.broadcast %cst_120 : f32 to vector<8x128xf32>
    %413 = arith.addf %412, %411 : vector<8x128xf32>
    %414 = tpu.reciprocal %413 {approx = true} : vector<8x128xf32> -> vector<8x128xf32>
    %415 = vector.extract_strided_slice %400 {offsets = [0, 256], sizes = [8, 128], strides = [1, 1]} : vector<8x512xf32> to vector<8x128xf32>
    %416 = math.tanh %415 : vector<8x128xf32>
    %417 = vector.extract_strided_slice %400 {offsets = [0, 384], sizes = [8, 128], strides = [1, 1]} : vector<8x512xf32> to vector<8x128xf32>
    %cst_121 = arith.constant 0.000000e+00 : f32
    %418 = vector.broadcast %cst_121 : f32 to vector<8x128xf32>
    %419 = arith.subf %418, %417 : vector<8x128xf32>
    %420 = math.exp %419 : vector<8x128xf32>
    %cst_122 = arith.constant 1.000000e+00 : f32
    %421 = vector.broadcast %cst_122 : f32 to vector<8x128xf32>
    %422 = arith.addf %421, %420 : vector<8x128xf32>
    %423 = tpu.reciprocal %422 {approx = true} : vector<8x128xf32> -> vector<8x128xf32>
    %424 = arith.mulf %414, %349 : vector<8x128xf32>
    %425 = arith.mulf %407, %416 : vector<8x128xf32>
    %426 = arith.addf %424, %425 : vector<8x128xf32>
    %427 = math.tanh %426 : vector<8x128xf32>
    %428 = arith.mulf %423, %427 : vector<8x128xf32>
    %429 = vector.shape_cast %356 : vector<8x1xi1> to vector<8x1xi1>
    %430 = vector.broadcast %429 : vector<8x1xi1> to vector<8x128xi1>
    %431 = arith.select %430, %428, %346 : vector<8x128xi1>, vector<8x128xf32>
    %432 = vector.shape_cast %356 : vector<8x1xi1> to vector<8x1xi1>
    %433 = vector.broadcast %432 : vector<8x1xi1> to vector<8x128xi1>
    %434 = arith.select %433, %426, %349 : vector<8x128xi1>, vector<8x128xf32>
    %cst_123 = arith.constant 0.000000e+00 : f32
    %435 = vector.shape_cast %356 : vector<8x1xi1> to vector<8x1xi1>
    %436 = vector.broadcast %435 : vector<8x1xi1> to vector<8x128xi1>
    %437 = vector.broadcast %cst_123 : f32 to vector<8x128xf32>
    %438 = arith.select %436, %431, %437 : vector<8x128xi1>, vector<8x128xf32>
    %c32_124 = arith.constant 32 : index
    %c0_125 = arith.constant 0 : index
    %439 = vector.load %arg9[%c32_124, %c0_125] : memref<64x128xf32, #tpu.memory_space<vmem>>, vector<8x128xf32>
    tpu.vector_store %arg9[%c32_124, %c0_125], %438 {strides = array<i32>} : memref<64x128xf32, #tpu.memory_space<vmem>>, vector<8x128xf32>,
    %c5_i32 = arith.constant 5 : i32
    %440 = vector.broadcast %c5_i32 : i32 to vector<8x1xi32>
    %441 = arith.cmpi sgt, %0, %440 : vector<8x1xi32>
    %c40 = arith.constant 40 : index
    %c0_126 = arith.constant 0 : index
    %442 = vector.load %arg13[%c40, %c0_126] : memref<64x512xf32, #tpu.memory_space<vmem>>, vector<8x512xf32>
    %443 = arith.truncf %392 : vector<8x128xf32> to vector<8x128xbf16>
    %c0_127 = arith.constant 0 : index
    %c0_128 = arith.constant 0 : index
    %444 = vector.load %arg3[%c0_127, %c0_128] : memref<128x512xbf16, #tpu.memory_space<vmem>>, vector<128x512xbf16>
    %cst_129 = arith.constant dense<0.000000e+00> : vector<8x512xf32>
    %445 = tpu.matmul %443, %444, %cst_129 {dimension_numbers = #tpu.dot_dimension_numbers<[1], [0], [0], [1], [0, 0, 1, 1], [], []>} : vector<8x128xbf16>, vector<128x512xbf16>, vector<8x512xf32> -> vector<8x512xf32>
    %446 = arith.addf %442, %445 : vector<8x512xf32>
    %447 = vector.extract_strided_slice %446 {offsets = [0, 0], sizes = [8, 128], strides = [1, 1]} : vector<8x512xf32> to vector<8x128xf32>
    %cst_130 = arith.constant 0.000000e+00 : f32
    %448 = vector.broadcast %cst_130 : f32 to vector<8x128xf32>
    %449 = arith.subf %448, %447 : vector<8x128xf32>
    %450 = math.exp %449 : vector<8x128xf32>
    %cst_131 = arith.constant 1.000000e+00 : f32
    %451 = vector.broadcast %cst_131 : f32 to vector<8x128xf32>
    %452 = arith.addf %451, %450 : vector<8x128xf32>
    %453 = tpu.reciprocal %452 {approx = true} : vector<8x128xf32> -> vector<8x128xf32>
    %454 = vector.extract_strided_slice %446 {offsets = [0, 128], sizes = [8, 128], strides = [1, 1]} : vector<8x512xf32> to vector<8x128xf32>
    %cst_132 = arith.constant 0.000000e+00 : f32
    %455 = vector.broadcast %cst_132 : f32 to vector<8x128xf32>
    %456 = arith.subf %455, %454 : vector<8x128xf32>
    %457 = math.exp %456 : vector<8x128xf32>
    %cst_133 = arith.constant 1.000000e+00 : f32
    %458 = vector.broadcast %cst_133 : f32 to vector<8x128xf32>
    %459 = arith.addf %458, %457 : vector<8x128xf32>
    %460 = tpu.reciprocal %459 {approx = true} : vector<8x128xf32> -> vector<8x128xf32>
    %461 = vector.extract_strided_slice %446 {offsets = [0, 256], sizes = [8, 128], strides = [1, 1]} : vector<8x512xf32> to vector<8x128xf32>
    %462 = math.tanh %461 : vector<8x128xf32>
    %463 = vector.extract_strided_slice %446 {offsets = [0, 384], sizes = [8, 128], strides = [1, 1]} : vector<8x512xf32> to vector<8x128xf32>
    %cst_134 = arith.constant 0.000000e+00 : f32
    %464 = vector.broadcast %cst_134 : f32 to vector<8x128xf32>
    %465 = arith.subf %464, %463 : vector<8x128xf32>
    %466 = math.exp %465 : vector<8x128xf32>
    %cst_135 = arith.constant 1.000000e+00 : f32
    %467 = vector.broadcast %cst_135 : f32 to vector<8x128xf32>
    %468 = arith.addf %467, %466 : vector<8x128xf32>
    %469 = tpu.reciprocal %468 {approx = true} : vector<8x128xf32> -> vector<8x128xf32>
    %470 = arith.mulf %460, %395 : vector<8x128xf32>
    %471 = arith.mulf %453, %462 : vector<8x128xf32>
    %472 = arith.addf %470, %471 : vector<8x128xf32>
    %473 = math.tanh %472 : vector<8x128xf32>
    %474 = arith.mulf %469, %473 : vector<8x128xf32>
    %475 = vector.shape_cast %441 : vector<8x1xi1> to vector<8x1xi1>
    %476 = vector.broadcast %475 : vector<8x1xi1> to vector<8x128xi1>
    %477 = arith.select %476, %474, %392 : vector<8x128xi1>, vector<8x128xf32>
    %478 = vector.shape_cast %441 : vector<8x1xi1> to vector<8x1xi1>
    %479 = vector.broadcast %478 : vector<8x1xi1> to vector<8x128xi1>
    %480 = arith.select %479, %472, %395 : vector<8x128xi1>, vector<8x128xf32>
    %481 = tpu.concatenate %477, %431 in 1 : vector<8x128xf32>, vector<8x128xf32> -> vector<8x256xf32>
    %482 = arith.truncf %481 : vector<8x256xf32> to vector<8x256xbf16>
    %c0_136 = arith.constant 0 : index
    %c0_137 = arith.constant 0 : index
    %483 = vector.load %arg5[%c0_136, %c0_137] : memref<256x512xbf16, #tpu.memory_space<vmem>>, vector<256x512xbf16>
    %cst_138 = arith.constant dense<0.000000e+00> : vector<8x512xf32>
    %484 = tpu.matmul %482, %483, %cst_138 {dimension_numbers = #tpu.dot_dimension_numbers<[1], [0], [0], [1], [0, 0, 1, 1], [], []>} : vector<8x256xbf16>, vector<256x512xbf16>, vector<8x512xf32> -> vector<8x512xf32>
    %485 = arith.addf %484, %10 : vector<8x512xf32>
    %486 = vector.extract_strided_slice %485 {offsets = [0, 0], sizes = [8, 128], strides = [1, 1]} : vector<8x512xf32> to vector<8x128xf32>
    %cst_139 = arith.constant 0.000000e+00 : f32
    %487 = vector.broadcast %cst_139 : f32 to vector<8x128xf32>
    %488 = arith.subf %487, %486 : vector<8x128xf32>
    %489 = math.exp %488 : vector<8x128xf32>
    %cst_140 = arith.constant 1.000000e+00 : f32
    %490 = vector.broadcast %cst_140 : f32 to vector<8x128xf32>
    %491 = arith.addf %490, %489 : vector<8x128xf32>
    %492 = tpu.reciprocal %491 {approx = true} : vector<8x128xf32> -> vector<8x128xf32>
    %493 = vector.extract_strided_slice %485 {offsets = [0, 128], sizes = [8, 128], strides = [1, 1]} : vector<8x512xf32> to vector<8x128xf32>
    %cst_141 = arith.constant 0.000000e+00 : f32
    %494 = vector.broadcast %cst_141 : f32 to vector<8x128xf32>
    %495 = arith.subf %494, %493 : vector<8x128xf32>
    %496 = math.exp %495 : vector<8x128xf32>
    %cst_142 = arith.constant 1.000000e+00 : f32
    %497 = vector.broadcast %cst_142 : f32 to vector<8x128xf32>
    %498 = arith.addf %497, %496 : vector<8x128xf32>
    %499 = tpu.reciprocal %498 {approx = true} : vector<8x128xf32> -> vector<8x128xf32>
    %500 = vector.extract_strided_slice %485 {offsets = [0, 256], sizes = [8, 128], strides = [1, 1]} : vector<8x512xf32> to vector<8x128xf32>
    %501 = math.tanh %500 : vector<8x128xf32>
    %502 = vector.extract_strided_slice %485 {offsets = [0, 384], sizes = [8, 128], strides = [1, 1]} : vector<8x512xf32> to vector<8x128xf32>
    %cst_143 = arith.constant 0.000000e+00 : f32
    %503 = vector.broadcast %cst_143 : f32 to vector<8x128xf32>
    %504 = arith.subf %503, %502 : vector<8x128xf32>
    %505 = math.exp %504 : vector<8x128xf32>
    %cst_144 = arith.constant 1.000000e+00 : f32
    %506 = vector.broadcast %cst_144 : f32 to vector<8x128xf32>
    %507 = arith.addf %506, %505 : vector<8x128xf32>
    %508 = tpu.reciprocal %507 {approx = true} : vector<8x128xf32> -> vector<8x128xf32>
    %509 = arith.mulf %499, %434 : vector<8x128xf32>
    %510 = arith.mulf %492, %501 : vector<8x128xf32>
    %511 = arith.addf %509, %510 : vector<8x128xf32>
    %512 = math.tanh %511 : vector<8x128xf32>
    %513 = arith.mulf %508, %512 : vector<8x128xf32>
    %514 = vector.shape_cast %441 : vector<8x1xi1> to vector<8x1xi1>
    %515 = vector.broadcast %514 : vector<8x1xi1> to vector<8x128xi1>
    %516 = arith.select %515, %513, %431 : vector<8x128xi1>, vector<8x128xf32>
    %517 = vector.shape_cast %441 : vector<8x1xi1> to vector<8x1xi1>
    %518 = vector.broadcast %517 : vector<8x1xi1> to vector<8x128xi1>
    %519 = arith.select %518, %511, %434 : vector<8x128xi1>, vector<8x128xf32>
    %cst_145 = arith.constant 0.000000e+00 : f32
    %520 = vector.shape_cast %441 : vector<8x1xi1> to vector<8x1xi1>
    %521 = vector.broadcast %520 : vector<8x1xi1> to vector<8x128xi1>
    %522 = vector.broadcast %cst_145 : f32 to vector<8x128xf32>
    %523 = arith.select %521, %516, %522 : vector<8x128xi1>, vector<8x128xf32>
    %c40_146 = arith.constant 40 : index
    %c0_147 = arith.constant 0 : index
    %524 = vector.load %arg9[%c40_146, %c0_147] : memref<64x128xf32, #tpu.memory_space<vmem>>, vector<8x128xf32>
    tpu.vector_store %arg9[%c40_146, %c0_147], %523 {strides = array<i32>} : memref<64x128xf32, #tpu.memory_space<vmem>>, vector<8x128xf32>,
    %c6_i32 = arith.constant 6 : i32
    %525 = vector.broadcast %c6_i32 : i32 to vector<8x1xi32>
    %526 = arith.cmpi sgt, %0, %525 : vector<8x1xi32>
    %c48 = arith.constant 48 : index
    %c0_148 = arith.constant 0 : index
    %527 = vector.load %arg13[%c48, %c0_148] : memref<64x512xf32, #tpu.memory_space<vmem>>, vector<8x512xf32>
    %528 = arith.truncf %477 : vector<8x128xf32> to vector<8x128xbf16>
    %c0_149 = arith.constant 0 : index
    %c0_150 = arith.constant 0 : index
    %529 = vector.load %arg3[%c0_149, %c0_150] : memref<128x512xbf16, #tpu.memory_space<vmem>>, vector<128x512xbf16>
    %cst_151 = arith.constant dense<0.000000e+00> : vector<8x512xf32>
    %530 = tpu.matmul %528, %529, %cst_151 {dimension_numbers = #tpu.dot_dimension_numbers<[1], [0], [0], [1], [0, 0, 1, 1], [], []>} : vector<8x128xbf16>, vector<128x512xbf16>, vector<8x512xf32> -> vector<8x512xf32>
    %531 = arith.addf %527, %530 : vector<8x512xf32>
    %532 = vector.extract_strided_slice %531 {offsets = [0, 0], sizes = [8, 128], strides = [1, 1]} : vector<8x512xf32> to vector<8x128xf32>
    %cst_152 = arith.constant 0.000000e+00 : f32
    %533 = vector.broadcast %cst_152 : f32 to vector<8x128xf32>
    %534 = arith.subf %533, %532 : vector<8x128xf32>
    %535 = math.exp %534 : vector<8x128xf32>
    %cst_153 = arith.constant 1.000000e+00 : f32
    %536 = vector.broadcast %cst_153 : f32 to vector<8x128xf32>
    %537 = arith.addf %536, %535 : vector<8x128xf32>
    %538 = tpu.reciprocal %537 {approx = true} : vector<8x128xf32> -> vector<8x128xf32>
    %539 = vector.extract_strided_slice %531 {offsets = [0, 128], sizes = [8, 128], strides = [1, 1]} : vector<8x512xf32> to vector<8x128xf32>
    %cst_154 = arith.constant 0.000000e+00 : f32
    %540 = vector.broadcast %cst_154 : f32 to vector<8x128xf32>
    %541 = arith.subf %540, %539 : vector<8x128xf32>
    %542 = math.exp %541 : vector<8x128xf32>
    %cst_155 = arith.constant 1.000000e+00 : f32
    %543 = vector.broadcast %cst_155 : f32 to vector<8x128xf32>
    %544 = arith.addf %543, %542 : vector<8x128xf32>
    %545 = tpu.reciprocal %544 {approx = true} : vector<8x128xf32> -> vector<8x128xf32>
    %546 = vector.extract_strided_slice %531 {offsets = [0, 256], sizes = [8, 128], strides = [1, 1]} : vector<8x512xf32> to vector<8x128xf32>
    %547 = math.tanh %546 : vector<8x128xf32>
    %548 = vector.extract_strided_slice %531 {offsets = [0, 384], sizes = [8, 128], strides = [1, 1]} : vector<8x512xf32> to vector<8x128xf32>
    %cst_156 = arith.constant 0.000000e+00 : f32
    %549 = vector.broadcast %cst_156 : f32 to vector<8x128xf32>
    %550 = arith.subf %549, %548 : vector<8x128xf32>
    %551 = math.exp %550 : vector<8x128xf32>
    %cst_157 = arith.constant 1.000000e+00 : f32
    %552 = vector.broadcast %cst_157 : f32 to vector<8x128xf32>
    %553 = arith.addf %552, %551 : vector<8x128xf32>
    %554 = tpu.reciprocal %553 {approx = true} : vector<8x128xf32> -> vector<8x128xf32>
    %555 = arith.mulf %545, %480 : vector<8x128xf32>
    %556 = arith.mulf %538, %547 : vector<8x128xf32>
    %557 = arith.addf %555, %556 : vector<8x128xf32>
    %558 = math.tanh %557 : vector<8x128xf32>
    %559 = arith.mulf %554, %558 : vector<8x128xf32>
    %560 = vector.shape_cast %526 : vector<8x1xi1> to vector<8x1xi1>
    %561 = vector.broadcast %560 : vector<8x1xi1> to vector<8x128xi1>
    %562 = arith.select %561, %559, %477 : vector<8x128xi1>, vector<8x128xf32>
    %563 = vector.shape_cast %526 : vector<8x1xi1> to vector<8x1xi1>
    %564 = vector.broadcast %563 : vector<8x1xi1> to vector<8x128xi1>
    %565 = arith.select %564, %557, %480 : vector<8x128xi1>, vector<8x128xf32>
    %566 = tpu.concatenate %562, %516 in 1 : vector<8x128xf32>, vector<8x128xf32> -> vector<8x256xf32>
    %567 = arith.truncf %566 : vector<8x256xf32> to vector<8x256xbf16>
    %c0_158 = arith.constant 0 : index
    %c0_159 = arith.constant 0 : index
    %568 = vector.load %arg5[%c0_158, %c0_159] : memref<256x512xbf16, #tpu.memory_space<vmem>>, vector<256x512xbf16>
    %cst_160 = arith.constant dense<0.000000e+00> : vector<8x512xf32>
    %569 = tpu.matmul %567, %568, %cst_160 {dimension_numbers = #tpu.dot_dimension_numbers<[1], [0], [0], [1], [0, 0, 1, 1], [], []>} : vector<8x256xbf16>, vector<256x512xbf16>, vector<8x512xf32> -> vector<8x512xf32>
    %570 = arith.addf %569, %10 : vector<8x512xf32>
    %571 = vector.extract_strided_slice %570 {offsets = [0, 0], sizes = [8, 128], strides = [1, 1]} : vector<8x512xf32> to vector<8x128xf32>
    %cst_161 = arith.constant 0.000000e+00 : f32
    %572 = vector.broadcast %cst_161 : f32 to vector<8x128xf32>
    %573 = arith.subf %572, %571 : vector<8x128xf32>
    %574 = math.exp %573 : vector<8x128xf32>
    %cst_162 = arith.constant 1.000000e+00 : f32
    %575 = vector.broadcast %cst_162 : f32 to vector<8x128xf32>
    %576 = arith.addf %575, %574 : vector<8x128xf32>
    %577 = tpu.reciprocal %576 {approx = true} : vector<8x128xf32> -> vector<8x128xf32>
    %578 = vector.extract_strided_slice %570 {offsets = [0, 128], sizes = [8, 128], strides = [1, 1]} : vector<8x512xf32> to vector<8x128xf32>
    %cst_163 = arith.constant 0.000000e+00 : f32
    %579 = vector.broadcast %cst_163 : f32 to vector<8x128xf32>
    %580 = arith.subf %579, %578 : vector<8x128xf32>
    %581 = math.exp %580 : vector<8x128xf32>
    %cst_164 = arith.constant 1.000000e+00 : f32
    %582 = vector.broadcast %cst_164 : f32 to vector<8x128xf32>
    %583 = arith.addf %582, %581 : vector<8x128xf32>
    %584 = tpu.reciprocal %583 {approx = true} : vector<8x128xf32> -> vector<8x128xf32>
    %585 = vector.extract_strided_slice %570 {offsets = [0, 256], sizes = [8, 128], strides = [1, 1]} : vector<8x512xf32> to vector<8x128xf32>
    %586 = math.tanh %585 : vector<8x128xf32>
    %587 = vector.extract_strided_slice %570 {offsets = [0, 384], sizes = [8, 128], strides = [1, 1]} : vector<8x512xf32> to vector<8x128xf32>
    %cst_165 = arith.constant 0.000000e+00 : f32
    %588 = vector.broadcast %cst_165 : f32 to vector<8x128xf32>
    %589 = arith.subf %588, %587 : vector<8x128xf32>
    %590 = math.exp %589 : vector<8x128xf32>
    %cst_166 = arith.constant 1.000000e+00 : f32
    %591 = vector.broadcast %cst_166 : f32 to vector<8x128xf32>
    %592 = arith.addf %591, %590 : vector<8x128xf32>
    %593 = tpu.reciprocal %592 {approx = true} : vector<8x128xf32> -> vector<8x128xf32>
    %594 = arith.mulf %584, %519 : vector<8x128xf32>
    %595 = arith.mulf %577, %586 : vector<8x128xf32>
    %596 = arith.addf %594, %595 : vector<8x128xf32>
    %597 = math.tanh %596 : vector<8x128xf32>
    %598 = arith.mulf %593, %597 : vector<8x128xf32>
    %599 = vector.shape_cast %526 : vector<8x1xi1> to vector<8x1xi1>
    %600 = vector.broadcast %599 : vector<8x1xi1> to vector<8x128xi1>
    %601 = arith.select %600, %598, %516 : vector<8x128xi1>, vector<8x128xf32>
    %602 = vector.shape_cast %526 : vector<8x1xi1> to vector<8x1xi1>
    %603 = vector.broadcast %602 : vector<8x1xi1> to vector<8x128xi1>
    %604 = arith.select %603, %596, %519 : vector<8x128xi1>, vector<8x128xf32>
    %cst_167 = arith.constant 0.000000e+00 : f32
    %605 = vector.shape_cast %526 : vector<8x1xi1> to vector<8x1xi1>
    %606 = vector.broadcast %605 : vector<8x1xi1> to vector<8x128xi1>
    %607 = vector.broadcast %cst_167 : f32 to vector<8x128xf32>
    %608 = arith.select %606, %601, %607 : vector<8x128xi1>, vector<8x128xf32>
    %c48_168 = arith.constant 48 : index
    %c0_169 = arith.constant 0 : index
    %609 = vector.load %arg9[%c48_168, %c0_169] : memref<64x128xf32, #tpu.memory_space<vmem>>, vector<8x128xf32>
    tpu.vector_store %arg9[%c48_168, %c0_169], %608 {strides = array<i32>} : memref<64x128xf32, #tpu.memory_space<vmem>>, vector<8x128xf32>,
    %c7_i32 = arith.constant 7 : i32
    %610 = vector.broadcast %c7_i32 : i32 to vector<8x1xi32>
    %611 = arith.cmpi sgt, %0, %610 : vector<8x1xi32>
    %c56 = arith.constant 56 : index
    %c0_170 = arith.constant 0 : index
    %612 = vector.load %arg13[%c56, %c0_170] : memref<64x512xf32, #tpu.memory_space<vmem>>, vector<8x512xf32>
    %613 = arith.truncf %562 : vector<8x128xf32> to vector<8x128xbf16>
    %c0_171 = arith.constant 0 : index
    %c0_172 = arith.constant 0 : index
    %614 = vector.load %arg3[%c0_171, %c0_172] : memref<128x512xbf16, #tpu.memory_space<vmem>>, vector<128x512xbf16>
    %cst_173 = arith.constant dense<0.000000e+00> : vector<8x512xf32>
    %615 = tpu.matmul %613, %614, %cst_173 {dimension_numbers = #tpu.dot_dimension_numbers<[1], [0], [0], [1], [0, 0, 1, 1], [], []>} : vector<8x128xbf16>, vector<128x512xbf16>, vector<8x512xf32> -> vector<8x512xf32>
    %616 = arith.addf %612, %615 : vector<8x512xf32>
    %617 = vector.extract_strided_slice %616 {offsets = [0, 0], sizes = [8, 128], strides = [1, 1]} : vector<8x512xf32> to vector<8x128xf32>
    %cst_174 = arith.constant 0.000000e+00 : f32
    %618 = vector.broadcast %cst_174 : f32 to vector<8x128xf32>
    %619 = arith.subf %618, %617 : vector<8x128xf32>
    %620 = math.exp %619 : vector<8x128xf32>
    %cst_175 = arith.constant 1.000000e+00 : f32
    %621 = vector.broadcast %cst_175 : f32 to vector<8x128xf32>
    %622 = arith.addf %621, %620 : vector<8x128xf32>
    %623 = tpu.reciprocal %622 {approx = true} : vector<8x128xf32> -> vector<8x128xf32>
    %624 = vector.extract_strided_slice %616 {offsets = [0, 128], sizes = [8, 128], strides = [1, 1]} : vector<8x512xf32> to vector<8x128xf32>
    %cst_176 = arith.constant 0.000000e+00 : f32
    %625 = vector.broadcast %cst_176 : f32 to vector<8x128xf32>
    %626 = arith.subf %625, %624 : vector<8x128xf32>
    %627 = math.exp %626 : vector<8x128xf32>
    %cst_177 = arith.constant 1.000000e+00 : f32
    %628 = vector.broadcast %cst_177 : f32 to vector<8x128xf32>
    %629 = arith.addf %628, %627 : vector<8x128xf32>
    %630 = tpu.reciprocal %629 {approx = true} : vector<8x128xf32> -> vector<8x128xf32>
    %631 = vector.extract_strided_slice %616 {offsets = [0, 256], sizes = [8, 128], strides = [1, 1]} : vector<8x512xf32> to vector<8x128xf32>
    %632 = math.tanh %631 : vector<8x128xf32>
    %633 = vector.extract_strided_slice %616 {offsets = [0, 384], sizes = [8, 128], strides = [1, 1]} : vector<8x512xf32> to vector<8x128xf32>
    %cst_178 = arith.constant 0.000000e+00 : f32
    %634 = vector.broadcast %cst_178 : f32 to vector<8x128xf32>
    %635 = arith.subf %634, %633 : vector<8x128xf32>
    %636 = math.exp %635 : vector<8x128xf32>
    %cst_179 = arith.constant 1.000000e+00 : f32
    %637 = vector.broadcast %cst_179 : f32 to vector<8x128xf32>
    %638 = arith.addf %637, %636 : vector<8x128xf32>
    %639 = tpu.reciprocal %638 {approx = true} : vector<8x128xf32> -> vector<8x128xf32>
    %640 = arith.mulf %630, %565 : vector<8x128xf32>
    %641 = arith.mulf %623, %632 : vector<8x128xf32>
    %642 = arith.addf %640, %641 : vector<8x128xf32>
    %643 = math.tanh %642 : vector<8x128xf32>
    %644 = arith.mulf %639, %643 : vector<8x128xf32>
    %645 = vector.shape_cast %611 : vector<8x1xi1> to vector<8x1xi1>
    %646 = vector.broadcast %645 : vector<8x1xi1> to vector<8x128xi1>
    %647 = arith.select %646, %644, %562 : vector<8x128xi1>, vector<8x128xf32>
    %648 = vector.shape_cast %611 : vector<8x1xi1> to vector<8x1xi1>
    %649 = vector.broadcast %648 : vector<8x1xi1> to vector<8x128xi1>
    %650 = arith.select %649, %642, %565 : vector<8x128xi1>, vector<8x128xf32>
    %651 = tpu.concatenate %647, %601 in 1 : vector<8x128xf32>, vector<8x128xf32> -> vector<8x256xf32>
    %652 = arith.truncf %651 : vector<8x256xf32> to vector<8x256xbf16>
    %c0_180 = arith.constant 0 : index
    %c0_181 = arith.constant 0 : index
    %653 = vector.load %arg5[%c0_180, %c0_181] : memref<256x512xbf16, #tpu.memory_space<vmem>>, vector<256x512xbf16>
    %cst_182 = arith.constant dense<0.000000e+00> : vector<8x512xf32>
    %654 = tpu.matmul %652, %653, %cst_182 {dimension_numbers = #tpu.dot_dimension_numbers<[1], [0], [0], [1], [0, 0, 1, 1], [], []>} : vector<8x256xbf16>, vector<256x512xbf16>, vector<8x512xf32> -> vector<8x512xf32>
    %655 = arith.addf %654, %10 : vector<8x512xf32>
    %656 = vector.extract_strided_slice %655 {offsets = [0, 0], sizes = [8, 128], strides = [1, 1]} : vector<8x512xf32> to vector<8x128xf32>
    %cst_183 = arith.constant 0.000000e+00 : f32
    %657 = vector.broadcast %cst_183 : f32 to vector<8x128xf32>
    %658 = arith.subf %657, %656 : vector<8x128xf32>
    %659 = math.exp %658 : vector<8x128xf32>
    %cst_184 = arith.constant 1.000000e+00 : f32
    %660 = vector.broadcast %cst_184 : f32 to vector<8x128xf32>
    %661 = arith.addf %660, %659 : vector<8x128xf32>
    %662 = tpu.reciprocal %661 {approx = true} : vector<8x128xf32> -> vector<8x128xf32>
    %663 = vector.extract_strided_slice %655 {offsets = [0, 128], sizes = [8, 128], strides = [1, 1]} : vector<8x512xf32> to vector<8x128xf32>
    %cst_185 = arith.constant 0.000000e+00 : f32
    %664 = vector.broadcast %cst_185 : f32 to vector<8x128xf32>
    %665 = arith.subf %664, %663 : vector<8x128xf32>
    %666 = math.exp %665 : vector<8x128xf32>
    %cst_186 = arith.constant 1.000000e+00 : f32
    %667 = vector.broadcast %cst_186 : f32 to vector<8x128xf32>
    %668 = arith.addf %667, %666 : vector<8x128xf32>
    %669 = tpu.reciprocal %668 {approx = true} : vector<8x128xf32> -> vector<8x128xf32>
    %670 = vector.extract_strided_slice %655 {offsets = [0, 256], sizes = [8, 128], strides = [1, 1]} : vector<8x512xf32> to vector<8x128xf32>
    %671 = math.tanh %670 : vector<8x128xf32>
    %672 = vector.extract_strided_slice %655 {offsets = [0, 384], sizes = [8, 128], strides = [1, 1]} : vector<8x512xf32> to vector<8x128xf32>
    %cst_187 = arith.constant 0.000000e+00 : f32
    %673 = vector.broadcast %cst_187 : f32 to vector<8x128xf32>
    %674 = arith.subf %673, %672 : vector<8x128xf32>
    %675 = math.exp %674 : vector<8x128xf32>
    %cst_188 = arith.constant 1.000000e+00 : f32
    %676 = vector.broadcast %cst_188 : f32 to vector<8x128xf32>
    %677 = arith.addf %676, %675 : vector<8x128xf32>
    %678 = tpu.reciprocal %677 {approx = true} : vector<8x128xf32> -> vector<8x128xf32>
    %679 = arith.mulf %669, %604 : vector<8x128xf32>
    %680 = arith.mulf %662, %671 : vector<8x128xf32>
    %681 = arith.addf %679, %680 : vector<8x128xf32>
    %682 = math.tanh %681 : vector<8x128xf32>
    %683 = arith.mulf %678, %682 : vector<8x128xf32>
    %684 = vector.shape_cast %611 : vector<8x1xi1> to vector<8x1xi1>
    %685 = vector.broadcast %684 : vector<8x1xi1> to vector<8x128xi1>
    %686 = arith.select %685, %683, %601 : vector<8x128xi1>, vector<8x128xf32>
    %687 = vector.shape_cast %611 : vector<8x1xi1> to vector<8x1xi1>
    %688 = vector.broadcast %687 : vector<8x1xi1> to vector<8x128xi1>
    %689 = arith.select %688, %681, %604 : vector<8x128xi1>, vector<8x128xf32>
    %cst_189 = arith.constant 0.000000e+00 : f32
    %690 = vector.shape_cast %611 : vector<8x1xi1> to vector<8x1xi1>
    %691 = vector.broadcast %690 : vector<8x1xi1> to vector<8x128xi1>
    %692 = vector.broadcast %cst_189 : f32 to vector<8x128xf32>
    %693 = arith.select %691, %686, %692 : vector<8x128xi1>, vector<8x128xf32>
    %c56_190 = arith.constant 56 : index
    %c0_191 = arith.constant 0 : index
    %694 = vector.load %arg9[%c56_190, %c0_191] : memref<64x128xf32, #tpu.memory_space<vmem>>, vector<8x128xf32>
    tpu.vector_store %arg9[%c56_190, %c0_191], %693 {strides = array<i32>} : memref<64x128xf32, #tpu.memory_space<vmem>>, vector<8x128xf32>,
    %c0_192 = arith.constant 0 : index
    %c0_193 = arith.constant 0 : index
    %c0_194 = arith.constant 0 : index
    %695 = vector.load %arg11[%c0_192, %c0_193, %c0_194] : memref<2x8x128xf32, #tpu.memory_space<vmem>>, vector<1x8x128xf32>
    %696 = vector.shape_cast %695 : vector<1x8x128xf32> to vector<8x128xf32>
    %697 = vector.shape_cast %647 : vector<8x128xf32> to vector<1x8x128xf32>
    tpu.vector_store %arg11[%c0_192, %c0_193, %c0_194], %697 {strides = array<i32>} : memref<2x8x128xf32, #tpu.memory_space<vmem>>, vector<1x8x128xf32>,
    %c0_195 = arith.constant 0 : index
    %c0_196 = arith.constant 0 : index
    %c0_197 = arith.constant 0 : index
    %698 = vector.load %arg12[%c0_195, %c0_196, %c0_197] : memref<2x8x128xf32, #tpu.memory_space<vmem>>, vector<1x8x128xf32>
    %699 = vector.shape_cast %698 : vector<1x8x128xf32> to vector<8x128xf32>
    %700 = vector.shape_cast %650 : vector<8x128xf32> to vector<1x8x128xf32>
    tpu.vector_store %arg12[%c0_195, %c0_196, %c0_197], %700 {strides = array<i32>} : memref<2x8x128xf32, #tpu.memory_space<vmem>>, vector<1x8x128xf32>,
    %c1 = arith.constant 1 : index
    %c0_198 = arith.constant 0 : index
    %c0_199 = arith.constant 0 : index
    %701 = vector.load %arg11[%c1, %c0_198, %c0_199] : memref<2x8x128xf32, #tpu.memory_space<vmem>>, vector<1x8x128xf32>
    %702 = vector.shape_cast %701 : vector<1x8x128xf32> to vector<8x128xf32>
    %703 = vector.shape_cast %686 : vector<8x128xf32> to vector<1x8x128xf32>
    tpu.vector_store %arg11[%c1, %c0_198, %c0_199], %703 {strides = array<i32>} : memref<2x8x128xf32, #tpu.memory_space<vmem>>, vector<1x8x128xf32>,
    %c1_200 = arith.constant 1 : index
    %c0_201 = arith.constant 0 : index
    %c0_202 = arith.constant 0 : index
    %704 = vector.load %arg12[%c1_200, %c0_201, %c0_202] : memref<2x8x128xf32, #tpu.memory_space<vmem>>, vector<1x8x128xf32>
    %705 = vector.shape_cast %704 : vector<1x8x128xf32> to vector<8x128xf32>
    %706 = vector.shape_cast %689 : vector<8x128xf32> to vector<1x8x128xf32>
    tpu.vector_store %arg12[%c1_200, %c0_201, %c0_202], %706 {strides = array<i32>} : memref<2x8x128xf32, #tpu.memory_space<vmem>>, vector<1x8x128xf32>,
    %c0_203 = arith.constant 0 : index
    %c0_204 = arith.constant 0 : index
    %707 = vector.load %arg9[%c0_203, %c0_204] : memref<64x128xf32, #tpu.memory_space<vmem>>, vector<64x128xf32>
    %708 = arith.truncf %707 : vector<64x128xf32> to vector<64x128xbf16>
    %c0_205 = arith.constant 0 : index
    %c0_206 = arith.constant 0 : index
    %709 = vector.load %arg7[%c0_205, %c0_206] : memref<128x128xbf16, #tpu.memory_space<vmem>>, vector<128x128xbf16>
    %cst_207 = arith.constant dense<0.000000e+00> : vector<64x128xf32>
    %710 = tpu.matmul %708, %709, %cst_207 {dimension_numbers = #tpu.dot_dimension_numbers<[1], [0], [0], [1], [0, 0, 1, 1], [], []>} : vector<64x128xbf16>, vector<128x128xbf16>, vector<64x128xf32> -> vector<64x128xf32>
    %c0_208 = arith.constant 0 : index
    %c0_209 = arith.constant 0 : index
    %711 = vector.load %arg8[%c0_208, %c0_209] : memref<1x128xf32, #tpu.memory_space<vmem>>, vector<1x128xf32>
    %712 = vector.broadcast %711 : vector<1x128xf32> to vector<64x128xf32>
    %713 = arith.addf %710, %712 : vector<64x128xf32>
    %c0_210 = arith.constant 0 : index
    %c0_211 = arith.constant 0 : index
    %714 = vector.load %arg10[%c0_210, %c0_211] : memref<64x128xf32, #tpu.memory_space<vmem>>, vector<64x128xf32>
    tpu.vector_store %arg10[%c0_210, %c0_211], %713 {strides = array<i32>} : memref<64x128xf32, #tpu.memory_space<vmem>>, vector<64x128xf32>,
    return
  }
}

</mosaic_0001>

<llo_original>
// kernel: tpu_custom_call.1
$region0: #{tpu_custom_call.1}
  #allocation0 [shape = 'u32[]', space=smem, size = 0x4, offset = 0x4, fixed_abs, tag = 'smem constant byte address 0x4 - core index']
  #allocation1 [shape = 'u32[144,128]{1,0:T(1,128)}', space=vmem, size = 0x12000, scoped, tag = 'internal scratch']
  #allocation2 [shape = 'f32[64,512]{1,0:T(8,128)}', space=vmem, size = 0x20000, scoped, tag = 'scratch operand']
  %s0 = inlined_call_operand.hbm [shape: bf16[64,384], index: 0, kind: input, shape index: {}]
  %s1 = inlined_call_operand.vmem [shape: s32[8,1], index: 1, kind: input, shape index: {}]
  %s2 = inlined_call_operand.hbm [shape: bf16[384,512], index: 2, kind: input, shape index: {}]
  %s3 = inlined_call_operand.hbm [shape: bf16[128,512], index: 3, kind: input, shape index: {}]
  %s4 = inlined_call_operand.vmem [shape: f32[1,512], index: 4, kind: input, shape index: {}]
  %s5 = inlined_call_operand.hbm [shape: bf16[256,512], index: 5, kind: input, shape index: {}]
  %s6 = inlined_call_operand.vmem [shape: f32[1,512], index: 6, kind: input, shape index: {}]
  %s7 = inlined_call_operand.hbm [shape: bf16[128,128], index: 7, kind: input, shape index: {}]
  %s8 = inlined_call_operand.vmem [shape: f32[1,128], index: 8, kind: input, shape index: {}]
  %s9 = inlined_call_operand.hbm [shape: f32[64,128], index: 9, kind: output, shape index: {0}]
  %s10 = inlined_call_operand.hbm [shape: f32[64,128], index: 10, kind: output, shape index: {1}]
  %s11 = inlined_call_operand.hbm [shape: f32[2,8,128], index: 11, kind: output, shape index: {2}]
  %s12 = inlined_call_operand.hbm [shape: f32[2,8,128], index: 12, kind: output, shape index: {3}]
  %13 = xla_tuple %s9, %s10, %s11, %s12
  %s14 = sld [smem:[#allocation0]]
  $region90: #{tpu_custom_call.1} parent=0
    _
  %s16 = ssub.s32 1, %s14
  %s17 = scalar_select 0, %s16, %s14
  $region1: #{tpu_custom_call.1} parent=0
    #allocation3 [shape = 'u8[49152]{0}', space=vmem, size = 0xc000, scoped, tag = 'input window, operand 0, single buffered']
    #allocation4 [shape = 's32[1]{0}', space=sflag, size = 0x4, scoped, tag = 'scoped memory for tpu_custom_call.1']
    #allocation5 [shape = 's32[1]{0}', space=sflag, size = 0x4, scoped, tag = 'scoped memory for tpu_custom_call.1']
    #allocation6 [shape = 'u8[393216]{0}', space=vmem, size = 0x60000, scoped, tag = 'input window, operand 2, single buffered']
    #allocation7 [shape = 's32[1]{0}', space=sflag, size = 0x4, scoped, tag = 'scoped memory for tpu_custom_call.1']
    #allocation8 [shape = 'u8[131072]{0}', space=vmem, size = 0x20000, scoped, tag = 'input window, operand 3, single buffered']
    #allocation9 [shape = 'u8[262144]{0}', space=vmem, size = 0x40000, scoped, tag = 'input window, operand 5, single buffered']
    #allocation10 [shape = 's32[1]{0}', space=sflag, size = 0x4, scoped, tag = 'scoped memory for tpu_custom_call.1']
    #allocation11 [shape = 'u8[32768]{0}', space=vmem, size = 0x8000, scoped, tag = 'input window, operand 7, single buffered']
    #allocation12 [shape = 'u8[32768]{0}', space=vmem, size = 0x8000, scoped, tag = 'output window, operand 0, single buffered']
    #allocation13 [shape = 'u8[32768]{0}', space=vmem, size = 0x8000, scoped, tag = 'output window, operand 1, single buffered']
    #allocation14 [shape = 's32[1]{0}', space=sflag, size = 0x4, scoped, tag = 'scoped memory for tpu_custom_call.1']
    #allocation15 [shape = 'u8[8192]{0}', space=vmem, size = 0x2000, scoped, tag = 'output window, operand 2, single buffered']
    #allocation16 [shape = 'u8[8192]{0}', space=vmem, size = 0x2000, scoped, tag = 'output window, operand 3, single buffered']
    #allocation17 [shape = 's32[1]{0}', space=sflag, size = 0x4, scoped, tag = 'scoped memory for tpu_custom_call.1']
    %18 = vsyncpa [#allocation4], 0
    %19 = vsyncpa [#allocation7], 0
    %20 = vsyncpa [#allocation10], 0
    %21 = vsyncpa [#allocation5], 0
    %22 = vsyncpa [#allocation14], 0
    %23 = vsyncpa [#allocation17], 0
    // Predicated region
    $region2: #{tpu_custom_call.1} parent=1 // pred_check
      _
    $region3: #{tpu_custom_call.1} parent=1 // pred_check_branch
      %25 = sbr.rel (0) target = $region5
    $region4: #{tpu_custom_call.1} parent=1 // pred_region
      %s27 = ssub.s32 1536, 1536
      %28 = vsyncadd [#allocation4], %s27
      %s29 = sshll.u32 [#allocation3], 4
      %s30 = int_to_ptr.vmem [resolvable:$true] %s29
      %35 = dma.hbm_to_vmem [thread:$0]  %s0, 1536, %s30, [#allocation4], 192, 192, 12
    $region5: #{tpu_custom_call.1} parent=1 // pred_fallthru
      _
    // Predicated region
    $region6: #{tpu_custom_call.1} parent=1 // pred_check
      _
    $region7: #{tpu_custom_call.1} parent=1 // pred_check_branch
      %37 = sbr.rel (0) target = $region9
    $region8: #{tpu_custom_call.1} parent=1 // pred_region
      _
    $region9: #{tpu_custom_call.1} parent=1 // pred_fallthru
      _
    // Predicated region
    $region10: #{tpu_custom_call.1} parent=1 // pred_check
      _
    $region11: #{tpu_custom_call.1} parent=1 // pred_check_branch
      %39 = sbr.rel (0) target = $region13
    $region12: #{tpu_custom_call.1} parent=1 // pred_region
      %s41 = ssub.s32 12288, 12288
      %42 = vsyncadd [#allocation7], %s41
      %s43 = sshll.u32 [#allocation6], 4
      %s44 = int_to_ptr.vmem [resolvable:$true] %s43
      %49 = dma.hbm_to_vmem [thread:$0]  %s2, 12288, %s44, [#allocation7], 256, 256, 16
    $region13: #{tpu_custom_call.1} parent=1 // pred_fallthru
      _
    // Predicated region
    $region14: #{tpu_custom_call.1} parent=1 // pred_check
      _
    $region15: #{tpu_custom_call.1} parent=1 // pred_check_branch
      %51 = sbr.rel (0) target = $region17
    $region16: #{tpu_custom_call.1} parent=1 // pred_region
      %s53 = ssub.s32 4096, 4096
      %54 = vsyncadd [#allocation7], %s53
      %s55 = sshll.u32 [#allocation8], 4
      %s56 = int_to_ptr.vmem [resolvable:$true] %s55
      %61 = dma.hbm_to_vmem [thread:$0]  %s3, 4096, %s56, [#allocation7], 256, 256, 16
    $region17: #{tpu_custom_call.1} parent=1 // pred_fallthru
      _
    // Predicated region
    $region18: #{tpu_custom_call.1} parent=1 // pred_check
      _
    $region19: #{tpu_custom_call.1} parent=1 // pred_check_branch
      %63 = sbr.rel (0) target = $region21
    $region20: #{tpu_custom_call.1} parent=1 // pred_region
      _
    $region21: #{tpu_custom_call.1} parent=1 // pred_fallthru
      _
    // Predicated region
    $region22: #{tpu_custom_call.1} parent=1 // pred_check
      _
    $region23: #{tpu_custom_call.1} parent=1 // pred_check_branch
      %65 = sbr.rel (0) target = $region25
    $region24: #{tpu_custom_call.1} parent=1 // pred_region
      %s67 = ssub.s32 8192, 8192
      %68 = vsyncadd [#allocation10], %s67
      %s69 = sshll.u32 [#allocation9], 4
      %s70 = int_to_ptr.vmem [resolvable:$true] %s69
      %75 = dma.hbm_to_vmem [thread:$0]  %s5, 8192, %s70, [#allocation10], 256, 256, 16
    $region25: #{tpu_custom_call.1} parent=1 // pred_fallthru
      _
    // Predicated region
    $region26: #{tpu_custom_call.1} parent=1 // pred_check
      _
    $region27: #{tpu_custom_call.1} parent=1 // pred_check_branch
      %77 = sbr.rel (0) target = $region29
    $region28: #{tpu_custom_call.1} parent=1 // pred_region
      _
    $region29: #{tpu_custom_call.1} parent=1 // pred_fallthru
      _
    // Predicated region
    $region30: #{tpu_custom_call.1} parent=1 // pred_check
      _
    $region31: #{tpu_custom_call.1} parent=1 // pred_check_branch
      %79 = sbr.rel (0) target = $region33
    $region32: #{tpu_custom_call.1} parent=1 // pred_region
      %s81 = ssub.s32 1024, 1024
      %82 = vsyncadd [#allocation10], %s81
      %s83 = sshll.u32 [#allocation11], 4
      %s84 = int_to_ptr.vmem [resolvable:$true] %s83
      %89 = dma.hbm_to_vmem [thread:$0]  %s7, 1024, %s84, [#allocation10], 64, 64, 4
    $region33: #{tpu_custom_call.1} parent=1 // pred_fallthru
      _
    // Predicated region
    $region34: #{tpu_custom_call.1} parent=1 // pred_check
      _
    $region35: #{tpu_custom_call.1} parent=1 // pred_check_branch
      %91 = sbr.rel (0) target = $region37
    $region36: #{tpu_custom_call.1} parent=1 // pred_region
      _
    $region37: #{tpu_custom_call.1} parent=1 // pred_fallthru
      _
    // Predicated region
    $region38: #{tpu_custom_call.1} parent=1 // pred_check
      _
    $region39: #{tpu_custom_call.1} parent=1 // pred_check_branch
      %93 = sbr.rel (0) target = $region41
    $region40: #{tpu_custom_call.1} parent=1 // pred_region
      %94 = dma.done [#allocation4], 1536
    $region41: #{tpu_custom_call.1} parent=1 // pred_fallthru
      _
    // Predicated region
    $region42: #{tpu_custom_call.1} parent=1 // pred_check
      _
    $region43: #{tpu_custom_call.1} parent=1 // pred_check_branch
      %96 = sbr.rel (0) target = $region45
    $region44: #{tpu_custom_call.1} parent=1 // pred_region
      %97 = dma.done [#allocation7], 12288
    $region45: #{tpu_custom_call.1} parent=1 // pred_fallthru
      _
    // Predicated region
    $region46: #{tpu_custom_call.1} parent=1 // pred_check
      _
    $region47: #{tpu_custom_call.1} parent=1 // pred_check_branch
      %99 = sbr.rel (0) target = $region49
    $region48: #{tpu_custom_call.1} parent=1 // pred_region
      %100 = dma.done [#allocation7], 4096
    $region49: #{tpu_custom_call.1} parent=1 // pred_fallthru
      _
    // Predicated region
    $region50: #{tpu_custom_call.1} parent=1 // pred_check
      _
    $region51: #{tpu_custom_call.1} parent=1 // pred_check_branch
      %102 = sbr.rel (0) target = $region53
    $region52: #{tpu_custom_call.1} parent=1 // pred_region
      %103 = dma.done [#allocation10], 8192
    $region53: #{tpu_custom_call.1} parent=1 // pred_fallthru
      _
    // Predicated region
    $region54: #{tpu_custom_call.1} parent=1 // pred_check
      _
    $region55: #{tpu_custom_call.1} parent=1 // pred_check_branch
      %105 = sbr.rel (0) target = $region57
    $region56: #{tpu_custom_call.1} parent=1 // pred_region
      %106 = dma.done [#allocation10], 1024
    $region57: #{tpu_custom_call.1} parent=1 // pred_fallthru
      _
    %v108 = vld [vmem:[%s1] sm:$0xff]
    %v109 = vld [vmem:[#allocation3] sm:$0xff]
    %v110 = vld [vmem:[#allocation3 + $0x8] sm:$0xf]
    %v111 = vld [vmem:[#allocation3 + $0xc] sm:$0xff]
    %v112 = vld [vmem:[#allocation3 + $0x14] sm:$0xf]
    %v113 = vld [vmem:[#allocation3 + $0x18] sm:$0xff]
    %v114 = vld [vmem:[#allocation3 + $0x20] sm:$0xf]
    %v115 = vld [vmem:[#allocation3 + $0x24] sm:$0xff]
    %v116 = vld [vmem:[#allocation3 + $0x2c] sm:$0xf]
    %v117 = vld [vmem:[#allocation3 + $0x30] sm:$0xff]
    %v118 = vld [vmem:[#allocation3 + $0x38] sm:$0xf]
    %v119 = vld [vmem:[#allocation3 + $0x3c] sm:$0xff]
    %v120 = vld [vmem:[#allocation3 + $0x44] sm:$0xf]
    %v121 = vld [vmem:[#allocation3 + $0x48] sm:$0xff]
    %v122 = vld [vmem:[#allocation3 + $0x50] sm:$0xf]
    %v123 = vld [vmem:[#allocation3 + $0x54] sm:$0xff]
    %v124 = vld [vmem:[#allocation3 + $0x5c] sm:$0xf]
    %v125 = vld [vmem:[#allocation6] sm:$0xff]
    %v126 = vld [vmem:[#allocation6 + $0x8] sm:$0xff]
    %v127 = vld [vmem:[#allocation6 + $0x10] sm:$0xff]
    %v128 = vld [vmem:[#allocation6 + $0x18] sm:$0xff]
    %v129 = vld [vmem:[#allocation6 + $0x20] sm:$0xff]
    %v130 = vld [vmem:[#allocation6 + $0x28] sm:$0xff]
    %v131 = vld [vmem:[#allocation6 + $0x30] sm:$0xff]
    %v132 = vld [vmem:[#allocation6 + $0x38] sm:$0xff]
    %v133 = vld [vmem:[#allocation6 + $0x40] sm:$0xff]
    %v134 = vld [vmem:[#allocation6 + $0x48] sm:$0xff]
    %v135 = vld [vmem:[#allocation6 + $0x50] sm:$0xff]
    %v136 = vld [vmem:[#allocation6 + $0x58] sm:$0xff]
    %v137 = vld [vmem:[#allocation6 + $0x60] sm:$0xff]
    %v138 = vld [vmem:[#allocation6 + $0x68] sm:$0xff]
    %v139 = vld [vmem:[#allocation6 + $0x70] sm:$0xff]
    %v140 = vld [vmem:[#allocation6 + $0x78] sm:$0xff]
    %v141 = vld [vmem:[#allocation6 + $0x80] sm:$0xff]
    %v142 = vld [vmem:[#allocation6 + $0x88] sm:$0xff]
    %v143 = vld [vmem:[#allocation6 + $0x90] sm:$0xff]
    %v144 = vld [vmem:[#allocation6 + $0x98] sm:$0xff]
    %v145 = vld [vmem:[#allocation6 + $0xa0] sm:$0xff]
    %v146 = vld [vmem:[#allocation6 + $0xa8] sm:$0xff]
    %v147 = vld [vmem:[#allocation6 + $0xb0] sm:$0xff]
    %v148 = vld [vmem:[#allocation6 + $0xb8] sm:$0xff]
    %v149 = vld [vmem:[#allocation6 + $0xc0] sm:$0xff]
    %v150 = vld [vmem:[#allocation6 + $0xc8] sm:$0xff]
    %v151 = vld [vmem:[#allocation6 + $0xd0] sm:$0xff]
    %v152 = vld [vmem:[#allocation6 + $0xd8] sm:$0xff]
    %v153 = vld [vmem:[#allocation6 + $0xe0] sm:$0xff]
    %v154 = vld [vmem:[#allocation6 + $0xe8] sm:$0xff]
    %v155 = vld [vmem:[#allocation6 + $0xf0] sm:$0xff]
    %v156 = vld [vmem:[#allocation6 + $0xf8] sm:$0xff]
    %v157 = vld [vmem:[#allocation6 + $0x100] sm:$0xff]
    %v158 = vld [vmem:[#allocation6 + $0x108] sm:$0xff]
    %v159 = vld [vmem:[#allocation6 + $0x110] sm:$0xff]
    %v160 = vld [vmem:[#allocation6 + $0x118] sm:$0xff]
    %v161 = vld [vmem:[#allocation6 + $0x120] sm:$0xff]
    %v162 = vld [vmem:[#allocation6 + $0x128] sm:$0xff]
    %v163 = vld [vmem:[#allocation6 + $0x130] sm:$0xff]
    %v164 = vld [vmem:[#allocation6 + $0x138] sm:$0xff]
    %v165 = vld [vmem:[#allocation6 + $0x140] sm:$0xff]
    %v166 = vld [vmem:[#allocation6 + $0x148] sm:$0xff]
    %v167 = vld [vmem:[#allocation6 + $0x150] sm:$0xff]
    %v168 = vld [vmem:[#allocation6 + $0x158] sm:$0xff]
    %v169 = vld [vmem:[#allocation6 + $0x160] sm:$0xff]
    %v170 = vld [vmem:[#allocation6 + $0x168] sm:$0xff]
    %v171 = vld [vmem:[#allocation6 + $0x170] sm:$0xff]
    %v172 = vld [vmem:[#allocation6 + $0x178] sm:$0xff]
    %v173 = vld [vmem:[#allocation6 + $0x180] sm:$0xff]
    %v174 = vld [vmem:[#allocation6 + $0x188] sm:$0xff]
    %v175 = vld [vmem:[#allocation6 + $0x190] sm:$0xff]
    %v176 = vld [vmem:[#allocation6 + $0x198] sm:$0xff]
    %v177 = vld [vmem:[#allocation6 + $0x1a0] sm:$0xff]
    %v178 = vld [vmem:[#allocation6 + $0x1a8] sm:$0xff]
    %v179 = vld [vmem:[#allocation6 + $0x1b0] sm:$0xff]
    %v180 = vld [vmem:[#allocation6 + $0x1b8] sm:$0xff]
    %v181 = vld [vmem:[#allocation6 + $0x1c0] sm:$0xff]
    %v182 = vld [vmem:[#allocation6 + $0x1c8] sm:$0xff]
    %v183 = vld [vmem:[#allocation6 + $0x1d0] sm:$0xff]
    %v184 = vld [vmem:[#allocation6 + $0x1d8] sm:$0xff]
    %v185 = vld [vmem:[#allocation6 + $0x1e0] sm:$0xff]
    %v186 = vld [vmem:[#allocation6 + $0x1e8] sm:$0xff]
    %v187 = vld [vmem:[#allocation6 + $0x1f0] sm:$0xff]
    %v188 = vld [vmem:[#allocation6 + $0x1f8] sm:$0xff]
    %v189 = vld [vmem:[#allocation6 + $0x200] sm:$0xff]
    %v190 = vld [vmem:[#allocation6 + $0x208] sm:$0xff]
    %v191 = vld [vmem:[#allocation6 + $0x210] sm:$0xff]
    %v192 = vld [vmem:[#allocation6 + $0x218] sm:$0xff]
    %v193 = vld [vmem:[#allocation6 + $0x220] sm:$0xff]
    %v194 = vld [vmem:[#allocation6 + $0x228] sm:$0xff]
    %v195 = vld [vmem:[#allocation6 + $0x230] sm:$0xff]
    %v196 = vld [vmem:[#allocation6 + $0x238] sm:$0xff]
    %v197 = vld [vmem:[#allocation6 + $0x240] sm:$0xff]
    %v198 = vld [vmem:[#allocation6 + $0x248] sm:$0xff]
    %v199 = vld [vmem:[#allocation6 + $0x250] sm:$0xff]
    %v200 = vld [vmem:[#allocation6 + $0x258] sm:$0xff]
    %v201 = vld [vmem:[#allocation6 + $0x260] sm:$0xff]
    %v202 = vld [vmem:[#allocation6 + $0x268] sm:$0xff]
    %v203 = vld [vmem:[#allocation6 + $0x270] sm:$0xff]
    %v204 = vld [vmem:[#allocation6 + $0x278] sm:$0xff]
    %v205 = vld [vmem:[#allocation6 + $0x280] sm:$0xff]
    %v206 = vld [vmem:[#allocation6 + $0x288] sm:$0xff]
    %v207 = vld [vmem:[#allocation6 + $0x290] sm:$0xff]
    %v208 = vld [vmem:[#allocation6 + $0x298] sm:$0xff]
    %v209 = vld [vmem:[#allocation6 + $0x2a0] sm:$0xff]
    %v210 = vld [vmem:[#allocation6 + $0x2a8] sm:$0xff]
    %v211 = vld [vmem:[#allocation6 + $0x2b0] sm:$0xff]
    %v212 = vld [vmem:[#allocation6 + $0x2b8] sm:$0xff]
    %v213 = vld [vmem:[#allocation6 + $0x2c0] sm:$0xff]
    %v214 = vld [vmem:[#allocation6 + $0x2c8] sm:$0xff]
    %v215 = vld [vmem:[#allocation6 + $0x2d0] sm:$0xff]
    %v216 = vld [vmem:[#allocation6 + $0x2d8] sm:$0xff]
    %v217 = vld [vmem:[#allocation6 + $0x2e0] sm:$0xff]
    %v218 = vld [vmem:[#allocation6 + $0x2e8] sm:$0xff]
    %v219 = vld [vmem:[#allocation6 + $0x2f0] sm:$0xff]
    %v220 = vld [vmem:[#allocation6 + $0x2f8] sm:$0xff]
    %v221 = vld [vmem:[%s4] sm:$0xf]
    %v223 = vlaneseq
    %v224 = vshrl.u32 %v223, 7
    %v225 = vsub.s32 0, %v224
    %v226 = vrot.slane %v221, %v225
    %v227 = vlaneseq
    %v228 = vshrl.u32 %v227, 7
    %v229 = vsub.s32 1, %v228
    %v230 = vrot.slane %v221, %v229
    %v231 = vlaneseq
    %v232 = vshrl.u32 %v231, 7
    %v233 = vsub.s32 2, %v232
    %v234 = vrot.slane %v221, %v233
    %v235 = vlaneseq
    %v236 = vshrl.u32 %v235, 7
    %v237 = vsub.s32 3, %v236
    %v238 = vrot.slane %v221, %v237
    %v259 = vunpack.c.l.b16 %v109
    %v260 = vunpack.c.h.b16 %v109
    %v261 = vunpack.c.l.b16 %v110
    %v262 = vunpack.c.l.b16 %v111
    %v263 = vunpack.c.h.b16 %v111
    %v264 = vunpack.c.l.b16 %v112
    %v265 = vunpack.c.l.b16 %v113
    %v266 = vunpack.c.h.b16 %v113
    %v267 = vunpack.c.l.b16 %v114
    %v268 = vunpack.c.l.b16 %v115
    %v269 = vunpack.c.h.b16 %v115
    %v270 = vunpack.c.l.b16 %v116
    %v271 = vunpack.c.l.b16 %v117
    %v272 = vunpack.c.h.b16 %v117
    %v273 = vunpack.c.l.b16 %v118
    %v274 = vunpack.c.l.b16 %v119
    %v275 = vunpack.c.h.b16 %v119
    %v276 = vunpack.c.l.b16 %v120
    %v277 = vunpack.c.l.b16 %v121
    %v278 = vunpack.c.h.b16 %v121
    %v279 = vunpack.c.l.b16 %v122
    %v280 = vunpack.c.l.b16 %v123
    %v281 = vunpack.c.h.b16 %v123
    %v282 = vunpack.c.l.b16 %v124
    %v283 = vpack.c.b16 %v262, %v259
    %v284 = vpack.c.b16 %v263, %v260
    %v285 = vpack.c.b16 %v264, %v261
    %v286 = vpack.c.b16 %v268, %v265
    %v287 = vpack.c.b16 %v269, %v266
    %v288 = vpack.c.b16 %v270, %v267
    %v289 = vpack.c.b16 %v274, %v271
    %v290 = vpack.c.b16 %v275, %v272
    %v291 = vpack.c.b16 %v276, %v273
    %v292 = vpack.c.b16 %v280, %v277
    %v293 = vpack.c.b16 %v281, %v278
    %v294 = vpack.c.b16 %v282, %v279
    %v403 = vunpack.c.l.b16 %v125
    %v404 = vunpack.c.h.b16 %v125
    %v405 = vunpack.c.l.b16 %v126
    %v406 = vunpack.c.h.b16 %v126
    %v407 = vunpack.c.l.b16 %v127
    %v408 = vunpack.c.h.b16 %v127
    %v409 = vunpack.c.l.b16 %v128
    %v410 = vunpack.c.h.b16 %v128
    %v411 = vunpack.c.l.b16 %v129
    %v412 = vunpack.c.h.b16 %v129
    %v413 = vunpack.c.l.b16 %v130
    %v414 = vunpack.c.h.b16 %v130
    %v415 = vunpack.c.l.b16 %v131
    %v416 = vunpack.c.h.b16 %v131
    %v417 = vunpack.c.l.b16 %v132
    %v418 = vunpack.c.h.b16 %v132
    %v419 = vunpack.c.l.b16 %v133
    %v420 = vunpack.c.h.b16 %v133
    %v421 = vunpack.c.l.b16 %v134
    %v422 = vunpack.c.h.b16 %v134
    %v423 = vunpack.c.l.b16 %v135
    %v424 = vunpack.c.h.b16 %v135
    %v425 = vunpack.c.l.b16 %v136
    %v426 = vunpack.c.h.b16 %v136
    %v427 = vunpack.c.l.b16 %v137
    %v428 = vunpack.c.h.b16 %v137
    %v429 = vunpack.c.l.b16 %v138
    %v430 = vunpack.c.h.b16 %v138
    %v431 = vunpack.c.l.b16 %v139
    %v432 = vunpack.c.h.b16 %v139
    %v433 = vunpack.c.l.b16 %v140
    %v434 = vunpack.c.h.b16 %v140
    %v435 = vunpack.c.l.b16 %v141
    %v436 = vunpack.c.h.b16 %v141
    %v437 = vunpack.c.l.b16 %v142
    %v438 = vunpack.c.h.b16 %v142
    %v439 = vunpack.c.l.b16 %v143
    %v440 = vunpack.c.h.b16 %v143
    %v441 = vunpack.c.l.b16 %v144
    %v442 = vunpack.c.h.b16 %v144
    %v443 = vunpack.c.l.b16 %v145
    %v444 = vunpack.c.h.b16 %v145
    %v445 = vunpack.c.l.b16 %v146
    %v446 = vunpack.c.h.b16 %v146
    %v447 = vunpack.c.l.b16 %v147
    %v448 = vunpack.c.h.b16 %v147
    %v449 = vunpack.c.l.b16 %v148
    %v450 = vunpack.c.h.b16 %v148
    %v451 = vunpack.c.l.b16 %v149
    %v452 = vunpack.c.h.b16 %v149
    %v453 = vunpack.c.l.b16 %v150
    %v454 = vunpack.c.h.b16 %v150
    %v455 = vunpack.c.l.b16 %v151
    %v456 = vunpack.c.h.b16 %v151
    %v457 = vunpack.c.l.b16 %v152
    %v458 = vunpack.c.h.b16 %v152
    %v459 = vunpack.c.l.b16 %v153
    %v460 = vunpack.c.h.b16 %v153
    %v461 = vunpack.c.l.b16 %v154
    %v462 = vunpack.c.h.b16 %v154
    %v463 = vunpack.c.l.b16 %v155
    %v464 = vunpack.c.h.b16 %v155
    %v465 = vunpack.c.l.b16 %v156
    %v466 = vunpack.c.h.b16 %v156
    %v467 = vunpack.c.l.b16 %v157
    %v468 = vunpack.c.h.b16 %v157
    %v469 = vunpack.c.l.b16 %v158
    %v470 = vunpack.c.h.b16 %v158
    %v471 = vunpack.c.l.b16 %v159
    %v472 = vunpack.c.h.b16 %v159
    %v473 = vunpack.c.l.b16 %v160
    %v474 = vunpack.c.h.b16 %v160
    %v475 = vunpack.c.l.b16 %v161
    %v476 = vunpack.c.h.b16 %v161
    %v477 = vunpack.c.l.b16 %v162
    %v478 = vunpack.c.h.b16 %v162
    %v479 = vunpack.c.l.b16 %v163
    %v480 = vunpack.c.h.b16 %v163
    %v481 = vunpack.c.l.b16 %v164
    %v482 = vunpack.c.h.b16 %v164
    %v483 = vunpack.c.l.b16 %v165
    %v484 = vunpack.c.h.b16 %v165
    %v485 = vunpack.c.l.b16 %v166
    %v486 = vunpack.c.h.b16 %v166
    %v487 = vunpack.c.l.b16 %v167
    %v488 = vunpack.c.h.b16 %v167
    %v489 = vunpack.c.l.b16 %v168
    %v490 = vunpack.c.h.b16 %v168
    %v491 = vunpack.c.l.b16 %v169
    %v492 = vunpack.c.h.b16 %v169
    %v493 = vunpack.c.l.b16 %v170
    %v494 = vunpack.c.h.b16 %v170
    %v495 = vunpack.c.l.b16 %v171
    %v496 = vunpack.c.h.b16 %v171
    %v497 = vunpack.c.l.b16 %v172
    %v498 = vunpack.c.h.b16 %v172
    %v499 = vunpack.c.l.b16 %v173
    %v500 = vunpack.c.h.b16 %v173
    %v501 = vunpack.c.l.b16 %v174
    %v502 = vunpack.c.h.b16 %v174
    %v503 = vunpack.c.l.b16 %v175
    %v504 = vunpack.c.h.b16 %v175
    %v505 = vunpack.c.l.b16 %v176
    %v506 = vunpack.c.h.b16 %v176
    %v507 = vunpack.c.l.b16 %v177
    %v508 = vunpack.c.h.b16 %v177
    %v509 = vunpack.c.l.b16 %v178
    %v510 = vunpack.c.h.b16 %v178
    %v511 = vunpack.c.l.b16 %v179
    %v512 = vunpack.c.h.b16 %v179
    %v513 = vunpack.c.l.b16 %v180
    %v514 = vunpack.c.h.b16 %v180
    %v515 = vunpack.c.l.b16 %v181
    %v516 = vunpack.c.h.b16 %v181
    %v517 = vunpack.c.l.b16 %v182
    %v518 = vunpack.c.h.b16 %v182
    %v519 = vunpack.c.l.b16 %v183
    %v520 = vunpack.c.h.b16 %v183
    %v521 = vunpack.c.l.b16 %v184
    %v522 = vunpack.c.h.b16 %v184
    %v523 = vunpack.c.l.b16 %v185
    %v524 = vunpack.c.h.b16 %v185
    %v525 = vunpack.c.l.b16 %v186
    %v526 = vunpack.c.h.b16 %v186
    %v527 = vunpack.c.l.b16 %v187
    %v528 = vunpack.c.h.b16 %v187
    %v529 = vunpack.c.l.b16 %v188
    %v530 = vunpack.c.h.b16 %v188
    %v531 = vunpack.c.l.b16 %v189
    %v532 = vunpack.c.h.b16 %v189
    %v533 = vunpack.c.l.b16 %v190
    %v534 = vunpack.c.h.b16 %v190
    %v535 = vunpack.c.l.b16 %v191
    %v536 = vunpack.c.h.b16 %v191
    %v537 = vunpack.c.l.b16 %v192
    %v538 = vunpack.c.h.b16 %v192
    %v539 = vunpack.c.l.b16 %v193
    %v540 = vunpack.c.h.b16 %v193
    %v541 = vunpack.c.l.b16 %v194
    %v542 = vunpack.c.h.b16 %v194
    %v543 = vunpack.c.l.b16 %v195
    %v544 = vunpack.c.h.b16 %v195
    %v545 = vunpack.c.l.b16 %v196
    %v546 = vunpack.c.h.b16 %v196
    %v547 = vunpack.c.l.b16 %v197
    %v548 = vunpack.c.h.b16 %v197
    %v549 = vunpack.c.l.b16 %v198
    %v550 = vunpack.c.h.b16 %v198
    %v551 = vunpack.c.l.b16 %v199
    %v552 = vunpack.c.h.b16 %v199
    %v553 = vunpack.c.l.b16 %v200
    %v554 = vunpack.c.h.b16 %v200
    %v555 = vunpack.c.l.b16 %v201
    %v556 = vunpack.c.h.b16 %v201
    %v557 = vunpack.c.l.b16 %v202
    %v558 = vunpack.c.h.b16 %v202
    %v559 = vunpack.c.l.b16 %v203
    %v560 = vunpack.c.h.b16 %v203
    %v561 = vunpack.c.l.b16 %v204
    %v562 = vunpack.c.h.b16 %v204
    %v563 = vunpack.c.l.b16 %v205
    %v564 = vunpack.c.h.b16 %v205
    %v565 = vunpack.c.l.b16 %v206
    %v566 = vunpack.c.h.b16 %v206
    %v567 = vunpack.c.l.b16 %v207
    %v568 = vunpack.c.h.b16 %v207
    %v569 = vunpack.c.l.b16 %v208
    %v570 = vunpack.c.h.b16 %v208
    %v571 = vunpack.c.l.b16 %v209
    %v572 = vunpack.c.h.b16 %v209
    %v573 = vunpack.c.l.b16 %v210
    %v574 = vunpack.c.h.b16 %v210
    %v575 = vunpack.c.l.b16 %v211
    %v576 = vunpack.c.h.b16 %v211
    %v577 = vunpack.c.l.b16 %v212
    %v578 = vunpack.c.h.b16 %v212
    %v579 = vunpack.c.l.b16 %v213
    %v580 = vunpack.c.h.b16 %v213
    %v581 = vunpack.c.l.b16 %v214
    %v582 = vunpack.c.h.b16 %v214
    %v583 = vunpack.c.l.b16 %v215
    %v584 = vunpack.c.h.b16 %v215
    %v585 = vunpack.c.l.b16 %v216
    %v586 = vunpack.c.h.b16 %v216
    %v587 = vunpack.c.l.b16 %v217
    %v588 = vunpack.c.h.b16 %v217
    %v589 = vunpack.c.l.b16 %v218
    %v590 = vunpack.c.h.b16 %v218
    %v591 = vunpack.c.l.b16 %v219
    %v592 = vunpack.c.h.b16 %v219
    %v593 = vunpack.c.l.b16 %v220
    %v594 = vunpack.c.h.b16 %v220
    %v595 = vpack.c.b16 %v407, %v403
    %v596 = vpack.c.b16 %v408, %v404
    %v597 = vpack.c.b16 %v409, %v405
    %v598 = vpack.c.b16 %v410, %v406
    %v599 = vpack.c.b16 %v415, %v411
    %v600 = vpack.c.b16 %v416, %v412
    %v601 = vpack.c.b16 %v417, %v413
    %v602 = vpack.c.b16 %v418, %v414
    %v603 = vpack.c.b16 %v423, %v419
    %v604 = vpack.c.b16 %v424, %v420
    %v605 = vpack.c.b16 %v425, %v421
    %v606 = vpack.c.b16 %v426, %v422
    %v607 = vpack.c.b16 %v431, %v427
    %v608 = vpack.c.b16 %v432, %v428
    %v609 = vpack.c.b16 %v433, %v429
    %v610 = vpack.c.b16 %v434, %v430
    %v611 = vpack.c.b16 %v439, %v435
    %v612 = vpack.c.b16 %v440, %v436
    %v613 = vpack.c.b16 %v441, %v437
    %v614 = vpack.c.b16 %v442, %v438
    %v615 = vpack.c.b16 %v447, %v443
    %v616 = vpack.c.b16 %v448, %v444
    %v617 = vpack.c.b16 %v449, %v445
    %v618 = vpack.c.b16 %v450, %v446
    %v619 = vpack.c.b16 %v455, %v451
    %v620 = vpack.c.b16 %v456, %v452
    %v621 = vpack.c.b16 %v457, %v453
    %v622 = vpack.c.b16 %v458, %v454
    %v623 = vpack.c.b16 %v463, %v459
    %v624 = vpack.c.b16 %v464, %v460
    %v625 = vpack.c.b16 %v465, %v461
    %v626 = vpack.c.b16 %v466, %v462
    %v627 = vpack.c.b16 %v471, %v467
    %v628 = vpack.c.b16 %v472, %v468
    %v629 = vpack.c.b16 %v473, %v469
    %v630 = vpack.c.b16 %v474, %v470
    %v631 = vpack.c.b16 %v479, %v475
    %v632 = vpack.c.b16 %v480, %v476
    %v633 = vpack.c.b16 %v481, %v477
    %v634 = vpack.c.b16 %v482, %v478
    %v635 = vpack.c.b16 %v487, %v483
    %v636 = vpack.c.b16 %v488, %v484
    %v637 = vpack.c.b16 %v489, %v485
    %v638 = vpack.c.b16 %v490, %v486
    %v639 = vpack.c.b16 %v495, %v491
    %v640 = vpack.c.b16 %v496, %v492
    %v641 = vpack.c.b16 %v497, %v493
    %v642 = vpack.c.b16 %v498, %v494
    %v643 = vpack.c.b16 %v503, %v499
    %v644 = vpack.c.b16 %v504, %v500
    %v645 = vpack.c.b16 %v505, %v501
    %v646 = vpack.c.b16 %v506, %v502
    %v647 = vpack.c.b16 %v511, %v507
    %v648 = vpack.c.b16 %v512, %v508
    %v649 = vpack.c.b16 %v513, %v509
    %v650 = vpack.c.b16 %v514, %v510
    %v651 = vpack.c.b16 %v519, %v515
    %v652 = vpack.c.b16 %v520, %v516
    %v653 = vpack.c.b16 %v521, %v517
    %v654 = vpack.c.b16 %v522, %v518
    %v655 = vpack.c.b16 %v527, %v523
    %v656 = vpack.c.b16 %v528, %v524
    %v657 = vpack.c.b16 %v529, %v525
    %v658 = vpack.c.b16 %v530, %v526
    %v659 = vpack.c.b16 %v535, %v531
    %v660 = vpack.c.b16 %v536, %v532
    %v661 = vpack.c.b16 %v537, %v533
    %v662 = vpack.c.b16 %v538, %v534
    %v663 = vpack.c.b16 %v543, %v539
    %v664 = vpack.c.b16 %v544, %v540
    %v665 = vpack.c.b16 %v545, %v541
    %v666 = vpack.c.b16 %v546, %v542
    %v667 = vpack.c.b16 %v551, %v547
    %v668 = vpack.c.b16 %v552, %v548
    %v669 = vpack.c.b16 %v553, %v549
    %v670 = vpack.c.b16 %v554, %v550
    %v671 = vpack.c.b16 %v559, %v555
    %v672 = vpack.c.b16 %v560, %v556
    %v673 = vpack.c.b16 %v561, %v557
    %v674 = vpack.c.b16 %v562, %v558
    %v675 = vpack.c.b16 %v567, %v563
    %v676 = vpack.c.b16 %v568, %v564
    %v677 = vpack.c.b16 %v569, %v565
    %v678 = vpack.c.b16 %v570, %v566
    %v679 = vpack.c.b16 %v575, %v571
    %v680 = vpack.c.b16 %v576, %v572
    %v681 = vpack.c.b16 %v577, %v573
    %v682 = vpack.c.b16 %v578, %v574
    %v683 = vpack.c.b16 %v583, %v579
    %v684 = vpack.c.b16 %v584, %v580
    %v685 = vpack.c.b16 %v585, %v581
    %v686 = vpack.c.b16 %v586, %v582
    %v687 = vpack.c.b16 %v591, %v587
    %v688 = vpack.c.b16 %v592, %v588
    %v689 = vpack.c.b16 %v593, %v589
    %v690 = vpack.c.b16 %v594, %v590
    %787 = vmatprep.subr.bf16.mxu0 %v596
    %788 = vmatpush1.bf16.msra.mxu0 %v595
    %789 = vmatprep.subr.bf16.mxu0 %v600
    %790 = vmatpush1.bf16.msra.mxu0 %v599
    %791 = vmatprep.subr.bf16.mxu0 %v604
    %792 = vmatpush1.bf16.msra.mxu0 %v603
    %793 = vmatprep.subr.bf16.mxu0 %v608
    %794 = vmatpush1.bf16.msra.mxu0 %v607
    %795 = vmatprep.subr.bf16.mxu0 %v612
    %796 = vmatpush1.bf16.msra.mxu0 %v611
    %797 = vmatprep.subr.bf16.mxu0 %v616
    %798 = vmatpush1.bf16.msra.mxu0 %v615
    %799 = vmatprep.subr.bf16.mxu0 %v620
    %800 = vmatpush1.bf16.msra.mxu0 %v619
    %801 = vmatprep.subr.bf16.mxu0 %v624
    %802 = vmatpush1.bf16.msra.mxu0 %v623
    %803 = vmatprep.subr.bf16.mxu0 %v628
    %804 = vmatpush1.bf16.msra.mxu0 %v627
    %805 = vmatprep.subr.bf16.mxu0 %v632
    %806 = vmatpush1.bf16.msra.mxu0 %v631
    %807 = vmatprep.subr.bf16.mxu0 %v636
    %808 = vmatpush1.bf16.msra.mxu0 %v635
    %809 = vmatprep.subr.bf16.mxu0 %v640
    %810 = vmatpush1.bf16.msra.mxu0 %v639
    %811 = vmatprep.subr.bf16.mxu0 %v644
    %812 = vmatpush1.bf16.msra.mxu0 %v643
    %813 = vmatprep.subr.bf16.mxu0 %v648
    %814 = vmatpush1.bf16.msra.mxu0 %v647
    %815 = vmatprep.subr.bf16.mxu0 %v652
    %816 = vmatpush1.bf16.msra.mxu0 %v651
    %817 = vmatprep.subr.bf16.mxu0 %v656
    %818 = vmatpush1.bf16.msra.mxu0 %v655
    %819 = vmatprep.mubr.bf16.mxu0 %v284
    %820 = vmatmul.mubr.bf16.gmra.mrb[0].mxu0 %v283
    %v821 = vpop.f32.mrb[0].mxu0
    %v822 = vadd.f32 %v226, %v821
    %v823 = vpop.f32.mrb[0].mxu0
    %v824 = vadd.f32 %v230, %v823
    %v825 = vpop.f32.mrb[0].mxu0
    %v826 = vadd.f32 %v226, %v825
    %v827 = vpop.f32.mrb[0].mxu0
    %v828 = vadd.f32 %v230, %v827
    %829 = vmatprep.mubr.bf16.mxu0 %v287
    %830 = vmatmul.mubr.bf16.gmra.mrb[0].mxu0 %v286
    %v831 = vpop.f32.mrb[0].mxu0
    %v832 = vadd.f32 %v226, %v831
    %v833 = vpop.f32.mrb[0].mxu0
    %v834 = vadd.f32 %v230, %v833
    %v835 = vpop.f32.mrb[0].mxu0
    %v836 = vadd.f32 %v226, %v835
    %v837 = vpop.f32.mrb[0].mxu0
    %v838 = vadd.f32 %v230, %v837
    %839 = vmatprep.mubr.bf16.mxu0 %v290
    %840 = vmatmul.mubr.bf16.gmra.mrb[0].mxu0 %v289
    %v841 = vpop.f32.mrb[0].mxu0
    %v842 = vadd.f32 %v226, %v841
    %v843 = vpop.f32.mrb[0].mxu0
    %v844 = vadd.f32 %v230, %v843
    %v845 = vpop.f32.mrb[0].mxu0
    %v846 = vadd.f32 %v226, %v845
    %v847 = vpop.f32.mrb[0].mxu0
    %v848 = vadd.f32 %v230, %v847
    %849 = vmatprep.mubr.bf16.mxu0 %v293
    %850 = vmatmul.mubr.bf16.gmra.mrb[0].mxu0 %v292
    %v851 = vpop.f32.mrb[0].mxu0
    %v852 = vadd.f32 %v226, %v851
    %v853 = vpop.f32.mrb[0].mxu0
    %v854 = vadd.f32 %v230, %v853
    %v855 = vpop.f32.mrb[0].mxu0
    %v856 = vadd.f32 %v226, %v855
    %v857 = vpop.f32.mrb[0].mxu0
    %v858 = vadd.f32 %v230, %v857
    %859 = vdwg.mxu0
    %860 = vmatprep.subr.bf16.mxu0 %v660
    %861 = vmatpush1.bf16.msra.mxu0 %v659
    %862 = vmatprep.subr.bf16.mxu0 %v664
    %863 = vmatpush1.bf16.msra.mxu0 %v663
    %864 = vmatprep.subr.bf16.mxu0 %v668
    %865 = vmatpush1.bf16.msra.mxu0 %v667
    %866 = vmatprep.subr.bf16.mxu0 %v672
    %867 = vmatpush1.bf16.msra.mxu0 %v671
    %868 = vmatprep.subr.bf16.mxu0 %v676
    %869 = vmatpush1.bf16.msra.mxu0 %v675
    %870 = vmatprep.subr.bf16.mxu0 %v680
    %871 = vmatpush1.bf16.msra.mxu0 %v679
    %872 = vmatprep.subr.bf16.mxu0 %v684
    %873 = vmatpush1.bf16.msra.mxu0 %v683
    %874 = vmatprep.subr.bf16.mxu0 %v688
    %875 = vmatpush1.bf16.msra.mxu0 %v687
    %876 = vmatprep.subr.bf16.mxu0 0
    %877 = vmatpush1.bf16.msra.mxu0 0
    %878 = vmatprep.subr.bf16.mxu0 0
    %879 = vmatpush1.bf16.msra.mxu0 0
    %880 = vmatprep.subr.bf16.mxu0 0
    %881 = vmatpush1.bf16.msra.mxu0 0
    %882 = vmatprep.subr.bf16.mxu0 0
    %883 = vmatpush1.bf16.msra.mxu0 0
    %884 = vmatprep.subr.bf16.mxu0 0
    %885 = vmatpush1.bf16.msra.mxu0 0
    %886 = vmatprep.subr.bf16.mxu0 0
    %887 = vmatpush1.bf16.msra.mxu0 0
    %888 = vmatprep.subr.bf16.mxu0 0
    %889 = vmatpush1.bf16.msra.mxu0 0
    %890 = vmatprep.subr.bf16.mxu0 0
    %891 = vmatpush1.bf16.msra.mxu0 0
    %892 = vmatprep.mubr.bf16.mxu0 0
    %893 = vmatmul.mubr.bf16.gmra.mrb[0].mxu0 %v285
    %v894 = vpop.f32.mrb[0].mxu0
    %v895 = vadd.f32 %v822, %v894
    %v896 = vpop.f32.mrb[0].mxu0
    %v897 = vadd.f32 %v824, %v896
    %v898 = vpop.f32.mrb[0].mxu0
    %v899 = vadd.f32 %v826, %v898
    %v900 = vpop.f32.mrb[0].mxu0
    %v901 = vadd.f32 %v828, %v900
    %902 = vmatprep.mubr.bf16.mxu0 0
    %903 = vmatmul.mubr.bf16.gmra.mrb[0].mxu0 %v288
    %v904 = vpop.f32.mrb[0].mxu0
    %v905 = vadd.f32 %v832, %v904
    %v906 = vpop.f32.mrb[0].mxu0
    %v907 = vadd.f32 %v834, %v906
    %v908 = vpop.f32.mrb[0].mxu0
    %v909 = vadd.f32 %v836, %v908
    %v910 = vpop.f32.mrb[0].mxu0
    %v911 = vadd.f32 %v838, %v910
    %912 = vmatprep.mubr.bf16.mxu0 0
    %913 = vmatmul.mubr.bf16.gmra.mrb[0].mxu0 %v291
    %v914 = vpop.f32.mrb[0].mxu0
    %v915 = vadd.f32 %v842, %v914
    %v916 = vpop.f32.mrb[0].mxu0
    %v917 = vadd.f32 %v844, %v916
    %v918 = vpop.f32.mrb[0].mxu0
    %v919 = vadd.f32 %v846, %v918
    %v920 = vpop.f32.mrb[0].mxu0
    %v921 = vadd.f32 %v848, %v920
    %922 = vmatprep.mubr.bf16.mxu0 0
    %923 = vmatmul.mubr.bf16.gmra.mrb[0].mxu0 %v294
    %v924 = vpop.f32.mrb[0].mxu0
    %v925 = vadd.f32 %v852, %v924
    %v926 = vpop.f32.mrb[0].mxu0
    %v927 = vadd.f32 %v854, %v926
    %v928 = vpop.f32.mrb[0].mxu0
    %v929 = vadd.f32 %v856, %v928
    %v930 = vpop.f32.mrb[0].mxu0
    %v931 = vadd.f32 %v858, %v930
    %932 = vdwg.mxu0
    %933 = vmatprep.subr.bf16.mxu0 %v598
    %934 = vmatpush1.bf16.msra.mxu0 %v597
    %935 = vmatprep.subr.bf16.mxu0 %v602
    %936 = vmatpush1.bf16.msra.mxu0 %v601
    %937 = vmatprep.subr.bf16.mxu0 %v606
    %938 = vmatpush1.bf16.msra.mxu0 %v605
    %939 = vmatprep.subr.bf16.mxu0 %v610
    %940 = vmatpush1.bf16.msra.mxu0 %v609
    %941 = vmatprep.subr.bf16.mxu0 %v614
    %942 = vmatpush1.bf16.msra.mxu0 %v613
    %943 = vmatprep.subr.bf16.mxu0 %v618
    %944 = vmatpush1.bf16.msra.mxu0 %v617
    %945 = vmatprep.subr.bf16.mxu0 %v622
    %946 = vmatpush1.bf16.msra.mxu0 %v621
    %947 = vmatprep.subr.bf16.mxu0 %v626
    %948 = vmatpush1.bf16.msra.mxu0 %v625
    %949 = vmatprep.subr.bf16.mxu0 %v630
    %950 = vmatpush1.bf16.msra.mxu0 %v629
    %951 = vmatprep.subr.bf16.mxu0 %v634
    %952 = vmatpush1.bf16.msra.mxu0 %v633
    %953 = vmatprep.subr.bf16.mxu0 %v638
    %954 = vmatpush1.bf16.msra.mxu0 %v637
    %955 = vmatprep.subr.bf16.mxu0 %v642
    %956 = vmatpush1.bf16.msra.mxu0 %v641
    %957 = vmatprep.subr.bf16.mxu0 %v646
    %958 = vmatpush1.bf16.msra.mxu0 %v645
    %959 = vmatprep.subr.bf16.mxu0 %v650
    %960 = vmatpush1.bf16.msra.mxu0 %v649
    %961 = vmatprep.subr.bf16.mxu0 %v654
    %962 = vmatpush1.bf16.msra.mxu0 %v653
    %963 = vmatprep.subr.bf16.mxu0 %v658
    %964 = vmatpush1.bf16.msra.mxu0 %v657
    %965 = vmatprep.mubr.bf16.mxu0 %v284
    %966 = vmatmul.mubr.bf16.gmra.mrb[0].mxu0 %v283
    %v967 = vpop.f32.mrb[0].mxu0
    %v968 = vadd.f32 %v234, %v967
    %v969 = vpop.f32.mrb[0].mxu0
    %v970 = vadd.f32 %v238, %v969
    %v971 = vpop.f32.mrb[0].mxu0
    %v972 = vadd.f32 %v234, %v971
    %v973 = vpop.f32.mrb[0].mxu0
    %v974 = vadd.f32 %v238, %v973
    %975 = vmatprep.mubr.bf16.mxu0 %v287
    %976 = vmatmul.mubr.bf16.gmra.mrb[0].mxu0 %v286
    %v977 = vpop.f32.mrb[0].mxu0
    %v978 = vadd.f32 %v234, %v977
    %v979 = vpop.f32.mrb[0].mxu0
    %v980 = vadd.f32 %v238, %v979
    %v981 = vpop.f32.mrb[0].mxu0
    %v982 = vadd.f32 %v234, %v981
    %v983 = vpop.f32.mrb[0].mxu0
    %v984 = vadd.f32 %v238, %v983
    %985 = vmatprep.mubr.bf16.mxu0 %v290
    %986 = vmatmul.mubr.bf16.gmra.mrb[0].mxu0 %v289
    %v987 = vpop.f32.mrb[0].mxu0
    %v988 = vadd.f32 %v234, %v987
    %v989 = vpop.f32.mrb[0].mxu0
    %v990 = vadd.f32 %v238, %v989
    %v991 = vpop.f32.mrb[0].mxu0
    %v992 = vadd.f32 %v234, %v991
    %v993 = vpop.f32.mrb[0].mxu0
    %v994 = vadd.f32 %v238, %v993
    %995 = vmatprep.mubr.bf16.mxu0 %v293
    %996 = vmatmul.mubr.bf16.gmra.mrb[0].mxu0 %v292
    %v997 = vpop.f32.mrb[0].mxu0
    %v998 = vadd.f32 %v234, %v997
    %v999 = vpop.f32.mrb[0].mxu0
    %v1000 = vadd.f32 %v238, %v999
    %v1001 = vpop.f32.mrb[0].mxu0
    %v1002 = vadd.f32 %v234, %v1001
    %v1003 = vpop.f32.mrb[0].mxu0
    %v1004 = vadd.f32 %v238, %v1003
    %1005 = vdwg.mxu0
    %1006 = vmatprep.subr.bf16.mxu0 %v662
    %1007 = vmatpush1.bf16.msra.mxu0 %v661
    %1008 = vmatprep.subr.bf16.mxu0 %v666
    %1009 = vmatpush1.bf16.msra.mxu0 %v665
    %1010 = vmatprep.subr.bf16.mxu0 %v670
    %1011 = vmatpush1.bf16.msra.mxu0 %v669
    %1012 = vmatprep.subr.bf16.mxu0 %v674
    %1013 = vmatpush1.bf16.msra.mxu0 %v673
    %1014 = vmatprep.subr.bf16.mxu0 %v678
    %1015 = vmatpush1.bf16.msra.mxu0 %v677
    %1016 = vmatprep.subr.bf16.mxu0 %v682
    %1017 = vmatpush1.bf16.msra.mxu0 %v681
    %1018 = vmatprep.subr.bf16.mxu0 %v686
    %1019 = vmatpush1.bf16.msra.mxu0 %v685
    %1020 = vmatprep.subr.bf16.mxu0 %v690
    %1021 = vmatpush1.bf16.msra.mxu0 %v689
    %1022 = vmatprep.subr.bf16.mxu0 0
    %1023 = vmatpush1.bf16.msra.mxu0 0
    %1024 = vmatprep.subr.bf16.mxu0 0
    %1025 = vmatpush1.bf16.msra.mxu0 0
    %1026 = vmatprep.subr.bf16.mxu0 0
    %1027 = vmatpush1.bf16.msra.mxu0 0
    %1028 = vmatprep.subr.bf16.mxu0 0
    %1029 = vmatpush1.bf16.msra.mxu0 0
    %1030 = vmatprep.subr.bf16.mxu0 0
    %1031 = vmatpush1.bf16.msra.mxu0 0
    %1032 = vmatprep.subr.bf16.mxu0 0
    %1033 = vmatpush1.bf16.msra.mxu0 0
    %1034 = vmatprep.subr.bf16.mxu0 0
    %1035 = vmatpush1.bf16.msra.mxu0 0
    %1036 = vmatprep.subr.bf16.mxu0 0
    %1037 = vmatpush1.bf16.msra.mxu0 0
    %1038 = vmatprep.mubr.bf16.mxu0 0
    %1039 = vmatmul.mubr.bf16.gmra.mrb[0].mxu0 %v285
    %v1040 = vpop.f32.mrb[0].mxu0
    %v1041 = vadd.f32 %v968, %v1040
    %v1042 = vpop.f32.mrb[0].mxu0
    %v1043 = vadd.f32 %v970, %v1042
    %v1044 = vpop.f32.mrb[0].mxu0
    %v1045 = vadd.f32 %v972, %v1044
    %v1046 = vpop.f32.mrb[0].mxu0
    %v1047 = vadd.f32 %v974, %v1046
    %1048 = vmatprep.mubr.bf16.mxu0 0
    %1049 = vmatmul.mubr.bf16.gmra.mrb[0].mxu0 %v288
    %v1050 = vpop.f32.mrb[0].mxu0
    %v1051 = vadd.f32 %v978, %v1050
    %v1052 = vpop.f32.mrb[0].mxu0
    %v1053 = vadd.f32 %v980, %v1052
    %v1054 = vpop.f32.mrb[0].mxu0
    %v1055 = vadd.f32 %v982, %v1054
    %v1056 = vpop.f32.mrb[0].mxu0
    %v1057 = vadd.f32 %v984, %v1056
    %1058 = vmatprep.mubr.bf16.mxu0 0
    %1059 = vmatmul.mubr.bf16.gmra.mrb[0].mxu0 %v291
    %v1060 = vpop.f32.mrb[0].mxu0
    %v1061 = vadd.f32 %v988, %v1060
    %v1062 = vpop.f32.mrb[0].mxu0
    %v1063 = vadd.f32 %v990, %v1062
    %v1064 = vpop.f32.mrb[0].mxu0
    %v1065 = vadd.f32 %v992, %v1064
    %v1066 = vpop.f32.mrb[0].mxu0
    %v1067 = vadd.f32 %v994, %v1066
    %1068 = vmatprep.mubr.bf16.mxu0 0
    %1069 = vmatmul.mubr.bf16.gmra.mrb[0].mxu0 %v294
    %v1070 = vpop.f32.mrb[0].mxu0
    %v1071 = vadd.f32 %v998, %v1070
    %v1072 = vpop.f32.mrb[0].mxu0
    %v1073 = vadd.f32 %v1000, %v1072
    %v1074 = vpop.f32.mrb[0].mxu0
    %v1075 = vadd.f32 %v1002, %v1074
    %v1076 = vpop.f32.mrb[0].mxu0
    %v1077 = vadd.f32 %v1004, %v1076
    %1078 = vdwg.mxu0
    %1079 = vst [vmem:[#allocation2] sm:$0xff] %v895
    %1080 = vst [vmem:[#allocation2 + $0x8] sm:$0xff] %v897
    %1081 = vst [vmem:[#allocation2 + $0x10] sm:$0xff] %v1041
    %1082 = vst [vmem:[#allocation2 + $0x18] sm:$0xff] %v1043
    %1083 = vst [vmem:[#allocation2 + $0x20] sm:$0xff] %v899
    %1084 = vst [vmem:[#allocation2 + $0x28] sm:$0xff] %v901
    %1085 = vst [vmem:[#allocation2 + $0x30] sm:$0xff] %v1045
    %1086 = vst [vmem:[#allocation2 + $0x38] sm:$0xff] %v1047
    %1087 = vst [vmem:[#allocation2 + $0x40] sm:$0xff] %v905
    %1088 = vst [vmem:[#allocation2 + $0x48] sm:$0xff] %v907
    %1089 = vst [vmem:[#allocation2 + $0x50] sm:$0xff] %v1051
    %1090 = vst [vmem:[#allocation2 + $0x58] sm:$0xff] %v1053
    %1091 = vst [vmem:[#allocation2 + $0x60] sm:$0xff] %v909
    %1092 = vst [vmem:[#allocation2 + $0x68] sm:$0xff] %v911
    %1093 = vst [vmem:[#allocation2 + $0x70] sm:$0xff] %v1055
    %1094 = vst [vmem:[#allocation2 + $0x78] sm:$0xff] %v1057
    %1095 = vst [vmem:[#allocation2 + $0x80] sm:$0xff] %v915
    %1096 = vst [vmem:[#allocation2 + $0x88] sm:$0xff] %v917
    %1097 = vst [vmem:[#allocation2 + $0x90] sm:$0xff] %v1061
    %1098 = vst [vmem:[#allocation2 + $0x98] sm:$0xff] %v1063
    %1099 = vst [vmem:[#allocation2 + $0xa0] sm:$0xff] %v919
    %1100 = vst [vmem:[#allocation2 + $0xa8] sm:$0xff] %v921
    %1101 = vst [vmem:[#allocation2 + $0xb0] sm:$0xff] %v1065
    %1102 = vst [vmem:[#allocation2 + $0xb8] sm:$0xff] %v1067
    %1103 = vst [vmem:[#allocation2 + $0xc0] sm:$0xff] %v925
    %1104 = vst [vmem:[#allocation2 + $0xc8] sm:$0xff] %v927
    %1105 = vst [vmem:[#allocation2 + $0xd0] sm:$0xff] %v1071
    %1106 = vst [vmem:[#allocation2 + $0xd8] sm:$0xff] %v1073
    %1107 = vst [vmem:[#allocation2 + $0xe0] sm:$0xff] %v929
    %1108 = vst [vmem:[#allocation2 + $0xe8] sm:$0xff] %v931
    %1109 = vst [vmem:[#allocation2 + $0xf0] sm:$0xff] %v1075
    %1110 = vst [vmem:[#allocation2 + $0xf8] sm:$0xff] %v1077
    %v1111 = vld [vmem:[%s6] sm:$0xf]
    %v1113 = vlaneseq
    %v1114 = vshrl.u32 %v1113, 7
    %v1115 = vsub.s32 0, %v1114
    %v1116 = vrot.slane %v1111, %v1115
    %v1117 = vlaneseq
    %v1118 = vshrl.u32 %v1117, 7
    %v1119 = vsub.s32 1, %v1118
    %v1120 = vrot.slane %v1111, %v1119
    %v1121 = vlaneseq
    %v1122 = vshrl.u32 %v1121, 7
    %v1123 = vsub.s32 2, %v1122
    %v1124 = vrot.slane %v1111, %v1123
    %v1125 = vlaneseq
    %v1126 = vshrl.u32 %v1125, 7
    %v1127 = vsub.s32 3, %v1126
    %v1128 = vrot.slane %v1111, %v1127
    %vm1133 = vcmp.gt.s32.totalorder %v108, 0
    %v1134 = vld [vmem:[#allocation2] sm:$0xff]
    %v1135 = vld [vmem:[#allocation2 + $0x8] sm:$0xff]
    %v1136 = vld [vmem:[#allocation2 + $0x10] sm:$0xff]
    %v1137 = vld [vmem:[#allocation2 + $0x18] sm:$0xff]
    %v1138 = vld [vmem:[#allocation8] sm:$0xff]
    %v1139 = vld [vmem:[#allocation8 + $0x8] sm:$0xff]
    %v1140 = vld [vmem:[#allocation8 + $0x10] sm:$0xff]
    %v1141 = vld [vmem:[#allocation8 + $0x18] sm:$0xff]
    %v1142 = vld [vmem:[#allocation8 + $0x20] sm:$0xff]
    %v1143 = vld [vmem:[#allocation8 + $0x28] sm:$0xff]
    %v1144 = vld [vmem:[#allocation8 + $0x30] sm:$0xff]
    %v1145 = vld [vmem:[#allocation8 + $0x38] sm:$0xff]
    %v1146 = vld [vmem:[#allocation8 + $0x40] sm:$0xff]
    %v1147 = vld [vmem:[#allocation8 + $0x48] sm:$0xff]
    %v1148 = vld [vmem:[#allocation8 + $0x50] sm:$0xff]
    %v1149 = vld [vmem:[#allocation8 + $0x58] sm:$0xff]
    %v1150 = vld [vmem:[#allocation8 + $0x60] sm:$0xff]
    %v1151 = vld [vmem:[#allocation8 + $0x68] sm:$0xff]
    %v1152 = vld [vmem:[#allocation8 + $0x70] sm:$0xff]
    %v1153 = vld [vmem:[#allocation8 + $0x78] sm:$0xff]
    %v1154 = vld [vmem:[#allocation8 + $0x80] sm:$0xff]
    %v1155 = vld [vmem:[#allocation8 + $0x88] sm:$0xff]
    %v1156 = vld [vmem:[#allocation8 + $0x90] sm:$0xff]
    %v1157 = vld [vmem:[#allocation8 + $0x98] sm:$0xff]
    %v1158 = vld [vmem:[#allocation8 + $0xa0] sm:$0xff]
    %v1159 = vld [vmem:[#allocation8 + $0xa8] sm:$0xff]
    %v1160 = vld [vmem:[#allocation8 + $0xb0] sm:$0xff]
    %v1161 = vld [vmem:[#allocation8 + $0xb8] sm:$0xff]
    %v1162 = vld [vmem:[#allocation8 + $0xc0] sm:$0xff]
    %v1163 = vld [vmem:[#allocation8 + $0xc8] sm:$0xff]
    %v1164 = vld [vmem:[#allocation8 + $0xd0] sm:$0xff]
    %v1165 = vld [vmem:[#allocation8 + $0xd8] sm:$0xff]
    %v1166 = vld [vmem:[#allocation8 + $0xe0] sm:$0xff]
    %v1167 = vld [vmem:[#allocation8 + $0xe8] sm:$0xff]
    %v1168 = vld [vmem:[#allocation8 + $0xf0] sm:$0xff]
    %v1169 = vld [vmem:[#allocation8 + $0xf8] sm:$0xff]
    %v1202 = vunpack.c.l.b16 %v1138
    %v1203 = vunpack.c.h.b16 %v1138
    %v1204 = vunpack.c.l.b16 %v1139
    %v1205 = vunpack.c.h.b16 %v1139
    %v1206 = vunpack.c.l.b16 %v1140
    %v1207 = vunpack.c.h.b16 %v1140
    %v1208 = vunpack.c.l.b16 %v1141
    %v1209 = vunpack.c.h.b16 %v1141
    %v1210 = vunpack.c.l.b16 %v1142
    %v1211 = vunpack.c.h.b16 %v1142
    %v1212 = vunpack.c.l.b16 %v1143
    %v1213 = vunpack.c.h.b16 %v1143
    %v1214 = vunpack.c.l.b16 %v1144
    %v1215 = vunpack.c.h.b16 %v1144
    %v1216 = vunpack.c.l.b16 %v1145
    %v1217 = vunpack.c.h.b16 %v1145
    %v1218 = vunpack.c.l.b16 %v1146
    %v1219 = vunpack.c.h.b16 %v1146
    %v1220 = vunpack.c.l.b16 %v1147
    %v1221 = vunpack.c.h.b16 %v1147
    %v1222 = vunpack.c.l.b16 %v1148
    %v1223 = vunpack.c.h.b16 %v1148
    %v1224 = vunpack.c.l.b16 %v1149
    %v1225 = vunpack.c.h.b16 %v1149
    %v1226 = vunpack.c.l.b16 %v1150
    %v1227 = vunpack.c.h.b16 %v1150
    %v1228 = vunpack.c.l.b16 %v1151
    %v1229 = vunpack.c.h.b16 %v1151
    %v1230 = vunpack.c.l.b16 %v1152
    %v1231 = vunpack.c.h.b16 %v1152
    %v1232 = vunpack.c.l.b16 %v1153
    %v1233 = vunpack.c.h.b16 %v1153
    %v1234 = vunpack.c.l.b16 %v1154
    %v1235 = vunpack.c.h.b16 %v1154
    %v1236 = vunpack.c.l.b16 %v1155
    %v1237 = vunpack.c.h.b16 %v1155
    %v1238 = vunpack.c.l.b16 %v1156
    %v1239 = vunpack.c.h.b16 %v1156
    %v1240 = vunpack.c.l.b16 %v1157
    %v1241 = vunpack.c.h.b16 %v1157
    %v1242 = vunpack.c.l.b16 %v1158
    %v1243 = vunpack.c.h.b16 %v1158
    %v1244 = vunpack.c.l.b16 %v1159
    %v1245 = vunpack.c.h.b16 %v1159
    %v1246 = vunpack.c.l.b16 %v1160
    %v1247 = vunpack.c.h.b16 %v1160
    %v1248 = vunpack.c.l.b16 %v1161
    %v1249 = vunpack.c.h.b16 %v1161
    %v1250 = vunpack.c.l.b16 %v1162
    %v1251 = vunpack.c.h.b16 %v1162
    %v1252 = vunpack.c.l.b16 %v1163
    %v1253 = vunpack.c.h.b16 %v1163
    %v1254 = vunpack.c.l.b16 %v1164
    %v1255 = vunpack.c.h.b16 %v1164
    %v1256 = vunpack.c.l.b16 %v1165
    %v1257 = vunpack.c.h.b16 %v1165
    %v1258 = vunpack.c.l.b16 %v1166
    %v1259 = vunpack.c.h.b16 %v1166
    %v1260 = vunpack.c.l.b16 %v1167
    %v1261 = vunpack.c.h.b16 %v1167
    %v1262 = vunpack.c.l.b16 %v1168
    %v1263 = vunpack.c.h.b16 %v1168
    %v1264 = vunpack.c.l.b16 %v1169
    %v1265 = vunpack.c.h.b16 %v1169
    %v1266 = vpack.c.b16 %v1206, %v1202
    %v1267 = vpack.c.b16 %v1207, %v1203
    %v1268 = vpack.c.b16 %v1208, %v1204
    %v1269 = vpack.c.b16 %v1209, %v1205
    %v1270 = vpack.c.b16 %v1214, %v1210
    %v1271 = vpack.c.b16 %v1215, %v1211
    %v1272 = vpack.c.b16 %v1216, %v1212
    %v1273 = vpack.c.b16 %v1217, %v1213
    %v1274 = vpack.c.b16 %v1222, %v1218
    %v1275 = vpack.c.b16 %v1223, %v1219
    %v1276 = vpack.c.b16 %v1224, %v1220
    %v1277 = vpack.c.b16 %v1225, %v1221
    %v1278 = vpack.c.b16 %v1230, %v1226
    %v1279 = vpack.c.b16 %v1231, %v1227
    %v1280 = vpack.c.b16 %v1232, %v1228
    %v1281 = vpack.c.b16 %v1233, %v1229
    %v1282 = vpack.c.b16 %v1238, %v1234
    %v1283 = vpack.c.b16 %v1239, %v1235
    %v1284 = vpack.c.b16 %v1240, %v1236
    %v1285 = vpack.c.b16 %v1241, %v1237
    %v1286 = vpack.c.b16 %v1246, %v1242
    %v1287 = vpack.c.b16 %v1247, %v1243
    %v1288 = vpack.c.b16 %v1248, %v1244
    %v1289 = vpack.c.b16 %v1249, %v1245
    %v1290 = vpack.c.b16 %v1254, %v1250
    %v1291 = vpack.c.b16 %v1255, %v1251
    %v1292 = vpack.c.b16 %v1256, %v1252
    %v1293 = vpack.c.b16 %v1257, %v1253
    %v1294 = vpack.c.b16 %v1262, %v1258
    %v1295 = vpack.c.b16 %v1263, %v1259
    %v1296 = vpack.c.b16 %v1264, %v1260
    %v1297 = vpack.c.b16 %v1265, %v1261
    %1330 = vmatprep.subr.bf16.mxu0 %v1267
    %1331 = vmatpush1.bf16.msra.mxu0 %v1266
    %1332 = vmatprep.subr.bf16.mxu0 %v1271
    %1333 = vmatpush1.bf16.msra.mxu0 %v1270
    %1334 = vmatprep.subr.bf16.mxu0 %v1275
    %1335 = vmatpush1.bf16.msra.mxu0 %v1274
    %1336 = vmatprep.subr.bf16.mxu0 %v1279
    %1337 = vmatpush1.bf16.msra.mxu0 %v1278
    %1338 = vmatprep.subr.bf16.mxu0 %v1283
    %1339 = vmatpush1.bf16.msra.mxu0 %v1282
    %1340 = vmatprep.subr.bf16.mxu0 %v1287
    %1341 = vmatpush1.bf16.msra.mxu0 %v1286
    %1342 = vmatprep.subr.bf16.mxu0 %v1291
    %1343 = vmatpush1.bf16.msra.mxu0 %v1290
    %1344 = vmatprep.subr.bf16.mxu0 %v1295
    %1345 = vmatpush1.bf16.msra.mxu0 %v1294
    %1346 = vmatprep.subr.bf16.mxu0 0
    %1347 = vmatpush1.bf16.msra.mxu0 0
    %1348 = vmatprep.subr.bf16.mxu0 0
    %1349 = vmatpush1.bf16.msra.mxu0 0
    %1350 = vmatprep.subr.bf16.mxu0 0
    %1351 = vmatpush1.bf16.msra.mxu0 0
    %1352 = vmatprep.subr.bf16.mxu0 0
    %1353 = vmatpush1.bf16.msra.mxu0 0
    %1354 = vmatprep.subr.bf16.mxu0 0
    %1355 = vmatpush1.bf16.msra.mxu0 0
    %1356 = vmatprep.subr.bf16.mxu0 0
    %1357 = vmatpush1.bf16.msra.mxu0 0
    %1358 = vmatprep.subr.bf16.mxu0 0
    %1359 = vmatpush1.bf16.msra.mxu0 0
    %1360 = vmatprep.subr.bf16.mxu0 0
    %1361 = vmatpush1.bf16.msra.mxu0 0
    %1362 = vmatprep.mubr.bf16.mxu0 0
    %1363 = vmatmul.mubr.bf16.gmra.mrb[0].mxu0 0
    %v1364 = vpop.f32.mrb[0].mxu0
    %v1365 = vadd.f32 0.0, %v1364
    %v1366 = vpop.f32.mrb[0].mxu0
    %v1367 = vadd.f32 0.0, %v1366
    %v1368 = vpop.f32.mrb[0].mxu0
    %v1369 = vpop.f32.mrb[0].mxu0
    %1370 = vdwg.mxu0
    %1371 = vmatprep.subr.bf16.mxu0 %v1269
    %1372 = vmatpush1.bf16.msra.mxu0 %v1268
    %1373 = vmatprep.subr.bf16.mxu0 %v1273
    %1374 = vmatpush1.bf16.msra.mxu0 %v1272
    %1375 = vmatprep.subr.bf16.mxu0 %v1277
    %1376 = vmatpush1.bf16.msra.mxu0 %v1276
    %1377 = vmatprep.subr.bf16.mxu0 %v1281
    %1378 = vmatpush1.bf16.msra.mxu0 %v1280
    %1379 = vmatprep.subr.bf16.mxu0 %v1285
    %1380 = vmatpush1.bf16.msra.mxu0 %v1284
    %1381 = vmatprep.subr.bf16.mxu0 %v1289
    %1382 = vmatpush1.bf16.msra.mxu0 %v1288
    %1383 = vmatprep.subr.bf16.mxu0 %v1293
    %1384 = vmatpush1.bf16.msra.mxu0 %v1292
    %1385 = vmatprep.subr.bf16.mxu0 %v1297
    %1386 = vmatpush1.bf16.msra.mxu0 %v1296
    %1387 = vmatprep.subr.bf16.mxu0 0
    %1388 = vmatpush1.bf16.msra.mxu0 0
    %1389 = vmatprep.subr.bf16.mxu0 0
    %1390 = vmatpush1.bf16.msra.mxu0 0
    %1391 = vmatprep.subr.bf16.mxu0 0
    %1392 = vmatpush1.bf16.msra.mxu0 0
    %1393 = vmatprep.subr.bf16.mxu0 0
    %1394 = vmatpush1.bf16.msra.mxu0 0
    %1395 = vmatprep.subr.bf16.mxu0 0
    %1396 = vmatpush1.bf16.msra.mxu0 0
    %1397 = vmatprep.subr.bf16.mxu0 0
    %1398 = vmatpush1.bf16.msra.mxu0 0
    %1399 = vmatprep.subr.bf16.mxu0 0
    %1400 = vmatpush1.bf16.msra.mxu0 0
    %1401 = vmatprep.subr.bf16.mxu0 0
    %1402 = vmatpush1.bf16.msra.mxu0 0
    %1403 = vmatprep.mubr.bf16.mxu0 0
    %1404 = vmatmul.mubr.bf16.gmra.mrb[0].mxu0 0
    %v1405 = vpop.f32.mrb[0].mxu0
    %v1406 = vadd.f32 0.0, %v1405
    %v1407 = vpop.f32.mrb[0].mxu0
    %v1408 = vadd.f32 0.0, %v1407
    %v1409 = vpop.f32.mrb[0].mxu0
    %v1410 = vpop.f32.mrb[0].mxu0
    %1411 = vdwg.mxu0
    %v1412 = vadd.f32 %v1134, %v1365
    %v1413 = vadd.f32 %v1135, %v1367
    %v1414 = vadd.f32 %v1136, %v1406
    %v1415 = vadd.f32 %v1137, %v1408
    %v1416 = vsub.f32 0.0, %v1412
    %v1417 = vmul.f32 %v1416, 1.442695
    %v1418 = vpow.pop %v1417
    %v1419 = vadd.f32 %v1418, 1.0
    %v1420 = vrcp.pop %v1419
    %v1421 = vsub.f32 0.0, %v1413
    %v1422 = vmul.f32 %v1421, 1.442695
    %v1423 = vpow.pop %v1422
    %v1424 = vadd.f32 %v1423, 1.0
    %v1425 = vrcp.pop %v1424
    %v1426 = vtanh.pop %v1414
    %v1427 = vsub.f32 0.0, %v1415
    %v1428 = vmul.f32 %v1427, 1.442695
    %v1429 = vpow.pop %v1428
    %v1430 = vadd.f32 %v1429, 1.0
    %v1431 = vrcp.pop %v1430
    %v1432 = vmul.f32 %v1425, 0.0
    %v1433 = vmul.f32 %v1420, %v1426
    %v1434 = vadd.f32 %v1432, %v1433
    %v1435 = vtanh.pop %v1434
    %v1436 = vmul.f32 %v1431, %v1435
    %v1437 = vsel %vm1133, 1, 0
    %1438 = vset.pattern.permute.xlu0 0
    %1439 = vperm.xlu0 %1438, %v1437
    %v1440 = vpop.permute.xlu0 %1439
    %vm1441 = vcmp.eq.s32.totalorder %v1440, 1
    %v1442 = vsel %vm1441, %v1436, 0.0
    %v1443 = vsel %vm1441, %v1434, 0.0
    %v1444 = vpack.c.bf16 %v1442, %v1442
    %v1445 = vpack.c.bf16 0.0, 0.0
    %v1446 = vld [vmem:[#allocation9] sm:$0xff]
    %v1447 = vld [vmem:[#allocation9 + $0x8] sm:$0xff]
    %v1448 = vld [vmem:[#allocation9 + $0x10] sm:$0xff]
    %v1449 = vld [vmem:[#allocation9 + $0x18] sm:$0xff]
    %v1450 = vld [vmem:[#allocation9 + $0x20] sm:$0xff]
    %v1451 = vld [vmem:[#allocation9 + $0x28] sm:$0xff]
    %v1452 = vld [vmem:[#allocation9 + $0x30] sm:$0xff]
    %v1453 = vld [vmem:[#allocation9 + $0x38] sm:$0xff]
    %v1454 = vld [vmem:[#allocation9 + $0x40] sm:$0xff]
    %v1455 = vld [vmem:[#allocation9 + $0x48] sm:$0xff]
    %v1456 = vld [vmem:[#allocation9 + $0x50] sm:$0xff]
    %v1457 = vld [vmem:[#allocation9 + $0x58] sm:$0xff]
    %v1458 = vld [vmem:[#allocation9 + $0x60] sm:$0xff]
    %v1459 = vld [vmem:[#allocation9 + $0x68] sm:$0xff]
    %v1460 = vld [vmem:[#allocation9 + $0x70] sm:$0xff]
    %v1461 = vld [vmem:[#allocation9 + $0x78] sm:$0xff]
    %v1462 = vld [vmem:[#allocation9 + $0x80] sm:$0xff]
    %v1463 = vld [vmem:[#allocation9 + $0x88] sm:$0xff]
    %v1464 = vld [vmem:[#allocation9 + $0x90] sm:$0xff]
    %v1465 = vld [vmem:[#allocation9 + $0x98] sm:$0xff]
    %v1466 = vld [vmem:[#allocation9 + $0xa0] sm:$0xff]
    %v1467 = vld [vmem:[#allocation9 + $0xa8] sm:$0xff]
    %v1468 = vld [vmem:[#allocation9 + $0xb0] sm:$0xff]
    %v1469 = vld [vmem:[#allocation9 + $0xb8] sm:$0xff]
    %v1470 = vld [vmem:[#allocation9 + $0xc0] sm:$0xff]
    %v1471 = vld [vmem:[#allocation9 + $0xc8] sm:$0xff]
    %v1472 = vld [vmem:[#allocation9 + $0xd0] sm:$0xff]
    %v1473 = vld [vmem:[#allocation9 + $0xd8] sm:$0xff]
    %v1474 = vld [vmem:[#allocation9 + $0xe0] sm:$0xff]
    %v1475 = vld [vmem:[#allocation9 + $0xe8] sm:$0xff]
    %v1476 = vld [vmem:[#allocation9 + $0xf0] sm:$0xff]
    %v1477 = vld [vmem:[#allocation9 + $0xf8] sm:$0xff]
    %v1478 = vld [vmem:[#allocation9 + $0x100] sm:$0xff]
    %v1479 = vld [vmem:[#allocation9 + $0x108] sm:$0xff]
    %v1480 = vld [vmem:[#allocation9 + $0x110] sm:$0xff]
    %v1481 = vld [vmem:[#allocation9 + $0x118] sm:$0xff]
    %v1482 = vld [vmem:[#allocation9 + $0x120] sm:$0xff]
    %v1483 = vld [vmem:[#allocation9 + $0x128] sm:$0xff]
    %v1484 = vld [vmem:[#allocation9 + $0x130] sm:$0xff]
    %v1485 = vld [vmem:[#allocation9 + $0x138] sm:$0xff]
    %v1486 = vld [vmem:[#allocation9 + $0x140] sm:$0xff]
    %v1487 = vld [vmem:[#allocation9 + $0x148] sm:$0xff]
    %v1488 = vld [vmem:[#allocation9 + $0x150] sm:$0xff]
    %v1489 = vld [vmem:[#allocation9 + $0x158] sm:$0xff]
    %v1490 = vld [vmem:[#allocation9 + $0x160] sm:$0xff]
    %v1491 = vld [vmem:[#allocation9 + $0x168] sm:$0xff]
    %v1492 = vld [vmem:[#allocation9 + $0x170] sm:$0xff]
    %v1493 = vld [vmem:[#allocation9 + $0x178] sm:$0xff]
    %v1494 = vld [vmem:[#allocation9 + $0x180] sm:$0xff]
    %v1495 = vld [vmem:[#allocation9 + $0x188] sm:$0xff]
    %v1496 = vld [vmem:[#allocation9 + $0x190] sm:$0xff]
    %v1497 = vld [vmem:[#allocation9 + $0x198] sm:$0xff]
    %v1498 = vld [vmem:[#allocation9 + $0x1a0] sm:$0xff]
    %v1499 = vld [vmem:[#allocation9 + $0x1a8] sm:$0xff]
    %v1500 = vld [vmem:[#allocation9 + $0x1b0] sm:$0xff]
    %v1501 = vld [vmem:[#allocation9 + $0x1b8] sm:$0xff]
    %v1502 = vld [vmem:[#allocation9 + $0x1c0] sm:$0xff]
    %v1503 = vld [vmem:[#allocation9 + $0x1c8] sm:$0xff]
    %v1504 = vld [vmem:[#allocation9 + $0x1d0] sm:$0xff]
    %v1505 = vld [vmem:[#allocation9 + $0x1d8] sm:$0xff]
    %v1506 = vld [vmem:[#allocation9 + $0x1e0] sm:$0xff]
    %v1507 = vld [vmem:[#allocation9 + $0x1e8] sm:$0xff]
    %v1508 = vld [vmem:[#allocation9 + $0x1f0] sm:$0xff]
    %v1509 = vld [vmem:[#allocation9 + $0x1f8] sm:$0xff]
    %v1574 = vunpack.c.l.b16 %v1446
    %v1575 = vunpack.c.h.b16 %v1446
    %v1576 = vunpack.c.l.b16 %v1447
    %v1577 = vunpack.c.h.b16 %v1447
    %v1578 = vunpack.c.l.b16 %v1448
    %v1579 = vunpack.c.h.b16 %v1448
    %v1580 = vunpack.c.l.b16 %v1449
    %v1581 = vunpack.c.h.b16 %v1449
    %v1582 = vunpack.c.l.b16 %v1450
    %v1583 = vunpack.c.h.b16 %v1450
    %v1584 = vunpack.c.l.b16 %v1451
    %v1585 = vunpack.c.h.b16 %v1451
    %v1586 = vunpack.c.l.b16 %v1452
    %v1587 = vunpack.c.h.b16 %v1452
    %v1588 = vunpack.c.l.b16 %v1453
    %v1589 = vunpack.c.h.b16 %v1453
    %v1590 = vunpack.c.l.b16 %v1454
    %v1591 = vunpack.c.h.b16 %v1454
    %v1592 = vunpack.c.l.b16 %v1455
    %v1593 = vunpack.c.h.b16 %v1455
    %v1594 = vunpack.c.l.b16 %v1456
    %v1595 = vunpack.c.h.b16 %v1456
    %v1596 = vunpack.c.l.b16 %v1457
    %v1597 = vunpack.c.h.b16 %v1457
    %v1598 = vunpack.c.l.b16 %v1458
    %v1599 = vunpack.c.h.b16 %v1458
    %v1600 = vunpack.c.l.b16 %v1459
    %v1601 = vunpack.c.h.b16 %v1459
    %v1602 = vunpack.c.l.b16 %v1460
    %v1603 = vunpack.c.h.b16 %v1460
    %v1604 = vunpack.c.l.b16 %v1461
    %v1605 = vunpack.c.h.b16 %v1461
    %v1606 = vunpack.c.l.b16 %v1462
    %v1607 = vunpack.c.h.b16 %v1462
    %v1608 = vunpack.c.l.b16 %v1463
    %v1609 = vunpack.c.h.b16 %v1463
    %v1610 = vunpack.c.l.b16 %v1464
    %v1611 = vunpack.c.h.b16 %v1464
    %v1612 = vunpack.c.l.b16 %v1465
    %v1613 = vunpack.c.h.b16 %v1465
    %v1614 = vunpack.c.l.b16 %v1466
    %v1615 = vunpack.c.h.b16 %v1466
    %v1616 = vunpack.c.l.b16 %v1467
    %v1617 = vunpack.c.h.b16 %v1467
    %v1618 = vunpack.c.l.b16 %v1468
    %v1619 = vunpack.c.h.b16 %v1468
    %v1620 = vunpack.c.l.b16 %v1469
    %v1621 = vunpack.c.h.b16 %v1469
    %v1622 = vunpack.c.l.b16 %v1470
    %v1623 = vunpack.c.h.b16 %v1470
    %v1624 = vunpack.c.l.b16 %v1471
    %v1625 = vunpack.c.h.b16 %v1471
    %v1626 = vunpack.c.l.b16 %v1472
    %v1627 = vunpack.c.h.b16 %v1472
    %v1628 = vunpack.c.l.b16 %v1473
    %v1629 = vunpack.c.h.b16 %v1473
    %v1630 = vunpack.c.l.b16 %v1474
    %v1631 = vunpack.c.h.b16 %v1474
    %v1632 = vunpack.c.l.b16 %v1475
    %v1633 = vunpack.c.h.b16 %v1475
    %v1634 = vunpack.c.l.b16 %v1476
    %v1635 = vunpack.c.h.b16 %v1476
    %v1636 = vunpack.c.l.b16 %v1477
    %v1637 = vunpack.c.h.b16 %v1477
    %v1638 = vunpack.c.l.b16 %v1478
    %v1639 = vunpack.c.h.b16 %v1478
    %v1640 = vunpack.c.l.b16 %v1479
    %v1641 = vunpack.c.h.b16 %v1479
    %v1642 = vunpack.c.l.b16 %v1480
    %v1643 = vunpack.c.h.b16 %v1480
    %v1644 = vunpack.c.l.b16 %v1481
    %v1645 = vunpack.c.h.b16 %v1481
    %v1646 = vunpack.c.l.b16 %v1482
    %v1647 = vunpack.c.h.b16 %v1482
    %v1648 = vunpack.c.l.b16 %v1483
    %v1649 = vunpack.c.h.b16 %v1483
    %v1650 = vunpack.c.l.b16 %v1484
    %v1651 = vunpack.c.h.b16 %v1484
    %v1652 = vunpack.c.l.b16 %v1485
    %v1653 = vunpack.c.h.b16 %v1485
    %v1654 = vunpack.c.l.b16 %v1486
    %v1655 = vunpack.c.h.b16 %v1486
    %v1656 = vunpack.c.l.b16 %v1487
    %v1657 = vunpack.c.h.b16 %v1487
    %v1658 = vunpack.c.l.b16 %v1488
    %v1659 = vunpack.c.h.b16 %v1488
    %v1660 = vunpack.c.l.b16 %v1489
    %v1661 = vunpack.c.h.b16 %v1489
    %v1662 = vunpack.c.l.b16 %v1490
    %v1663 = vunpack.c.h.b16 %v1490
    %v1664 = vunpack.c.l.b16 %v1491
    %v1665 = vunpack.c.h.b16 %v1491
    %v1666 = vunpack.c.l.b16 %v1492
    %v1667 = vunpack.c.h.b16 %v1492
    %v1668 = vunpack.c.l.b16 %v1493
    %v1669 = vunpack.c.h.b16 %v1493
    %v1670 = vunpack.c.l.b16 %v1494
    %v1671 = vunpack.c.h.b16 %v1494
    %v1672 = vunpack.c.l.b16 %v1495
    %v1673 = vunpack.c.h.b16 %v1495
    %v1674 = vunpack.c.l.b16 %v1496
    %v1675 = vunpack.c.h.b16 %v1496
    %v1676 = vunpack.c.l.b16 %v1497
    %v1677 = vunpack.c.h.b16 %v1497
    %v1678 = vunpack.c.l.b16 %v1498
    %v1679 = vunpack.c.h.b16 %v1498
    %v1680 = vunpack.c.l.b16 %v1499
    %v1681 = vunpack.c.h.b16 %v1499
    %v1682 = vunpack.c.l.b16 %v1500
    %v1683 = vunpack.c.h.b16 %v1500
    %v1684 = vunpack.c.l.b16 %v1501
    %v1685 = vunpack.c.h.b16 %v1501
    %v1686 = vunpack.c.l.b16 %v1502
    %v1687 = vunpack.c.h.b16 %v1502
    %v1688 = vunpack.c.l.b16 %v1503
    %v1689 = vunpack.c.h.b16 %v1503
    %v1690 = vunpack.c.l.b16 %v1504
    %v1691 = vunpack.c.h.b16 %v1504
    %v1692 = vunpack.c.l.b16 %v1505
    %v1693 = vunpack.c.h.b16 %v1505
    %v1694 = vunpack.c.l.b16 %v1506
    %v1695 = vunpack.c.h.b16 %v1506
    %v1696 = vunpack.c.l.b16 %v1507
    %v1697 = vunpack.c.h.b16 %v1507
    %v1698 = vunpack.c.l.b16 %v1508
    %v1699 = vunpack.c.h.b16 %v1508
    %v1700 = vunpack.c.l.b16 %v1509
    %v1701 = vunpack.c.h.b16 %v1509
    %v1702 = vpack.c.b16 %v1578, %v1574
    %v1703 = vpack.c.b16 %v1579, %v1575
    %v1704 = vpack.c.b16 %v1580, %v1576
    %v1705 = vpack.c.b16 %v1581, %v1577
    %v1706 = vpack.c.b16 %v1586, %v1582
    %v1707 = vpack.c.b16 %v1587, %v1583
    %v1708 = vpack.c.b16 %v1588, %v1584
    %v1709 = vpack.c.b16 %v1589, %v1585
    %v1710 = vpack.c.b16 %v1594, %v1590
    %v1711 = vpack.c.b16 %v1595, %v1591
    %v1712 = vpack.c.b16 %v1596, %v1592
    %v1713 = vpack.c.b16 %v1597, %v1593
    %v1714 = vpack.c.b16 %v1602, %v1598
    %v1715 = vpack.c.b16 %v1603, %v1599
    %v1716 = vpack.c.b16 %v1604, %v1600
    %v1717 = vpack.c.b16 %v1605, %v1601
    %v1718 = vpack.c.b16 %v1610, %v1606
    %v1719 = vpack.c.b16 %v1611, %v1607
    %v1720 = vpack.c.b16 %v1612, %v1608
    %v1721 = vpack.c.b16 %v1613, %v1609
    %v1722 = vpack.c.b16 %v1618, %v1614
    %v1723 = vpack.c.b16 %v1619, %v1615
    %v1724 = vpack.c.b16 %v1620, %v1616
    %v1725 = vpack.c.b16 %v1621, %v1617
    %v1726 = vpack.c.b16 %v1626, %v1622
    %v1727 = vpack.c.b16 %v1627, %v1623
    %v1728 = vpack.c.b16 %v1628, %v1624
    %v1729 = vpack.c.b16 %v1629, %v1625
    %v1730 = vpack.c.b16 %v1634, %v1630
    %v1731 = vpack.c.b16 %v1635, %v1631
    %v1732 = vpack.c.b16 %v1636, %v1632
    %v1733 = vpack.c.b16 %v1637, %v1633
    %v1734 = vpack.c.b16 %v1642, %v1638
    %v1735 = vpack.c.b16 %v1643, %v1639
    %v1736 = vpack.c.b16 %v1644, %v1640
    %v1737 = vpack.c.b16 %v1645, %v1641
    %v1738 = vpack.c.b16 %v1650, %v1646
    %v1739 = vpack.c.b16 %v1651, %v1647
    %v1740 = vpack.c.b16 %v1652, %v1648
    %v1741 = vpack.c.b16 %v1653, %v1649
    %v1742 = vpack.c.b16 %v1658, %v1654
    %v1743 = vpack.c.b16 %v1659, %v1655
    %v1744 = vpack.c.b16 %v1660, %v1656
    %v1745 = vpack.c.b16 %v1661, %v1657
    %v1746 = vpack.c.b16 %v1666, %v1662
    %v1747 = vpack.c.b16 %v1667, %v1663
    %v1748 = vpack.c.b16 %v1668, %v1664
    %v1749 = vpack.c.b16 %v1669, %v1665
    %v1750 = vpack.c.b16 %v1674, %v1670
    %v1751 = vpack.c.b16 %v1675, %v1671
    %v1752 = vpack.c.b16 %v1676, %v1672
    %v1753 = vpack.c.b16 %v1677, %v1673
    %v1754 = vpack.c.b16 %v1682, %v1678
    %v1755 = vpack.c.b16 %v1683, %v1679
    %v1756 = vpack.c.b16 %v1684, %v1680
    %v1757 = vpack.c.b16 %v1685, %v1681
    %v1758 = vpack.c.b16 %v1690, %v1686
    %v1759 = vpack.c.b16 %v1691, %v1687
    %v1760 = vpack.c.b16 %v1692, %v1688
    %v1761 = vpack.c.b16 %v1693, %v1689
    %v1762 = vpack.c.b16 %v1698, %v1694
    %v1763 = vpack.c.b16 %v1699, %v1695
    %v1764 = vpack.c.b16 %v1700, %v1696
    %v1765 = vpack.c.b16 %v1701, %v1697
    %1830 = vmatprep.subr.bf16.mxu0 %v1703
    %1831 = vmatpush1.bf16.msra.mxu0 %v1702
    %1832 = vmatprep.subr.bf16.mxu0 %v1707
    %1833 = vmatpush1.bf16.msra.mxu0 %v1706
    %1834 = vmatprep.subr.bf16.mxu0 %v1711
    %1835 = vmatpush1.bf16.msra.mxu0 %v1710
    %1836 = vmatprep.subr.bf16.mxu0 %v1715
    %1837 = vmatpush1.bf16.msra.mxu0 %v1714
    %1838 = vmatprep.subr.bf16.mxu0 %v1719
    %1839 = vmatpush1.bf16.msra.mxu0 %v1718
    %1840 = vmatprep.subr.bf16.mxu0 %v1723
    %1841 = vmatpush1.bf16.msra.mxu0 %v1722
    %1842 = vmatprep.subr.bf16.mxu0 %v1727
    %1843 = vmatpush1.bf16.msra.mxu0 %v1726
    %1844 = vmatprep.subr.bf16.mxu0 %v1731
    %1845 = vmatpush1.bf16.msra.mxu0 %v1730
    %1846 = vmatprep.subr.bf16.mxu0 %v1735
    %1847 = vmatpush1.bf16.msra.mxu0 %v1734
    %1848 = vmatprep.subr.bf16.mxu0 %v1739
    %1849 = vmatpush1.bf16.msra.mxu0 %v1738
    %1850 = vmatprep.subr.bf16.mxu0 %v1743
    %1851 = vmatpush1.bf16.msra.mxu0 %v1742
    %1852 = vmatprep.subr.bf16.mxu0 %v1747
    %1853 = vmatpush1.bf16.msra.mxu0 %v1746
    %1854 = vmatprep.subr.bf16.mxu0 %v1751
    %1855 = vmatpush1.bf16.msra.mxu0 %v1750
    %1856 = vmatprep.subr.bf16.mxu0 %v1755
    %1857 = vmatpush1.bf16.msra.mxu0 %v1754
    %1858 = vmatprep.subr.bf16.mxu0 %v1759
    %1859 = vmatpush1.bf16.msra.mxu0 %v1758
    %1860 = vmatprep.subr.bf16.mxu0 %v1763
    %1861 = vmatpush1.bf16.msra.mxu0 %v1762
    %1862 = vmatprep.mubr.bf16.mxu0 %v1445
    %1863 = vmatmul.mubr.bf16.gmra.mrb[0].mxu0 %v1444
    %v1864 = vpop.f32.mrb[0].mxu0
    %v1865 = vadd.f32 %v1116, %v1864
    %v1866 = vpop.f32.mrb[0].mxu0
    %v1867 = vadd.f32 %v1120, %v1866
    %v1868 = vpop.f32.mrb[0].mxu0
    %v1869 = vpop.f32.mrb[0].mxu0
    %1870 = vdwg.mxu0
    %1871 = vmatprep.subr.bf16.mxu0 %v1705
    %1872 = vmatpush1.bf16.msra.mxu0 %v1704
    %1873 = vmatprep.subr.bf16.mxu0 %v1709
    %1874 = vmatpush1.bf16.msra.mxu0 %v1708
    %1875 = vmatprep.subr.bf16.mxu0 %v1713
    %1876 = vmatpush1.bf16.msra.mxu0 %v1712
    %1877 = vmatprep.subr.bf16.mxu0 %v1717
    %1878 = vmatpush1.bf16.msra.mxu0 %v1716
    %1879 = vmatprep.subr.bf16.mxu0 %v1721
    %1880 = vmatpush1.bf16.msra.mxu0 %v1720
    %1881 = vmatprep.subr.bf16.mxu0 %v1725
    %1882 = vmatpush1.bf16.msra.mxu0 %v1724
    %1883 = vmatprep.subr.bf16.mxu0 %v1729
    %1884 = vmatpush1.bf16.msra.mxu0 %v1728
    %1885 = vmatprep.subr.bf16.mxu0 %v1733
    %1886 = vmatpush1.bf16.msra.mxu0 %v1732
    %1887 = vmatprep.subr.bf16.mxu0 %v1737
    %1888 = vmatpush1.bf16.msra.mxu0 %v1736
    %1889 = vmatprep.subr.bf16.mxu0 %v1741
    %1890 = vmatpush1.bf16.msra.mxu0 %v1740
    %1891 = vmatprep.subr.bf16.mxu0 %v1745
    %1892 = vmatpush1.bf16.msra.mxu0 %v1744
    %1893 = vmatprep.subr.bf16.mxu0 %v1749
    %1894 = vmatpush1.bf16.msra.mxu0 %v1748
    %1895 = vmatprep.subr.bf16.mxu0 %v1753
    %1896 = vmatpush1.bf16.msra.mxu0 %v1752
    %1897 = vmatprep.subr.bf16.mxu0 %v1757
    %1898 = vmatpush1.bf16.msra.mxu0 %v1756
    %1899 = vmatprep.subr.bf16.mxu0 %v1761
    %1900 = vmatpush1.bf16.msra.mxu0 %v1760
    %1901 = vmatprep.subr.bf16.mxu0 %v1765
    %1902 = vmatpush1.bf16.msra.mxu0 %v1764
    %1903 = vmatprep.mubr.bf16.mxu0 %v1445
    %1904 = vmatmul.mubr.bf16.gmra.mrb[0].mxu0 %v1444
    %v1905 = vpop.f32.mrb[0].mxu0
    %v1906 = vadd.f32 %v1124, %v1905
    %v1907 = vpop.f32.mrb[0].mxu0
    %v1908 = vadd.f32 %v1128, %v1907
    %v1909 = vpop.f32.mrb[0].mxu0
    %v1910 = vpop.f32.mrb[0].mxu0
    %1911 = vdwg.mxu0
    %v1912 = vsub.f32 0.0, %v1865
    %v1913 = vmul.f32 %v1912, 1.442695
    %v1914 = vpow.pop %v1913
    %v1915 = vadd.f32 %v1914, 1.0
    %v1916 = vrcp.pop %v1915
    %v1917 = vsub.f32 0.0, %v1867
    %v1918 = vmul.f32 %v1917, 1.442695
    %v1919 = vpow.pop %v1918
    %v1920 = vadd.f32 %v1919, 1.0
    %v1921 = vrcp.pop %v1920
    %v1922 = vtanh.pop %v1906
    %v1923 = vsub.f32 0.0, %v1908
    %v1924 = vmul.f32 %v1923, 1.442695
    %v1925 = vpow.pop %v1924
    %v1926 = vadd.f32 %v1925, 1.0
    %v1927 = vrcp.pop %v1926
    %v1928 = vmul.f32 %v1921, 0.0
    %v1929 = vmul.f32 %v1916, %v1922
    %v1930 = vadd.f32 %v1928, %v1929
    %v1931 = vtanh.pop %v1930
    %v1932 = vmul.f32 %v1927, %v1931
    %v1933 = vsel %vm1441, %v1932, 0.0
    %v1934 = vsel %vm1441, %v1930, 0.0
    %1935 = vst [vmem:[#allocation12] sm:$0xff] %v1933
    %vm1936 = vcmp.gt.s32.totalorder %v108, 1
    %v1937 = vld [vmem:[#allocation2 + $0x20] sm:$0xff]
    %v1938 = vld [vmem:[#allocation2 + $0x28] sm:$0xff]
    %v1939 = vld [vmem:[#allocation2 + $0x30] sm:$0xff]
    %v1940 = vld [vmem:[#allocation2 + $0x38] sm:$0xff]
    %v1941 = vld [vmem:[#allocation8] sm:$0xff]
    %v1942 = vld [vmem:[#allocation8 + $0x8] sm:$0xff]
    %v1943 = vld [vmem:[#allocation8 + $0x10] sm:$0xff]
    %v1944 = vld [vmem:[#allocation8 + $0x18] sm:$0xff]
    %v1945 = vld [vmem:[#allocation8 + $0x20] sm:$0xff]
    %v1946 = vld [vmem:[#allocation8 + $0x28] sm:$0xff]
    %v1947 = vld [vmem:[#allocation8 + $0x30] sm:$0xff]
    %v1948 = vld [vmem:[#allocation8 + $0x38] sm:$0xff]
    %v1949 = vld [vmem:[#allocation8 + $0x40] sm:$0xff]
    %v1950 = vld [vmem:[#allocation8 + $0x48] sm:$0xff]
    %v1951 = vld [vmem:[#allocation8 + $0x50] sm:$0xff]
    %v1952 = vld [vmem:[#allocation8 + $0x58] sm:$0xff]
    %v1953 = vld [vmem:[#allocation8 + $0x60] sm:$0xff]
    %v1954 = vld [vmem:[#allocation8 + $0x68] sm:$0xff]
    %v1955 = vld [vmem:[#allocation8 + $0x70] sm:$0xff]
    %v1956 = vld [vmem:[#allocation8 + $0x78] sm:$0xff]
    %v1957 = vld [vmem:[#allocation8 + $0x80] sm:$0xff]
    %v1958 = vld [vmem:[#allocation8 + $0x88] sm:$0xff]
    %v1959 = vld [vmem:[#allocation8 + $0x90] sm:$0xff]
    %v1960 = vld [vmem:[#allocation8 + $0x98] sm:$0xff]
    %v1961 = vld [vmem:[#allocation8 + $0xa0] sm:$0xff]
    %v1962 = vld [vmem:[#allocation8 + $0xa8] sm:$0xff]
    %v1963 = vld [vmem:[#allocation8 + $0xb0] sm:$0xff]
    %v1964 = vld [vmem:[#allocation8 + $0xb8] sm:$0xff]
    %v1965 = vld [vmem:[#allocation8 + $0xc0] sm:$0xff]
    %v1966 = vld [vmem:[#allocation8 + $0xc8] sm:$0xff]
    %v1967 = vld [vmem:[#allocation8 + $0xd0] sm:$0xff]
    %v1968 = vld [vmem:[#allocation8 + $0xd8] sm:$0xff]
    %v1969 = vld [vmem:[#allocation8 + $0xe0] sm:$0xff]
    %v1970 = vld [vmem:[#allocation8 + $0xe8] sm:$0xff]
    %v1971 = vld [vmem:[#allocation8 + $0xf0] sm:$0xff]
    %v1972 = vld [vmem:[#allocation8 + $0xf8] sm:$0xff]
    %v2005 = vunpack.c.l.b16 %v1941
    %v2006 = vunpack.c.h.b16 %v1941
    %v2007 = vunpack.c.l.b16 %v1942
    %v2008 = vunpack.c.h.b16 %v1942
    %v2009 = vunpack.c.l.b16 %v1943
    %v2010 = vunpack.c.h.b16 %v1943
    %v2011 = vunpack.c.l.b16 %v1944
    %v2012 = vunpack.c.h.b16 %v1944
    %v2013 = vunpack.c.l.b16 %v1945
    %v2014 = vunpack.c.h.b16 %v1945
    %v2015 = vunpack.c.l.b16 %v1946
    %v2016 = vunpack.c.h.b16 %v1946
    %v2017 = vunpack.c.l.b16 %v1947
    %v2018 = vunpack.c.h.b16 %v1947
    %v2019 = vunpack.c.l.b16 %v1948
    %v2020 = vunpack.c.h.b16 %v1948
    %v2021 = vunpack.c.l.b16 %v1949
    %v2022 = vunpack.c.h.b16 %v1949
    %v2023 = vunpack.c.l.b16 %v1950
    %v2024 = vunpack.c.h.b16 %v1950
    %v2025 = vunpack.c.l.b16 %v1951
    %v2026 = vunpack.c.h.b16 %v1951
    %v2027 = vunpack.c.l.b16 %v1952
    %v2028 = vunpack.c.h.b16 %v1952
    %v2029 = vunpack.c.l.b16 %v1953
    %v2030 = vunpack.c.h.b16 %v1953
    %v2031 = vunpack.c.l.b16 %v1954
    %v2032 = vunpack.c.h.b16 %v1954
    %v2033 = vunpack.c.l.b16 %v1955
    %v2034 = vunpack.c.h.b16 %v1955
    %v2035 = vunpack.c.l.b16 %v1956
    %v2036 = vunpack.c.h.b16 %v1956
    %v2037 = vunpack.c.l.b16 %v1957
    %v2038 = vunpack.c.h.b16 %v1957
    %v2039 = vunpack.c.l.b16 %v1958
    %v2040 = vunpack.c.h.b16 %v1958
    %v2041 = vunpack.c.l.b16 %v1959
    %v2042 = vunpack.c.h.b16 %v1959
    %v2043 = vunpack.c.l.b16 %v1960
    %v2044 = vunpack.c.h.b16 %v1960
    %v2045 = vunpack.c.l.b16 %v1961
    %v2046 = vunpack.c.h.b16 %v1961
    %v2047 = vunpack.c.l.b16 %v1962
    %v2048 = vunpack.c.h.b16 %v1962
    %v2049 = vunpack.c.l.b16 %v1963
    %v2050 = vunpack.c.h.b16 %v1963
    %v2051 = vunpack.c.l.b16 %v1964
    %v2052 = vunpack.c.h.b16 %v1964
    %v2053 = vunpack.c.l.b16 %v1965
    %v2054 = vunpack.c.h.b16 %v1965
    %v2055 = vunpack.c.l.b16 %v1966
    %v2056 = vunpack.c.h.b16 %v1966
    %v2057 = vunpack.c.l.b16 %v1967
    %v2058 = vunpack.c.h.b16 %v1967
    %v2059 = vunpack.c.l.b16 %v1968
    %v2060 = vunpack.c.h.b16 %v1968
    %v2061 = vunpack.c.l.b16 %v1969
    %v2062 = vunpack.c.h.b16 %v1969
    %v2063 = vunpack.c.l.b16 %v1970
    %v2064 = vunpack.c.h.b16 %v1970
    %v2065 = vunpack.c.l.b16 %v1971
    %v2066 = vunpack.c.h.b16 %v1971
    %v2067 = vunpack.c.l.b16 %v1972
    %v2068 = vunpack.c.h.b16 %v1972
    %v2069 = vpack.c.b16 %v2009, %v2005
    %v2070 = vpack.c.b16 %v2010, %v2006
    %v2071 = vpack.c.b16 %v2011, %v2007
    %v2072 = vpack.c.b16 %v2012, %v2008
    %v2073 = vpack.c.b16 %v2017, %v2013
    %v2074 = vpack.c.b16 %v2018, %v2014
    %v2075 = vpack.c.b16 %v2019, %v2015
    %v2076 = vpack.c.b16 %v2020, %v2016
    %v2077 = vpack.c.b16 %v2025, %v2021
    %v2078 = vpack.c.b16 %v2026, %v2022
    %v2079 = vpack.c.b16 %v2027, %v2023
    %v2080 = vpack.c.b16 %v2028, %v2024
    %v2081 = vpack.c.b16 %v2033, %v2029
    %v2082 = vpack.c.b16 %v2034, %v2030
    %v2083 = vpack.c.b16 %v2035, %v2031
    %v2084 = vpack.c.b16 %v2036, %v2032
    %v2085 = vpack.c.b16 %v2041, %v2037
    %v2086 = vpack.c.b16 %v2042, %v2038
    %v2087 = vpack.c.b16 %v2043, %v2039
    %v2088 = vpack.c.b16 %v2044, %v2040
    %v2089 = vpack.c.b16 %v2049, %v2045
    %v2090 = vpack.c.b16 %v2050, %v2046
    %v2091 = vpack.c.b16 %v2051, %v2047
    %v2092 = vpack.c.b16 %v2052, %v2048
    %v2093 = vpack.c.b16 %v2057, %v2053
    %v2094 = vpack.c.b16 %v2058, %v2054
    %v2095 = vpack.c.b16 %v2059, %v2055
    %v2096 = vpack.c.b16 %v2060, %v2056
    %v2097 = vpack.c.b16 %v2065, %v2061
    %v2098 = vpack.c.b16 %v2066, %v2062
    %v2099 = vpack.c.b16 %v2067, %v2063
    %v2100 = vpack.c.b16 %v2068, %v2064
    %2133 = vmatprep.subr.bf16.mxu0 %v2070
    %2134 = vmatpush1.bf16.msra.mxu0 %v2069
    %2135 = vmatprep.subr.bf16.mxu0 %v2074
    %2136 = vmatpush1.bf16.msra.mxu0 %v2073
    %2137 = vmatprep.subr.bf16.mxu0 %v2078
    %2138 = vmatpush1.bf16.msra.mxu0 %v2077
    %2139 = vmatprep.subr.bf16.mxu0 %v2082
    %2140 = vmatpush1.bf16.msra.mxu0 %v2081
    %2141 = vmatprep.subr.bf16.mxu0 %v2086
    %2142 = vmatpush1.bf16.msra.mxu0 %v2085
    %2143 = vmatprep.subr.bf16.mxu0 %v2090
    %2144 = vmatpush1.bf16.msra.mxu0 %v2089
    %2145 = vmatprep.subr.bf16.mxu0 %v2094
    %2146 = vmatpush1.bf16.msra.mxu0 %v2093
    %2147 = vmatprep.subr.bf16.mxu0 %v2098
    %2148 = vmatpush1.bf16.msra.mxu0 %v2097
    %2149 = vmatprep.subr.bf16.mxu0 0
    %2150 = vmatpush1.bf16.msra.mxu0 0
    %2151 = vmatprep.subr.bf16.mxu0 0
    %2152 = vmatpush1.bf16.msra.mxu0 0
    %2153 = vmatprep.subr.bf16.mxu0 0
    %2154 = vmatpush1.bf16.msra.mxu0 0
    %2155 = vmatprep.subr.bf16.mxu0 0
    %2156 = vmatpush1.bf16.msra.mxu0 0
    %2157 = vmatprep.subr.bf16.mxu0 0
    %2158 = vmatpush1.bf16.msra.mxu0 0
    %2159 = vmatprep.subr.bf16.mxu0 0
    %2160 = vmatpush1.bf16.msra.mxu0 0
    %2161 = vmatprep.subr.bf16.mxu0 0
    %2162 = vmatpush1.bf16.msra.mxu0 0
    %2163 = vmatprep.subr.bf16.mxu0 0
    %2164 = vmatpush1.bf16.msra.mxu0 0
    %2165 = vmatprep.mubr.bf16.mxu0 0
    %2166 = vmatmul.mubr.bf16.gmra.mrb[0].mxu0 %v1444
    %v2167 = vpop.f32.mrb[0].mxu0
    %v2168 = vadd.f32 0.0, %v2167
    %v2169 = vpop.f32.mrb[0].mxu0
    %v2170 = vadd.f32 0.0, %v2169
    %v2171 = vpop.f32.mrb[0].mxu0
    %v2172 = vpop.f32.mrb[0].mxu0
    %2173 = vdwg.mxu0
    %2174 = vmatprep.subr.bf16.mxu0 %v2072
    %2175 = vmatpush1.bf16.msra.mxu0 %v2071
    %2176 = vmatprep.subr.bf16.mxu0 %v2076
    %2177 = vmatpush1.bf16.msra.mxu0 %v2075
    %2178 = vmatprep.subr.bf16.mxu0 %v2080
    %2179 = vmatpush1.bf16.msra.mxu0 %v2079
    %2180 = vmatprep.subr.bf16.mxu0 %v2084
    %2181 = vmatpush1.bf16.msra.mxu0 %v2083
    %2182 = vmatprep.subr.bf16.mxu0 %v2088
    %2183 = vmatpush1.bf16.msra.mxu0 %v2087
    %2184 = vmatprep.subr.bf16.mxu0 %v2092
    %2185 = vmatpush1.bf16.msra.mxu0 %v2091
    %2186 = vmatprep.subr.bf16.mxu0 %v2096
    %2187 = vmatpush1.bf16.msra.mxu0 %v2095
    %2188 = vmatprep.subr.bf16.mxu0 %v2100
    %2189 = vmatpush1.bf16.msra.mxu0 %v2099
    %2190 = vmatprep.subr.bf16.mxu0 0
    %2191 = vmatpush1.bf16.msra.mxu0 0
    %2192 = vmatprep.subr.bf16.mxu0 0
    %2193 = vmatpush1.bf16.msra.mxu0 0
    %2194 = vmatprep.subr.bf16.mxu0 0
    %2195 = vmatpush1.bf16.msra.mxu0 0
    %2196 = vmatprep.subr.bf16.mxu0 0
    %2197 = vmatpush1.bf16.msra.mxu0 0
    %2198 = vmatprep.subr.bf16.mxu0 0
    %2199 = vmatpush1.bf16.msra.mxu0 0
    %2200 = vmatprep.subr.bf16.mxu0 0
    %2201 = vmatpush1.bf16.msra.mxu0 0
    %2202 = vmatprep.subr.bf16.mxu0 0
    %2203 = vmatpush1.bf16.msra.mxu0 0
    %2204 = vmatprep.subr.bf16.mxu0 0
    %2205 = vmatpush1.bf16.msra.mxu0 0
    %2206 = vmatprep.mubr.bf16.mxu0 0
    %2207 = vmatmul.mubr.bf16.gmra.mrb[0].mxu0 %v1444
    %v2208 = vpop.f32.mrb[0].mxu0
    %v2209 = vadd.f32 0.0, %v2208
    %v2210 = vpop.f32.mrb[0].mxu0
    %v2211 = vadd.f32 0.0, %v2210
    %v2212 = vpop.f32.mrb[0].mxu0
    %v2213 = vpop.f32.mrb[0].mxu0
    %2214 = vdwg.mxu0
    %v2215 = vadd.f32 %v1937, %v2168
    %v2216 = vadd.f32 %v1938, %v2170
    %v2217 = vadd.f32 %v1939, %v2209
    %v2218 = vadd.f32 %v1940, %v2211
    %v2219 = vsub.f32 0.0, %v2215
    %v2220 = vmul.f32 %v2219, 1.442695
    %v2221 = vpow.pop %v2220
    %v2222 = vadd.f32 %v2221, 1.0
    %v2223 = vrcp.pop %v2222
    %v2224 = vsub.f32 0.0, %v2216
    %v2225 = vmul.f32 %v2224, 1.442695
    %v2226 = vpow.pop %v2225
    %v2227 = vadd.f32 %v2226, 1.0
    %v2228 = vrcp.pop %v2227
    %v2229 = vtanh.pop %v2217
    %v2230 = vsub.f32 0.0, %v2218
    %v2231 = vmul.f32 %v2230, 1.442695
    %v2232 = vpow.pop %v2231
    %v2233 = vadd.f32 %v2232, 1.0
    %v2234 = vrcp.pop %v2233
    %v2235 = vmul.f32 %v2228, %v1443
    %v2236 = vmul.f32 %v2223, %v2229
    %v2237 = vadd.f32 %v2235, %v2236
    %v2238 = vtanh.pop %v2237
    %v2239 = vmul.f32 %v2234, %v2238
    %v2240 = vsel %vm1936, 1, 0
    %2241 = vset.pattern.permute.xlu0 0
    %2242 = vperm.xlu0 %2241, %v2240
    %v2243 = vpop.permute.xlu0 %2242
    %vm2244 = vcmp.eq.s32.totalorder %v2243, 1
    %v2245 = vsel %vm2244, %v2239, %v1442
    %v2246 = vsel %vm2244, %v2237, %v1443
    %v2247 = vpack.c.bf16 %v2245, %v2245
    %v2248 = vpack.c.bf16 %v1933, %v1933
    %v2249 = vld [vmem:[#allocation9] sm:$0xff]
    %v2250 = vld [vmem:[#allocation9 + $0x8] sm:$0xff]
    %v2251 = vld [vmem:[#allocation9 + $0x10] sm:$0xff]
    %v2252 = vld [vmem:[#allocation9 + $0x18] sm:$0xff]
    %v2253 = vld [vmem:[#allocation9 + $0x20] sm:$0xff]
    %v2254 = vld [vmem:[#allocation9 + $0x28] sm:$0xff]
    %v2255 = vld [vmem:[#allocation9 + $0x30] sm:$0xff]
    %v2256 = vld [vmem:[#allocation9 + $0x38] sm:$0xff]
    %v2257 = vld [vmem:[#allocation9 + $0x40] sm:$0xff]
    %v2258 = vld [vmem:[#allocation9 + $0x48] sm:$0xff]
    %v2259 = vld [vmem:[#allocation9 + $0x50] sm:$0xff]
    %v2260 = vld [vmem:[#allocation9 + $0x58] sm:$0xff]
    %v2261 = vld [vmem:[#allocation9 + $0x60] sm:$0xff]
    %v2262 = vld [vmem:[#allocation9 + $0x68] sm:$0xff]
    %v2263 = vld [vmem:[#allocation9 + $0x70] sm:$0xff]
    %v2264 = vld [vmem:[#allocation9 + $0x78] sm:$0xff]
    %v2265 = vld [vmem:[#allocation9 + $0x80] sm:$0xff]
    %v2266 = vld [vmem:[#allocation9 + $0x88] sm:$0xff]
    %v2267 = vld [vmem:[#allocation9 + $0x90] sm:$0xff]
    %v2268 = vld [vmem:[#allocation9 + $0x98] sm:$0xff]
    %v2269 = vld [vmem:[#allocation9 + $0xa0] sm:$0xff]
    %v2270 = vld [vmem:[#allocation9 + $0xa8] sm:$0xff]
    %v2271 = vld [vmem:[#allocation9 + $0xb0] sm:$0xff]
    %v2272 = vld [vmem:[#allocation9 + $0xb8] sm:$0xff]
    %v2273 = vld [vmem:[#allocation9 + $0xc0] sm:$0xff]
    %v2274 = vld [vmem:[#allocation9 + $0xc8] sm:$0xff]
    %v2275 = vld [vmem:[#allocation9 + $0xd0] sm:$0xff]
    %v2276 = vld [vmem:[#allocation9 + $0xd8] sm:$0xff]
    %v2277 = vld [vmem:[#allocation9 + $0xe0] sm:$0xff]
    %v2278 = vld [vmem:[#allocation9 + $0xe8] sm:$0xff]
    %v2279 = vld [vmem:[#allocation9 + $0xf0] sm:$0xff]
    %v2280 = vld [vmem:[#allocation9 + $0xf8] sm:$0xff]
    %v2281 = vld [vmem:[#allocation9 + $0x100] sm:$0xff]
    %v2282 = vld [vmem:[#allocation9 + $0x108] sm:$0xff]
    %v2283 = vld [vmem:[#allocation9 + $0x110] sm:$0xff]
    %v2284 = vld [vmem:[#allocation9 + $0x118] sm:$0xff]
    %v2285 = vld [vmem:[#allocation9 + $0x120] sm:$0xff]
    %v2286 = vld [vmem:[#allocation9 + $0x128] sm:$0xff]
    %v2287 = vld [vmem:[#allocation9 + $0x130] sm:$0xff]
    %v2288 = vld [vmem:[#allocation9 + $0x138] sm:$0xff]
    %v2289 = vld [vmem:[#allocation9 + $0x140] sm:$0xff]
    %v2290 = vld [vmem:[#allocation9 + $0x148] sm:$0xff]
    %v2291 = vld [vmem:[#allocation9 + $0x150] sm:$0xff]
    %v2292 = vld [vmem:[#allocation9 + $0x158] sm:$0xff]
    %v2293 = vld [vmem:[#allocation9 + $0x160] sm:$0xff]
    %v2294 = vld [vmem:[#allocation9 + $0x168] sm:$0xff]
    %v2295 = vld [vmem:[#allocation9 + $0x170] sm:$0xff]
    %v2296 = vld [vmem:[#allocation9 + $0x178] sm:$0xff]
    %v2297 = vld [vmem:[#allocation9 + $0x180] sm:$0xff]
    %v2298 = vld [vmem:[#allocation9 + $0x188] sm:$0xff]
    %v2299 = vld [vmem:[#allocation9 + $0x190] sm:$0xff]
    %v2300 = vld [vmem:[#allocation9 + $0x198] sm:$0xff]
    %v2301 = vld [vmem:[#allocation9 + $0x1a0] sm:$0xff]
    %v2302 = vld [vmem:[#allocation9 + $0x1a8] sm:$0xff]
    %v2303 = vld [vmem:[#allocation9 + $0x1b0] sm:$0xff]
    %v2304 = vld [vmem:[#allocation9 + $0x1b8] sm:$0xff]
    %v2305 = vld [vmem:[#allocation9 + $0x1c0] sm:$0xff]
    %v2306 = vld [vmem:[#allocation9 + $0x1c8] sm:$0xff]
    %v2307 = vld [vmem:[#allocation9 + $0x1d0] sm:$0xff]
    %v2308 = vld [vmem:[#allocation9 + $0x1d8] sm:$0xff]
    %v2309 = vld [vmem:[#allocation9 + $0x1e0] sm:$0xff]
    %v2310 = vld [vmem:[#allocation9 + $0x1e8] sm:$0xff]
    %v2311 = vld [vmem:[#allocation9 + $0x1f0] sm:$0xff]
    %v2312 = vld [vmem:[#allocation9 + $0x1f8] sm:$0xff]
    %v2377 = vunpack.c.l.b16 %v2249
    %v2378 = vunpack.c.h.b16 %v2249
    %v2379 = vunpack.c.l.b16 %v2250
    %v2380 = vunpack.c.h.b16 %v2250
    %v2381 = vunpack.c.l.b16 %v2251
    %v2382 = vunpack.c.h.b16 %v2251
    %v2383 = vunpack.c.l.b16 %v2252
    %v2384 = vunpack.c.h.b16 %v2252
    %v2385 = vunpack.c.l.b16 %v2253
    %v2386 = vunpack.c.h.b16 %v2253
    %v2387 = vunpack.c.l.b16 %v2254
    %v2388 = vunpack.c.h.b16 %v2254
    %v2389 = vunpack.c.l.b16 %v2255
    %v2390 = vunpack.c.h.b16 %v2255
    %v2391 = vunpack.c.l.b16 %v2256
    %v2392 = vunpack.c.h.b16 %v2256
    %v2393 = vunpack.c.l.b16 %v2257
    %v2394 = vunpack.c.h.b16 %v2257
    %v2395 = vunpack.c.l.b16 %v2258
    %v2396 = vunpack.c.h.b16 %v2258
    %v2397 = vunpack.c.l.b16 %v2259
    %v2398 = vunpack.c.h.b16 %v2259
    %v2399 = vunpack.c.l.b16 %v2260
    %v2400 = vunpack.c.h.b16 %v2260
    %v2401 = vunpack.c.l.b16 %v2261
    %v2402 = vunpack.c.h.b16 %v2261
    %v2403 = vunpack.c.l.b16 %v2262
    %v2404 = vunpack.c.h.b16 %v2262
    %v2405 = vunpack.c.l.b16 %v2263
    %v2406 = vunpack.c.h.b16 %v2263
    %v2407 = vunpack.c.l.b16 %v2264
    %v2408 = vunpack.c.h.b16 %v2264
    %v2409 = vunpack.c.l.b16 %v2265
    %v2410 = vunpack.c.h.b16 %v2265
    %v2411 = vunpack.c.l.b16 %v2266
    %v2412 = vunpack.c.h.b16 %v2266
    %v2413 = vunpack.c.l.b16 %v2267
    %v2414 = vunpack.c.h.b16 %v2267
    %v2415 = vunpack.c.l.b16 %v2268
    %v2416 = vunpack.c.h.b16 %v2268
    %v2417 = vunpack.c.l.b16 %v2269
    %v2418 = vunpack.c.h.b16 %v2269
    %v2419 = vunpack.c.l.b16 %v2270
    %v2420 = vunpack.c.h.b16 %v2270
    %v2421 = vunpack.c.l.b16 %v2271
    %v2422 = vunpack.c.h.b16 %v2271
    %v2423 = vunpack.c.l.b16 %v2272
    %v2424 = vunpack.c.h.b16 %v2272
    %v2425 = vunpack.c.l.b16 %v2273
    %v2426 = vunpack.c.h.b16 %v2273
    %v2427 = vunpack.c.l.b16 %v2274
    %v2428 = vunpack.c.h.b16 %v2274
    %v2429 = vunpack.c.l.b16 %v2275
    %v2430 = vunpack.c.h.b16 %v2275
    %v2431 = vunpack.c.l.b16 %v2276
    %v2432 = vunpack.c.h.b16 %v2276
    %v2433 = vunpack.c.l.b16 %v2277
    %v2434 = vunpack.c.h.b16 %v2277
    %v2435 = vunpack.c.l.b16 %v2278
    %v2436 = vunpack.c.h.b16 %v2278
    %v2437 = vunpack.c.l.b16 %v2279
    %v2438 = vunpack.c.h.b16 %v2279
    %v2439 = vunpack.c.l.b16 %v2280
    %v2440 = vunpack.c.h.b16 %v2280
    %v2441 = vunpack.c.l.b16 %v2281
    %v2442 = vunpack.c.h.b16 %v2281
    %v2443 = vunpack.c.l.b16 %v2282
    %v2444 = vunpack.c.h.b16 %v2282
    %v2445 = vunpack.c.l.b16 %v2283
    %v2446 = vunpack.c.h.b16 %v2283
    %v2447 = vunpack.c.l.b16 %v2284
    %v2448 = vunpack.c.h.b16 %v2284
    %v2449 = vunpack.c.l.b16 %v2285
    %v2450 = vunpack.c.h.b16 %v2285
    %v2451 = vunpack.c.l.b16 %v2286
    %v2452 = vunpack.c.h.b16 %v2286
    %v2453 = vunpack.c.l.b16 %v2287
    %v2454 = vunpack.c.h.b16 %v2287
    %v2455 = vunpack.c.l.b16 %v2288
    %v2456 = vunpack.c.h.b16 %v2288
    %v2457 = vunpack.c.l.b16 %v2289
    %v2458 = vunpack.c.h.b16 %v2289
    %v2459 = vunpack.c.l.b16 %v2290
    %v2460 = vunpack.c.h.b16 %v2290
    %v2461 = vunpack.c.l.b16 %v2291
    %v2462 = vunpack.c.h.b16 %v2291
    %v2463 = vunpack.c.l.b16 %v2292
    %v2464 = vunpack.c.h.b16 %v2292
    %v2465 = vunpack.c.l.b16 %v2293
    %v2466 = vunpack.c.h.b16 %v2293
    %v2467 = vunpack.c.l.b16 %v2294
    %v2468 = vunpack.c.h.b16 %v2294
    %v2469 = vunpack.c.l.b16 %v2295
    %v2470 = vunpack.c.h.b16 %v2295
    %v2471 = vunpack.c.l.b16 %v2296
    %v2472 = vunpack.c.h.b16 %v2296
    %v2473 = vunpack.c.l.b16 %v2297
    %v2474 = vunpack.c.h.b16 %v2297
    %v2475 = vunpack.c.l.b16 %v2298
    %v2476 = vunpack.c.h.b16 %v2298
    %v2477 = vunpack.c.l.b16 %v2299
    %v2478 = vunpack.c.h.b16 %v2299
    %v2479 = vunpack.c.l.b16 %v2300
    %v2480 = vunpack.c.h.b16 %v2300
    %v2481 = vunpack.c.l.b16 %v2301
    %v2482 = vunpack.c.h.b16 %v2301
    %v2483 = vunpack.c.l.b16 %v2302
    %v2484 = vunpack.c.h.b16 %v2302
    %v2485 = vunpack.c.l.b16 %v2303
    %v2486 = vunpack.c.h.b16 %v2303
    %v2487 = vunpack.c.l.b16 %v2304
    %v2488 = vunpack.c.h.b16 %v2304
    %v2489 = vunpack.c.l.b16 %v2305
    %v2490 = vunpack.c.h.b16 %v2305
    %v2491 = vunpack.c.l.b16 %v2306
    %v2492 = vunpack.c.h.b16 %v2306
    %v2493 = vunpack.c.l.b16 %v2307
    %v2494 = vunpack.c.h.b16 %v2307
    %v2495 = vunpack.c.l.b16 %v2308
    %v2496 = vunpack.c.h.b16 %v2308
    %v2497 = vunpack.c.l.b16 %v2309
    %v2498 = vunpack.c.h.b16 %v2309
    %v2499 = vunpack.c.l.b16 %v2310
    %v2500 = vunpack.c.h.b16 %v2310
    %v2501 = vunpack.c.l.b16 %v2311
    %v2502 = vunpack.c.h.b16 %v2311
    %v2503 = vunpack.c.l.b16 %v2312
    %v2504 = vunpack.c.h.b16 %v2312
    %v2505 = vpack.c.b16 %v2381, %v2377
    %v2506 = vpack.c.b16 %v2382, %v2378
    %v2507 = vpack.c.b16 %v2383, %v2379
    %v2508 = vpack.c.b16 %v2384, %v2380
    %v2509 = vpack.c.b16 %v2389, %v2385
    %v2510 = vpack.c.b16 %v2390, %v2386
    %v2511 = vpack.c.b16 %v2391, %v2387
    %v2512 = vpack.c.b16 %v2392, %v2388
    %v2513 = vpack.c.b16 %v2397, %v2393
    %v2514 = vpack.c.b16 %v2398, %v2394
    %v2515 = vpack.c.b16 %v2399, %v2395
    %v2516 = vpack.c.b16 %v2400, %v2396
    %v2517 = vpack.c.b16 %v2405, %v2401
    %v2518 = vpack.c.b16 %v2406, %v2402
    %v2519 = vpack.c.b16 %v2407, %v2403
    %v2520 = vpack.c.b16 %v2408, %v2404
    %v2521 = vpack.c.b16 %v2413, %v2409
    %v2522 = vpack.c.b16 %v2414, %v2410
    %v2523 = vpack.c.b16 %v2415, %v2411
    %v2524 = vpack.c.b16 %v2416, %v2412
    %v2525 = vpack.c.b16 %v2421, %v2417
    %v2526 = vpack.c.b16 %v2422, %v2418
    %v2527 = vpack.c.b16 %v2423, %v2419
    %v2528 = vpack.c.b16 %v2424, %v2420
    %v2529 = vpack.c.b16 %v2429, %v2425
    %v2530 = vpack.c.b16 %v2430, %v2426
    %v2531 = vpack.c.b16 %v2431, %v2427
    %v2532 = vpack.c.b16 %v2432, %v2428
    %v2533 = vpack.c.b16 %v2437, %v2433
    %v2534 = vpack.c.b16 %v2438, %v2434
    %v2535 = vpack.c.b16 %v2439, %v2435
    %v2536 = vpack.c.b16 %v2440, %v2436
    %v2537 = vpack.c.b16 %v2445, %v2441
    %v2538 = vpack.c.b16 %v2446, %v2442
    %v2539 = vpack.c.b16 %v2447, %v2443
    %v2540 = vpack.c.b16 %v2448, %v2444
    %v2541 = vpack.c.b16 %v2453, %v2449
    %v2542 = vpack.c.b16 %v2454, %v2450
    %v2543 = vpack.c.b16 %v2455, %v2451
    %v2544 = vpack.c.b16 %v2456, %v2452
    %v2545 = vpack.c.b16 %v2461, %v2457
    %v2546 = vpack.c.b16 %v2462, %v2458
    %v2547 = vpack.c.b16 %v2463, %v2459
    %v2548 = vpack.c.b16 %v2464, %v2460
    %v2549 = vpack.c.b16 %v2469, %v2465
    %v2550 = vpack.c.b16 %v2470, %v2466
    %v2551 = vpack.c.b16 %v2471, %v2467
    %v2552 = vpack.c.b16 %v2472, %v2468
    %v2553 = vpack.c.b16 %v2477, %v2473
    %v2554 = vpack.c.b16 %v2478, %v2474
    %v2555 = vpack.c.b16 %v2479, %v2475
    %v2556 = vpack.c.b16 %v2480, %v2476
    %v2557 = vpack.c.b16 %v2485, %v2481
    %v2558 = vpack.c.b16 %v2486, %v2482
    %v2559 = vpack.c.b16 %v2487, %v2483
    %v2560 = vpack.c.b16 %v2488, %v2484
    %v2561 = vpack.c.b16 %v2493, %v2489
    %v2562 = vpack.c.b16 %v2494, %v2490
    %v2563 = vpack.c.b16 %v2495, %v2491
    %v2564 = vpack.c.b16 %v2496, %v2492
    %v2565 = vpack.c.b16 %v2501, %v2497
    %v2566 = vpack.c.b16 %v2502, %v2498
    %v2567 = vpack.c.b16 %v2503, %v2499
    %v2568 = vpack.c.b16 %v2504, %v2500
    %2633 = vmatprep.subr.bf16.mxu0 %v2506
    %2634 = vmatpush1.bf16.msra.mxu0 %v2505
    %2635 = vmatprep.subr.bf16.mxu0 %v2510
    %2636 = vmatpush1.bf16.msra.mxu0 %v2509
    %2637 = vmatprep.subr.bf16.mxu0 %v2514
    %2638 = vmatpush1.bf16.msra.mxu0 %v2513
    %2639 = vmatprep.subr.bf16.mxu0 %v2518
    %2640 = vmatpush1.bf16.msra.mxu0 %v2517
    %2641 = vmatprep.subr.bf16.mxu0 %v2522
    %2642 = vmatpush1.bf16.msra.mxu0 %v2521
    %2643 = vmatprep.subr.bf16.mxu0 %v2526
    %2644 = vmatpush1.bf16.msra.mxu0 %v2525
    %2645 = vmatprep.subr.bf16.mxu0 %v2530
    %2646 = vmatpush1.bf16.msra.mxu0 %v2529
    %2647 = vmatprep.subr.bf16.mxu0 %v2534
    %2648 = vmatpush1.bf16.msra.mxu0 %v2533
    %2649 = vmatprep.subr.bf16.mxu0 %v2538
    %2650 = vmatpush1.bf16.msra.mxu0 %v2537
    %2651 = vmatprep.subr.bf16.mxu0 %v2542
    %2652 = vmatpush1.bf16.msra.mxu0 %v2541
    %2653 = vmatprep.subr.bf16.mxu0 %v2546
    %2654 = vmatpush1.bf16.msra.mxu0 %v2545
    %2655 = vmatprep.subr.bf16.mxu0 %v2550
    %2656 = vmatpush1.bf16.msra.mxu0 %v2549
    %2657 = vmatprep.subr.bf16.mxu0 %v2554
    %2658 = vmatpush1.bf16.msra.mxu0 %v2553
    %2659 = vmatprep.subr.bf16.mxu0 %v2558
    %2660 = vmatpush1.bf16.msra.mxu0 %v2557
    %2661 = vmatprep.subr.bf16.mxu0 %v2562
    %2662 = vmatpush1.bf16.msra.mxu0 %v2561
    %2663 = vmatprep.subr.bf16.mxu0 %v2566
    %2664 = vmatpush1.bf16.msra.mxu0 %v2565
    %2665 = vmatprep.mubr.bf16.mxu0 %v2248
    %2666 = vmatmul.mubr.bf16.gmra.mrb[0].mxu0 %v2247
    %v2667 = vpop.f32.mrb[0].mxu0
    %v2668 = vadd.f32 %v1116, %v2667
    %v2669 = vpop.f32.mrb[0].mxu0
    %v2670 = vadd.f32 %v1120, %v2669
    %v2671 = vpop.f32.mrb[0].mxu0
    %v2672 = vpop.f32.mrb[0].mxu0
    %2673 = vdwg.mxu0
    %2674 = vmatprep.subr.bf16.mxu0 %v2508
    %2675 = vmatpush1.bf16.msra.mxu0 %v2507
    %2676 = vmatprep.subr.bf16.mxu0 %v2512
    %2677 = vmatpush1.bf16.msra.mxu0 %v2511
    %2678 = vmatprep.subr.bf16.mxu0 %v2516
    %2679 = vmatpush1.bf16.msra.mxu0 %v2515
    %2680 = vmatprep.subr.bf16.mxu0 %v2520
    %2681 = vmatpush1.bf16.msra.mxu0 %v2519
    %2682 = vmatprep.subr.bf16.mxu0 %v2524
    %2683 = vmatpush1.bf16.msra.mxu0 %v2523
    %2684 = vmatprep.subr.bf16.mxu0 %v2528
    %2685 = vmatpush1.bf16.msra.mxu0 %v2527
    %2686 = vmatprep.subr.bf16.mxu0 %v2532
    %2687 = vmatpush1.bf16.msra.mxu0 %v2531
    %2688 = vmatprep.subr.bf16.mxu0 %v2536
    %2689 = vmatpush1.bf16.msra.mxu0 %v2535
    %2690 = vmatprep.subr.bf16.mxu0 %v2540
    %2691 = vmatpush1.bf16.msra.mxu0 %v2539
    %2692 = vmatprep.subr.bf16.mxu0 %v2544
    %2693 = vmatpush1.bf16.msra.mxu0 %v2543
    %2694 = vmatprep.subr.bf16.mxu0 %v2548
    %2695 = vmatpush1.bf16.msra.mxu0 %v2547
    %2696 = vmatprep.subr.bf16.mxu0 %v2552
    %2697 = vmatpush1.bf16.msra.mxu0 %v2551
    %2698 = vmatprep.subr.bf16.mxu0 %v2556
    %2699 = vmatpush1.bf16.msra.mxu0 %v2555
    %2700 = vmatprep.subr.bf16.mxu0 %v2560
    %2701 = vmatpush1.bf16.msra.mxu0 %v2559
    %2702 = vmatprep.subr.bf16.mxu0 %v2564
    %2703 = vmatpush1.bf16.msra.mxu0 %v2563
    %2704 = vmatprep.subr.bf16.mxu0 %v2568
    %2705 = vmatpush1.bf16.msra.mxu0 %v2567
    %2706 = vmatprep.mubr.bf16.mxu0 %v2248
    %2707 = vmatmul.mubr.bf16.gmra.mrb[0].mxu0 %v2247
    %v2708 = vpop.f32.mrb[0].mxu0
    %v2709 = vadd.f32 %v1124, %v2708
    %v2710 = vpop.f32.mrb[0].mxu0
    %v2711 = vadd.f32 %v1128, %v2710
    %v2712 = vpop.f32.mrb[0].mxu0
    %v2713 = vpop.f32.mrb[0].mxu0
    %2714 = vdwg.mxu0
    %v2715 = vsub.f32 0.0, %v2668
    %v2716 = vmul.f32 %v2715, 1.442695
    %v2717 = vpow.pop %v2716
    %v2718 = vadd.f32 %v2717, 1.0
    %v2719 = vrcp.pop %v2718
    %v2720 = vsub.f32 0.0, %v2670
    %v2721 = vmul.f32 %v2720, 1.442695
    %v2722 = vpow.pop %v2721
    %v2723 = vadd.f32 %v2722, 1.0
    %v2724 = vrcp.pop %v2723
    %v2725 = vtanh.pop %v2709
    %v2726 = vsub.f32 0.0, %v2711
    %v2727 = vmul.f32 %v2726, 1.442695
    %v2728 = vpow.pop %v2727
    %v2729 = vadd.f32 %v2728, 1.0
    %v2730 = vrcp.pop %v2729
    %v2731 = vmul.f32 %v2724, %v1934
    %v2732 = vmul.f32 %v2719, %v2725
    %v2733 = vadd.f32 %v2731, %v2732
    %v2734 = vtanh.pop %v2733
    %v2735 = vmul.f32 %v2730, %v2734
    %v2736 = vsel %vm2244, %v2735, %v1933
    %v2737 = vsel %vm2244, %v2733, %v1934
    %v2738 = vsel %vm2244, %v2735, 0.0
    %2739 = vst [vmem:[#allocation12 + $0x8] sm:$0xff] %v2738
    %vm2740 = vcmp.gt.s32.totalorder %v108, 2
    %v2741 = vld [vmem:[#allocation2 + $0x40] sm:$0xff]
    %v2742 = vld [vmem:[#allocation2 + $0x48] sm:$0xff]
    %v2743 = vld [vmem:[#allocation2 + $0x50] sm:$0xff]
    %v2744 = vld [vmem:[#allocation2 + $0x58] sm:$0xff]
    %v2745 = vld [vmem:[#allocation8] sm:$0xff]
    %v2746 = vld [vmem:[#allocation8 + $0x8] sm:$0xff]
    %v2747 = vld [vmem:[#allocation8 + $0x10] sm:$0xff]
    %v2748 = vld [vmem:[#allocation8 + $0x18] sm:$0xff]
    %v2749 = vld [vmem:[#allocation8 + $0x20] sm:$0xff]
    %v2750 = vld [vmem:[#allocation8 + $0x28] sm:$0xff]
    %v2751 = vld [vmem:[#allocation8 + $0x30] sm:$0xff]
    %v2752 = vld [vmem:[#allocation8 + $0x38] sm:$0xff]
    %v2753 = vld [vmem:[#allocation8 + $0x40] sm:$0xff]
    %v2754 = vld [vmem:[#allocation8 + $0x48] sm:$0xff]
    %v2755 = vld [vmem:[#allocation8 + $0x50] sm:$0xff]
    %v2756 = vld [vmem:[#allocation8 + $0x58] sm:$0xff]
    %v2757 = vld [vmem:[#allocation8 + $0x60] sm:$0xff]
    %v2758 = vld [vmem:[#allocation8 + $0x68] sm:$0xff]
    %v2759 = vld [vmem:[#allocation8 + $0x70] sm:$0xff]
    %v2760 = vld [vmem:[#allocation8 + $0x78] sm:$0xff]
    %v2761 = vld [vmem:[#allocation8 + $0x80] sm:$0xff]
    %v2762 = vld [vmem:[#allocation8 + $0x88] sm:$0xff]
    %v2763 = vld [vmem:[#allocation8 + $0x90] sm:$0xff]
    %v2764 = vld [vmem:[#allocation8 + $0x98] sm:$0xff]
    %v2765 = vld [vmem:[#allocation8 + $0xa0] sm:$0xff]
    %v2766 = vld [vmem:[#allocation8 + $0xa8] sm:$0xff]
    %v2767 = vld [vmem:[#allocation8 + $0xb0] sm:$0xff]
    %v2768 = vld [vmem:[#allocation8 + $0xb8] sm:$0xff]
    %v2769 = vld [vmem:[#allocation8 + $0xc0] sm:$0xff]
    %v2770 = vld [vmem:[#allocation8 + $0xc8] sm:$0xff]
    %v2771 = vld [vmem:[#allocation8 + $0xd0] sm:$0xff]
    %v2772 = vld [vmem:[#allocation8 + $0xd8] sm:$0xff]
    %v2773 = vld [vmem:[#allocation8 + $0xe0] sm:$0xff]
    %v2774 = vld [vmem:[#allocation8 + $0xe8] sm:$0xff]
    %v2775 = vld [vmem:[#allocation8 + $0xf0] sm:$0xff]
    %v2776 = vld [vmem:[#allocation8 + $0xf8] sm:$0xff]
    %v2809 = vunpack.c.l.b16 %v2745
    %v2810 = vunpack.c.h.b16 %v2745
    %v2811 = vunpack.c.l.b16 %v2746
    %v2812 = vunpack.c.h.b16 %v2746
    %v2813 = vunpack.c.l.b16 %v2747
    %v2814 = vunpack.c.h.b16 %v2747
    %v2815 = vunpack.c.l.b16 %v2748
    %v2816 = vunpack.c.h.b16 %v2748
    %v2817 = vunpack.c.l.b16 %v2749
    %v2818 = vunpack.c.h.b16 %v2749
    %v2819 = vunpack.c.l.b16 %v2750
    %v2820 = vunpack.c.h.b16 %v2750
    %v2821 = vunpack.c.l.b16 %v2751
    %v2822 = vunpack.c.h.b16 %v2751
    %v2823 = vunpack.c.l.b16 %v2752
    %v2824 = vunpack.c.h.b16 %v2752
    %v2825 = vunpack.c.l.b16 %v2753
    %v2826 = vunpack.c.h.b16 %v2753
    %v2827 = vunpack.c.l.b16 %v2754
    %v2828 = vunpack.c.h.b16 %v2754
    %v2829 = vunpack.c.l.b16 %v2755
    %v2830 = vunpack.c.h.b16 %v2755
    %v2831 = vunpack.c.l.b16 %v2756
    %v2832 = vunpack.c.h.b16 %v2756
    %v2833 = vunpack.c.l.b16 %v2757
    %v2834 = vunpack.c.h.b16 %v2757
    %v2835 = vunpack.c.l.b16 %v2758
    %v2836 = vunpack.c.h.b16 %v2758
    %v2837 = vunpack.c.l.b16 %v2759
    %v2838 = vunpack.c.h.b16 %v2759
    %v2839 = vunpack.c.l.b16 %v2760
    %v2840 = vunpack.c.h.b16 %v2760
    %v2841 = vunpack.c.l.b16 %v2761
    %v2842 = vunpack.c.h.b16 %v2761
    %v2843 = vunpack.c.l.b16 %v2762
    %v2844 = vunpack.c.h.b16 %v2762
    %v2845 = vunpack.c.l.b16 %v2763
    %v2846 = vunpack.c.h.b16 %v2763
    %v2847 = vunpack.c.l.b16 %v2764
    %v2848 = vunpack.c.h.b16 %v2764
    %v2849 = vunpack.c.l.b16 %v2765
    %v2850 = vunpack.c.h.b16 %v2765
    %v2851 = vunpack.c.l.b16 %v2766
    %v2852 = vunpack.c.h.b16 %v2766
    %v2853 = vunpack.c.l.b16 %v2767
    %v2854 = vunpack.c.h.b16 %v2767
    %v2855 = vunpack.c.l.b16 %v2768
    %v2856 = vunpack.c.h.b16 %v2768
    %v2857 = vunpack.c.l.b16 %v2769
    %v2858 = vunpack.c.h.b16 %v2769
    %v2859 = vunpack.c.l.b16 %v2770
    %v2860 = vunpack.c.h.b16 %v2770
    %v2861 = vunpack.c.l.b16 %v2771
    %v2862 = vunpack.c.h.b16 %v2771
    %v2863 = vunpack.c.l.b16 %v2772
    %v2864 = vunpack.c.h.b16 %v2772
    %v2865 = vunpack.c.l.b16 %v2773
    %v2866 = vunpack.c.h.b16 %v2773
    %v2867 = vunpack.c.l.b16 %v2774
    %v2868 = vunpack.c.h.b16 %v2774
    %v2869 = vunpack.c.l.b16 %v2775
    %v2870 = vunpack.c.h.b16 %v2775
    %v2871 = vunpack.c.l.b16 %v2776
    %v2872 = vunpack.c.h.b16 %v2776
    %v2873 = vpack.c.b16 %v2813, %v2809
    %v2874 = vpack.c.b16 %v2814, %v2810
    %v2875 = vpack.c.b16 %v2815, %v2811
    %v2876 = vpack.c.b16 %v2816, %v2812
    %v2877 = vpack.c.b16 %v2821, %v2817
    %v2878 = vpack.c.b16 %v2822, %v2818
    %v2879 = vpack.c.b16 %v2823, %v2819
    %v2880 = vpack.c.b16 %v2824, %v2820
    %v2881 = vpack.c.b16 %v2829, %v2825
    %v2882 = vpack.c.b16 %v2830, %v2826
    %v2883 = vpack.c.b16 %v2831, %v2827
    %v2884 = vpack.c.b16 %v2832, %v2828
    %v2885 = vpack.c.b16 %v2837, %v2833
    %v2886 = vpack.c.b16 %v2838, %v2834
    %v2887 = vpack.c.b16 %v2839, %v2835
    %v2888 = vpack.c.b16 %v2840, %v2836
    %v2889 = vpack.c.b16 %v2845, %v2841
    %v2890 = vpack.c.b16 %v2846, %v2842
    %v2891 = vpack.c.b16 %v2847, %v2843
    %v2892 = vpack.c.b16 %v2848, %v2844
    %v2893 = vpack.c.b16 %v2853, %v2849
    %v2894 = vpack.c.b16 %v2854, %v2850
    %v2895 = vpack.c.b16 %v2855, %v2851
    %v2896 = vpack.c.b16 %v2856, %v2852
    %v2897 = vpack.c.b16 %v2861, %v2857
    %v2898 = vpack.c.b16 %v2862, %v2858
    %v2899 = vpack.c.b16 %v2863, %v2859
    %v2900 = vpack.c.b16 %v2864, %v2860
    %v2901 = vpack.c.b16 %v2869, %v2865
    %v2902 = vpack.c.b16 %v2870, %v2866
    %v2903 = vpack.c.b16 %v2871, %v2867
    %v2904 = vpack.c.b16 %v2872, %v2868
    %2937 = vmatprep.subr.bf16.mxu0 %v2874
    %2938 = vmatpush1.bf16.msra.mxu0 %v2873
    %2939 = vmatprep.subr.bf16.mxu0 %v2878
    %2940 = vmatpush1.bf16.msra.mxu0 %v2877
    %2941 = vmatprep.subr.bf16.mxu0 %v2882
    %2942 = vmatpush1.bf16.msra.mxu0 %v2881
    %2943 = vmatprep.subr.bf16.mxu0 %v2886
    %2944 = vmatpush1.bf16.msra.mxu0 %v2885
    %2945 = vmatprep.subr.bf16.mxu0 %v2890
    %2946 = vmatpush1.bf16.msra.mxu0 %v2889
    %2947 = vmatprep.subr.bf16.mxu0 %v2894
    %2948 = vmatpush1.bf16.msra.mxu0 %v2893
    %2949 = vmatprep.subr.bf16.mxu0 %v2898
    %2950 = vmatpush1.bf16.msra.mxu0 %v2897
    %2951 = vmatprep.subr.bf16.mxu0 %v2902
    %2952 = vmatpush1.bf16.msra.mxu0 %v2901
    %2953 = vmatprep.subr.bf16.mxu0 0
    %2954 = vmatpush1.bf16.msra.mxu0 0
    %2955 = vmatprep.subr.bf16.mxu0 0
    %2956 = vmatpush1.bf16.msra.mxu0 0
    %2957 = vmatprep.subr.bf16.mxu0 0
    %2958 = vmatpush1.bf16.msra.mxu0 0
    %2959 = vmatprep.subr.bf16.mxu0 0
    %2960 = vmatpush1.bf16.msra.mxu0 0
    %2961 = vmatprep.subr.bf16.mxu0 0
    %2962 = vmatpush1.bf16.msra.mxu0 0
    %2963 = vmatprep.subr.bf16.mxu0 0
    %2964 = vmatpush1.bf16.msra.mxu0 0
    %2965 = vmatprep.subr.bf16.mxu0 0
    %2966 = vmatpush1.bf16.msra.mxu0 0
    %2967 = vmatprep.subr.bf16.mxu0 0
    %2968 = vmatpush1.bf16.msra.mxu0 0
    %2969 = vmatprep.mubr.bf16.mxu0 0
    %2970 = vmatmul.mubr.bf16.gmra.mrb[0].mxu0 %v2247
    %v2971 = vpop.f32.mrb[0].mxu0
    %v2972 = vadd.f32 0.0, %v2971
    %v2973 = vpop.f32.mrb[0].mxu0
    %v2974 = vadd.f32 0.0, %v2973
    %v2975 = vpop.f32.mrb[0].mxu0
    %v2976 = vpop.f32.mrb[0].mxu0
    %2977 = vdwg.mxu0
    %2978 = vmatprep.subr.bf16.mxu0 %v2876
    %2979 = vmatpush1.bf16.msra.mxu0 %v2875
    %2980 = vmatprep.subr.bf16.mxu0 %v2880
    %2981 = vmatpush1.bf16.msra.mxu0 %v2879
    %2982 = vmatprep.subr.bf16.mxu0 %v2884
    %2983 = vmatpush1.bf16.msra.mxu0 %v2883
    %2984 = vmatprep.subr.bf16.mxu0 %v2888
    %2985 = vmatpush1.bf16.msra.mxu0 %v2887
    %2986 = vmatprep.subr.bf16.mxu0 %v2892
    %2987 = vmatpush1.bf16.msra.mxu0 %v2891
    %2988 = vmatprep.subr.bf16.mxu0 %v2896
    %2989 = vmatpush1.bf16.msra.mxu0 %v2895
    %2990 = vmatprep.subr.bf16.mxu0 %v2900
    %2991 = vmatpush1.bf16.msra.mxu0 %v2899
    %2992 = vmatprep.subr.bf16.mxu0 %v2904
    %2993 = vmatpush1.bf16.msra.mxu0 %v2903
    %2994 = vmatprep.subr.bf16.mxu0 0
    %2995 = vmatpush1.bf16.msra.mxu0 0
    %2996 = vmatprep.subr.bf16.mxu0 0
    %2997 = vmatpush1.bf16.msra.mxu0 0
    %2998 = vmatprep.subr.bf16.mxu0 0
    %2999 = vmatpush1.bf16.msra.mxu0 0
    %3000 = vmatprep.subr.bf16.mxu0 0
    %3001 = vmatpush1.bf16.msra.mxu0 0
    %3002 = vmatprep.subr.bf16.mxu0 0
    %3003 = vmatpush1.bf16.msra.mxu0 0
    %3004 = vmatprep.subr.bf16.mxu0 0
    %3005 = vmatpush1.bf16.msra.mxu0 0
    %3006 = vmatprep.subr.bf16.mxu0 0
    %3007 = vmatpush1.bf16.msra.mxu0 0
    %3008 = vmatprep.subr.bf16.mxu0 0
    %3009 = vmatpush1.bf16.msra.mxu0 0
    %3010 = vmatprep.mubr.bf16.mxu0 0
    %3011 = vmatmul.mubr.bf16.gmra.mrb[0].mxu0 %v2247
    %v3012 = vpop.f32.mrb[0].mxu0
    %v3013 = vadd.f32 0.0, %v3012
    %v3014 = vpop.f32.mrb[0].mxu0
    %v3015 = vadd.f32 0.0, %v3014
    %v3016 = vpop.f32.mrb[0].mxu0
    %v3017 = vpop.f32.mrb[0].mxu0
    %3018 = vdwg.mxu0
    %v3019 = vadd.f32 %v2741, %v2972
    %v3020 = vadd.f32 %v2742, %v2974
    %v3021 = vadd.f32 %v2743, %v3013
    %v3022 = vadd.f32 %v2744, %v3015
    %v3023 = vsub.f32 0.0, %v3019
    %v3024 = vmul.f32 %v3023, 1.442695
    %v3025 = vpow.pop %v3024
    %v3026 = vadd.f32 %v3025, 1.0
    %v3027 = vrcp.pop %v3026
    %v3028 = vsub.f32 0.0, %v3020
    %v3029 = vmul.f32 %v3028, 1.442695
    %v3030 = vpow.pop %v3029
    %v3031 = vadd.f32 %v3030, 1.0
    %v3032 = vrcp.pop %v3031
    %v3033 = vtanh.pop %v3021
    %v3034 = vsub.f32 0.0, %v3022
    %v3035 = vmul.f32 %v3034, 1.442695
    %v3036 = vpow.pop %v3035
    %v3037 = vadd.f32 %v3036, 1.0
    %v3038 = vrcp.pop %v3037
    %v3039 = vmul.f32 %v3032, %v2246
    %v3040 = vmul.f32 %v3027, %v3033
    %v3041 = vadd.f32 %v3039, %v3040
    %v3042 = vtanh.pop %v3041
    %v3043 = vmul.f32 %v3038, %v3042
    %v3044 = vsel %vm2740, 1, 0
    %3045 = vset.pattern.permute.xlu0 0
    %3046 = vperm.xlu0 %3045, %v3044
    %v3047 = vpop.permute.xlu0 %3046
    %vm3048 = vcmp.eq.s32.totalorder %v3047, 1
    %v3049 = vsel %vm3048, %v3043, %v2245
    %v3050 = vsel %vm3048, %v3041, %v2246
    %v3051 = vpack.c.bf16 %v3049, %v3049
    %v3052 = vpack.c.bf16 %v2736, %v2736
    %v3053 = vld [vmem:[#allocation9] sm:$0xff]
    %v3054 = vld [vmem:[#allocation9 + $0x8] sm:$0xff]
    %v3055 = vld [vmem:[#allocation9 + $0x10] sm:$0xff]
    %v3056 = vld [vmem:[#allocation9 + $0x18] sm:$0xff]
    %v3057 = vld [vmem:[#allocation9 + $0x20] sm:$0xff]
    %v3058 = vld [vmem:[#allocation9 + $0x28] sm:$0xff]
    %v3059 = vld [vmem:[#allocation9 + $0x30] sm:$0xff]
    %v3060 = vld [vmem:[#allocation9 + $0x38] sm:$0xff]
    %v3061 = vld [vmem:[#allocation9 + $0x40] sm:$0xff]
    %v3062 = vld [vmem:[#allocation9 + $0x48] sm:$0xff]
    %v3063 = vld [vmem:[#allocation9 + $0x50] sm:$0xff]
    %v3064 = vld [vmem:[#allocation9 + $0x58] sm:$0xff]
    %v3065 = vld [vmem:[#allocation9 + $0x60] sm:$0xff]
    %v3066 = vld [vmem:[#allocation9 + $0x68] sm:$0xff]
    %v3067 = vld [vmem:[#allocation9 + $0x70] sm:$0xff]
    %v3068 = vld [vmem:[#allocation9 + $0x78] sm:$0xff]
    %v3069 = vld [vmem:[#allocation9 + $0x80] sm:$0xff]
    %v3070 = vld [vmem:[#allocation9 + $0x88] sm:$0xff]
    %v3071 = vld [vmem:[#allocation9 + $0x90] sm:$0xff]
    %v3072 = vld [vmem:[#allocation9 + $0x98] sm:$0xff]
    %v3073 = vld [vmem:[#allocation9 + $0xa0] sm:$0xff]
    %v3074 = vld [vmem:[#allocation9 + $0xa8] sm:$0xff]
    %v3075 = vld [vmem:[#allocation9 + $0xb0] sm:$0xff]
    %v3076 = vld [vmem:[#allocation9 + $0xb8] sm:$0xff]
    %v3077 = vld [vmem:[#allocation9 + $0xc0] sm:$0xff]
    %v3078 = vld [vmem:[#allocation9 + $0xc8] sm:$0xff]
    %v3079 = vld [vmem:[#allocation9 + $0xd0] sm:$0xff]
    %v3080 = vld [vmem:[#allocation9 + $0xd8] sm:$0xff]
    %v3081 = vld [vmem:[#allocation9 + $0xe0] sm:$0xff]
    %v3082 = vld [vmem:[#allocation9 + $0xe8] sm:$0xff]
    %v3083 = vld [vmem:[#allocation9 + $0xf0] sm:$0xff]
    %v3084 = vld [vmem:[#allocation9 + $0xf8] sm:$0xff]
    %v3085 = vld [vmem:[#allocation9 + $0x100] sm:$0xff]
    %v3086 = vld [vmem:[#allocation9 + $0x108] sm:$0xff]
    %v3087 = vld [vmem:[#allocation9 + $0x110] sm:$0xff]
    %v3088 = vld [vmem:[#allocation9 + $0x118] sm:$0xff]
    %v3089 = vld [vmem:[#allocation9 + $0x120] sm:$0xff]
    %v3090 = vld [vmem:[#allocation9 + $0x128] sm:$0xff]
    %v3091 = vld [vmem:[#allocation9 + $0x130] sm:$0xff]
    %v3092 = vld [vmem:[#allocation9 + $0x138] sm:$0xff]
    %v3093 = vld [vmem:[#allocation9 + $0x140] sm:$0xff]
    %v3094 = vld [vmem:[#allocation9 + $0x148] sm:$0xff]
    %v3095 = vld [vmem:[#allocation9 + $0x150] sm:$0xff]
    %v3096 = vld [vmem:[#allocation9 + $0x158] sm:$0xff]
    %v3097 = vld [vmem:[#allocation9 + $0x160] sm:$0xff]
    %v3098 = vld [vmem:[#allocation9 + $0x168] sm:$0xff]
    %v3099 = vld [vmem:[#allocation9 + $0x170] sm:$0xff]
    %v3100 = vld [vmem:[#allocation9 + $0x178] sm:$0xff]
    %v3101 = vld [vmem:[#allocation9 + $0x180] sm:$0xff]
    %v3102 = vld [vmem:[#allocation9 + $0x188] sm:$0xff]
    %v3103 = vld [vmem:[#allocation9 + $0x190] sm:$0xff]
    %v3104 = vld [vmem:[#allocation9 + $0x198] sm:$0xff]
    %v3105 = vld [vmem:[#allocation9 + $0x1a0] sm:$0xff]
    %v3106 = vld [vmem:[#allocation9 + $0x1a8] sm:$0xff]
    %v3107 = vld [vmem:[#allocation9 + $0x1b0] sm:$0xff]
    %v3108 = vld [vmem:[#allocation9 + $0x1b8] sm:$0xff]
    %v3109 = vld [vmem:[#allocation9 + $0x1c0] sm:$0xff]
    %v3110 = vld [vmem:[#allocation9 + $0x1c8] sm:$0xff]
    %v3111 = vld [vmem:[#allocation9 + $0x1d0] sm:$0xff]
    %v3112 = vld [vmem:[#allocation9 + $0x1d8] sm:$0xff]
    %v3113 = vld [vmem:[#allocation9 + $0x1e0] sm:$0xff]
    %v3114 = vld [vmem:[#allocation9 + $0x1e8] sm:$0xff]
    %v3115 = vld [vmem:[#allocation9 + $0x1f0] sm:$0xff]
    %v3116 = vld [vmem:[#allocation9 + $0x1f8] sm:$0xff]
    %v3181 = vunpack.c.l.b16 %v3053
    %v3182 = vunpack.c.h.b16 %v3053
    %v3183 = vunpack.c.l.b16 %v3054
    %v3184 = vunpack.c.h.b16 %v3054
    %v3185 = vunpack.c.l.b16 %v3055
    %v3186 = vunpack.c.h.b16 %v3055
    %v3187 = vunpack.c.l.b16 %v3056
    %v3188 = vunpack.c.h.b16 %v3056
    %v3189 = vunpack.c.l.b16 %v3057
    %v3190 = vunpack.c.h.b16 %v3057
    %v3191 = vunpack.c.l.b16 %v3058
    %v3192 = vunpack.c.h.b16 %v3058
    %v3193 = vunpack.c.l.b16 %v3059
    %v3194 = vunpack.c.h.b16 %v3059
    %v3195 = vunpack.c.l.b16 %v3060
    %v3196 = vunpack.c.h.b16 %v3060
    %v3197 = vunpack.c.l.b16 %v3061
    %v3198 = vunpack.c.h.b16 %v3061
    %v3199 = vunpack.c.l.b16 %v3062
    %v3200 = vunpack.c.h.b16 %v3062
    %v3201 = vunpack.c.l.b16 %v3063
    %v3202 = vunpack.c.h.b16 %v3063
    %v3203 = vunpack.c.l.b16 %v3064
    %v3204 = vunpack.c.h.b16 %v3064
    %v3205 = vunpack.c.l.b16 %v3065
    %v3206 = vunpack.c.h.b16 %v3065
    %v3207 = vunpack.c.l.b16 %v3066
    %v3208 = vunpack.c.h.b16 %v3066
    %v3209 = vunpack.c.l.b16 %v3067
    %v3210 = vunpack.c.h.b16 %v3067
    %v3211 = vunpack.c.l.b16 %v3068
    %v3212 = vunpack.c.h.b16 %v3068
    %v3213 = vunpack.c.l.b16 %v3069
    %v3214 = vunpack.c.h.b16 %v3069
    %v3215 = vunpack.c.l.b16 %v3070
    %v3216 = vunpack.c.h.b16 %v3070
    %v3217 = vunpack.c.l.b16 %v3071
    %v3218 = vunpack.c.h.b16 %v3071
    %v3219 = vunpack.c.l.b16 %v3072
    %v3220 = vunpack.c.h.b16 %v3072
    %v3221 = vunpack.c.l.b16 %v3073
    %v3222 = vunpack.c.h.b16 %v3073
    %v3223 = vunpack.c.l.b16 %v3074
    %v3224 = vunpack.c.h.b16 %v3074
    %v3225 = vunpack.c.l.b16 %v3075
    %v3226 = vunpack.c.h.b16 %v3075
    %v3227 = vunpack.c.l.b16 %v3076
    %v3228 = vunpack.c.h.b16 %v3076
    %v3229 = vunpack.c.l.b16 %v3077
    %v3230 = vunpack.c.h.b16 %v3077
    %v3231 = vunpack.c.l.b16 %v3078
    %v3232 = vunpack.c.h.b16 %v3078
    %v3233 = vunpack.c.l.b16 %v3079
    %v3234 = vunpack.c.h.b16 %v3079
    %v3235 = vunpack.c.l.b16 %v3080
    %v3236 = vunpack.c.h.b16 %v3080
    %v3237 = vunpack.c.l.b16 %v3081
    %v3238 = vunpack.c.h.b16 %v3081
    %v3239 = vunpack.c.l.b16 %v3082
    %v3240 = vunpack.c.h.b16 %v3082
    %v3241 = vunpack.c.l.b16 %v3083
    %v3242 = vunpack.c.h.b16 %v3083
    %v3243 = vunpack.c.l.b16 %v3084
    %v3244 = vunpack.c.h.b16 %v3084
    %v3245 = vunpack.c.l.b16 %v3085
    %v3246 = vunpack.c.h.b16 %v3085
    %v3247 = vunpack.c.l.b16 %v3086
    %v3248 = vunpack.c.h.b16 %v3086
    %v3249 = vunpack.c.l.b16 %v3087
    %v3250 = vunpack.c.h.b16 %v3087
    %v3251 = vunpack.c.l.b16 %v3088
    %v3252 = vunpack.c.h.b16 %v3088
    %v3253 = vunpack.c.l.b16 %v3089
    %v3254 = vunpack.c.h.b16 %v3089
    %v3255 = vunpack.c.l.b16 %v3090
    %v3256 = vunpack.c.h.b16 %v3090
    %v3257 = vunpack.c.l.b16 %v3091
    %v3258 = vunpack.c.h.b16 %v3091
    %v3259 = vunpack.c.l.b16 %v3092
    %v3260 = vunpack.c.h.b16 %v3092
    %v3261 = vunpack.c.l.b16 %v3093
    %v3262 = vunpack.c.h.b16 %v3093
    %v3263 = vunpack.c.l.b16 %v3094
    %v3264 = vunpack.c.h.b16 %v3094
    %v3265 = vunpack.c.l.b16 %v3095
    %v3266 = vunpack.c.h.b16 %v3095
    %v3267 = vunpack.c.l.b16 %v3096
    %v3268 = vunpack.c.h.b16 %v3096
    %v3269 = vunpack.c.l.b16 %v3097
    %v3270 = vunpack.c.h.b16 %v3097
    %v3271 = vunpack.c.l.b16 %v3098
    %v3272 = vunpack.c.h.b16 %v3098
    %v3273 = vunpack.c.l.b16 %v3099
    %v3274 = vunpack.c.h.b16 %v3099
    %v3275 = vunpack.c.l.b16 %v3100
    %v3276 = vunpack.c.h.b16 %v3100
    %v3277 = vunpack.c.l.b16 %v3101
    %v3278 = vunpack.c.h.b16 %v3101
    %v3279 = vunpack.c.l.b16 %v3102
    %v3280 = vunpack.c.h.b16 %v3102
    %v3281 = vunpack.c.l.b16 %v3103
    %v3282 = vunpack.c.h.b16 %v3103
    %v3283 = vunpack.c.l.b16 %v3104
    %v3284 = vunpack.c.h.b16 %v3104
    %v3285 = vunpack.c.l.b16 %v3105
    %v3286 = vunpack.c.h.b16 %v3105
    %v3287 = vunpack.c.l.b16 %v3106
    %v3288 = vunpack.c.h.b16 %v3106
    %v3289 = vunpack.c.l.b16 %v3107
    %v3290 = vunpack.c.h.b16 %v3107
    %v3291 = vunpack.c.l.b16 %v3108
    %v3292 = vunpack.c.h.b16 %v3108
    %v3293 = vunpack.c.l.b16 %v3109
    %v3294 = vunpack.c.h.b16 %v3109
    %v3295 = vunpack.c.l.b16 %v3110
    %v3296 = vunpack.c.h.b16 %v3110
    %v3297 = vunpack.c.l.b16 %v3111
    %v3298 = vunpack.c.h.b16 %v3111
    %v3299 = vunpack.c.l.b16 %v3112
    %v3300 = vunpack.c.h.b16 %v3112
    %v3301 = vunpack.c.l.b16 %v3113
    %v3302 = vunpack.c.h.b16 %v3113
    %v3303 = vunpack.c.l.b16 %v3114
    %v3304 = vunpack.c.h.b16 %v3114
    %v3305 = vunpack.c.l.b16 %v3115
    %v3306 = vunpack.c.h.b16 %v3115
    %v3307 = vunpack.c.l.b16 %v3116
    %v3308 = vunpack.c.h.b16 %v3116
    %v3309 = vpack.c.b16 %v3185, %v3181
    %v3310 = vpack.c.b16 %v3186, %v3182
    %v3311 = vpack.c.b16 %v3187, %v3183
    %v3312 = vpack.c.b16 %v3188, %v3184
    %v3313 = vpack.c.b16 %v3193, %v3189
    %v3314 = vpack.c.b16 %v3194, %v3190
    %v3315 = vpack.c.b16 %v3195, %v3191
    %v3316 = vpack.c.b16 %v3196, %v3192
    %v3317 = vpack.c.b16 %v3201, %v3197
    %v3318 = vpack.c.b16 %v3202, %v3198
    %v3319 = vpack.c.b16 %v3203, %v3199
    %v3320 = vpack.c.b16 %v3204, %v3200
    %v3321 = vpack.c.b16 %v3209, %v3205
    %v3322 = vpack.c.b16 %v3210, %v3206
    %v3323 = vpack.c.b16 %v3211, %v3207
    %v3324 = vpack.c.b16 %v3212, %v3208
    %v3325 = vpack.c.b16 %v3217, %v3213
    %v3326 = vpack.c.b16 %v3218, %v3214
    %v3327 = vpack.c.b16 %v3219, %v3215
    %v3328 = vpack.c.b16 %v3220, %v3216
    %v3329 = vpack.c.b16 %v3225, %v3221
    %v3330 = vpack.c.b16 %v3226, %v3222
    %v3331 = vpack.c.b16 %v3227, %v3223
    %v3332 = vpack.c.b16 %v3228, %v3224
    %v3333 = vpack.c.b16 %v3233, %v3229
    %v3334 = vpack.c.b16 %v3234, %v3230
    %v3335 = vpack.c.b16 %v3235, %v3231
    %v3336 = vpack.c.b16 %v3236, %v3232
    %v3337 = vpack.c.b16 %v3241, %v3237
    %v3338 = vpack.c.b16 %v3242, %v3238
    %v3339 = vpack.c.b16 %v3243, %v3239
    %v3340 = vpack.c.b16 %v3244, %v3240
    %v3341 = vpack.c.b16 %v3249, %v3245
    %v3342 = vpack.c.b16 %v3250, %v3246
    %v3343 = vpack.c.b16 %v3251, %v3247
    %v3344 = vpack.c.b16 %v3252, %v3248
    %v3345 = vpack.c.b16 %v3257, %v3253
    %v3346 = vpack.c.b16 %v3258, %v3254
    %v3347 = vpack.c.b16 %v3259, %v3255
    %v3348 = vpack.c.b16 %v3260, %v3256
    %v3349 = vpack.c.b16 %v3265, %v3261
    %v3350 = vpack.c.b16 %v3266, %v3262
    %v3351 = vpack.c.b16 %v3267, %v3263
    %v3352 = vpack.c.b16 %v3268, %v3264
    %v3353 = vpack.c.b16 %v3273, %v3269
    %v3354 = vpack.c.b16 %v3274, %v3270
    %v3355 = vpack.c.b16 %v3275, %v3271
    %v3356 = vpack.c.b16 %v3276, %v3272
    %v3357 = vpack.c.b16 %v3281, %v3277
    %v3358 = vpack.c.b16 %v3282, %v3278
    %v3359 = vpack.c.b16 %v3283, %v3279
    %v3360 = vpack.c.b16 %v3284, %v3280
    %v3361 = vpack.c.b16 %v3289, %v3285
    %v3362 = vpack.c.b16 %v3290, %v3286
    %v3363 = vpack.c.b16 %v3291, %v3287
    %v3364 = vpack.c.b16 %v3292, %v3288
    %v3365 = vpack.c.b16 %v3297, %v3293
    %v3366 = vpack.c.b16 %v3298, %v3294
    %v3367 = vpack.c.b16 %v3299, %v3295
    %v3368 = vpack.c.b16 %v3300, %v3296
    %v3369 = vpack.c.b16 %v3305, %v3301
    %v3370 = vpack.c.b16 %v3306, %v3302
    %v3371 = vpack.c.b16 %v3307, %v3303
    %v3372 = vpack.c.b16 %v3308, %v3304
    %3437 = vmatprep.subr.bf16.mxu0 %v3310
    %3438 = vmatpush1.bf16.msra.mxu0 %v3309
    %3439 = vmatprep.subr.bf16.mxu0 %v3314
    %3440 = vmatpush1.bf16.msra.mxu0 %v3313
    %3441 = vmatprep.subr.bf16.mxu0 %v3318
    %3442 = vmatpush1.bf16.msra.mxu0 %v3317
    %3443 = vmatprep.subr.bf16.mxu0 %v3322
    %3444 = vmatpush1.bf16.msra.mxu0 %v3321
    %3445 = vmatprep.subr.bf16.mxu0 %v3326
    %3446 = vmatpush1.bf16.msra.mxu0 %v3325
    %3447 = vmatprep.subr.bf16.mxu0 %v3330
    %3448 = vmatpush1.bf16.msra.mxu0 %v3329
    %3449 = vmatprep.subr.bf16.mxu0 %v3334
    %3450 = vmatpush1.bf16.msra.mxu0 %v3333
    %3451 = vmatprep.subr.bf16.mxu0 %v3338
    %3452 = vmatpush1.bf16.msra.mxu0 %v3337
    %3453 = vmatprep.subr.bf16.mxu0 %v3342
    %3454 = vmatpush1.bf16.msra.mxu0 %v3341
    %3455 = vmatprep.subr.bf16.mxu0 %v3346
    %3456 = vmatpush1.bf16.msra.mxu0 %v3345
    %3457 = vmatprep.subr.bf16.mxu0 %v3350
    %3458 = vmatpush1.bf16.msra.mxu0 %v3349
    %3459 = vmatprep.subr.bf16.mxu0 %v3354
    %3460 = vmatpush1.bf16.msra.mxu0 %v3353
    %3461 = vmatprep.subr.bf16.mxu0 %v3358
    %3462 = vmatpush1.bf16.msra.mxu0 %v3357
    %3463 = vmatprep.subr.bf16.mxu0 %v3362
    %3464 = vmatpush1.bf16.msra.mxu0 %v3361
    %3465 = vmatprep.subr.bf16.mxu0 %v3366
    %3466 = vmatpush1.bf16.msra.mxu0 %v3365
    %3467 = vmatprep.subr.bf16.mxu0 %v3370
    %3468 = vmatpush1.bf16.msra.mxu0 %v3369
    %3469 = vmatprep.mubr.bf16.mxu0 %v3052
    %3470 = vmatmul.mubr.bf16.gmra.mrb[0].mxu0 %v3051
    %v3471 = vpop.f32.mrb[0].mxu0
    %v3472 = vadd.f32 %v1116, %v3471
    %v3473 = vpop.f32.mrb[0].mxu0
    %v3474 = vadd.f32 %v1120, %v3473
    %v3475 = vpop.f32.mrb[0].mxu0
    %v3476 = vpop.f32.mrb[0].mxu0
    %3477 = vdwg.mxu0
    %3478 = vmatprep.subr.bf16.mxu0 %v3312
    %3479 = vmatpush1.bf16.msra.mxu0 %v3311
    %3480 = vmatprep.subr.bf16.mxu0 %v3316
    %3481 = vmatpush1.bf16.msra.mxu0 %v3315
    %3482 = vmatprep.subr.bf16.mxu0 %v3320
    %3483 = vmatpush1.bf16.msra.mxu0 %v3319
    %3484 = vmatprep.subr.bf16.mxu0 %v3324
    %3485 = vmatpush1.bf16.msra.mxu0 %v3323
    %3486 = vmatprep.subr.bf16.mxu0 %v3328
    %3487 = vmatpush1.bf16.msra.mxu0 %v3327
    %3488 = vmatprep.subr.bf16.mxu0 %v3332
    %3489 = vmatpush1.bf16.msra.mxu0 %v3331
    %3490 = vmatprep.subr.bf16.mxu0 %v3336
    %3491 = vmatpush1.bf16.msra.mxu0 %v3335
    %3492 = vmatprep.subr.bf16.mxu0 %v3340
    %3493 = vmatpush1.bf16.msra.mxu0 %v3339
    %3494 = vmatprep.subr.bf16.mxu0 %v3344
    %3495 = vmatpush1.bf16.msra.mxu0 %v3343
    %3496 = vmatprep.subr.bf16.mxu0 %v3348
    %3497 = vmatpush1.bf16.msra.mxu0 %v3347
    %3498 = vmatprep.subr.bf16.mxu0 %v3352
    %3499 = vmatpush1.bf16.msra.mxu0 %v3351
    %3500 = vmatprep.subr.bf16.mxu0 %v3356
    %3501 = vmatpush1.bf16.msra.mxu0 %v3355
    %3502 = vmatprep.subr.bf16.mxu0 %v3360
    %3503 = vmatpush1.bf16.msra.mxu0 %v3359
    %3504 = vmatprep.subr.bf16.mxu0 %v3364
    %3505 = vmatpush1.bf16.msra.mxu0 %v3363
    %3506 = vmatprep.subr.bf16.mxu0 %v3368
    %3507 = vmatpush1.bf16.msra.mxu0 %v3367
    %3508 = vmatprep.subr.bf16.mxu0 %v3372
    %3509 = vmatpush1.bf16.msra.mxu0 %v3371
    %3510 = vmatprep.mubr.bf16.mxu0 %v3052
    %3511 = vmatmul.mubr.bf16.gmra.mrb[0].mxu0 %v3051
    %v3512 = vpop.f32.mrb[0].mxu0
    %v3513 = vadd.f32 %v1124, %v3512
    %v3514 = vpop.f32.mrb[0].mxu0
    %v3515 = vadd.f32 %v1128, %v3514
    %v3516 = vpop.f32.mrb[0].mxu0
    %v3517 = vpop.f32.mrb[0].mxu0
    %3518 = vdwg.mxu0
    %v3519 = vsub.f32 0.0, %v3472
    %v3520 = vmul.f32 %v3519, 1.442695
    %v3521 = vpow.pop %v3520
    %v3522 = vadd.f32 %v3521, 1.0
    %v3523 = vrcp.pop %v3522
    %v3524 = vsub.f32 0.0, %v3474
    %v3525 = vmul.f32 %v3524, 1.442695
    %v3526 = vpow.pop %v3525
    %v3527 = vadd.f32 %v3526, 1.0
    %v3528 = vrcp.pop %v3527
    %v3529 = vtanh.pop %v3513
    %v3530 = vsub.f32 0.0, %v3515
    %v3531 = vmul.f32 %v3530, 1.442695
    %v3532 = vpow.pop %v3531
    %v3533 = vadd.f32 %v3532, 1.0
    %v3534 = vrcp.pop %v3533
    %v3535 = vmul.f32 %v3528, %v2737
    %v3536 = vmul.f32 %v3523, %v3529
    %v3537 = vadd.f32 %v3535, %v3536
    %v3538 = vtanh.pop %v3537
    %v3539 = vmul.f32 %v3534, %v3538
    %v3540 = vsel %vm3048, %v3539, %v2736
    %v3541 = vsel %vm3048, %v3537, %v2737
    %v3542 = vsel %vm3048, %v3539, 0.0
    %3543 = vst [vmem:[#allocation12 + $0x10] sm:$0xff] %v3542
    %vm3544 = vcmp.gt.s32.totalorder %v108, 3
    %v3545 = vld [vmem:[#allocation2 + $0x60] sm:$0xff]
    %v3546 = vld [vmem:[#allocation2 + $0x68] sm:$0xff]
    %v3547 = vld [vmem:[#allocation2 + $0x70] sm:$0xff]
    %v3548 = vld [vmem:[#allocation2 + $0x78] sm:$0xff]
    %v3549 = vld [vmem:[#allocation8] sm:$0xff]
    %v3550 = vld [vmem:[#allocation8 + $0x8] sm:$0xff]
    %v3551 = vld [vmem:[#allocation8 + $0x10] sm:$0xff]
    %v3552 = vld [vmem:[#allocation8 + $0x18] sm:$0xff]
    %v3553 = vld [vmem:[#allocation8 + $0x20] sm:$0xff]
    %v3554 = vld [vmem:[#allocation8 + $0x28] sm:$0xff]
    %v3555 = vld [vmem:[#allocation8 + $0x30] sm:$0xff]
    %v3556 = vld [vmem:[#allocation8 + $0x38] sm:$0xff]
    %v3557 = vld [vmem:[#allocation8 + $0x40] sm:$0xff]
    %v3558 = vld [vmem:[#allocation8 + $0x48] sm:$0xff]
    %v3559 = vld [vmem:[#allocation8 + $0x50] sm:$0xff]
    %v3560 = vld [vmem:[#allocation8 + $0x58] sm:$0xff]
    %v3561 = vld [vmem:[#allocation8 + $0x60] sm:$0xff]
    %v3562 = vld [vmem:[#allocation8 + $0x68] sm:$0xff]
    %v3563 = vld [vmem:[#allocation8 + $0x70] sm:$0xff]
    %v3564 = vld [vmem:[#allocation8 + $0x78] sm:$0xff]
    %v3565 = vld [vmem:[#allocation8 + $0x80] sm:$0xff]
    %v3566 = vld [vmem:[#allocation8 + $0x88] sm:$0xff]
    %v3567 = vld [vmem:[#allocation8 + $0x90] sm:$0xff]
    %v3568 = vld [vmem:[#allocation8 + $0x98] sm:$0xff]
    %v3569 = vld [vmem:[#allocation8 + $0xa0] sm:$0xff]
    %v3570 = vld [vmem:[#allocation8 + $0xa8] sm:$0xff]
    %v3571 = vld [vmem:[#allocation8 + $0xb0] sm:$0xff]
    %v3572 = vld [vmem:[#allocation8 + $0xb8] sm:$0xff]
    %v3573 = vld [vmem:[#allocation8 + $0xc0] sm:$0xff]
    %v3574 = vld [vmem:[#allocation8 + $0xc8] sm:$0xff]
    %v3575 = vld [vmem:[#allocation8 + $0xd0] sm:$0xff]
    %v3576 = vld [vmem:[#allocation8 + $0xd8] sm:$0xff]
    %v3577 = vld [vmem:[#allocation8 + $0xe0] sm:$0xff]
    %v3578 = vld [vmem:[#allocation8 + $0xe8] sm:$0xff]
    %v3579 = vld [vmem:[#allocation8 + $0xf0] sm:$0xff]
    %v3580 = vld [vmem:[#allocation8 + $0xf8] sm:$0xff]
    %v3613 = vunpack.c.l.b16 %v3549
    %v3614 = vunpack.c.h.b16 %v3549
    %v3615 = vunpack.c.l.b16 %v3550
    %v3616 = vunpack.c.h.b16 %v3550
    %v3617 = vunpack.c.l.b16 %v3551
    %v3618 = vunpack.c.h.b16 %v3551
    %v3619 = vunpack.c.l.b16 %v3552
    %v3620 = vunpack.c.h.b16 %v3552
    %v3621 = vunpack.c.l.b16 %v3553
    %v3622 = vunpack.c.h.b16 %v3553
    %v3623 = vunpack.c.l.b16 %v3554
    %v3624 = vunpack.c.h.b16 %v3554
    %v3625 = vunpack.c.l.b16 %v3555
    %v3626 = vunpack.c.h.b16 %v3555
    %v3627 = vunpack.c.l.b16 %v3556
    %v3628 = vunpack.c.h.b16 %v3556
    %v3629 = vunpack.c.l.b16 %v3557
    %v3630 = vunpack.c.h.b16 %v3557
    %v3631 = vunpack.c.l.b16 %v3558
    %v3632 = vunpack.c.h.b16 %v3558
    %v3633 = vunpack.c.l.b16 %v3559
    %v3634 = vunpack.c.h.b16 %v3559
    %v3635 = vunpack.c.l.b16 %v3560
    %v3636 = vunpack.c.h.b16 %v3560
    %v3637 = vunpack.c.l.b16 %v3561
    %v3638 = vunpack.c.h.b16 %v3561
    %v3639 = vunpack.c.l.b16 %v3562
    %v3640 = vunpack.c.h.b16 %v3562
    %v3641 = vunpack.c.l.b16 %v3563
    %v3642 = vunpack.c.h.b16 %v3563
    %v3643 = vunpack.c.l.b16 %v3564
    %v3644 = vunpack.c.h.b16 %v3564
    %v3645 = vunpack.c.l.b16 %v3565
    %v3646 = vunpack.c.h.b16 %v3565
    %v3647 = vunpack.c.l.b16 %v3566
    %v3648 = vunpack.c.h.b16 %v3566
    %v3649 = vunpack.c.l.b16 %v3567
    %v3650 = vunpack.c.h.b16 %v3567
    %v3651 = vunpack.c.l.b16 %v3568
    %v3652 = vunpack.c.h.b16 %v3568
    %v3653 = vunpack.c.l.b16 %v3569
    %v3654 = vunpack.c.h.b16 %v3569
    %v3655 = vunpack.c.l.b16 %v3570
    %v3656 = vunpack.c.h.b16 %v3570
    %v3657 = vunpack.c.l.b16 %v3571
    %v3658 = vunpack.c.h.b16 %v3571
    %v3659 = vunpack.c.l.b16 %v3572
    %v3660 = vunpack.c.h.b16 %v3572
    %v3661 = vunpack.c.l.b16 %v3573
    %v3662 = vunpack.c.h.b16 %v3573
    %v3663 = vunpack.c.l.b16 %v3574
    %v3664 = vunpack.c.h.b16 %v3574
    %v3665 = vunpack.c.l.b16 %v3575
    %v3666 = vunpack.c.h.b16 %v3575
    %v3667 = vunpack.c.l.b16 %v3576
    %v3668 = vunpack.c.h.b16 %v3576
    %v3669 = vunpack.c.l.b16 %v3577
    %v3670 = vunpack.c.h.b16 %v3577
    %v3671 = vunpack.c.l.b16 %v3578
    %v3672 = vunpack.c.h.b16 %v3578
    %v3673 = vunpack.c.l.b16 %v3579
    %v3674 = vunpack.c.h.b16 %v3579
    %v3675 = vunpack.c.l.b16 %v3580
    %v3676 = vunpack.c.h.b16 %v3580
    %v3677 = vpack.c.b16 %v3617, %v3613
    %v3678 = vpack.c.b16 %v3618, %v3614
    %v3679 = vpack.c.b16 %v3619, %v3615
    %v3680 = vpack.c.b16 %v3620, %v3616
    %v3681 = vpack.c.b16 %v3625, %v3621
    %v3682 = vpack.c.b16 %v3626, %v3622
    %v3683 = vpack.c.b16 %v3627, %v3623
    %v3684 = vpack.c.b16 %v3628, %v3624
    %v3685 = vpack.c.b16 %v3633, %v3629
    %v3686 = vpack.c.b16 %v3634, %v3630
    %v3687 = vpack.c.b16 %v3635, %v3631
    %v3688 = vpack.c.b16 %v3636, %v3632
    %v3689 = vpack.c.b16 %v3641, %v3637
    %v3690 = vpack.c.b16 %v3642, %v3638
    %v3691 = vpack.c.b16 %v3643, %v3639
    %v3692 = vpack.c.b16 %v3644, %v3640
    %v3693 = vpack.c.b16 %v3649, %v3645
    %v3694 = vpack.c.b16 %v3650, %v3646
    %v3695 = vpack.c.b16 %v3651, %v3647
    %v3696 = vpack.c.b16 %v3652, %v3648
    %v3697 = vpack.c.b16 %v3657, %v3653
    %v3698 = vpack.c.b16 %v3658, %v3654
    %v3699 = vpack.c.b16 %v3659, %v3655
    %v3700 = vpack.c.b16 %v3660, %v3656
    %v3701 = vpack.c.b16 %v3665, %v3661
    %v3702 = vpack.c.b16 %v3666, %v3662
    %v3703 = vpack.c.b16 %v3667, %v3663
    %v3704 = vpack.c.b16 %v3668, %v3664
    %v3705 = vpack.c.b16 %v3673, %v3669
    %v3706 = vpack.c.b16 %v3674, %v3670
    %v3707 = vpack.c.b16 %v3675, %v3671
    %v3708 = vpack.c.b16 %v3676, %v3672
    %3741 = vmatprep.subr.bf16.mxu0 %v3678
    %3742 = vmatpush1.bf16.msra.mxu0 %v3677
    %3743 = vmatprep.subr.bf16.mxu0 %v3682
    %3744 = vmatpush1.bf16.msra.mxu0 %v3681
    %3745 = vmatprep.subr.bf16.mxu0 %v3686
    %3746 = vmatpush1.bf16.msra.mxu0 %v3685
    %3747 = vmatprep.subr.bf16.mxu0 %v3690
    %3748 = vmatpush1.bf16.msra.mxu0 %v3689
    %3749 = vmatprep.subr.bf16.mxu0 %v3694
    %3750 = vmatpush1.bf16.msra.mxu0 %v3693
    %3751 = vmatprep.subr.bf16.mxu0 %v3698
    %3752 = vmatpush1.bf16.msra.mxu0 %v3697
    %3753 = vmatprep.subr.bf16.mxu0 %v3702
    %3754 = vmatpush1.bf16.msra.mxu0 %v3701
    %3755 = vmatprep.subr.bf16.mxu0 %v3706
    %3756 = vmatpush1.bf16.msra.mxu0 %v3705
    %3757 = vmatprep.subr.bf16.mxu0 0
    %3758 = vmatpush1.bf16.msra.mxu0 0
    %3759 = vmatprep.subr.bf16.mxu0 0
    %3760 = vmatpush1.bf16.msra.mxu0 0
    %3761 = vmatprep.subr.bf16.mxu0 0
    %3762 = vmatpush1.bf16.msra.mxu0 0
    %3763 = vmatprep.subr.bf16.mxu0 0
    %3764 = vmatpush1.bf16.msra.mxu0 0
    %3765 = vmatprep.subr.bf16.mxu0 0
    %3766 = vmatpush1.bf16.msra.mxu0 0
    %3767 = vmatprep.subr.bf16.mxu0 0
    %3768 = vmatpush1.bf16.msra.mxu0 0
    %3769 = vmatprep.subr.bf16.mxu0 0
    %3770 = vmatpush1.bf16.msra.mxu0 0
    %3771 = vmatprep.subr.bf16.mxu0 0
    %3772 = vmatpush1.bf16.msra.mxu0 0
    %3773 = vmatprep.mubr.bf16.mxu0 0
    %3774 = vmatmul.mubr.bf16.gmra.mrb[0].mxu0 %v3051
    %v3775 = vpop.f32.mrb[0].mxu0
    %v3776 = vadd.f32 0.0, %v3775
    %v3777 = vpop.f32.mrb[0].mxu0
    %v3778 = vadd.f32 0.0, %v3777
    %v3779 = vpop.f32.mrb[0].mxu0
    %v3780 = vpop.f32.mrb[0].mxu0
    %3781 = vdwg.mxu0
    %3782 = vmatprep.subr.bf16.mxu0 %v3680
    %3783 = vmatpush1.bf16.msra.mxu0 %v3679
    %3784 = vmatprep.subr.bf16.mxu0 %v3684
    %3785 = vmatpush1.bf16.msra.mxu0 %v3683
    %3786 = vmatprep.subr.bf16.mxu0 %v3688
    %3787 = vmatpush1.bf16.msra.mxu0 %v3687
    %3788 = vmatprep.subr.bf16.mxu0 %v3692
    %3789 = vmatpush1.bf16.msra.mxu0 %v3691
    %3790 = vmatprep.subr.bf16.mxu0 %v3696
    %3791 = vmatpush1.bf16.msra.mxu0 %v3695
    %3792 = vmatprep.subr.bf16.mxu0 %v3700
    %3793 = vmatpush1.bf16.msra.mxu0 %v3699
    %3794 = vmatprep.subr.bf16.mxu0 %v3704
    %3795 = vmatpush1.bf16.msra.mxu0 %v3703
    %3796 = vmatprep.subr.bf16.mxu0 %v3708
    %3797 = vmatpush1.bf16.msra.mxu0 %v3707
    %3798 = vmatprep.subr.bf16.mxu0 0
    %3799 = vmatpush1.bf16.msra.mxu0 0
    %3800 = vmatprep.subr.bf16.mxu0 0
    %3801 = vmatpush1.bf16.msra.mxu0 0
    %3802 = vmatprep.subr.bf16.mxu0 0
    %3803 = vmatpush1.bf16.msra.mxu0 0
    %3804 = vmatprep.subr.bf16.mxu0 0
    %3805 = vmatpush1.bf16.msra.mxu0 0
    %3806 = vmatprep.subr.bf16.mxu0 0
    %3807 = vmatpush1.bf16.msra.mxu0 0
    %3808 = vmatprep.subr.bf16.mxu0 0
    %3809 = vmatpush1.bf16.msra.mxu0 0
    %3810 = vmatprep.subr.bf16.mxu0 0
    %3811 = vmatpush1.bf16.msra.mxu0 0
    %3812 = vmatprep.subr.bf16.mxu0 0
    %3813 = vmatpush1.bf16.msra.mxu0 0
    %3814 = vmatprep.mubr.bf16.mxu0 0
    %3815 = vmatmul.mubr.bf16.gmra.mrb[0].mxu0 %v3051
    %v3816 = vpop.f32.mrb[0].mxu0
    %v3817 = vadd.f32 0.0, %v3816
    %v3818 = vpop.f32.mrb[0].mxu0
    %v3819 = vadd.f32 0.0, %v3818
    %v3820 = vpop.f32.mrb[0].mxu0
    %v3821 = vpop.f32.mrb[0].mxu0
    %3822 = vdwg.mxu0
    %v3823 = vadd.f32 %v3545, %v3776
    %v3824 = vadd.f32 %v3546, %v3778
    %v3825 = vadd.f32 %v3547, %v3817
    %v3826 = vadd.f32 %v3548, %v3819
    %v3827 = vsub.f32 0.0, %v3823
    %v3828 = vmul.f32 %v3827, 1.442695
    %v3829 = vpow.pop %v3828
    %v3830 = vadd.f32 %v3829, 1.0
    %v3831 = vrcp.pop %v3830
    %v3832 = vsub.f32 0.0, %v3824
    %v3833 = vmul.f32 %v3832, 1.442695
    %v3834 = vpow.pop %v3833
    %v3835 = vadd.f32 %v3834, 1.0
    %v3836 = vrcp.pop %v3835
    %v3837 = vtanh.pop %v3825
    %v3838 = vsub.f32 0.0, %v3826
    %v3839 = vmul.f32 %v3838, 1.442695
    %v3840 = vpow.pop %v3839
    %v3841 = vadd.f32 %v3840, 1.0
    %v3842 = vrcp.pop %v3841
    %v3843 = vmul.f32 %v3836, %v3050
    %v3844 = vmul.f32 %v3831, %v3837
    %v3845 = vadd.f32 %v3843, %v3844
    %v3846 = vtanh.pop %v3845
    %v3847 = vmul.f32 %v3842, %v3846
    %v3848 = vsel %vm3544, 1, 0
    %3849 = vset.pattern.permute.xlu0 0
    %3850 = vperm.xlu0 %3849, %v3848
    %v3851 = vpop.permute.xlu0 %3850
    %vm3852 = vcmp.eq.s32.totalorder %v3851, 1
    %v3853 = vsel %vm3852, %v3847, %v3049
    %v3854 = vsel %vm3852, %v3845, %v3050
    %v3855 = vpack.c.bf16 %v3853, %v3853
    %v3856 = vpack.c.bf16 %v3540, %v3540
    %v3857 = vld [vmem:[#allocation9] sm:$0xff]
    %v3858 = vld [vmem:[#allocation9 + $0x8] sm:$0xff]
    %v3859 = vld [vmem:[#allocation9 + $0x10] sm:$0xff]
    %v3860 = vld [vmem:[#allocation9 + $0x18] sm:$0xff]
    %v3861 = vld [vmem:[#allocation9 + $0x20] sm:$0xff]
    %v3862 = vld [vmem:[#allocation9 + $0x28] sm:$0xff]
    %v3863 = vld [vmem:[#allocation9 + $0x30] sm:$0xff]
    %v3864 = vld [vmem:[#allocation9 + $0x38] sm:$0xff]
    %v3865 = vld [vmem:[#allocation9 + $0x40] sm:$0xff]
    %v3866 = vld [vmem:[#allocation9 + $0x48] sm:$0xff]
    %v3867 = vld [vmem:[#allocation9 + $0x50] sm:$0xff]
    %v3868 = vld [vmem:[#allocation9 + $0x58] sm:$0xff]
    %v3869 = vld [vmem:[#allocation9 + $0x60] sm:$0xff]
    %v3870 = vld [vmem:[#allocation9 + $0x68] sm:$0xff]
    %v3871 = vld [vmem:[#allocation9 + $0x70] sm:$0xff]
    %v3872 = vld [vmem:[#allocation9 + $0x78] sm:$0xff]
    %v3873 = vld [vmem:[#allocation9 + $0x80] sm:$0xff]
    %v3874 = vld [vmem:[#allocation9 + $0x88] sm:$0xff]
    %v3875 = vld [vmem:[#allocation9 + $0x90] sm:$0xff]
    %v3876 = vld [vmem:[#allocation9 + $0x98] sm:$0xff]
    %v3877 = vld [vmem:[#allocation9 + $0xa0] sm:$0xff]
    %v3878 = vld [vmem:[#allocation9 + $0xa8] sm:$0xff]
    %v3879 = vld [vmem:[#allocation9 + $0xb0] sm:$0xff]
    %v3880 = vld [vmem:[#allocation9 + $0xb8] sm:$0xff]
    %v3881 = vld [vmem:[#allocation9 + $0xc0] sm:$0xff]
    %v3882 = vld [vmem:[#allocation9 + $0xc8] sm:$0xff]
    %v3883 = vld [vmem:[#allocation9 + $0xd0] sm:$0xff]
    %v3884 = vld [vmem:[#allocation9 + $0xd8] sm:$0xff]
    %v3885 = vld [vmem:[#allocation9 + $0xe0] sm:$0xff]
    %v3886 = vld [vmem:[#allocation9 + $0xe8] sm:$0xff]
    %v3887 = vld [vmem:[#allocation9 + $0xf0] sm:$0xff]
    %v3888 = vld [vmem:[#allocation9 + $0xf8] sm:$0xff]
    %v3889 = vld [vmem:[#allocation9 + $0x100] sm:$0xff]
    %v3890 = vld [vmem:[#allocation9 + $0x108] sm:$0xff]
    %v3891 = vld [vmem:[#allocation9 + $0x110] sm:$0xff]
    %v3892 = vld [vmem:[#allocation9 + $0x118] sm:$0xff]
    %v3893 = vld [vmem:[#allocation9 + $0x120] sm:$0xff]
    %v3894 = vld [vmem:[#allocation9 + $0x128] sm:$0xff]
    %v3895 = vld [vmem:[#allocation9 + $0x130] sm:$0xff]
    %v3896 = vld [vmem:[#allocation9 + $0x138] sm:$0xff]
    %v3897 = vld [vmem:[#allocation9 + $0x140] sm:$0xff]
    %v3898 = vld [vmem:[#allocation9 + $0x148] sm:$0xff]
    %v3899 = vld [vmem:[#allocation9 + $0x150] sm:$0xff]
    %v3900 = vld [vmem:[#allocation9 + $0x158] sm:$0xff]
    %v3901 = vld [vmem:[#allocation9 + $0x160] sm:$0xff]
    %v3902 = vld [vmem:[#allocation9 + $0x168] sm:$0xff]
    %v3903 = vld [vmem:[#allocation9 + $0x170] sm:$0xff]
    %v3904 = vld [vmem:[#allocation9 + $0x178] sm:$0xff]
    %v3905 = vld [vmem:[#allocation9 + $0x180] sm:$0xff]
    %v3906 = vld [vmem:[#allocation9 + $0x188] sm:$0xff]
    %v3907 = vld [vmem:[#allocation9 + $0x190] sm:$0xff]
    %v3908 = vld [vmem:[#allocation9 + $0x198] sm:$0xff]
    %v3909 = vld [vmem:[#allocation9 + $0x1a0] sm:$0xff]
    %v3910 = vld [vmem:[#allocation9 + $0x1a8] sm:$0xff]
    %v3911 = vld [vmem:[#allocation9 + $0x1b0] sm:$0xff]
    %v3912 = vld [vmem:[#allocation9 + $0x1b8] sm:$0xff]
    %v3913 = vld [vmem:[#allocation9 + $0x1c0] sm:$0xff]
    %v3914 = vld [vmem:[#allocation9 + $0x1c8] sm:$0xff]
    %v3915 = vld [vmem:[#allocation9 + $0x1d0] sm:$0xff]
    %v3916 = vld [vmem:[#allocation9 + $0x1d8] sm:$0xff]
    %v3917 = vld [vmem:[#allocation9 + $0x1e0] sm:$0xff]
    %v3918 = vld [vmem:[#allocation9 + $0x1e8] sm:$0xff]
    %v3919 = vld [vmem:[#allocation9 + $0x1f0] sm:$0xff]
    %v3920 = vld [vmem:[#allocation9 + $0x1f8] sm:$0xff]
    %v3985 = vunpack.c.l.b16 %v3857
    %v3986 = vunpack.c.h.b16 %v3857
    %v3987 = vunpack.c.l.b16 %v3858
    %v3988 = vunpack.c.h.b16 %v3858
    %v3989 = vunpack.c.l.b16 %v3859
    %v3990 = vunpack.c.h.b16 %v3859
    %v3991 = vunpack.c.l.b16 %v3860
    %v3992 = vunpack.c.h.b16 %v3860
    %v3993 = vunpack.c.l.b16 %v3861
    %v3994 = vunpack.c.h.b16 %v3861
    %v3995 = vunpack.c.l.b16 %v3862
    %v3996 = vunpack.c.h.b16 %v3862
    %v3997 = vunpack.c.l.b16 %v3863
    %v3998 = vunpack.c.h.b16 %v3863
    %v3999 = vunpack.c.l.b16 %v3864
    %v4000 = vunpack.c.h.b16 %v3864
    %v4001 = vunpack.c.l.b16 %v3865
    %v4002 = vunpack.c.h.b16 %v3865
    %v4003 = vunpack.c.l.b16 %v3866
    %v4004 = vunpack.c.h.b16 %v3866
    %v4005 = vunpack.c.l.b16 %v3867
    %v4006 = vunpack.c.h.b16 %v3867
    %v4007 = vunpack.c.l.b16 %v3868
    %v4008 = vunpack.c.h.b16 %v3868
    %v4009 = vunpack.c.l.b16 %v3869
    %v4010 = vunpack.c.h.b16 %v3869
    %v4011 = vunpack.c.l.b16 %v3870
    %v4012 = vunpack.c.h.b16 %v3870
    %v4013 = vunpack.c.l.b16 %v3871
    %v4014 = vunpack.c.h.b16 %v3871
    %v4015 = vunpack.c.l.b16 %v3872
    %v4016 = vunpack.c.h.b16 %v3872
    %v4017 = vunpack.c.l.b16 %v3873
    %v4018 = vunpack.c.h.b16 %v3873
    %v4019 = vunpack.c.l.b16 %v3874
    %v4020 = vunpack.c.h.b16 %v3874
    %v4021 = vunpack.c.l.b16 %v3875
    %v4022 = vunpack.c.h.b16 %v3875
    %v4023 = vunpack.c.l.b16 %v3876
    %v4024 = vunpack.c.h.b16 %v3876
    %v4025 = vunpack.c.l.b16 %v3877
    %v4026 = vunpack.c.h.b16 %v3877
    %v4027 = vunpack.c.l.b16 %v3878
    %v4028 = vunpack.c.h.b16 %v3878
    %v4029 = vunpack.c.l.b16 %v3879
    %v4030 = vunpack.c.h.b16 %v3879
    %v4031 = vunpack.c.l.b16 %v3880
    %v4032 = vunpack.c.h.b16 %v3880
    %v4033 = vunpack.c.l.b16 %v3881
    %v4034 = vunpack.c.h.b16 %v3881
    %v4035 = vunpack.c.l.b16 %v3882
    %v4036 = vunpack.c.h.b16 %v3882
    %v4037 = vunpack.c.l.b16 %v3883
    %v4038 = vunpack.c.h.b16 %v3883
    %v4039 = vunpack.c.l.b16 %v3884
    %v4040 = vunpack.c.h.b16 %v3884
    %v4041 = vunpack.c.l.b16 %v3885
    %v4042 = vunpack.c.h.b16 %v3885
    %v4043 = vunpack.c.l.b16 %v3886
    %v4044 = vunpack.c.h.b16 %v3886
    %v4045 = vunpack.c.l.b16 %v3887
    %v4046 = vunpack.c.h.b16 %v3887
    %v4047 = vunpack.c.l.b16 %v3888
    %v4048 = vunpack.c.h.b16 %v3888
    %v4049 = vunpack.c.l.b16 %v3889
    %v4050 = vunpack.c.h.b16 %v3889
    %v4051 = vunpack.c.l.b16 %v3890
    %v4052 = vunpack.c.h.b16 %v3890
    %v4053 = vunpack.c.l.b16 %v3891
    %v4054 = vunpack.c.h.b16 %v3891
    %v4055 = vunpack.c.l.b16 %v3892
    %v4056 = vunpack.c.h.b16 %v3892
    %v4057 = vunpack.c.l.b16 %v3893
    %v4058 = vunpack.c.h.b16 %v3893
    %v4059 = vunpack.c.l.b16 %v3894
    %v4060 = vunpack.c.h.b16 %v3894
    %v4061 = vunpack.c.l.b16 %v3895
    %v4062 = vunpack.c.h.b16 %v3895
    %v4063 = vunpack.c.l.b16 %v3896
    %v4064 = vunpack.c.h.b16 %v3896
    %v4065 = vunpack.c.l.b16 %v3897
    %v4066 = vunpack.c.h.b16 %v3897
    %v4067 = vunpack.c.l.b16 %v3898
    %v4068 = vunpack.c.h.b16 %v3898
    %v4069 = vunpack.c.l.b16 %v3899
    %v4070 = vunpack.c.h.b16 %v3899
    %v4071 = vunpack.c.l.b16 %v3900
    %v4072 = vunpack.c.h.b16 %v3900
    %v4073 = vunpack.c.l.b16 %v3901
    %v4074 = vunpack.c.h.b16 %v3901
    %v4075 = vunpack.c.l.b16 %v3902
    %v4076 = vunpack.c.h.b16 %v3902
    %v4077 = vunpack.c.l.b16 %v3903
    %v4078 = vunpack.c.h.b16 %v3903
    %v4079 = vunpack.c.l.b16 %v3904
    %v4080 = vunpack.c.h.b16 %v3904
    %v4081 = vunpack.c.l.b16 %v3905
    %v4082 = vunpack.c.h.b16 %v3905
    %v4083 = vunpack.c.l.b16 %v3906
    %v4084 = vunpack.c.h.b16 %v3906
    %v4085 = vunpack.c.l.b16 %v3907
    %v4086 = vunpack.c.h.b16 %v3907
    %v4087 = vunpack.c.l.b16 %v3908
    %v4088 = vunpack.c.h.b16 %v3908
    %v4089 = vunpack.c.l.b16 %v3909
    %v4090 = vunpack.c.h.b16 %v3909
    %v4091 = vunpack.c.l.b16 %v3910
    %v4092 = vunpack.c.h.b16 %v3910
    %v4093 = vunpack.c.l.b16 %v3911
    %v4094 = vunpack.c.h.b16 %v3911
    %v4095 = vunpack.c.l.b16 %v3912
    %v4096 = vunpack.c.h.b16 %v3912
    %v4097 = vunpack.c.l.b16 %v3913
    %v4098 = vunpack.c.h.b16 %v3913
    %v4099 = vunpack.c.l.b16 %v3914
    %v4100 = vunpack.c.h.b16 %v3914
    %v4101 = vunpack.c.l.b16 %v3915
    %v4102 = vunpack.c.h.b16 %v3915
    %v4103 = vunpack.c.l.b16 %v3916
    %v4104 = vunpack.c.h.b16 %v3916
    %v4105 = vunpack.c.l.b16 %v3917
    %v4106 = vunpack.c.h.b16 %v3917
    %v4107 = vunpack.c.l.b16 %v3918
    %v4108 = vunpack.c.h.b16 %v3918
    %v4109 = vunpack.c.l.b16 %v3919
    %v4110 = vunpack.c.h.b16 %v3919
    %v4111 = vunpack.c.l.b16 %v3920
    %v4112 = vunpack.c.h.b16 %v3920
    %v4113 = vpack.c.b16 %v3989, %v3985
    %v4114 = vpack.c.b16 %v3990, %v3986
    %v4115 = vpack.c.b16 %v3991, %v3987
    %v4116 = vpack.c.b16 %v3992, %v3988
    %v4117 = vpack.c.b16 %v3997, %v3993
    %v4118 = vpack.c.b16 %v3998, %v3994
    %v4119 = vpack.c.b16 %v3999, %v3995
    %v4120 = vpack.c.b16 %v4000, %v3996
    %v4121 = vpack.c.b16 %v4005, %v4001
    %v4122 = vpack.c.b16 %v4006, %v4002
    %v4123 = vpack.c.b16 %v4007, %v4003
    %v4124 = vpack.c.b16 %v4008, %v4004
    %v4125 = vpack.c.b16 %v4013, %v4009
    %v4126 = vpack.c.b16 %v4014, %v4010
    %v4127 = vpack.c.b16 %v4015, %v4011
    %v4128 = vpack.c.b16 %v4016, %v4012
    %v4129 = vpack.c.b16 %v4021, %v4017
    %v4130 = vpack.c.b16 %v4022, %v4018
    %v4131 = vpack.c.b16 %v4023, %v4019
    %v4132 = vpack.c.b16 %v4024, %v4020
    %v4133 = vpack.c.b16 %v4029, %v4025
    %v4134 = vpack.c.b16 %v4030, %v4026
    %v4135 = vpack.c.b16 %v4031, %v4027
    %v4136 = vpack.c.b16 %v4032, %v4028
    %v4137 = vpack.c.b16 %v4037, %v4033
    %v4138 = vpack.c.b16 %v4038, %v4034
    %v4139 = vpack.c.b16 %v4039, %v4035
    %v4140 = vpack.c.b16 %v4040, %v4036
    %v4141 = vpack.c.b16 %v4045, %v4041
    %v4142 = vpack.c.b16 %v4046, %v4042
    %v4143 = vpack.c.b16 %v4047, %v4043
    %v4144 = vpack.c.b16 %v4048, %v4044
    %v4145 = vpack.c.b16 %v4053, %v4049
    %v4146 = vpack.c.b16 %v4054, %v4050
    %v4147 = vpack.c.b16 %v4055, %v4051
    %v4148 = vpack.c.b16 %v4056, %v4052
    %v4149 = vpack.c.b16 %v4061, %v4057
    %v4150 = vpack.c.b16 %v4062, %v4058
    %v4151 = vpack.c.b16 %v4063, %v4059
    %v4152 = vpack.c.b16 %v4064, %v4060
    %v4153 = vpack.c.b16 %v4069, %v4065
    %v4154 = vpack.c.b16 %v4070, %v4066
    %v4155 = vpack.c.b16 %v4071, %v4067
    %v4156 = vpack.c.b16 %v4072, %v4068
    %v4157 = vpack.c.b16 %v4077, %v4073
    %v4158 = vpack.c.b16 %v4078, %v4074
    %v4159 = vpack.c.b16 %v4079, %v4075
    %v4160 = vpack.c.b16 %v4080, %v4076
    %v4161 = vpack.c.b16 %v4085, %v4081
    %v4162 = vpack.c.b16 %v4086, %v4082
    %v4163 = vpack.c.b16 %v4087, %v4083
    %v4164 = vpack.c.b16 %v4088, %v4084
    %v4165 = vpack.c.b16 %v4093, %v4089
    %v4166 = vpack.c.b16 %v4094, %v4090
    %v4167 = vpack.c.b16 %v4095, %v4091
    %v4168 = vpack.c.b16 %v4096, %v4092
    %v4169 = vpack.c.b16 %v4101, %v4097
    %v4170 = vpack.c.b16 %v4102, %v4098
    %v4171 = vpack.c.b16 %v4103, %v4099
    %v4172 = vpack.c.b16 %v4104, %v4100
    %v4173 = vpack.c.b16 %v4109, %v4105
    %v4174 = vpack.c.b16 %v4110, %v4106
    %v4175 = vpack.c.b16 %v4111, %v4107
    %v4176 = vpack.c.b16 %v4112, %v4108
    %4241 = vmatprep.subr.bf16.mxu0 %v4114
    %4242 = vmatpush1.bf16.msra.mxu0 %v4113
    %4243 = vmatprep.subr.bf16.mxu0 %v4118
    %4244 = vmatpush1.bf16.msra.mxu0 %v4117
    %4245 = vmatprep.subr.bf16.mxu0 %v4122
    %4246 = vmatpush1.bf16.msra.mxu0 %v4121
    %4247 = vmatprep.subr.bf16.mxu0 %v4126
    %4248 = vmatpush1.bf16.msra.mxu0 %v4125
    %4249 = vmatprep.subr.bf16.mxu0 %v4130
    %4250 = vmatpush1.bf16.msra.mxu0 %v4129
    %4251 = vmatprep.subr.bf16.mxu0 %v4134
    %4252 = vmatpush1.bf16.msra.mxu0 %v4133
    %4253 = vmatprep.subr.bf16.mxu0 %v4138
    %4254 = vmatpush1.bf16.msra.mxu0 %v4137
    %4255 = vmatprep.subr.bf16.mxu0 %v4142
    %4256 = vmatpush1.bf16.msra.mxu0 %v4141
    %4257 = vmatprep.subr.bf16.mxu0 %v4146
    %4258 = vmatpush1.bf16.msra.mxu0 %v4145
    %4259 = vmatprep.subr.bf16.mxu0 %v4150
    %4260 = vmatpush1.bf16.msra.mxu0 %v4149
    %4261 = vmatprep.subr.bf16.mxu0 %v4154
    %4262 = vmatpush1.bf16.msra.mxu0 %v4153
    %4263 = vmatprep.subr.bf16.mxu0 %v4158
    %4264 = vmatpush1.bf16.msra.mxu0 %v4157
    %4265 = vmatprep.subr.bf16.mxu0 %v4162
    %4266 = vmatpush1.bf16.msra.mxu0 %v4161
    %4267 = vmatprep.subr.bf16.mxu0 %v4166
    %4268 = vmatpush1.bf16.msra.mxu0 %v4165
    %4269 = vmatprep.subr.bf16.mxu0 %v4170
    %4270 = vmatpush1.bf16.msra.mxu0 %v4169
    %4271 = vmatprep.subr.bf16.mxu0 %v4174
    %4272 = vmatpush1.bf16.msra.mxu0 %v4173
    %4273 = vmatprep.mubr.bf16.mxu0 %v3856
    %4274 = vmatmul.mubr.bf16.gmra.mrb[0].mxu0 %v3855
    %v4275 = vpop.f32.mrb[0].mxu0
    %v4276 = vadd.f32 %v1116, %v4275
    %v4277 = vpop.f32.mrb[0].mxu0
    %v4278 = vadd.f32 %v1120, %v4277
    %v4279 = vpop.f32.mrb[0].mxu0
    %v4280 = vpop.f32.mrb[0].mxu0
    %4281 = vdwg.mxu0
    %4282 = vmatprep.subr.bf16.mxu0 %v4116
    %4283 = vmatpush1.bf16.msra.mxu0 %v4115
    %4284 = vmatprep.subr.bf16.mxu0 %v4120
    %4285 = vmatpush1.bf16.msra.mxu0 %v4119
    %4286 = vmatprep.subr.bf16.mxu0 %v4124
    %4287 = vmatpush1.bf16.msra.mxu0 %v4123
    %4288 = vmatprep.subr.bf16.mxu0 %v4128
    %4289 = vmatpush1.bf16.msra.mxu0 %v4127
    %4290 = vmatprep.subr.bf16.mxu0 %v4132
    %4291 = vmatpush1.bf16.msra.mxu0 %v4131
    %4292 = vmatprep.subr.bf16.mxu0 %v4136
    %4293 = vmatpush1.bf16.msra.mxu0 %v4135
    %4294 = vmatprep.subr.bf16.mxu0 %v4140
    %4295 = vmatpush1.bf16.msra.mxu0 %v4139
    %4296 = vmatprep.subr.bf16.mxu0 %v4144
    %4297 = vmatpush1.bf16.msra.mxu0 %v4143
    %4298 = vmatprep.subr.bf16.mxu0 %v4148
    %4299 = vmatpush1.bf16.msra.mxu0 %v4147
    %4300 = vmatprep.subr.bf16.mxu0 %v4152
    %4301 = vmatpush1.bf16.msra.mxu0 %v4151
    %4302 = vmatprep.subr.bf16.mxu0 %v4156
    %4303 = vmatpush1.bf16.msra.mxu0 %v4155
    %4304 = vmatprep.subr.bf16.mxu0 %v4160
    %4305 = vmatpush1.bf16.msra.mxu0 %v4159
    %4306 = vmatprep.subr.bf16.mxu0 %v4164
    %4307 = vmatpush1.bf16.msra.mxu0 %v4163
    %4308 = vmatprep.subr.bf16.mxu0 %v4168
    %4309 = vmatpush1.bf16.msra.mxu0 %v4167
    %4310 = vmatprep.subr.bf16.mxu0 %v4172
    %4311 = vmatpush1.bf16.msra.mxu0 %v4171
    %4312 = vmatprep.subr.bf16.mxu0 %v4176
    %4313 = vmatpush1.bf16.msra.mxu0 %v4175
    %4314 = vmatprep.mubr.bf16.mxu0 %v3856
    %4315 = vmatmul.mubr.bf16.gmra.mrb[0].mxu0 %v3855
    %v4316 = vpop.f32.mrb[0].mxu0
    %v4317 = vadd.f32 %v1124, %v4316
    %v4318 = vpop.f32.mrb[0].mxu0
    %v4319 = vadd.f32 %v1128, %v4318
    %v4320 = vpop.f32.mrb[0].mxu0
    %v4321 = vpop.f32.mrb[0].mxu0
    %4322 = vdwg.mxu0
    %v4323 = vsub.f32 0.0, %v4276
    %v4324 = vmul.f32 %v4323, 1.442695
    %v4325 = vpow.pop %v4324
    %v4326 = vadd.f32 %v4325, 1.0
    %v4327 = vrcp.pop %v4326
    %v4328 = vsub.f32 0.0, %v4278
    %v4329 = vmul.f32 %v4328, 1.442695
    %v4330 = vpow.pop %v4329
    %v4331 = vadd.f32 %v4330, 1.0
    %v4332 = vrcp.pop %v4331
    %v4333 = vtanh.pop %v4317
    %v4334 = vsub.f32 0.0, %v4319
    %v4335 = vmul.f32 %v4334, 1.442695
    %v4336 = vpow.pop %v4335
    %v4337 = vadd.f32 %v4336, 1.0
    %v4338 = vrcp.pop %v4337
    %v4339 = vmul.f32 %v4332, %v3541
    %v4340 = vmul.f32 %v4327, %v4333
    %v4341 = vadd.f32 %v4339, %v4340
    %v4342 = vtanh.pop %v4341
    %v4343 = vmul.f32 %v4338, %v4342
    %v4344 = vsel %vm3852, %v4343, %v3540
    %v4345 = vsel %vm3852, %v4341, %v3541
    %v4346 = vsel %vm3852, %v4343, 0.0
    %4347 = vst [vmem:[#allocation12 + $0x18] sm:$0xff] %v4346
    %vm4348 = vcmp.gt.s32.totalorder %v108, 4
    %v4349 = vld [vmem:[#allocation2 + $0x80] sm:$0xff]
    %v4350 = vld [vmem:[#allocation2 + $0x88] sm:$0xff]
    %v4351 = vld [vmem:[#allocation2 + $0x90] sm:$0xff]
    %v4352 = vld [vmem:[#allocation2 + $0x98] sm:$0xff]
    %v4353 = vld [vmem:[#allocation8] sm:$0xff]
    %v4354 = vld [vmem:[#allocation8 + $0x8] sm:$0xff]
    %v4355 = vld [vmem:[#allocation8 + $0x10] sm:$0xff]
    %v4356 = vld [vmem:[#allocation8 + $0x18] sm:$0xff]
    %v4357 = vld [vmem:[#allocation8 + $0x20] sm:$0xff]
    %v4358 = vld [vmem:[#allocation8 + $0x28] sm:$0xff]
    %v4359 = vld [vmem:[#allocation8 + $0x30] sm:$0xff]
    %v4360 = vld [vmem:[#allocation8 + $0x38] sm:$0xff]
    %v4361 = vld [vmem:[#allocation8 + $0x40] sm:$0xff]
    %v4362 = vld [vmem:[#allocation8 + $0x48] sm:$0xff]
    %v4363 = vld [vmem:[#allocation8 + $0x50] sm:$0xff]
    %v4364 = vld [vmem:[#allocation8 + $0x58] sm:$0xff]
    %v4365 = vld [vmem:[#allocation8 + $0x60] sm:$0xff]
    %v4366 = vld [vmem:[#allocation8 + $0x68] sm:$0xff]
    %v4367 = vld [vmem:[#allocation8 + $0x70] sm:$0xff]
    %v4368 = vld [vmem:[#allocation8 + $0x78] sm:$0xff]
    %v4369 = vld [vmem:[#allocation8 + $0x80] sm:$0xff]
    %v4370 = vld [vmem:[#allocation8 + $0x88] sm:$0xff]
    %v4371 = vld [vmem:[#allocation8 + $0x90] sm:$0xff]
    %v4372 = vld [vmem:[#allocation8 + $0x98] sm:$0xff]
    %v4373 = vld [vmem:[#allocation8 + $0xa0] sm:$0xff]
    %v4374 = vld [vmem:[#allocation8 + $0xa8] sm:$0xff]
    %v4375 = vld [vmem:[#allocation8 + $0xb0] sm:$0xff]
    %v4376 = vld [vmem:[#allocation8 + $0xb8] sm:$0xff]
    %v4377 = vld [vmem:[#allocation8 + $0xc0] sm:$0xff]
    %v4378 = vld [vmem:[#allocation8 + $0xc8] sm:$0xff]
    %v4379 = vld [vmem:[#allocation8 + $0xd0] sm:$0xff]
    %v4380 = vld [vmem:[#allocation8 + $0xd8] sm:$0xff]
    %v4381 = vld [vmem:[#allocation8 + $0xe0] sm:$0xff]
    %v4382 = vld [vmem:[#allocation8 + $0xe8] sm:$0xff]
    %v4383 = vld [vmem:[#allocation8 + $0xf0] sm:$0xff]
    %v4384 = vld [vmem:[#allocation8 + $0xf8] sm:$0xff]
    %v4417 = vunpack.c.l.b16 %v4353
    %v4418 = vunpack.c.h.b16 %v4353
    %v4419 = vunpack.c.l.b16 %v4354
    %v4420 = vunpack.c.h.b16 %v4354
    %v4421 = vunpack.c.l.b16 %v4355
    %v4422 = vunpack.c.h.b16 %v4355
    %v4423 = vunpack.c.l.b16 %v4356
    %v4424 = vunpack.c.h.b16 %v4356
    %v4425 = vunpack.c.l.b16 %v4357
    %v4426 = vunpack.c.h.b16 %v4357
    %v4427 = vunpack.c.l.b16 %v4358
    %v4428 = vunpack.c.h.b16 %v4358
    %v4429 = vunpack.c.l.b16 %v4359
    %v4430 = vunpack.c.h.b16 %v4359
    %v4431 = vunpack.c.l.b16 %v4360
    %v4432 = vunpack.c.h.b16 %v4360
    %v4433 = vunpack.c.l.b16 %v4361
    %v4434 = vunpack.c.h.b16 %v4361
    %v4435 = vunpack.c.l.b16 %v4362
    %v4436 = vunpack.c.h.b16 %v4362
    %v4437 = vunpack.c.l.b16 %v4363
    %v4438 = vunpack.c.h.b16 %v4363
    %v4439 = vunpack.c.l.b16 %v4364
    %v4440 = vunpack.c.h.b16 %v4364
    %v4441 = vunpack.c.l.b16 %v4365
    %v4442 = vunpack.c.h.b16 %v4365
    %v4443 = vunpack.c.l.b16 %v4366
    %v4444 = vunpack.c.h.b16 %v4366
    %v4445 = vunpack.c.l.b16 %v4367
    %v4446 = vunpack.c.h.b16 %v4367
    %v4447 = vunpack.c.l.b16 %v4368
    %v4448 = vunpack.c.h.b16 %v4368
    %v4449 = vunpack.c.l.b16 %v4369
    %v4450 = vunpack.c.h.b16 %v4369
    %v4451 = vunpack.c.l.b16 %v4370
    %v4452 = vunpack.c.h.b16 %v4370
    %v4453 = vunpack.c.l.b16 %v4371
    %v4454 = vunpack.c.h.b16 %v4371
    %v4455 = vunpack.c.l.b16 %v4372
    %v4456 = vunpack.c.h.b16 %v4372
    %v4457 = vunpack.c.l.b16 %v4373
    %v4458 = vunpack.c.h.b16 %v4373
    %v4459 = vunpack.c.l.b16 %v4374
    %v4460 = vunpack.c.h.b16 %v4374
    %v4461 = vunpack.c.l.b16 %v4375
    %v4462 = vunpack.c.h.b16 %v4375
    %v4463 = vunpack.c.l.b16 %v4376
    %v4464 = vunpack.c.h.b16 %v4376
    %v4465 = vunpack.c.l.b16 %v4377
    %v4466 = vunpack.c.h.b16 %v4377
    %v4467 = vunpack.c.l.b16 %v4378
    %v4468 = vunpack.c.h.b16 %v4378
    %v4469 = vunpack.c.l.b16 %v4379
    %v4470 = vunpack.c.h.b16 %v4379
    %v4471 = vunpack.c.l.b16 %v4380
    %v4472 = vunpack.c.h.b16 %v4380
    %v4473 = vunpack.c.l.b16 %v4381
    %v4474 = vunpack.c.h.b16 %v4381
    %v4475 = vunpack.c.l.b16 %v4382
    %v4476 = vunpack.c.h.b16 %v4382
    %v4477 = vunpack.c.l.b16 %v4383
    %v4478 = vunpack.c.h.b16 %v4383
    %v4479 = vunpack.c.l.b16 %v4384
    %v4480 = vunpack.c.h.b16 %v4384
    %v4481 = vpack.c.b16 %v4421, %v4417
    %v4482 = vpack.c.b16 %v4422, %v4418
    %v4483 = vpack.c.b16 %v4423, %v4419
    %v4484 = vpack.c.b16 %v4424, %v4420
    %v4485 = vpack.c.b16 %v4429, %v4425
    %v4486 = vpack.c.b16 %v4430, %v4426
    %v4487 = vpack.c.b16 %v4431, %v4427
    %v4488 = vpack.c.b16 %v4432, %v4428
    %v4489 = vpack.c.b16 %v4437, %v4433
    %v4490 = vpack.c.b16 %v4438, %v4434
    %v4491 = vpack.c.b16 %v4439, %v4435
    %v4492 = vpack.c.b16 %v4440, %v4436
    %v4493 = vpack.c.b16 %v4445, %v4441
    %v4494 = vpack.c.b16 %v4446, %v4442
    %v4495 = vpack.c.b16 %v4447, %v4443
    %v4496 = vpack.c.b16 %v4448, %v4444
    %v4497 = vpack.c.b16 %v4453, %v4449
    %v4498 = vpack.c.b16 %v4454, %v4450
    %v4499 = vpack.c.b16 %v4455, %v4451
    %v4500 = vpack.c.b16 %v4456, %v4452
    %v4501 = vpack.c.b16 %v4461, %v4457
    %v4502 = vpack.c.b16 %v4462, %v4458
    %v4503 = vpack.c.b16 %v4463, %v4459
    %v4504 = vpack.c.b16 %v4464, %v4460
    %v4505 = vpack.c.b16 %v4469, %v4465
    %v4506 = vpack.c.b16 %v4470, %v4466
    %v4507 = vpack.c.b16 %v4471, %v4467
    %v4508 = vpack.c.b16 %v4472, %v4468
    %v4509 = vpack.c.b16 %v4477, %v4473
    %v4510 = vpack.c.b16 %v4478, %v4474
    %v4511 = vpack.c.b16 %v4479, %v4475
    %v4512 = vpack.c.b16 %v4480, %v4476
    %4545 = vmatprep.subr.bf16.mxu0 %v4482
    %4546 = vmatpush1.bf16.msra.mxu0 %v4481
    %4547 = vmatprep.subr.bf16.mxu0 %v4486
    %4548 = vmatpush1.bf16.msra.mxu0 %v4485
    %4549 = vmatprep.subr.bf16.mxu0 %v4490
    %4550 = vmatpush1.bf16.msra.mxu0 %v4489
    %4551 = vmatprep.subr.bf16.mxu0 %v4494
    %4552 = vmatpush1.bf16.msra.mxu0 %v4493
    %4553 = vmatprep.subr.bf16.mxu0 %v4498
    %4554 = vmatpush1.bf16.msra.mxu0 %v4497
    %4555 = vmatprep.subr.bf16.mxu0 %v4502
    %4556 = vmatpush1.bf16.msra.mxu0 %v4501
    %4557 = vmatprep.subr.bf16.mxu0 %v4506
    %4558 = vmatpush1.bf16.msra.mxu0 %v4505
    %4559 = vmatprep.subr.bf16.mxu0 %v4510
    %4560 = vmatpush1.bf16.msra.mxu0 %v4509
    %4561 = vmatprep.subr.bf16.mxu0 0
    %4562 = vmatpush1.bf16.msra.mxu0 0
    %4563 = vmatprep.subr.bf16.mxu0 0
    %4564 = vmatpush1.bf16.msra.mxu0 0
    %4565 = vmatprep.subr.bf16.mxu0 0
    %4566 = vmatpush1.bf16.msra.mxu0 0
    %4567 = vmatprep.subr.bf16.mxu0 0
    %4568 = vmatpush1.bf16.msra.mxu0 0
    %4569 = vmatprep.subr.bf16.mxu0 0
    %4570 = vmatpush1.bf16.msra.mxu0 0
    %4571 = vmatprep.subr.bf16.mxu0 0
    %4572 = vmatpush1.bf16.msra.mxu0 0
    %4573 = vmatprep.subr.bf16.mxu0 0
    %4574 = vmatpush1.bf16.msra.mxu0 0
    %4575 = vmatprep.subr.bf16.mxu0 0
    %4576 = vmatpush1.bf16.msra.mxu0 0
    %4577 = vmatprep.mubr.bf16.mxu0 0
    %4578 = vmatmul.mubr.bf16.gmra.mrb[0].mxu0 %v3855
    %v4579 = vpop.f32.mrb[0].mxu0
    %v4580 = vadd.f32 0.0, %v4579
    %v4581 = vpop.f32.mrb[0].mxu0
    %v4582 = vadd.f32 0.0, %v4581
    %v4583 = vpop.f32.mrb[0].mxu0
    %v4584 = vpop.f32.mrb[0].mxu0
    %4585 = vdwg.mxu0
    %4586 = vmatprep.subr.bf16.mxu0 %v4484
    %4587 = vmatpush1.bf16.msra.mxu0 %v4483
    %4588 = vmatprep.subr.bf16.mxu0 %v4488
    %4589 = vmatpush1.bf16.msra.mxu0 %v4487
    %4590 = vmatprep.subr.bf16.mxu0 %v4492
    %4591 = vmatpush1.bf16.msra.mxu0 %v4491
    %4592 = vmatprep.subr.bf16.mxu0 %v4496
    %4593 = vmatpush1.bf16.msra.mxu0 %v4495
    %4594 = vmatprep.subr.bf16.mxu0 %v4500
    %4595 = vmatpush1.bf16.msra.mxu0 %v4499
    %4596 = vmatprep.subr.bf16.mxu0 %v4504
    %4597 = vmatpush1.bf16.msra.mxu0 %v4503
    %4598 = vmatprep.subr.bf16.mxu0 %v4508
    %4599 = vmatpush1.bf16.msra.mxu0 %v4507
    %4600 = vmatprep.subr.bf16.mxu0 %v4512
    %4601 = vmatpush1.bf16.msra.mxu0 %v4511
    %4602 = vmatprep.subr.bf16.mxu0 0
    %4603 = vmatpush1.bf16.msra.mxu0 0
    %4604 = vmatprep.subr.bf16.mxu0 0
    %4605 = vmatpush1.bf16.msra.mxu0 0
    %4606 = vmatprep.subr.bf16.mxu0 0
    %4607 = vmatpush1.bf16.msra.mxu0 0
    %4608 = vmatprep.subr.bf16.mxu0 0
    %4609 = vmatpush1.bf16.msra.mxu0 0
    %4610 = vmatprep.subr.bf16.mxu0 0
    %4611 = vmatpush1.bf16.msra.mxu0 0
    %4612 = vmatprep.subr.bf16.mxu0 0
    %4613 = vmatpush1.bf16.msra.mxu0 0
    %4614 = vmatprep.subr.bf16.mxu0 0
    %4615 = vmatpush1.bf16.msra.mxu0 0
    %4616 = vmatprep.subr.bf16.mxu0 0
    %4617 = vmatpush1.bf16.msra.mxu0 0
    %4618 = vmatprep.mubr.bf16.mxu0 0
    %4619 = vmatmul.mubr.bf16.gmra.mrb[0].mxu0 %v3855
    %v4620 = vpop.f32.mrb[0].mxu0
    %v4621 = vadd.f32 0.0, %v4620
    %v4622 = vpop.f32.mrb[0].mxu0
    %v4623 = vadd.f32 0.0, %v4622
    %v4624 = vpop.f32.mrb[0].mxu0
    %v4625 = vpop.f32.mrb[0].mxu0
    %4626 = vdwg.mxu0
    %v4627 = vadd.f32 %v4349, %v4580
    %v4628 = vadd.f32 %v4350, %v4582
    %v4629 = vadd.f32 %v4351, %v4621
    %v4630 = vadd.f32 %v4352, %v4623
    %v4631 = vsub.f32 0.0, %v4627
    %v4632 = vmul.f32 %v4631, 1.442695
    %v4633 = vpow.pop %v4632
    %v4634 = vadd.f32 %v4633, 1.0
    %v4635 = vrcp.pop %v4634
    %v4636 = vsub.f32 0.0, %v4628
    %v4637 = vmul.f32 %v4636, 1.442695
    %v4638 = vpow.pop %v4637
    %v4639 = vadd.f32 %v4638, 1.0
    %v4640 = vrcp.pop %v4639
    %v4641 = vtanh.pop %v4629
    %v4642 = vsub.f32 0.0, %v4630
    %v4643 = vmul.f32 %v4642, 1.442695
    %v4644 = vpow.pop %v4643
    %v4645 = vadd.f32 %v4644, 1.0
    %v4646 = vrcp.pop %v4645
    %v4647 = vmul.f32 %v4640, %v3854
    %v4648 = vmul.f32 %v4635, %v4641
    %v4649 = vadd.f32 %v4647, %v4648
    %v4650 = vtanh.pop %v4649
    %v4651 = vmul.f32 %v4646, %v4650
    %v4652 = vsel %vm4348, 1, 0
    %4653 = vset.pattern.permute.xlu0 0
    %4654 = vperm.xlu0 %4653, %v4652
    %v4655 = vpop.permute.xlu0 %4654
    %vm4656 = vcmp.eq.s32.totalorder %v4655, 1
    %v4657 = vsel %vm4656, %v4651, %v3853
    %v4658 = vsel %vm4656, %v4649, %v3854
    %v4659 = vpack.c.bf16 %v4657, %v4657
    %v4660 = vpack.c.bf16 %v4344, %v4344
    %v4661 = vld [vmem:[#allocation9] sm:$0xff]
    %v4662 = vld [vmem:[#allocation9 + $0x8] sm:$0xff]
    %v4663 = vld [vmem:[#allocation9 + $0x10] sm:$0xff]
    %v4664 = vld [vmem:[#allocation9 + $0x18] sm:$0xff]
    %v4665 = vld [vmem:[#allocation9 + $0x20] sm:$0xff]
    %v4666 = vld [vmem:[#allocation9 + $0x28] sm:$0xff]
    %v4667 = vld [vmem:[#allocation9 + $0x30] sm:$0xff]
    %v4668 = vld [vmem:[#allocation9 + $0x38] sm:$0xff]
    %v4669 = vld [vmem:[#allocation9 + $0x40] sm:$0xff]
    %v4670 = vld [vmem:[#allocation9 + $0x48] sm:$0xff]
    %v4671 = vld [vmem:[#allocation9 + $0x50] sm:$0xff]
    %v4672 = vld [vmem:[#allocation9 + $0x58] sm:$0xff]
    %v4673 = vld [vmem:[#allocation9 + $0x60] sm:$0xff]
    %v4674 = vld [vmem:[#allocation9 + $0x68] sm:$0xff]
    %v4675 = vld [vmem:[#allocation9 + $0x70] sm:$0xff]
    %v4676 = vld [vmem:[#allocation9 + $0x78] sm:$0xff]
    %v4677 = vld [vmem:[#allocation9 + $0x80] sm:$0xff]
    %v4678 = vld [vmem:[#allocation9 + $0x88] sm:$0xff]
    %v4679 = vld [vmem:[#allocation9 + $0x90] sm:$0xff]
    %v4680 = vld [vmem:[#allocation9 + $0x98] sm:$0xff]
    %v4681 = vld [vmem:[#allocation9 + $0xa0] sm:$0xff]
    %v4682 = vld [vmem:[#allocation9 + $0xa8] sm:$0xff]
    %v4683 = vld [vmem:[#allocation9 + $0xb0] sm:$0xff]
    %v4684 = vld [vmem:[#allocation9 + $0xb8] sm:$0xff]
    %v4685 = vld [vmem:[#allocation9 + $0xc0] sm:$0xff]
    %v4686 = vld [vmem:[#allocation9 + $0xc8] sm:$0xff]
    %v4687 = vld [vmem:[#allocation9 + $0xd0] sm:$0xff]
    %v4688 = vld [vmem:[#allocation9 + $0xd8] sm:$0xff]
    %v4689 = vld [vmem:[#allocation9 + $0xe0] sm:$0xff]
    %v4690 = vld [vmem:[#allocation9 + $0xe8] sm:$0xff]
    %v4691 = vld [vmem:[#allocation9 + $0xf0] sm:$0xff]
    %v4692 = vld [vmem:[#allocation9 + $0xf8] sm:$0xff]
    %v4693 = vld [vmem:[#allocation9 + $0x100] sm:$0xff]
    %v4694 = vld [vmem:[#allocation9 + $0x108] sm:$0xff]
    %v4695 = vld [vmem:[#allocation9 + $0x110] sm:$0xff]
    %v4696 = vld [vmem:[#allocation9 + $0x118] sm:$0xff]
    %v4697 = vld [vmem:[#allocation9 + $0x120] sm:$0xff]
    %v4698 = vld [vmem:[#allocation9 + $0x128] sm:$0xff]
    %v4699 = vld [vmem:[#allocation9 + $0x130] sm:$0xff]
    %v4700 = vld [vmem:[#allocation9 + $0x138] sm:$0xff]
    %v4701 = vld [vmem:[#allocation9 + $0x140] sm:$0xff]
    %v4702 = vld [vmem:[#allocation9 + $0x148] sm:$0xff]
    %v4703 = vld [vmem:[#allocation9 + $0x150] sm:$0xff]
    %v4704 = vld [vmem:[#allocation9 + $0x158] sm:$0xff]
    %v4705 = vld [vmem:[#allocation9 + $0x160] sm:$0xff]
    %v4706 = vld [vmem:[#allocation9 + $0x168] sm:$0xff]
    %v4707 = vld [vmem:[#allocation9 + $0x170] sm:$0xff]
    %v4708 = vld [vmem:[#allocation9 + $0x178] sm:$0xff]
    %v4709 = vld [vmem:[#allocation9 + $0x180] sm:$0xff]
    %v4710 = vld [vmem:[#allocation9 + $0x188] sm:$0xff]
    %v4711 = vld [vmem:[#allocation9 + $0x190] sm:$0xff]
    %v4712 = vld [vmem:[#allocation9 + $0x198] sm:$0xff]
    %v4713 = vld [vmem:[#allocation9 + $0x1a0] sm:$0xff]
    %v4714 = vld [vmem:[#allocation9 + $0x1a8] sm:$0xff]
    %v4715 = vld [vmem:[#allocation9 + $0x1b0] sm:$0xff]
    %v4716 = vld [vmem:[#allocation9 + $0x1b8] sm:$0xff]
    %v4717 = vld [vmem:[#allocation9 + $0x1c0] sm:$0xff]
    %v4718 = vld [vmem:[#allocation9 + $0x1c8] sm:$0xff]
    %v4719 = vld [vmem:[#allocation9 + $0x1d0] sm:$0xff]
    %v4720 = vld [vmem:[#allocation9 + $0x1d8] sm:$0xff]
    %v4721 = vld [vmem:[#allocation9 + $0x1e0] sm:$0xff]
    %v4722 = vld [vmem:[#allocation9 + $0x1e8] sm:$0xff]
    %v4723 = vld [vmem:[#allocation9 + $0x1f0] sm:$0xff]
    %v4724 = vld [vmem:[#allocation9 + $0x1f8] sm:$0xff]
    %v4789 = vunpack.c.l.b16 %v4661
    %v4790 = vunpack.c.h.b16 %v4661
    %v4791 = vunpack.c.l.b16 %v4662
    %v4792 = vunpack.c.h.b16 %v4662
    %v4793 = vunpack.c.l.b16 %v4663
    %v4794 = vunpack.c.h.b16 %v4663
    %v4795 = vunpack.c.l.b16 %v4664
    %v4796 = vunpack.c.h.b16 %v4664
    %v4797 = vunpack.c.l.b16 %v4665
    %v4798 = vunpack.c.h.b16 %v4665
    %v4799 = vunpack.c.l.b16 %v4666
    %v4800 = vunpack.c.h.b16 %v4666
    %v4801 = vunpack.c.l.b16 %v4667
    %v4802 = vunpack.c.h.b16 %v4667
    %v4803 = vunpack.c.l.b16 %v4668
    %v4804 = vunpack.c.h.b16 %v4668
    %v4805 = vunpack.c.l.b16 %v4669
    %v4806 = vunpack.c.h.b16 %v4669
    %v4807 = vunpack.c.l.b16 %v4670
    %v4808 = vunpack.c.h.b16 %v4670
    %v4809 = vunpack.c.l.b16 %v4671
    %v4810 = vunpack.c.h.b16 %v4671
    %v4811 = vunpack.c.l.b16 %v4672
    %v4812 = vunpack.c.h.b16 %v4672
    %v4813 = vunpack.c.l.b16 %v4673
    %v4814 = vunpack.c.h.b16 %v4673
    %v4815 = vunpack.c.l.b16 %v4674
    %v4816 = vunpack.c.h.b16 %v4674
    %v4817 = vunpack.c.l.b16 %v4675
    %v4818 = vunpack.c.h.b16 %v4675
    %v4819 = vunpack.c.l.b16 %v4676
    %v4820 = vunpack.c.h.b16 %v4676
    %v4821 = vunpack.c.l.b16 %v4677
    %v4822 = vunpack.c.h.b16 %v4677
    %v4823 = vunpack.c.l.b16 %v4678
    %v4824 = vunpack.c.h.b16 %v4678
    %v4825 = vunpack.c.l.b16 %v4679
    %v4826 = vunpack.c.h.b16 %v4679
    %v4827 = vunpack.c.l.b16 %v4680
    %v4828 = vunpack.c.h.b16 %v4680
    %v4829 = vunpack.c.l.b16 %v4681
    %v4830 = vunpack.c.h.b16 %v4681
    %v4831 = vunpack.c.l.b16 %v4682
    %v4832 = vunpack.c.h.b16 %v4682
    %v4833 = vunpack.c.l.b16 %v4683
    %v4834 = vunpack.c.h.b16 %v4683
    %v4835 = vunpack.c.l.b16 %v4684
    %v4836 = vunpack.c.h.b16 %v4684
    %v4837 = vunpack.c.l.b16 %v4685
    %v4838 = vunpack.c.h.b16 %v4685
    %v4839 = vunpack.c.l.b16 %v4686
    %v4840 = vunpack.c.h.b16 %v4686
    %v4841 = vunpack.c.l.b16 %v4687
    %v4842 = vunpack.c.h.b16 %v4687
    %v4843 = vunpack.c.l.b16 %v4688
    %v4844 = vunpack.c.h.b16 %v4688
    %v4845 = vunpack.c.l.b16 %v4689
    %v4846 = vunpack.c.h.b16 %v4689
    %v4847 = vunpack.c.l.b16 %v4690
    %v4848 = vunpack.c.h.b16 %v4690
    %v4849 = vunpack.c.l.b16 %v4691
    %v4850 = vunpack.c.h.b16 %v4691
    %v4851 = vunpack.c.l.b16 %v4692
    %v4852 = vunpack.c.h.b16 %v4692
    %v4853 = vunpack.c.l.b16 %v4693
    %v4854 = vunpack.c.h.b16 %v4693
    %v4855 = vunpack.c.l.b16 %v4694
    %v4856 = vunpack.c.h.b16 %v4694
    %v4857 = vunpack.c.l.b16 %v4695
    %v4858 = vunpack.c.h.b16 %v4695
    %v4859 = vunpack.c.l.b16 %v4696
    %v4860 = vunpack.c.h.b16 %v4696
    %v4861 = vunpack.c.l.b16 %v4697
    %v4862 = vunpack.c.h.b16 %v4697
    %v4863 = vunpack.c.l.b16 %v4698
    %v4864 = vunpack.c.h.b16 %v4698
    %v4865 = vunpack.c.l.b16 %v4699
    %v4866 = vunpack.c.h.b16 %v4699
    %v4867 = vunpack.c.l.b16 %v4700
    %v4868 = vunpack.c.h.b16 %v4700
    %v4869 = vunpack.c.l.b16 %v4701
    %v4870 = vunpack.c.h.b16 %v4701
    %v4871 = vunpack.c.l.b16 %v4702
    %v4872 = vunpack.c.h.b16 %v4702
    %v4873 = vunpack.c.l.b16 %v4703
    %v4874 = vunpack.c.h.b16 %v4703
    %v4875 = vunpack.c.l.b16 %v4704
    %v4876 = vunpack.c.h.b16 %v4704
    %v4877 = vunpack.c.l.b16 %v4705
    %v4878 = vunpack.c.h.b16 %v4705
    %v4879 = vunpack.c.l.b16 %v4706
    %v4880 = vunpack.c.h.b16 %v4706
    %v4881 = vunpack.c.l.b16 %v4707
    %v4882 = vunpack.c.h.b16 %v4707
    %v4883 = vunpack.c.l.b16 %v4708
    %v4884 = vunpack.c.h.b16 %v4708
    %v4885 = vunpack.c.l.b16 %v4709
    %v4886 = vunpack.c.h.b16 %v4709
    %v4887 = vunpack.c.l.b16 %v4710
    %v4888 = vunpack.c.h.b16 %v4710
    %v4889 = vunpack.c.l.b16 %v4711
    %v4890 = vunpack.c.h.b16 %v4711
    %v4891 = vunpack.c.l.b16 %v4712
    %v4892 = vunpack.c.h.b16 %v4712
    %v4893 = vunpack.c.l.b16 %v4713
    %v4894 = vunpack.c.h.b16 %v4713
    %v4895 = vunpack.c.l.b16 %v4714
    %v4896 = vunpack.c.h.b16 %v4714
    %v4897 = vunpack.c.l.b16 %v4715
    %v4898 = vunpack.c.h.b16 %v4715
    %v4899 = vunpack.c.l.b16 %v4716
    %v4900 = vunpack.c.h.b16 %v4716
    %v4901 = vunpack.c.l.b16 %v4717
    %v4902 = vunpack.c.h.b16 %v4717
    %v4903 = vunpack.c.l.b16 %v4718
    %v4904 = vunpack.c.h.b16 %v4718
    %v4905 = vunpack.c.l.b16 %v4719
    %v4906 = vunpack.c.h.b16 %v4719
    %v4907 = vunpack.c.l.b16 %v4720
    %v4908 = vunpack.c.h.b16 %v4720
    %v4909 = vunpack.c.l.b16 %v4721
    %v4910 = vunpack.c.h.b16 %v4721
    %v4911 = vunpack.c.l.b16 %v4722
    %v4912 = vunpack.c.h.b16 %v4722
    %v4913 = vunpack.c.l.b16 %v4723
    %v4914 = vunpack.c.h.b16 %v4723
    %v4915 = vunpack.c.l.b16 %v4724
    %v4916 = vunpack.c.h.b16 %v4724
    %v4917 = vpack.c.b16 %v4793, %v4789
    %v4918 = vpack.c.b16 %v4794, %v4790
    %v4919 = vpack.c.b16 %v4795, %v4791
    %v4920 = vpack.c.b16 %v4796, %v4792
    %v4921 = vpack.c.b16 %v4801, %v4797
    %v4922 = vpack.c.b16 %v4802, %v4798
    %v4923 = vpack.c.b16 %v4803, %v4799
    %v4924 = vpack.c.b16 %v4804, %v4800
    %v4925 = vpack.c.b16 %v4809, %v4805
    %v4926 = vpack.c.b16 %v4810, %v4806
    %v4927 = vpack.c.b16 %v4811, %v4807
    %v4928 = vpack.c.b16 %v4812, %v4808
    %v4929 = vpack.c.b16 %v4817, %v4813
    %v4930 = vpack.c.b16 %v4818, %v4814
    %v4931 = vpack.c.b16 %v4819, %v4815
    %v4932 = vpack.c.b16 %v4820, %v4816
    %v4933 = vpack.c.b16 %v4825, %v4821
    %v4934 = vpack.c.b16 %v4826, %v4822
    %v4935 = vpack.c.b16 %v4827, %v4823
    %v4936 = vpack.c.b16 %v4828, %v4824
    %v4937 = vpack.c.b16 %v4833, %v4829
    %v4938 = vpack.c.b16 %v4834, %v4830
    %v4939 = vpack.c.b16 %v4835, %v4831
    %v4940 = vpack.c.b16 %v4836, %v4832
    %v4941 = vpack.c.b16 %v4841, %v4837
    %v4942 = vpack.c.b16 %v4842, %v4838
    %v4943 = vpack.c.b16 %v4843, %v4839
    %v4944 = vpack.c.b16 %v4844, %v4840
    %v4945 = vpack.c.b16 %v4849, %v4845
    %v4946 = vpack.c.b16 %v4850, %v4846
    %v4947 = vpack.c.b16 %v4851, %v4847
    %v4948 = vpack.c.b16 %v4852, %v4848
    %v4949 = vpack.c.b16 %v4857, %v4853
    %v4950 = vpack.c.b16 %v4858, %v4854
    %v4951 = vpack.c.b16 %v4859, %v4855
    %v4952 = vpack.c.b16 %v4860, %v4856
    %v4953 = vpack.c.b16 %v4865, %v4861
    %v4954 = vpack.c.b16 %v4866, %v4862
    %v4955 = vpack.c.b16 %v4867, %v4863
    %v4956 = vpack.c.b16 %v4868, %v4864
    %v4957 = vpack.c.b16 %v4873, %v4869
    %v4958 = vpack.c.b16 %v4874, %v4870
    %v4959 = vpack.c.b16 %v4875, %v4871
    %v4960 = vpack.c.b16 %v4876, %v4872
    %v4961 = vpack.c.b16 %v4881, %v4877
    %v4962 = vpack.c.b16 %v4882, %v4878
    %v4963 = vpack.c.b16 %v4883, %v4879
    %v4964 = vpack.c.b16 %v4884, %v4880
    %v4965 = vpack.c.b16 %v4889, %v4885
    %v4966 = vpack.c.b16 %v4890, %v4886
    %v4967 = vpack.c.b16 %v4891, %v4887
    %v4968 = vpack.c.b16 %v4892, %v4888
    %v4969 = vpack.c.b16 %v4897, %v4893
    %v4970 = vpack.c.b16 %v4898, %v4894
    %v4971 = vpack.c.b16 %v4899, %v4895
    %v4972 = vpack.c.b16 %v4900, %v4896
    %v4973 = vpack.c.b16 %v4905, %v4901
    %v4974 = vpack.c.b16 %v4906, %v4902
    %v4975 = vpack.c.b16 %v4907, %v4903
    %v4976 = vpack.c.b16 %v4908, %v4904
    %v4977 = vpack.c.b16 %v4913, %v4909
    %v4978 = vpack.c.b16 %v4914, %v4910
    %v4979 = vpack.c.b16 %v4915, %v4911
    %v4980 = vpack.c.b16 %v4916, %v4912
    %5045 = vmatprep.subr.bf16.mxu0 %v4918
    %5046 = vmatpush1.bf16.msra.mxu0 %v4917
    %5047 = vmatprep.subr.bf16.mxu0 %v4922
    %5048 = vmatpush1.bf16.msra.mxu0 %v4921
    %5049 = vmatprep.subr.bf16.mxu0 %v4926
    %5050 = vmatpush1.bf16.msra.mxu0 %v4925
    %5051 = vmatprep.subr.bf16.mxu0 %v4930
    %5052 = vmatpush1.bf16.msra.mxu0 %v4929
    %5053 = vmatprep.subr.bf16.mxu0 %v4934
    %5054 = vmatpush1.bf16.msra.mxu0 %v4933
    %5055 = vmatprep.subr.bf16.mxu0 %v4938
    %5056 = vmatpush1.bf16.msra.mxu0 %v4937
    %5057 = vmatprep.subr.bf16.mxu0 %v4942
    %5058 = vmatpush1.bf16.msra.mxu0 %v4941
    %5059 = vmatprep.subr.bf16.mxu0 %v4946
    %5060 = vmatpush1.bf16.msra.mxu0 %v4945
    %5061 = vmatprep.subr.bf16.mxu0 %v4950
    %5062 = vmatpush1.bf16.msra.mxu0 %v4949
    %5063 = vmatprep.subr.bf16.mxu0 %v4954
    %5064 = vmatpush1.bf16.msra.mxu0 %v4953
    %5065 = vmatprep.subr.bf16.mxu0 %v4958
    %5066 = vmatpush1.bf16.msra.mxu0 %v4957
    %5067 = vmatprep.subr.bf16.mxu0 %v4962
    %5068 = vmatpush1.bf16.msra.mxu0 %v4961
    %5069 = vmatprep.subr.bf16.mxu0 %v4966
    %5070 = vmatpush1.bf16.msra.mxu0 %v4965
    %5071 = vmatprep.subr.bf16.mxu0 %v4970
    %5072 = vmatpush1.bf16.msra.mxu0 %v4969
    %5073 = vmatprep.subr.bf16.mxu0 %v4974
    %5074 = vmatpush1.bf16.msra.mxu0 %v4973
    %5075 = vmatprep.subr.bf16.mxu0 %v4978
    %5076 = vmatpush1.bf16.msra.mxu0 %v4977
    %5077 = vmatprep.mubr.bf16.mxu0 %v4660
    %5078 = vmatmul.mubr.bf16.gmra.mrb[0].mxu0 %v4659
    %v5079 = vpop.f32.mrb[0].mxu0
    %v5080 = vadd.f32 %v1116, %v5079
    %v5081 = vpop.f32.mrb[0].mxu0
    %v5082 = vadd.f32 %v1120, %v5081
    %v5083 = vpop.f32.mrb[0].mxu0
    %v5084 = vpop.f32.mrb[0].mxu0
    %5085 = vdwg.mxu0
    %5086 = vmatprep.subr.bf16.mxu0 %v4920
    %5087 = vmatpush1.bf16.msra.mxu0 %v4919
    %5088 = vmatprep.subr.bf16.mxu0 %v4924
    %5089 = vmatpush1.bf16.msra.mxu0 %v4923
    %5090 = vmatprep.subr.bf16.mxu0 %v4928
    %5091 = vmatpush1.bf16.msra.mxu0 %v4927
    %5092 = vmatprep.subr.bf16.mxu0 %v4932
    %5093 = vmatpush1.bf16.msra.mxu0 %v4931
    %5094 = vmatprep.subr.bf16.mxu0 %v4936
    %5095 = vmatpush1.bf16.msra.mxu0 %v4935
    %5096 = vmatprep.subr.bf16.mxu0 %v4940
    %5097 = vmatpush1.bf16.msra.mxu0 %v4939
    %5098 = vmatprep.subr.bf16.mxu0 %v4944
    %5099 = vmatpush1.bf16.msra.mxu0 %v4943
    %5100 = vmatprep.subr.bf16.mxu0 %v4948
    %5101 = vmatpush1.bf16.msra.mxu0 %v4947
    %5102 = vmatprep.subr.bf16.mxu0 %v4952
    %5103 = vmatpush1.bf16.msra.mxu0 %v4951
    %5104 = vmatprep.subr.bf16.mxu0 %v4956
    %5105 = vmatpush1.bf16.msra.mxu0 %v4955
    %5106 = vmatprep.subr.bf16.mxu0 %v4960
    %5107 = vmatpush1.bf16.msra.mxu0 %v4959
    %5108 = vmatprep.subr.bf16.mxu0 %v4964
    %5109 = vmatpush1.bf16.msra.mxu0 %v4963
    %5110 = vmatprep.subr.bf16.mxu0 %v4968
    %5111 = vmatpush1.bf16.msra.mxu0 %v4967
    %5112 = vmatprep.subr.bf16.mxu0 %v4972
    %5113 = vmatpush1.bf16.msra.mxu0 %v4971
    %5114 = vmatprep.subr.bf16.mxu0 %v4976
    %5115 = vmatpush1.bf16.msra.mxu0 %v4975
    %5116 = vmatprep.subr.bf16.mxu0 %v4980
    %5117 = vmatpush1.bf16.msra.mxu0 %v4979
    %5118 = vmatprep.mubr.bf16.mxu0 %v4660
    %5119 = vmatmul.mubr.bf16.gmra.mrb[0].mxu0 %v4659
    %v5120 = vpop.f32.mrb[0].mxu0
    %v5121 = vadd.f32 %v1124, %v5120
    %v5122 = vpop.f32.mrb[0].mxu0
    %v5123 = vadd.f32 %v1128, %v5122
    %v5124 = vpop.f32.mrb[0].mxu0
    %v5125 = vpop.f32.mrb[0].mxu0
    %5126 = vdwg.mxu0
    %v5127 = vsub.f32 0.0, %v5080
    %v5128 = vmul.f32 %v5127, 1.442695
    %v5129 = vpow.pop %v5128
    %v5130 = vadd.f32 %v5129, 1.0
    %v5131 = vrcp.pop %v5130
    %v5132 = vsub.f32 0.0, %v5082
    %v5133 = vmul.f32 %v5132, 1.442695
    %v5134 = vpow.pop %v5133
    %v5135 = vadd.f32 %v5134, 1.0
    %v5136 = vrcp.pop %v5135
    %v5137 = vtanh.pop %v5121
    %v5138 = vsub.f32 0.0, %v5123
    %v5139 = vmul.f32 %v5138, 1.442695
    %v5140 = vpow.pop %v5139
    %v5141 = vadd.f32 %v5140, 1.0
    %v5142 = vrcp.pop %v5141
    %v5143 = vmul.f32 %v5136, %v4345
    %v5144 = vmul.f32 %v5131, %v5137
    %v5145 = vadd.f32 %v5143, %v5144
    %v5146 = vtanh.pop %v5145
    %v5147 = vmul.f32 %v5142, %v5146
    %v5148 = vsel %vm4656, %v5147, %v4344
    %v5149 = vsel %vm4656, %v5145, %v4345
    %v5150 = vsel %vm4656, %v5147, 0.0
    %5151 = vst [vmem:[#allocation12 + $0x20] sm:$0xff] %v5150
    %vm5152 = vcmp.gt.s32.totalorder %v108, 5
    %v5153 = vld [vmem:[#allocation2 + $0xa0] sm:$0xff]
    %v5154 = vld [vmem:[#allocation2 + $0xa8] sm:$0xff]
    %v5155 = vld [vmem:[#allocation2 + $0xb0] sm:$0xff]
    %v5156 = vld [vmem:[#allocation2 + $0xb8] sm:$0xff]
    %v5157 = vld [vmem:[#allocation8] sm:$0xff]
    %v5158 = vld [vmem:[#allocation8 + $0x8] sm:$0xff]
    %v5159 = vld [vmem:[#allocation8 + $0x10] sm:$0xff]
    %v5160 = vld [vmem:[#allocation8 + $0x18] sm:$0xff]
    %v5161 = vld [vmem:[#allocation8 + $0x20] sm:$0xff]
    %v5162 = vld [vmem:[#allocation8 + $0x28] sm:$0xff]
    %v5163 = vld [vmem:[#allocation8 + $0x30] sm:$0xff]
    %v5164 = vld [vmem:[#allocation8 + $0x38] sm:$0xff]
    %v5165 = vld [vmem:[#allocation8 + $0x40] sm:$0xff]
    %v5166 = vld [vmem:[#allocation8 + $0x48] sm:$0xff]
    %v5167 = vld [vmem:[#allocation8 + $0x50] sm:$0xff]
    %v5168 = vld [vmem:[#allocation8 + $0x58] sm:$0xff]
    %v5169 = vld [vmem:[#allocation8 + $0x60] sm:$0xff]
    %v5170 = vld [vmem:[#allocation8 + $0x68] sm:$0xff]
    %v5171 = vld [vmem:[#allocation8 + $0x70] sm:$0xff]
    %v5172 = vld [vmem:[#allocation8 + $0x78] sm:$0xff]
    %v5173 = vld [vmem:[#allocation8 + $0x80] sm:$0xff]
    %v5174 = vld [vmem:[#allocation8 + $0x88] sm:$0xff]
    %v5175 = vld [vmem:[#allocation8 + $0x90] sm:$0xff]
    %v5176 = vld [vmem:[#allocation8 + $0x98] sm:$0xff]
    %v5177 = vld [vmem:[#allocation8 + $0xa0] sm:$0xff]
    %v5178 = vld [vmem:[#allocation8 + $0xa8] sm:$0xff]
    %v5179 = vld [vmem:[#allocation8 + $0xb0] sm:$0xff]
    %v5180 = vld [vmem:[#allocation8 + $0xb8] sm:$0xff]
    %v5181 = vld [vmem:[#allocation8 + $0xc0] sm:$0xff]
    %v5182 = vld [vmem:[#allocation8 + $0xc8] sm:$0xff]
    %v5183 = vld [vmem:[#allocation8 + $0xd0] sm:$0xff]
    %v5184 = vld [vmem:[#allocation8 + $0xd8] sm:$0xff]
    %v5185 = vld [vmem:[#allocation8 + $0xe0] sm:$0xff]
    %v5186 = vld [vmem:[#allocation8 + $0xe8] sm:$0xff]
    %v5187 = vld [vmem:[#allocation8 + $0xf0] sm:$0xff]
    %v5188 = vld [vmem:[#allocation8 + $0xf8] sm:$0xff]
    %v5221 = vunpack.c.l.b16 %v5157
    %v5222 = vunpack.c.h.b16 %v5157
    %v5223 = vunpack.c.l.b16 %v5158
    %v5224 = vunpack.c.h.b16 %v5158
    %v5225 = vunpack.c.l.b16 %v5159
    %v5226 = vunpack.c.h.b16 %v5159
    %v5227 = vunpack.c.l.b16 %v5160
    %v5228 = vunpack.c.h.b16 %v5160
    %v5229 = vunpack.c.l.b16 %v5161
    %v5230 = vunpack.c.h.b16 %v5161
    %v5231 = vunpack.c.l.b16 %v5162
    %v5232 = vunpack.c.h.b16 %v5162
    %v5233 = vunpack.c.l.b16 %v5163
    %v5234 = vunpack.c.h.b16 %v5163
    %v5235 = vunpack.c.l.b16 %v5164
    %v5236 = vunpack.c.h.b16 %v5164
    %v5237 = vunpack.c.l.b16 %v5165
    %v5238 = vunpack.c.h.b16 %v5165
    %v5239 = vunpack.c.l.b16 %v5166
    %v5240 = vunpack.c.h.b16 %v5166
    %v5241 = vunpack.c.l.b16 %v5167
    %v5242 = vunpack.c.h.b16 %v5167
    %v5243 = vunpack.c.l.b16 %v5168
    %v5244 = vunpack.c.h.b16 %v5168
    %v5245 = vunpack.c.l.b16 %v5169
    %v5246 = vunpack.c.h.b16 %v5169
    %v5247 = vunpack.c.l.b16 %v5170
    %v5248 = vunpack.c.h.b16 %v5170
    %v5249 = vunpack.c.l.b16 %v5171
    %v5250 = vunpack.c.h.b16 %v5171
    %v5251 = vunpack.c.l.b16 %v5172
    %v5252 = vunpack.c.h.b16 %v5172
    %v5253 = vunpack.c.l.b16 %v5173
    %v5254 = vunpack.c.h.b16 %v5173
    %v5255 = vunpack.c.l.b16 %v5174
    %v5256 = vunpack.c.h.b16 %v5174
    %v5257 = vunpack.c.l.b16 %v5175
    %v5258 = vunpack.c.h.b16 %v5175
    %v5259 = vunpack.c.l.b16 %v5176
    %v5260 = vunpack.c.h.b16 %v5176
    %v5261 = vunpack.c.l.b16 %v5177
    %v5262 = vunpack.c.h.b16 %v5177
    %v5263 = vunpack.c.l.b16 %v5178
    %v5264 = vunpack.c.h.b16 %v5178
    %v5265 = vunpack.c.l.b16 %v5179
    %v5266 = vunpack.c.h.b16 %v5179
    %v5267 = vunpack.c.l.b16 %v5180
    %v5268 = vunpack.c.h.b16 %v5180
    %v5269 = vunpack.c.l.b16 %v5181
    %v5270 = vunpack.c.h.b16 %v5181
    %v5271 = vunpack.c.l.b16 %v5182
    %v5272 = vunpack.c.h.b16 %v5182
    %v5273 = vunpack.c.l.b16 %v5183
    %v5274 = vunpack.c.h.b16 %v5183
    %v5275 = vunpack.c.l.b16 %v5184
    %v5276 = vunpack.c.h.b16 %v5184
    %v5277 = vunpack.c.l.b16 %v5185
    %v5278 = vunpack.c.h.b16 %v5185
    %v5279 = vunpack.c.l.b16 %v5186
    %v5280 = vunpack.c.h.b16 %v5186
    %v5281 = vunpack.c.l.b16 %v5187
    %v5282 = vunpack.c.h.b16 %v5187
    %v5283 = vunpack.c.l.b16 %v5188
    %v5284 = vunpack.c.h.b16 %v5188
    %v5285 = vpack.c.b16 %v5225, %v5221
    %v5286 = vpack.c.b16 %v5226, %v5222
    %v5287 = vpack.c.b16 %v5227, %v5223
    %v5288 = vpack.c.b16 %v5228, %v5224
    %v5289 = vpack.c.b16 %v5233, %v5229
    %v5290 = vpack.c.b16 %v5234, %v5230
    %v5291 = vpack.c.b16 %v5235, %v5231
    %v5292 = vpack.c.b16 %v5236, %v5232
    %v5293 = vpack.c.b16 %v5241, %v5237
    %v5294 = vpack.c.b16 %v5242, %v5238
    %v5295 = vpack.c.b16 %v5243, %v5239
    %v5296 = vpack.c.b16 %v5244, %v5240
    %v5297 = vpack.c.b16 %v5249, %v5245
    %v5298 = vpack.c.b16 %v5250, %v5246
    %v5299 = vpack.c.b16 %v5251, %v5247
    %v5300 = vpack.c.b16 %v5252, %v5248
    %v5301 = vpack.c.b16 %v5257, %v5253
    %v5302 = vpack.c.b16 %v5258, %v5254
    %v5303 = vpack.c.b16 %v5259, %v5255
    %v5304 = vpack.c.b16 %v5260, %v5256
    %v5305 = vpack.c.b16 %v5265, %v5261
    %v5306 = vpack.c.b16 %v5266, %v5262
    %v5307 = vpack.c.b16 %v5267, %v5263
    %v5308 = vpack.c.b16 %v5268, %v5264
    %v5309 = vpack.c.b16 %v5273, %v5269
    %v5310 = vpack.c.b16 %v5274, %v5270
    %v5311 = vpack.c.b16 %v5275, %v5271
    %v5312 = vpack.c.b16 %v5276, %v5272
    %v5313 = vpack.c.b16 %v5281, %v5277
    %v5314 = vpack.c.b16 %v5282, %v5278
    %v5315 = vpack.c.b16 %v5283, %v5279
    %v5316 = vpack.c.b16 %v5284, %v5280
    %5349 = vmatprep.subr.bf16.mxu0 %v5286
    %5350 = vmatpush1.bf16.msra.mxu0 %v5285
    %5351 = vmatprep.subr.bf16.mxu0 %v5290
    %5352 = vmatpush1.bf16.msra.mxu0 %v5289
    %5353 = vmatprep.subr.bf16.mxu0 %v5294
    %5354 = vmatpush1.bf16.msra.mxu0 %v5293
    %5355 = vmatprep.subr.bf16.mxu0 %v5298
    %5356 = vmatpush1.bf16.msra.mxu0 %v5297
    %5357 = vmatprep.subr.bf16.mxu0 %v5302
    %5358 = vmatpush1.bf16.msra.mxu0 %v5301
    %5359 = vmatprep.subr.bf16.mxu0 %v5306
    %5360 = vmatpush1.bf16.msra.mxu0 %v5305
    %5361 = vmatprep.subr.bf16.mxu0 %v5310
    %5362 = vmatpush1.bf16.msra.mxu0 %v5309
    %5363 = vmatprep.subr.bf16.mxu0 %v5314
    %5364 = vmatpush1.bf16.msra.mxu0 %v5313
    %5365 = vmatprep.subr.bf16.mxu0 0
    %5366 = vmatpush1.bf16.msra.mxu0 0
    %5367 = vmatprep.subr.bf16.mxu0 0
    %5368 = vmatpush1.bf16.msra.mxu0 0
    %5369 = vmatprep.subr.bf16.mxu0 0
    %5370 = vmatpush1.bf16.msra.mxu0 0
    %5371 = vmatprep.subr.bf16.mxu0 0
    %5372 = vmatpush1.bf16.msra.mxu0 0
    %5373 = vmatprep.subr.bf16.mxu0 0
    %5374 = vmatpush1.bf16.msra.mxu0 0
    %5375 = vmatprep.subr.bf16.mxu0 0
    %5376 = vmatpush1.bf16.msra.mxu0 0
    %5377 = vmatprep.subr.bf16.mxu0 0
    %5378 = vmatpush1.bf16.msra.mxu0 0
    %5379 = vmatprep.subr.bf16.mxu0 0
    %5380 = vmatpush1.bf16.msra.mxu0 0
    %5381 = vmatprep.mubr.bf16.mxu0 0
    %5382 = vmatmul.mubr.bf16.gmra.mrb[0].mxu0 %v4659
    %v5383 = vpop.f32.mrb[0].mxu0
    %v5384 = vadd.f32 0.0, %v5383
    %v5385 = vpop.f32.mrb[0].mxu0
    %v5386 = vadd.f32 0.0, %v5385
    %v5387 = vpop.f32.mrb[0].mxu0
    %v5388 = vpop.f32.mrb[0].mxu0
    %5389 = vdwg.mxu0
    %5390 = vmatprep.subr.bf16.mxu0 %v5288
    %5391 = vmatpush1.bf16.msra.mxu0 %v5287
    %5392 = vmatprep.subr.bf16.mxu0 %v5292
    %5393 = vmatpush1.bf16.msra.mxu0 %v5291
    %5394 = vmatprep.subr.bf16.mxu0 %v5296
    %5395 = vmatpush1.bf16.msra.mxu0 %v5295
    %5396 = vmatprep.subr.bf16.mxu0 %v5300
    %5397 = vmatpush1.bf16.msra.mxu0 %v5299
    %5398 = vmatprep.subr.bf16.mxu0 %v5304
    %5399 = vmatpush1.bf16.msra.mxu0 %v5303
    %5400 = vmatprep.subr.bf16.mxu0 %v5308
    %5401 = vmatpush1.bf16.msra.mxu0 %v5307
    %5402 = vmatprep.subr.bf16.mxu0 %v5312
    %5403 = vmatpush1.bf16.msra.mxu0 %v5311
    %5404 = vmatprep.subr.bf16.mxu0 %v5316
    %5405 = vmatpush1.bf16.msra.mxu0 %v5315
    %5406 = vmatprep.subr.bf16.mxu0 0
    %5407 = vmatpush1.bf16.msra.mxu0 0
    %5408 = vmatprep.subr.bf16.mxu0 0
    %5409 = vmatpush1.bf16.msra.mxu0 0
    %5410 = vmatprep.subr.bf16.mxu0 0
    %5411 = vmatpush1.bf16.msra.mxu0 0
    %5412 = vmatprep.subr.bf16.mxu0 0
    %5413 = vmatpush1.bf16.msra.mxu0 0
    %5414 = vmatprep.subr.bf16.mxu0 0
    %5415 = vmatpush1.bf16.msra.mxu0 0
    %5416 = vmatprep.subr.bf16.mxu0 0
    %5417 = vmatpush1.bf16.msra.mxu0 0
    %5418 = vmatprep.subr.bf16.mxu0 0
    %5419 = vmatpush1.bf16.msra.mxu0 0
    %5420 = vmatprep.subr.bf16.mxu0 0
    %5421 = vmatpush1.bf16.msra.mxu0 0
    %5422 = vmatprep.mubr.bf16.mxu0 0
    %5423 = vmatmul.mubr.bf16.gmra.mrb[0].mxu0 %v4659
    %v5424 = vpop.f32.mrb[0].mxu0
    %v5425 = vadd.f32 0.0, %v5424
    %v5426 = vpop.f32.mrb[0].mxu0
    %v5427 = vadd.f32 0.0, %v5426
    %v5428 = vpop.f32.mrb[0].mxu0
    %v5429 = vpop.f32.mrb[0].mxu0
    %5430 = vdwg.mxu0
    %v5431 = vadd.f32 %v5153, %v5384
    %v5432 = vadd.f32 %v5154, %v5386
    %v5433 = vadd.f32 %v5155, %v5425
    %v5434 = vadd.f32 %v5156, %v5427
    %v5435 = vsub.f32 0.0, %v5431
    %v5436 = vmul.f32 %v5435, 1.442695
    %v5437 = vpow.pop %v5436
    %v5438 = vadd.f32 %v5437, 1.0
    %v5439 = vrcp.pop %v5438
    %v5440 = vsub.f32 0.0, %v5432
    %v5441 = vmul.f32 %v5440, 1.442695
    %v5442 = vpow.pop %v5441
    %v5443 = vadd.f32 %v5442, 1.0
    %v5444 = vrcp.pop %v5443
    %v5445 = vtanh.pop %v5433
    %v5446 = vsub.f32 0.0, %v5434
    %v5447 = vmul.f32 %v5446, 1.442695
    %v5448 = vpow.pop %v5447
    %v5449 = vadd.f32 %v5448, 1.0
    %v5450 = vrcp.pop %v5449
    %v5451 = vmul.f32 %v5444, %v4658
    %v5452 = vmul.f32 %v5439, %v5445
    %v5453 = vadd.f32 %v5451, %v5452
    %v5454 = vtanh.pop %v5453
    %v5455 = vmul.f32 %v5450, %v5454
    %v5456 = vsel %vm5152, 1, 0
    %5457 = vset.pattern.permute.xlu0 0
    %5458 = vperm.xlu0 %5457, %v5456
    %v5459 = vpop.permute.xlu0 %5458
    %vm5460 = vcmp.eq.s32.totalorder %v5459, 1
    %v5461 = vsel %vm5460, %v5455, %v4657
    %v5462 = vsel %vm5460, %v5453, %v4658
    %v5463 = vpack.c.bf16 %v5461, %v5461
    %v5464 = vpack.c.bf16 %v5148, %v5148
    %v5465 = vld [vmem:[#allocation9] sm:$0xff]
    %v5466 = vld [vmem:[#allocation9 + $0x8] sm:$0xff]
    %v5467 = vld [vmem:[#allocation9 + $0x10] sm:$0xff]
    %v5468 = vld [vmem:[#allocation9 + $0x18] sm:$0xff]
    %v5469 = vld [vmem:[#allocation9 + $0x20] sm:$0xff]
    %v5470 = vld [vmem:[#allocation9 + $0x28] sm:$0xff]
    %v5471 = vld [vmem:[#allocation9 + $0x30] sm:$0xff]
    %v5472 = vld [vmem:[#allocation9 + $0x38] sm:$0xff]
    %v5473 = vld [vmem:[#allocation9 + $0x40] sm:$0xff]
    %v5474 = vld [vmem:[#allocation9 + $0x48] sm:$0xff]
    %v5475 = vld [vmem:[#allocation9 + $0x50] sm:$0xff]
    %v5476 = vld [vmem:[#allocation9 + $0x58] sm:$0xff]
    %v5477 = vld [vmem:[#allocation9 + $0x60] sm:$0xff]
    %v5478 = vld [vmem:[#allocation9 + $0x68] sm:$0xff]
    %v5479 = vld [vmem:[#allocation9 + $0x70] sm:$0xff]
    %v5480 = vld [vmem:[#allocation9 + $0x78] sm:$0xff]
    %v5481 = vld [vmem:[#allocation9 + $0x80] sm:$0xff]
    %v5482 = vld [vmem:[#allocation9 + $0x88] sm:$0xff]
    %v5483 = vld [vmem:[#allocation9 + $0x90] sm:$0xff]
    %v5484 = vld [vmem:[#allocation9 + $0x98] sm:$0xff]
    %v5485 = vld [vmem:[#allocation9 + $0xa0] sm:$0xff]
    %v5486 = vld [vmem:[#allocation9 + $0xa8] sm:$0xff]
    %v5487 = vld [vmem:[#allocation9 + $0xb0] sm:$0xff]
    %v5488 = vld [vmem:[#allocation9 + $0xb8] sm:$0xff]
    %v5489 = vld [vmem:[#allocation9 + $0xc0] sm:$0xff]
    %v5490 = vld [vmem:[#allocation9 + $0xc8] sm:$0xff]
    %v5491 = vld [vmem:[#allocation9 + $0xd0] sm:$0xff]
    %v5492 = vld [vmem:[#allocation9 + $0xd8] sm:$0xff]
    %v5493 = vld [vmem:[#allocation9 + $0xe0] sm:$0xff]
    %v5494 = vld [vmem:[#allocation9 + $0xe8] sm:$0xff]
    %v5495 = vld [vmem:[#allocation9 + $0xf0] sm:$0xff]
    %v5496 = vld [vmem:[#allocation9 + $0xf8] sm:$0xff]
    %v5497 = vld [vmem:[#allocation9 + $0x100] sm:$0xff]
    %v5498 = vld [vmem:[#allocation9 + $0x108] sm:$0xff]
    %v5499 = vld [vmem:[#allocation9 + $0x110] sm:$0xff]
    %v5500 = vld [vmem:[#allocation9 + $0x118] sm:$0xff]
    %v5501 = vld [vmem:[#allocation9 + $0x120] sm:$0xff]
    %v5502 = vld [vmem:[#allocation9 + $0x128] sm:$0xff]
    %v5503 = vld [vmem:[#allocation9 + $0x130] sm:$0xff]
    %v5504 = vld [vmem:[#allocation9 + $0x138] sm:$0xff]
    %v5505 = vld [vmem:[#allocation9 + $0x140] sm:$0xff]
    %v5506 = vld [vmem:[#allocation9 + $0x148] sm:$0xff]
    %v5507 = vld [vmem:[#allocation9 + $0x150] sm:$0xff]
    %v5508 = vld [vmem:[#allocation9 + $0x158] sm:$0xff]
    %v5509 = vld [vmem:[#allocation9 + $0x160] sm:$0xff]
    %v5510 = vld [vmem:[#allocation9 + $0x168] sm:$0xff]
    %v5511 = vld [vmem:[#allocation9 + $0x170] sm:$0xff]
    %v5512 = vld [vmem:[#allocation9 + $0x178] sm:$0xff]
    %v5513 = vld [vmem:[#allocation9 + $0x180] sm:$0xff]
    %v5514 = vld [vmem:[#allocation9 + $0x188] sm:$0xff]
    %v5515 = vld [vmem:[#allocation9 + $0x190] sm:$0xff]
    %v5516 = vld [vmem:[#allocation9 + $0x198] sm:$0xff]
    %v5517 = vld [vmem:[#allocation9 + $0x1a0] sm:$0xff]
    %v5518 = vld [vmem:[#allocation9 + $0x1a8] sm:$0xff]
    %v5519 = vld [vmem:[#allocation9 + $0x1b0] sm:$0xff]
    %v5520 = vld [vmem:[#allocation9 + $0x1b8] sm:$0xff]
    %v5521 = vld [vmem:[#allocation9 + $0x1c0] sm:$0xff]
    %v5522 = vld [vmem:[#allocation9 + $0x1c8] sm:$0xff]
    %v5523 = vld [vmem:[#allocation9 + $0x1d0] sm:$0xff]
    %v5524 = vld [vmem:[#allocation9 + $0x1d8] sm:$0xff]
    %v5525 = vld [vmem:[#allocation9 + $0x1e0] sm:$0xff]
    %v5526 = vld [vmem:[#allocation9 + $0x1e8] sm:$0xff]
    %v5527 = vld [vmem:[#allocation9 + $0x1f0] sm:$0xff]
    %v5528 = vld [vmem:[#allocation9 + $0x1f8] sm:$0xff]
    %v5593 = vunpack.c.l.b16 %v5465
    %v5594 = vunpack.c.h.b16 %v5465
    %v5595 = vunpack.c.l.b16 %v5466
    %v5596 = vunpack.c.h.b16 %v5466
    %v5597 = vunpack.c.l.b16 %v5467
    %v5598 = vunpack.c.h.b16 %v5467
    %v5599 = vunpack.c.l.b16 %v5468
    %v5600 = vunpack.c.h.b16 %v5468
    %v5601 = vunpack.c.l.b16 %v5469
    %v5602 = vunpack.c.h.b16 %v5469
    %v5603 = vunpack.c.l.b16 %v5470
    %v5604 = vunpack.c.h.b16 %v5470
    %v5605 = vunpack.c.l.b16 %v5471
    %v5606 = vunpack.c.h.b16 %v5471
    %v5607 = vunpack.c.l.b16 %v5472
    %v5608 = vunpack.c.h.b16 %v5472
    %v5609 = vunpack.c.l.b16 %v5473
    %v5610 = vunpack.c.h.b16 %v5473
    %v5611 = vunpack.c.l.b16 %v5474
    %v5612 = vunpack.c.h.b16 %v5474
    %v5613 = vunpack.c.l.b16 %v5475
    %v5614 = vunpack.c.h.b16 %v5475
    %v5615 = vunpack.c.l.b16 %v5476
    %v5616 = vunpack.c.h.b16 %v5476
    %v5617 = vunpack.c.l.b16 %v5477
    %v5618 = vunpack.c.h.b16 %v5477
    %v5619 = vunpack.c.l.b16 %v5478
    %v5620 = vunpack.c.h.b16 %v5478
    %v5621 = vunpack.c.l.b16 %v5479
    %v5622 = vunpack.c.h.b16 %v5479
    %v5623 = vunpack.c.l.b16 %v5480
    %v5624 = vunpack.c.h.b16 %v5480
    %v5625 = vunpack.c.l.b16 %v5481
    %v5626 = vunpack.c.h.b16 %v5481
    %v5627 = vunpack.c.l.b16 %v5482
    %v5628 = vunpack.c.h.b16 %v5482
    %v5629 = vunpack.c.l.b16 %v5483
    %v5630 = vunpack.c.h.b16 %v5483
    %v5631 = vunpack.c.l.b16 %v5484
    %v5632 = vunpack.c.h.b16 %v5484
    %v5633 = vunpack.c.l.b16 %v5485
    %v5634 = vunpack.c.h.b16 %v5485
    %v5635 = vunpack.c.l.b16 %v5486
    %v5636 = vunpack.c.h.b16 %v5486
    %v5637 = vunpack.c.l.b16 %v5487
    %v5638 = vunpack.c.h.b16 %v5487
    %v5639 = vunpack.c.l.b16 %v5488
    %v5640 = vunpack.c.h.b16 %v5488
    %v5641 = vunpack.c.l.b16 %v5489
    %v5642 = vunpack.c.h.b16 %v5489
    %v5643 = vunpack.c.l.b16 %v5490
    %v5644 = vunpack.c.h.b16 %v5490
    %v5645 = vunpack.c.l.b16 %v5491
    %v5646 = vunpack.c.h.b16 %v5491
    %v5647 = vunpack.c.l.b16 %v5492
    %v5648 = vunpack.c.h.b16 %v5492
    %v5649 = vunpack.c.l.b16 %v5493
    %v5650 = vunpack.c.h.b16 %v5493
    %v5651 = vunpack.c.l.b16 %v5494
    %v5652 = vunpack.c.h.b16 %v5494
    %v5653 = vunpack.c.l.b16 %v5495
    %v5654 = vunpack.c.h.b16 %v5495
    %v5655 = vunpack.c.l.b16 %v5496
    %v5656 = vunpack.c.h.b16 %v5496
    %v5657 = vunpack.c.l.b16 %v5497
    %v5658 = vunpack.c.h.b16 %v5497
    %v5659 = vunpack.c.l.b16 %v5498
    %v5660 = vunpack.c.h.b16 %v5498
    %v5661 = vunpack.c.l.b16 %v5499
    %v5662 = vunpack.c.h.b16 %v5499
    %v5663 = vunpack.c.l.b16 %v5500
    %v5664 = vunpack.c.h.b16 %v5500
    %v5665 = vunpack.c.l.b16 %v5501
    %v5666 = vunpack.c.h.b16 %v5501
    %v5667 = vunpack.c.l.b16 %v5502
    %v5668 = vunpack.c.h.b16 %v5502
    %v5669 = vunpack.c.l.b16 %v5503
    %v5670 = vunpack.c.h.b16 %v5503
    %v5671 = vunpack.c.l.b16 %v5504
    %v5672 = vunpack.c.h.b16 %v5504
    %v5673 = vunpack.c.l.b16 %v5505
    %v5674 = vunpack.c.h.b16 %v5505
    %v5675 = vunpack.c.l.b16 %v5506
    %v5676 = vunpack.c.h.b16 %v5506
    %v5677 = vunpack.c.l.b16 %v5507
    %v5678 = vunpack.c.h.b16 %v5507
    %v5679 = vunpack.c.l.b16 %v5508
    %v5680 = vunpack.c.h.b16 %v5508
    %v5681 = vunpack.c.l.b16 %v5509
    %v5682 = vunpack.c.h.b16 %v5509
    %v5683 = vunpack.c.l.b16 %v5510
    %v5684 = vunpack.c.h.b16 %v5510
    %v5685 = vunpack.c.l.b16 %v5511
    %v5686 = vunpack.c.h.b16 %v5511
    %v5687 = vunpack.c.l.b16 %v5512
    %v5688 = vunpack.c.h.b16 %v5512
    %v5689 = vunpack.c.l.b16 %v5513
    %v5690 = vunpack.c.h.b16 %v5513
    %v5691 = vunpack.c.l.b16 %v5514
    %v5692 = vunpack.c.h.b16 %v5514
    %v5693 = vunpack.c.l.b16 %v5515
    %v5694 = vunpack.c.h.b16 %v5515
    %v5695 = vunpack.c.l.b16 %v5516
    %v5696 = vunpack.c.h.b16 %v5516
    %v5697 = vunpack.c.l.b16 %v5517
    %v5698 = vunpack.c.h.b16 %v5517
    %v5699 = vunpack.c.l.b16 %v5518
    %v5700 = vunpack.c.h.b16 %v5518
    %v5701 = vunpack.c.l.b16 %v5519
    %v5702 = vunpack.c.h.b16 %v5519
    %v5703 = vunpack.c.l.b16 %v5520
    %v5704 = vunpack.c.h.b16 %v5520
    %v5705 = vunpack.c.l.b16 %v5521
    %v5706 = vunpack.c.h.b16 %v5521
    %v5707 = vunpack.c.l.b16 %v5522
    %v5708 = vunpack.c.h.b16 %v5522
    %v5709 = vunpack.c.l.b16 %v5523
    %v5710 = vunpack.c.h.b16 %v5523
    %v5711 = vunpack.c.l.b16 %v5524
    %v5712 = vunpack.c.h.b16 %v5524
    %v5713 = vunpack.c.l.b16 %v5525
    %v5714 = vunpack.c.h.b16 %v5525
    %v5715 = vunpack.c.l.b16 %v5526
    %v5716 = vunpack.c.h.b16 %v5526
    %v5717 = vunpack.c.l.b16 %v5527
    %v5718 = vunpack.c.h.b16 %v5527
    %v5719 = vunpack.c.l.b16 %v5528
    %v5720 = vunpack.c.h.b16 %v5528
    %v5721 = vpack.c.b16 %v5597, %v5593
    %v5722 = vpack.c.b16 %v5598, %v5594
    %v5723 = vpack.c.b16 %v5599, %v5595
    %v5724 = vpack.c.b16 %v5600, %v5596
    %v5725 = vpack.c.b16 %v5605, %v5601
    %v5726 = vpack.c.b16 %v5606, %v5602
    %v5727 = vpack.c.b16 %v5607, %v5603
    %v5728 = vpack.c.b16 %v5608, %v5604
    %v5729 = vpack.c.b16 %v5613, %v5609
    %v5730 = vpack.c.b16 %v5614, %v5610
    %v5731 = vpack.c.b16 %v5615, %v5611
    %v5732 = vpack.c.b16 %v5616, %v5612
    %v5733 = vpack.c.b16 %v5621, %v5617
    %v5734 = vpack.c.b16 %v5622, %v5618
    %v5735 = vpack.c.b16 %v5623, %v5619
    %v5736 = vpack.c.b16 %v5624, %v5620
    %v5737 = vpack.c.b16 %v5629, %v5625
    %v5738 = vpack.c.b16 %v5630, %v5626
    %v5739 = vpack.c.b16 %v5631, %v5627
    %v5740 = vpack.c.b16 %v5632, %v5628
    %v5741 = vpack.c.b16 %v5637, %v5633
    %v5742 = vpack.c.b16 %v5638, %v5634
    %v5743 = vpack.c.b16 %v5639, %v5635
    %v5744 = vpack.c.b16 %v5640, %v5636
    %v5745 = vpack.c.b16 %v5645, %v5641
    %v5746 = vpack.c.b16 %v5646, %v5642
    %v5747 = vpack.c.b16 %v5647, %v5643
    %v5748 = vpack.c.b16 %v5648, %v5644
    %v5749 = vpack.c.b16 %v5653, %v5649
    %v5750 = vpack.c.b16 %v5654, %v5650
    %v5751 = vpack.c.b16 %v5655, %v5651
    %v5752 = vpack.c.b16 %v5656, %v5652
    %v5753 = vpack.c.b16 %v5661, %v5657
    %v5754 = vpack.c.b16 %v5662, %v5658
    %v5755 = vpack.c.b16 %v5663, %v5659
    %v5756 = vpack.c.b16 %v5664, %v5660
    %v5757 = vpack.c.b16 %v5669, %v5665
    %v5758 = vpack.c.b16 %v5670, %v5666
    %v5759 = vpack.c.b16 %v5671, %v5667
    %v5760 = vpack.c.b16 %v5672, %v5668
    %v5761 = vpack.c.b16 %v5677, %v5673
    %v5762 = vpack.c.b16 %v5678, %v5674
    %v5763 = vpack.c.b16 %v5679, %v5675
    %v5764 = vpack.c.b16 %v5680, %v5676
    %v5765 = vpack.c.b16 %v5685, %v5681
    %v5766 = vpack.c.b16 %v5686, %v5682
    %v5767 = vpack.c.b16 %v5687, %v5683
    %v5768 = vpack.c.b16 %v5688, %v5684
    %v5769 = vpack.c.b16 %v5693, %v5689
    %v5770 = vpack.c.b16 %v5694, %v5690
    %v5771 = vpack.c.b16 %v5695, %v5691
    %v5772 = vpack.c.b16 %v5696, %v5692
    %v5773 = vpack.c.b16 %v5701, %v5697
    %v5774 = vpack.c.b16 %v5702, %v5698
    %v5775 = vpack.c.b16 %v5703, %v5699
    %v5776 = vpack.c.b16 %v5704, %v5700
    %v5777 = vpack.c.b16 %v5709, %v5705
    %v5778 = vpack.c.b16 %v5710, %v5706
    %v5779 = vpack.c.b16 %v5711, %v5707
    %v5780 = vpack.c.b16 %v5712, %v5708
    %v5781 = vpack.c.b16 %v5717, %v5713
    %v5782 = vpack.c.b16 %v5718, %v5714
    %v5783 = vpack.c.b16 %v5719, %v5715
    %v5784 = vpack.c.b16 %v5720, %v5716
    %5849 = vmatprep.subr.bf16.mxu0 %v5722
    %5850 = vmatpush1.bf16.msra.mxu0 %v5721
    %5851 = vmatprep.subr.bf16.mxu0 %v5726
    %5852 = vmatpush1.bf16.msra.mxu0 %v5725
    %5853 = vmatprep.subr.bf16.mxu0 %v5730
    %5854 = vmatpush1.bf16.msra.mxu0 %v5729
    %5855 = vmatprep.subr.bf16.mxu0 %v5734
    %5856 = vmatpush1.bf16.msra.mxu0 %v5733
    %5857 = vmatprep.subr.bf16.mxu0 %v5738
    %5858 = vmatpush1.bf16.msra.mxu0 %v5737
    %5859 = vmatprep.subr.bf16.mxu0 %v5742
    %5860 = vmatpush1.bf16.msra.mxu0 %v5741
    %5861 = vmatprep.subr.bf16.mxu0 %v5746
    %5862 = vmatpush1.bf16.msra.mxu0 %v5745
    %5863 = vmatprep.subr.bf16.mxu0 %v5750
    %5864 = vmatpush1.bf16.msra.mxu0 %v5749
    %5865 = vmatprep.subr.bf16.mxu0 %v5754
    %5866 = vmatpush1.bf16.msra.mxu0 %v5753
    %5867 = vmatprep.subr.bf16.mxu0 %v5758
    %5868 = vmatpush1.bf16.msra.mxu0 %v5757
    %5869 = vmatprep.subr.bf16.mxu0 %v5762
    %5870 = vmatpush1.bf16.msra.mxu0 %v5761
    %5871 = vmatprep.subr.bf16.mxu0 %v5766
    %5872 = vmatpush1.bf16.msra.mxu0 %v5765
    %5873 = vmatprep.subr.bf16.mxu0 %v5770
    %5874 = vmatpush1.bf16.msra.mxu0 %v5769
    %5875 = vmatprep.subr.bf16.mxu0 %v5774
    %5876 = vmatpush1.bf16.msra.mxu0 %v5773
    %5877 = vmatprep.subr.bf16.mxu0 %v5778
    %5878 = vmatpush1.bf16.msra.mxu0 %v5777
    %5879 = vmatprep.subr.bf16.mxu0 %v5782
    %5880 = vmatpush1.bf16.msra.mxu0 %v5781
    %5881 = vmatprep.mubr.bf16.mxu0 %v5464
    %5882 = vmatmul.mubr.bf16.gmra.mrb[0].mxu0 %v5463
    %v5883 = vpop.f32.mrb[0].mxu0
    %v5884 = vadd.f32 %v1116, %v5883
    %v5885 = vpop.f32.mrb[0].mxu0
    %v5886 = vadd.f32 %v1120, %v5885
    %v5887 = vpop.f32.mrb[0].mxu0
    %v5888 = vpop.f32.mrb[0].mxu0
    %5889 = vdwg.mxu0
    %5890 = vmatprep.subr.bf16.mxu0 %v5724
    %5891 = vmatpush1.bf16.msra.mxu0 %v5723
    %5892 = vmatprep.subr.bf16.mxu0 %v5728
    %5893 = vmatpush1.bf16.msra.mxu0 %v5727
    %5894 = vmatprep.subr.bf16.mxu0 %v5732
    %5895 = vmatpush1.bf16.msra.mxu0 %v5731
    %5896 = vmatprep.subr.bf16.mxu0 %v5736
    %5897 = vmatpush1.bf16.msra.mxu0 %v5735
    %5898 = vmatprep.subr.bf16.mxu0 %v5740
    %5899 = vmatpush1.bf16.msra.mxu0 %v5739
    %5900 = vmatprep.subr.bf16.mxu0 %v5744
    %5901 = vmatpush1.bf16.msra.mxu0 %v5743
    %5902 = vmatprep.subr.bf16.mxu0 %v5748
    %5903 = vmatpush1.bf16.msra.mxu0 %v5747
    %5904 = vmatprep.subr.bf16.mxu0 %v5752
    %5905 = vmatpush1.bf16.msra.mxu0 %v5751
    %5906 = vmatprep.subr.bf16.mxu0 %v5756
    %5907 = vmatpush1.bf16.msra.mxu0 %v5755
    %5908 = vmatprep.subr.bf16.mxu0 %v5760
    %5909 = vmatpush1.bf16.msra.mxu0 %v5759
    %5910 = vmatprep.subr.bf16.mxu0 %v5764
    %5911 = vmatpush1.bf16.msra.mxu0 %v5763
    %5912 = vmatprep.subr.bf16.mxu0 %v5768
    %5913 = vmatpush1.bf16.msra.mxu0 %v5767
    %5914 = vmatprep.subr.bf16.mxu0 %v5772
    %5915 = vmatpush1.bf16.msra.mxu0 %v5771
    %5916 = vmatprep.subr.bf16.mxu0 %v5776
    %5917 = vmatpush1.bf16.msra.mxu0 %v5775
    %5918 = vmatprep.subr.bf16.mxu0 %v5780
    %5919 = vmatpush1.bf16.msra.mxu0 %v5779
    %5920 = vmatprep.subr.bf16.mxu0 %v5784
    %5921 = vmatpush1.bf16.msra.mxu0 %v5783
    %5922 = vmatprep.mubr.bf16.mxu0 %v5464
    %5923 = vmatmul.mubr.bf16.gmra.mrb[0].mxu0 %v5463
    %v5924 = vpop.f32.mrb[0].mxu0
    %v5925 = vadd.f32 %v1124, %v5924
    %v5926 = vpop.f32.mrb[0].mxu0
    %v5927 = vadd.f32 %v1128, %v5926
    %v5928 = vpop.f32.mrb[0].mxu0
    %v5929 = vpop.f32.mrb[0].mxu0
    %5930 = vdwg.mxu0
    %v5931 = vsub.f32 0.0, %v5884
    %v5932 = vmul.f32 %v5931, 1.442695
    %v5933 = vpow.pop %v5932
    %v5934 = vadd.f32 %v5933, 1.0
    %v5935 = vrcp.pop %v5934
    %v5936 = vsub.f32 0.0, %v5886
    %v5937 = vmul.f32 %v5936, 1.442695
    %v5938 = vpow.pop %v5937
    %v5939 = vadd.f32 %v5938, 1.0
    %v5940 = vrcp.pop %v5939
    %v5941 = vtanh.pop %v5925
    %v5942 = vsub.f32 0.0, %v5927
    %v5943 = vmul.f32 %v5942, 1.442695
    %v5944 = vpow.pop %v5943
    %v5945 = vadd.f32 %v5944, 1.0
    %v5946 = vrcp.pop %v5945
    %v5947 = vmul.f32 %v5940, %v5149
    %v5948 = vmul.f32 %v5935, %v5941
    %v5949 = vadd.f32 %v5947, %v5948
    %v5950 = vtanh.pop %v5949
    %v5951 = vmul.f32 %v5946, %v5950
    %v5952 = vsel %vm5460, %v5951, %v5148
    %v5953 = vsel %vm5460, %v5949, %v5149
    %v5954 = vsel %vm5460, %v5951, 0.0
    %5955 = vst [vmem:[#allocation12 + $0x28] sm:$0xff] %v5954
    %vm5956 = vcmp.gt.s32.totalorder %v108, 6
    %v5957 = vld [vmem:[#allocation2 + $0xc0] sm:$0xff]
    %v5958 = vld [vmem:[#allocation2 + $0xc8] sm:$0xff]
    %v5959 = vld [vmem:[#allocation2 + $0xd0] sm:$0xff]
    %v5960 = vld [vmem:[#allocation2 + $0xd8] sm:$0xff]
    %v5961 = vld [vmem:[#allocation8] sm:$0xff]
    %v5962 = vld [vmem:[#allocation8 + $0x8] sm:$0xff]
    %v5963 = vld [vmem:[#allocation8 + $0x10] sm:$0xff]
    %v5964 = vld [vmem:[#allocation8 + $0x18] sm:$0xff]
    %v5965 = vld [vmem:[#allocation8 + $0x20] sm:$0xff]
    %v5966 = vld [vmem:[#allocation8 + $0x28] sm:$0xff]
    %v5967 = vld [vmem:[#allocation8 + $0x30] sm:$0xff]
    %v5968 = vld [vmem:[#allocation8 + $0x38] sm:$0xff]
    %v5969 = vld [vmem:[#allocation8 + $0x40] sm:$0xff]
    %v5970 = vld [vmem:[#allocation8 + $0x48] sm:$0xff]
    %v5971 = vld [vmem:[#allocation8 + $0x50] sm:$0xff]
    %v5972 = vld [vmem:[#allocation8 + $0x58] sm:$0xff]
    %v5973 = vld [vmem:[#allocation8 + $0x60] sm:$0xff]
    %v5974 = vld [vmem:[#allocation8 + $0x68] sm:$0xff]
    %v5975 = vld [vmem:[#allocation8 + $0x70] sm:$0xff]
    %v5976 = vld [vmem:[#allocation8 + $0x78] sm:$0xff]
    %v5977 = vld [vmem:[#allocation8 + $0x80] sm:$0xff]
    %v5978 = vld [vmem:[#allocation8 + $0x88] sm:$0xff]
    %v5979 = vld [vmem:[#allocation8 + $0x90] sm:$0xff]
    %v5980 = vld [vmem:[#allocation8 + $0x98] sm:$0xff]
    %v5981 = vld [vmem:[#allocation8 + $0xa0] sm:$0xff]
    %v5982 = vld [vmem:[#allocation8 + $0xa8] sm:$0xff]
    %v5983 = vld [vmem:[#allocation8 + $0xb0] sm:$0xff]
    %v5984 = vld [vmem:[#allocation8 + $0xb8] sm:$0xff]
    %v5985 = vld [vmem:[#allocation8 + $0xc0] sm:$0xff]
    %v5986 = vld [vmem:[#allocation8 + $0xc8] sm:$0xff]
    %v5987 = vld [vmem:[#allocation8 + $0xd0] sm:$0xff]
    %v5988 = vld [vmem:[#allocation8 + $0xd8] sm:$0xff]
    %v5989 = vld [vmem:[#allocation8 + $0xe0] sm:$0xff]
    %v5990 = vld [vmem:[#allocation8 + $0xe8] sm:$0xff]
    %v5991 = vld [vmem:[#allocation8 + $0xf0] sm:$0xff]
    %v5992 = vld [vmem:[#allocation8 + $0xf8] sm:$0xff]
    %v6025 = vunpack.c.l.b16 %v5961
    %v6026 = vunpack.c.h.b16 %v5961
    %v6027 = vunpack.c.l.b16 %v5962
    %v6028 = vunpack.c.h.b16 %v5962
    %v6029 = vunpack.c.l.b16 %v5963
    %v6030 = vunpack.c.h.b16 %v5963
    %v6031 = vunpack.c.l.b16 %v5964
    %v6032 = vunpack.c.h.b16 %v5964
    %v6033 = vunpack.c.l.b16 %v5965
    %v6034 = vunpack.c.h.b16 %v5965
    %v6035 = vunpack.c.l.b16 %v5966
    %v6036 = vunpack.c.h.b16 %v5966
    %v6037 = vunpack.c.l.b16 %v5967
    %v6038 = vunpack.c.h.b16 %v5967
    %v6039 = vunpack.c.l.b16 %v5968
    %v6040 = vunpack.c.h.b16 %v5968
    %v6041 = vunpack.c.l.b16 %v5969
    %v6042 = vunpack.c.h.b16 %v5969
    %v6043 = vunpack.c.l.b16 %v5970
    %v6044 = vunpack.c.h.b16 %v5970
    %v6045 = vunpack.c.l.b16 %v5971
    %v6046 = vunpack.c.h.b16 %v5971
    %v6047 = vunpack.c.l.b16 %v5972
    %v6048 = vunpack.c.h.b16 %v5972
    %v6049 = vunpack.c.l.b16 %v5973
    %v6050 = vunpack.c.h.b16 %v5973
    %v6051 = vunpack.c.l.b16 %v5974
    %v6052 = vunpack.c.h.b16 %v5974
    %v6053 = vunpack.c.l.b16 %v5975
    %v6054 = vunpack.c.h.b16 %v5975
    %v6055 = vunpack.c.l.b16 %v5976
    %v6056 = vunpack.c.h.b16 %v5976
    %v6057 = vunpack.c.l.b16 %v5977
    %v6058 = vunpack.c.h.b16 %v5977
    %v6059 = vunpack.c.l.b16 %v5978
    %v6060 = vunpack.c.h.b16 %v5978
    %v6061 = vunpack.c.l.b16 %v5979
    %v6062 = vunpack.c.h.b16 %v5979
    %v6063 = vunpack.c.l.b16 %v5980
    %v6064 = vunpack.c.h.b16 %v5980
    %v6065 = vunpack.c.l.b16 %v5981
    %v6066 = vunpack.c.h.b16 %v5981
    %v6067 = vunpack.c.l.b16 %v5982
    %v6068 = vunpack.c.h.b16 %v5982
    %v6069 = vunpack.c.l.b16 %v5983
    %v6070 = vunpack.c.h.b16 %v5983
    %v6071 = vunpack.c.l.b16 %v5984
    %v6072 = vunpack.c.h.b16 %v5984
    %v6073 = vunpack.c.l.b16 %v5985
    %v6074 = vunpack.c.h.b16 %v5985
    %v6075 = vunpack.c.l.b16 %v5986
    %v6076 = vunpack.c.h.b16 %v5986
    %v6077 = vunpack.c.l.b16 %v5987
    %v6078 = vunpack.c.h.b16 %v5987
    %v6079 = vunpack.c.l.b16 %v5988
    %v6080 = vunpack.c.h.b16 %v5988
    %v6081 = vunpack.c.l.b16 %v5989
    %v6082 = vunpack.c.h.b16 %v5989
    %v6083 = vunpack.c.l.b16 %v5990
    %v6084 = vunpack.c.h.b16 %v5990
    %v6085 = vunpack.c.l.b16 %v5991
    %v6086 = vunpack.c.h.b16 %v5991
    %v6087 = vunpack.c.l.b16 %v5992
    %v6088 = vunpack.c.h.b16 %v5992
    %v6089 = vpack.c.b16 %v6029, %v6025
    %v6090 = vpack.c.b16 %v6030, %v6026
    %v6091 = vpack.c.b16 %v6031, %v6027
    %v6092 = vpack.c.b16 %v6032, %v6028
    %v6093 = vpack.c.b16 %v6037, %v6033
    %v6094 = vpack.c.b16 %v6038, %v6034
    %v6095 = vpack.c.b16 %v6039, %v6035
    %v6096 = vpack.c.b16 %v6040, %v6036
    %v6097 = vpack.c.b16 %v6045, %v6041
    %v6098 = vpack.c.b16 %v6046, %v6042
    %v6099 = vpack.c.b16 %v6047, %v6043
    %v6100 = vpack.c.b16 %v6048, %v6044
    %v6101 = vpack.c.b16 %v6053, %v6049
    %v6102 = vpack.c.b16 %v6054, %v6050
    %v6103 = vpack.c.b16 %v6055, %v6051
    %v6104 = vpack.c.b16 %v6056, %v6052
    %v6105 = vpack.c.b16 %v6061, %v6057
    %v6106 = vpack.c.b16 %v6062, %v6058
    %v6107 = vpack.c.b16 %v6063, %v6059
    %v6108 = vpack.c.b16 %v6064, %v6060
    %v6109 = vpack.c.b16 %v6069, %v6065
    %v6110 = vpack.c.b16 %v6070, %v6066
    %v6111 = vpack.c.b16 %v6071, %v6067
    %v6112 = vpack.c.b16 %v6072, %v6068
    %v6113 = vpack.c.b16 %v6077, %v6073
    %v6114 = vpack.c.b16 %v6078, %v6074
    %v6115 = vpack.c.b16 %v6079, %v6075
    %v6116 = vpack.c.b16 %v6080, %v6076
    %v6117 = vpack.c.b16 %v6085, %v6081
    %v6118 = vpack.c.b16 %v6086, %v6082
    %v6119 = vpack.c.b16 %v6087, %v6083
    %v6120 = vpack.c.b16 %v6088, %v6084
    %6153 = vmatprep.subr.bf16.mxu0 %v6090
    %6154 = vmatpush1.bf16.msra.mxu0 %v6089
    %6155 = vmatprep.subr.bf16.mxu0 %v6094
    %6156 = vmatpush1.bf16.msra.mxu0 %v6093
    %6157 = vmatprep.subr.bf16.mxu0 %v6098
    %6158 = vmatpush1.bf16.msra.mxu0 %v6097
    %6159 = vmatprep.subr.bf16.mxu0 %v6102
    %6160 = vmatpush1.bf16.msra.mxu0 %v6101
    %6161 = vmatprep.subr.bf16.mxu0 %v6106
    %6162 = vmatpush1.bf16.msra.mxu0 %v6105
    %6163 = vmatprep.subr.bf16.mxu0 %v6110
    %6164 = vmatpush1.bf16.msra.mxu0 %v6109
    %6165 = vmatprep.subr.bf16.mxu0 %v6114
    %6166 = vmatpush1.bf16.msra.mxu0 %v6113
    %6167 = vmatprep.subr.bf16.mxu0 %v6118
    %6168 = vmatpush1.bf16.msra.mxu0 %v6117
    %6169 = vmatprep.subr.bf16.mxu0 0
    %6170 = vmatpush1.bf16.msra.mxu0 0
    %6171 = vmatprep.subr.bf16.mxu0 0
    %6172 = vmatpush1.bf16.msra.mxu0 0
    %6173 = vmatprep.subr.bf16.mxu0 0
    %6174 = vmatpush1.bf16.msra.mxu0 0
    %6175 = vmatprep.subr.bf16.mxu0 0
    %6176 = vmatpush1.bf16.msra.mxu0 0
    %6177 = vmatprep.subr.bf16.mxu0 0
    %6178 = vmatpush1.bf16.msra.mxu0 0
    %6179 = vmatprep.subr.bf16.mxu0 0
    %6180 = vmatpush1.bf16.msra.mxu0 0
    %6181 = vmatprep.subr.bf16.mxu0 0
    %6182 = vmatpush1.bf16.msra.mxu0 0
    %6183 = vmatprep.subr.bf16.mxu0 0
    %6184 = vmatpush1.bf16.msra.mxu0 0
    %6185 = vmatprep.mubr.bf16.mxu0 0
    %6186 = vmatmul.mubr.bf16.gmra.mrb[0].mxu0 %v5463
    %v6187 = vpop.f32.mrb[0].mxu0
    %v6188 = vadd.f32 0.0, %v6187
    %v6189 = vpop.f32.mrb[0].mxu0
    %v6190 = vadd.f32 0.0, %v6189
    %v6191 = vpop.f32.mrb[0].mxu0
    %v6192 = vpop.f32.mrb[0].mxu0
    %6193 = vdwg.mxu0
    %6194 = vmatprep.subr.bf16.mxu0 %v6092
    %6195 = vmatpush1.bf16.msra.mxu0 %v6091
    %6196 = vmatprep.subr.bf16.mxu0 %v6096
    %6197 = vmatpush1.bf16.msra.mxu0 %v6095
    %6198 = vmatprep.subr.bf16.mxu0 %v6100
    %6199 = vmatpush1.bf16.msra.mxu0 %v6099
    %6200 = vmatprep.subr.bf16.mxu0 %v6104
    %6201 = vmatpush1.bf16.msra.mxu0 %v6103
    %6202 = vmatprep.subr.bf16.mxu0 %v6108
    %6203 = vmatpush1.bf16.msra.mxu0 %v6107
    %6204 = vmatprep.subr.bf16.mxu0 %v6112
    %6205 = vmatpush1.bf16.msra.mxu0 %v6111
    %6206 = vmatprep.subr.bf16.mxu0 %v6116
    %6207 = vmatpush1.bf16.msra.mxu0 %v6115
    %6208 = vmatprep.subr.bf16.mxu0 %v6120
    %6209 = vmatpush1.bf16.msra.mxu0 %v6119
    %6210 = vmatprep.subr.bf16.mxu0 0
    %6211 = vmatpush1.bf16.msra.mxu0 0
    %6212 = vmatprep.subr.bf16.mxu0 0
    %6213 = vmatpush1.bf16.msra.mxu0 0
    %6214 = vmatprep.subr.bf16.mxu0 0
    %6215 = vmatpush1.bf16.msra.mxu0 0
    %6216 = vmatprep.subr.bf16.mxu0 0
    %6217 = vmatpush1.bf16.msra.mxu0 0
    %6218 = vmatprep.subr.bf16.mxu0 0
    %6219 = vmatpush1.bf16.msra.mxu0 0
    %6220 = vmatprep.subr.bf16.mxu0 0
    %6221 = vmatpush1.bf16.msra.mxu0 0
    %6222 = vmatprep.subr.bf16.mxu0 0
    %6223 = vmatpush1.bf16.msra.mxu0 0
    %6224 = vmatprep.subr.bf16.mxu0 0
    %6225 = vmatpush1.bf16.msra.mxu0 0
    %6226 = vmatprep.mubr.bf16.mxu0 0
    %6227 = vmatmul.mubr.bf16.gmra.mrb[0].mxu0 %v5463
    %v6228 = vpop.f32.mrb[0].mxu0
    %v6229 = vadd.f32 0.0, %v6228
    %v6230 = vpop.f32.mrb[0].mxu0
    %v6231 = vadd.f32 0.0, %v6230
    %v6232 = vpop.f32.mrb[0].mxu0
    %v6233 = vpop.f32.mrb[0].mxu0
    %6234 = vdwg.mxu0
    %v6235 = vadd.f32 %v5957, %v6188
    %v6236 = vadd.f32 %v5958, %v6190
    %v6237 = vadd.f32 %v5959, %v6229
    %v6238 = vadd.f32 %v5960, %v6231
    %v6239 = vsub.f32 0.0, %v6235
    %v6240 = vmul.f32 %v6239, 1.442695
    %v6241 = vpow.pop %v6240
    %v6242 = vadd.f32 %v6241, 1.0
    %v6243 = vrcp.pop %v6242
    %v6244 = vsub.f32 0.0, %v6236
    %v6245 = vmul.f32 %v6244, 1.442695
    %v6246 = vpow.pop %v6245
    %v6247 = vadd.f32 %v6246, 1.0
    %v6248 = vrcp.pop %v6247
    %v6249 = vtanh.pop %v6237
    %v6250 = vsub.f32 0.0, %v6238
    %v6251 = vmul.f32 %v6250, 1.442695
    %v6252 = vpow.pop %v6251
    %v6253 = vadd.f32 %v6252, 1.0
    %v6254 = vrcp.pop %v6253
    %v6255 = vmul.f32 %v6248, %v5462
    %v6256 = vmul.f32 %v6243, %v6249
    %v6257 = vadd.f32 %v6255, %v6256
    %v6258 = vtanh.pop %v6257
    %v6259 = vmul.f32 %v6254, %v6258
    %v6260 = vsel %vm5956, 1, 0
    %6261 = vset.pattern.permute.xlu0 0
    %6262 = vperm.xlu0 %6261, %v6260
    %v6263 = vpop.permute.xlu0 %6262
    %vm6264 = vcmp.eq.s32.totalorder %v6263, 1
    %v6265 = vsel %vm6264, %v6259, %v5461
    %v6266 = vsel %vm6264, %v6257, %v5462
    %v6267 = vpack.c.bf16 %v6265, %v6265
    %v6268 = vpack.c.bf16 %v5952, %v5952
    %v6269 = vld [vmem:[#allocation9] sm:$0xff]
    %v6270 = vld [vmem:[#allocation9 + $0x8] sm:$0xff]
    %v6271 = vld [vmem:[#allocation9 + $0x10] sm:$0xff]
    %v6272 = vld [vmem:[#allocation9 + $0x18] sm:$0xff]
    %v6273 = vld [vmem:[#allocation9 + $0x20] sm:$0xff]
    %v6274 = vld [vmem:[#allocation9 + $0x28] sm:$0xff]
    %v6275 = vld [vmem:[#allocation9 + $0x30] sm:$0xff]
    %v6276 = vld [vmem:[#allocation9 + $0x38] sm:$0xff]
    %v6277 = vld [vmem:[#allocation9 + $0x40] sm:$0xff]
    %v6278 = vld [vmem:[#allocation9 + $0x48] sm:$0xff]
    %v6279 = vld [vmem:[#allocation9 + $0x50] sm:$0xff]
    %v6280 = vld [vmem:[#allocation9 + $0x58] sm:$0xff]
    %v6281 = vld [vmem:[#allocation9 + $0x60] sm:$0xff]
    %v6282 = vld [vmem:[#allocation9 + $0x68] sm:$0xff]
    %v6283 = vld [vmem:[#allocation9 + $0x70] sm:$0xff]
    %v6284 = vld [vmem:[#allocation9 + $0x78] sm:$0xff]
    %v6285 = vld [vmem:[#allocation9 + $0x80] sm:$0xff]
    %v6286 = vld [vmem:[#allocation9 + $0x88] sm:$0xff]
    %v6287 = vld [vmem:[#allocation9 + $0x90] sm:$0xff]
    %v6288 = vld [vmem:[#allocation9 + $0x98] sm:$0xff]
    %v6289 = vld [vmem:[#allocation9 + $0xa0] sm:$0xff]
    %v6290 = vld [vmem:[#allocation9 + $0xa8] sm:$0xff]
    %v6291 = vld [vmem:[#allocation9 + $0xb0] sm:$0xff]
    %v6292 = vld [vmem:[#allocation9 + $0xb8] sm:$0xff]
    %v6293 = vld [vmem:[#allocation9 + $0xc0] sm:$0xff]
    %v6294 = vld [vmem:[#allocation9 + $0xc8] sm:$0xff]
    %v6295 = vld [vmem:[#allocation9 + $0xd0] sm:$0xff]
    %v6296 = vld [vmem:[#allocation9 + $0xd8] sm:$0xff]
    %v6297 = vld [vmem:[#allocation9 + $0xe0] sm:$0xff]
    %v6298 = vld [vmem:[#allocation9 + $0xe8] sm:$0xff]
    %v6299 = vld [vmem:[#allocation9 + $0xf0] sm:$0xff]
    %v6300 = vld [vmem:[#allocation9 + $0xf8] sm:$0xff]
    %v6301 = vld [vmem:[#allocation9 + $0x100] sm:$0xff]
    %v6302 = vld [vmem:[#allocation9 + $0x108] sm:$0xff]
    %v6303 = vld [vmem:[#allocation9 + $0x110] sm:$0xff]
    %v6304 = vld [vmem:[#allocation9 + $0x118] sm:$0xff]
    %v6305 = vld [vmem:[#allocation9 + $0x120] sm:$0xff]
    %v6306 = vld [vmem:[#allocation9 + $0x128] sm:$0xff]
    %v6307 = vld [vmem:[#allocation9 + $0x130] sm:$0xff]
    %v6308 = vld [vmem:[#allocation9 + $0x138] sm:$0xff]
    %v6309 = vld [vmem:[#allocation9 + $0x140] sm:$0xff]
    %v6310 = vld [vmem:[#allocation9 + $0x148] sm:$0xff]
    %v6311 = vld [vmem:[#allocation9 + $0x150] sm:$0xff]
    %v6312 = vld [vmem:[#allocation9 + $0x158] sm:$0xff]
    %v6313 = vld [vmem:[#allocation9 + $0x160] sm:$0xff]
    %v6314 = vld [vmem:[#allocation9 + $0x168] sm:$0xff]
    %v6315 = vld [vmem:[#allocation9 + $0x170] sm:$0xff]
    %v6316 = vld [vmem:[#allocation9 + $0x178] sm:$0xff]
    %v6317 = vld [vmem:[#allocation9 + $0x180] sm:$0xff]
    %v6318 = vld [vmem:[#allocation9 + $0x188] sm:$0xff]
    %v6319 = vld [vmem:[#allocation9 + $0x190] sm:$0xff]
    %v6320 = vld [vmem:[#allocation9 + $0x198] sm:$0xff]
    %v6321 = vld [vmem:[#allocation9 + $0x1a0] sm:$0xff]
    %v6322 = vld [vmem:[#allocation9 + $0x1a8] sm:$0xff]
    %v6323 = vld [vmem:[#allocation9 + $0x1b0] sm:$0xff]
    %v6324 = vld [vmem:[#allocation9 + $0x1b8] sm:$0xff]
    %v6325 = vld [vmem:[#allocation9 + $0x1c0] sm:$0xff]
    %v6326 = vld [vmem:[#allocation9 + $0x1c8] sm:$0xff]
    %v6327 = vld [vmem:[#allocation9 + $0x1d0] sm:$0xff]
    %v6328 = vld [vmem:[#allocation9 + $0x1d8] sm:$0xff]
    %v6329 = vld [vmem:[#allocation9 + $0x1e0] sm:$0xff]
    %v6330 = vld [vmem:[#allocation9 + $0x1e8] sm:$0xff]
    %v6331 = vld [vmem:[#allocation9 + $0x1f0] sm:$0xff]
    %v6332 = vld [vmem:[#allocation9 + $0x1f8] sm:$0xff]
    %v6397 = vunpack.c.l.b16 %v6269
    %v6398 = vunpack.c.h.b16 %v6269
    %v6399 = vunpack.c.l.b16 %v6270
    %v6400 = vunpack.c.h.b16 %v6270
    %v6401 = vunpack.c.l.b16 %v6271
    %v6402 = vunpack.c.h.b16 %v6271
    %v6403 = vunpack.c.l.b16 %v6272
    %v6404 = vunpack.c.h.b16 %v6272
    %v6405 = vunpack.c.l.b16 %v6273
    %v6406 = vunpack.c.h.b16 %v6273
    %v6407 = vunpack.c.l.b16 %v6274
    %v6408 = vunpack.c.h.b16 %v6274
    %v6409 = vunpack.c.l.b16 %v6275
    %v6410 = vunpack.c.h.b16 %v6275
    %v6411 = vunpack.c.l.b16 %v6276
    %v6412 = vunpack.c.h.b16 %v6276
    %v6413 = vunpack.c.l.b16 %v6277
    %v6414 = vunpack.c.h.b16 %v6277
    %v6415 = vunpack.c.l.b16 %v6278
    %v6416 = vunpack.c.h.b16 %v6278
    %v6417 = vunpack.c.l.b16 %v6279
    %v6418 = vunpack.c.h.b16 %v6279
    %v6419 = vunpack.c.l.b16 %v6280
    %v6420 = vunpack.c.h.b16 %v6280
    %v6421 = vunpack.c.l.b16 %v6281
    %v6422 = vunpack.c.h.b16 %v6281
    %v6423 = vunpack.c.l.b16 %v6282
    %v6424 = vunpack.c.h.b16 %v6282
    %v6425 = vunpack.c.l.b16 %v6283
    %v6426 = vunpack.c.h.b16 %v6283
    %v6427 = vunpack.c.l.b16 %v6284
    %v6428 = vunpack.c.h.b16 %v6284
    %v6429 = vunpack.c.l.b16 %v6285
    %v6430 = vunpack.c.h.b16 %v6285
    %v6431 = vunpack.c.l.b16 %v6286
    %v6432 = vunpack.c.h.b16 %v6286
    %v6433 = vunpack.c.l.b16 %v6287
    %v6434 = vunpack.c.h.b16 %v6287
    %v6435 = vunpack.c.l.b16 %v6288
    %v6436 = vunpack.c.h.b16 %v6288
    %v6437 = vunpack.c.l.b16 %v6289
    %v6438 = vunpack.c.h.b16 %v6289
    %v6439 = vunpack.c.l.b16 %v6290
    %v6440 = vunpack.c.h.b16 %v6290
    %v6441 = vunpack.c.l.b16 %v6291
    %v6442 = vunpack.c.h.b16 %v6291
    %v6443 = vunpack.c.l.b16 %v6292
    %v6444 = vunpack.c.h.b16 %v6292
    %v6445 = vunpack.c.l.b16 %v6293
    %v6446 = vunpack.c.h.b16 %v6293
    %v6447 = vunpack.c.l.b16 %v6294
    %v6448 = vunpack.c.h.b16 %v6294
    %v6449 = vunpack.c.l.b16 %v6295
    %v6450 = vunpack.c.h.b16 %v6295
    %v6451 = vunpack.c.l.b16 %v6296
    %v6452 = vunpack.c.h.b16 %v6296
    %v6453 = vunpack.c.l.b16 %v6297
    %v6454 = vunpack.c.h.b16 %v6297
    %v6455 = vunpack.c.l.b16 %v6298
    %v6456 = vunpack.c.h.b16 %v6298
    %v6457 = vunpack.c.l.b16 %v6299
    %v6458 = vunpack.c.h.b16 %v6299
    %v6459 = vunpack.c.l.b16 %v6300
    %v6460 = vunpack.c.h.b16 %v6300
    %v6461 = vunpack.c.l.b16 %v6301
    %v6462 = vunpack.c.h.b16 %v6301
    %v6463 = vunpack.c.l.b16 %v6302
    %v6464 = vunpack.c.h.b16 %v6302
    %v6465 = vunpack.c.l.b16 %v6303
    %v6466 = vunpack.c.h.b16 %v6303
    %v6467 = vunpack.c.l.b16 %v6304
    %v6468 = vunpack.c.h.b16 %v6304
    %v6469 = vunpack.c.l.b16 %v6305
    %v6470 = vunpack.c.h.b16 %v6305
    %v6471 = vunpack.c.l.b16 %v6306
    %v6472 = vunpack.c.h.b16 %v6306
    %v6473 = vunpack.c.l.b16 %v6307
    %v6474 = vunpack.c.h.b16 %v6307
    %v6475 = vunpack.c.l.b16 %v6308
    %v6476 = vunpack.c.h.b16 %v6308
    %v6477 = vunpack.c.l.b16 %v6309
    %v6478 = vunpack.c.h.b16 %v6309
    %v6479 = vunpack.c.l.b16 %v6310
    %v6480 = vunpack.c.h.b16 %v6310
    %v6481 = vunpack.c.l.b16 %v6311
    %v6482 = vunpack.c.h.b16 %v6311
    %v6483 = vunpack.c.l.b16 %v6312
    %v6484 = vunpack.c.h.b16 %v6312
    %v6485 = vunpack.c.l.b16 %v6313
    %v6486 = vunpack.c.h.b16 %v6313
    %v6487 = vunpack.c.l.b16 %v6314
    %v6488 = vunpack.c.h.b16 %v6314
    %v6489 = vunpack.c.l.b16 %v6315
    %v6490 = vunpack.c.h.b16 %v6315
    %v6491 = vunpack.c.l.b16 %v6316
    %v6492 = vunpack.c.h.b16 %v6316
    %v6493 = vunpack.c.l.b16 %v6317
    %v6494 = vunpack.c.h.b16 %v6317
    %v6495 = vunpack.c.l.b16 %v6318
    %v6496 = vunpack.c.h.b16 %v6318
    %v6497 = vunpack.c.l.b16 %v6319
    %v6498 = vunpack.c.h.b16 %v6319
    %v6499 = vunpack.c.l.b16 %v6320
    %v6500 = vunpack.c.h.b16 %v6320
    %v6501 = vunpack.c.l.b16 %v6321
    %v6502 = vunpack.c.h.b16 %v6321
    %v6503 = vunpack.c.l.b16 %v6322
    %v6504 = vunpack.c.h.b16 %v6322
    %v6505 = vunpack.c.l.b16 %v6323
    %v6506 = vunpack.c.h.b16 %v6323
    %v6507 = vunpack.c.l.b16 %v6324
    %v6508 = vunpack.c.h.b16 %v6324
    %v6509 = vunpack.c.l.b16 %v6325
    %v6510 = vunpack.c.h.b16 %v6325
    %v6511 = vunpack.c.l.b16 %v6326
    %v6512 = vunpack.c.h.b16 %v6326
    %v6513 = vunpack.c.l.b16 %v6327
    %v6514 = vunpack.c.h.b16 %v6327
    %v6515 = vunpack.c.l.b16 %v6328
    %v6516 = vunpack.c.h.b16 %v6328
    %v6517 = vunpack.c.l.b16 %v6329
    %v6518 = vunpack.c.h.b16 %v6329
    %v6519 = vunpack.c.l.b16 %v6330
    %v6520 = vunpack.c.h.b16 %v6330
    %v6521 = vunpack.c.l.b16 %v6331
    %v6522 = vunpack.c.h.b16 %v6331
    %v6523 = vunpack.c.l.b16 %v6332
    %v6524 = vunpack.c.h.b16 %v6332
    %v6525 = vpack.c.b16 %v6401, %v6397
    %v6526 = vpack.c.b16 %v6402, %v6398
    %v6527 = vpack.c.b16 %v6403, %v6399
    %v6528 = vpack.c.b16 %v6404, %v6400
    %v6529 = vpack.c.b16 %v6409, %v6405
    %v6530 = vpack.c.b16 %v6410, %v6406
    %v6531 = vpack.c.b16 %v6411, %v6407
    %v6532 = vpack.c.b16 %v6412, %v6408
    %v6533 = vpack.c.b16 %v6417, %v6413
    %v6534 = vpack.c.b16 %v6418, %v6414
    %v6535 = vpack.c.b16 %v6419, %v6415
    %v6536 = vpack.c.b16 %v6420, %v6416
    %v6537 = vpack.c.b16 %v6425, %v6421
    %v6538 = vpack.c.b16 %v6426, %v6422
    %v6539 = vpack.c.b16 %v6427, %v6423
    %v6540 = vpack.c.b16 %v6428, %v6424
    %v6541 = vpack.c.b16 %v6433, %v6429
    %v6542 = vpack.c.b16 %v6434, %v6430
    %v6543 = vpack.c.b16 %v6435, %v6431
    %v6544 = vpack.c.b16 %v6436, %v6432
    %v6545 = vpack.c.b16 %v6441, %v6437
    %v6546 = vpack.c.b16 %v6442, %v6438
    %v6547 = vpack.c.b16 %v6443, %v6439
    %v6548 = vpack.c.b16 %v6444, %v6440
    %v6549 = vpack.c.b16 %v6449, %v6445
    %v6550 = vpack.c.b16 %v6450, %v6446
    %v6551 = vpack.c.b16 %v6451, %v6447
    %v6552 = vpack.c.b16 %v6452, %v6448
    %v6553 = vpack.c.b16 %v6457, %v6453
    %v6554 = vpack.c.b16 %v6458, %v6454
    %v6555 = vpack.c.b16 %v6459, %v6455
    %v6556 = vpack.c.b16 %v6460, %v6456
    %v6557 = vpack.c.b16 %v6465, %v6461
    %v6558 = vpack.c.b16 %v6466, %v6462
    %v6559 = vpack.c.b16 %v6467, %v6463
    %v6560 = vpack.c.b16 %v6468, %v6464
    %v6561 = vpack.c.b16 %v6473, %v6469
    %v6562 = vpack.c.b16 %v6474, %v6470
    %v6563 = vpack.c.b16 %v6475, %v6471
    %v6564 = vpack.c.b16 %v6476, %v6472
    %v6565 = vpack.c.b16 %v6481, %v6477
    %v6566 = vpack.c.b16 %v6482, %v6478
    %v6567 = vpack.c.b16 %v6483, %v6479
    %v6568 = vpack.c.b16 %v6484, %v6480
    %v6569 = vpack.c.b16 %v6489, %v6485
    %v6570 = vpack.c.b16 %v6490, %v6486
    %v6571 = vpack.c.b16 %v6491, %v6487
    %v6572 = vpack.c.b16 %v6492, %v6488
    %v6573 = vpack.c.b16 %v6497, %v6493
    %v6574 = vpack.c.b16 %v6498, %v6494
    %v6575 = vpack.c.b16 %v6499, %v6495
    %v6576 = vpack.c.b16 %v6500, %v6496
    %v6577 = vpack.c.b16 %v6505, %v6501
    %v6578 = vpack.c.b16 %v6506, %v6502
    %v6579 = vpack.c.b16 %v6507, %v6503
    %v6580 = vpack.c.b16 %v6508, %v6504
    %v6581 = vpack.c.b16 %v6513, %v6509
    %v6582 = vpack.c.b16 %v6514, %v6510
    %v6583 = vpack.c.b16 %v6515, %v6511
    %v6584 = vpack.c.b16 %v6516, %v6512
    %v6585 = vpack.c.b16 %v6521, %v6517
    %v6586 = vpack.c.b16 %v6522, %v6518
    %v6587 = vpack.c.b16 %v6523, %v6519
    %v6588 = vpack.c.b16 %v6524, %v6520
    %6653 = vmatprep.subr.bf16.mxu0 %v6526
    %6654 = vmatpush1.bf16.msra.mxu0 %v6525
    %6655 = vmatprep.subr.bf16.mxu0 %v6530
    %6656 = vmatpush1.bf16.msra.mxu0 %v6529
    %6657 = vmatprep.subr.bf16.mxu0 %v6534
    %6658 = vmatpush1.bf16.msra.mxu0 %v6533
    %6659 = vmatprep.subr.bf16.mxu0 %v6538
    %6660 = vmatpush1.bf16.msra.mxu0 %v6537
    %6661 = vmatprep.subr.bf16.mxu0 %v6542
    %6662 = vmatpush1.bf16.msra.mxu0 %v6541
    %6663 = vmatprep.subr.bf16.mxu0 %v6546
    %6664 = vmatpush1.bf16.msra.mxu0 %v6545
    %6665 = vmatprep.subr.bf16.mxu0 %v6550
    %6666 = vmatpush1.bf16.msra.mxu0 %v6549
    %6667 = vmatprep.subr.bf16.mxu0 %v6554
    %6668 = vmatpush1.bf16.msra.mxu0 %v6553
    %6669 = vmatprep.subr.bf16.mxu0 %v6558
    %6670 = vmatpush1.bf16.msra.mxu0 %v6557
    %6671 = vmatprep.subr.bf16.mxu0 %v6562
    %6672 = vmatpush1.bf16.msra.mxu0 %v6561
    %6673 = vmatprep.subr.bf16.mxu0 %v6566
    %6674 = vmatpush1.bf16.msra.mxu0 %v6565
    %6675 = vmatprep.subr.bf16.mxu0 %v6570
    %6676 = vmatpush1.bf16.msra.mxu0 %v6569
    %6677 = vmatprep.subr.bf16.mxu0 %v6574
    %6678 = vmatpush1.bf16.msra.mxu0 %v6573
    %6679 = vmatprep.subr.bf16.mxu0 %v6578
    %6680 = vmatpush1.bf16.msra.mxu0 %v6577
    %6681 = vmatprep.subr.bf16.mxu0 %v6582
    %6682 = vmatpush1.bf16.msra.mxu0 %v6581
    %6683 = vmatprep.subr.bf16.mxu0 %v6586
    %6684 = vmatpush1.bf16.msra.mxu0 %v6585
    %6685 = vmatprep.mubr.bf16.mxu0 %v6268
    %6686 = vmatmul.mubr.bf16.gmra.mrb[0].mxu0 %v6267
    %v6687 = vpop.f32.mrb[0].mxu0
    %v6688 = vadd.f32 %v1116, %v6687
    %v6689 = vpop.f32.mrb[0].mxu0
    %v6690 = vadd.f32 %v1120, %v6689
    %v6691 = vpop.f32.mrb[0].mxu0
    %v6692 = vpop.f32.mrb[0].mxu0
    %6693 = vdwg.mxu0
    %6694 = vmatprep.subr.bf16.mxu0 %v6528
    %6695 = vmatpush1.bf16.msra.mxu0 %v6527
    %6696 = vmatprep.subr.bf16.mxu0 %v6532
    %6697 = vmatpush1.bf16.msra.mxu0 %v6531
    %6698 = vmatprep.subr.bf16.mxu0 %v6536
    %6699 = vmatpush1.bf16.msra.mxu0 %v6535
    %6700 = vmatprep.subr.bf16.mxu0 %v6540
    %6701 = vmatpush1.bf16.msra.mxu0 %v6539
    %6702 = vmatprep.subr.bf16.mxu0 %v6544
    %6703 = vmatpush1.bf16.msra.mxu0 %v6543
    %6704 = vmatprep.subr.bf16.mxu0 %v6548
    %6705 = vmatpush1.bf16.msra.mxu0 %v6547
    %6706 = vmatprep.subr.bf16.mxu0 %v6552
    %6707 = vmatpush1.bf16.msra.mxu0 %v6551
    %6708 = vmatprep.subr.bf16.mxu0 %v6556
    %6709 = vmatpush1.bf16.msra.mxu0 %v6555
    %6710 = vmatprep.subr.bf16.mxu0 %v6560
    %6711 = vmatpush1.bf16.msra.mxu0 %v6559
    %6712 = vmatprep.subr.bf16.mxu0 %v6564
    %6713 = vmatpush1.bf16.msra.mxu0 %v6563
    %6714 = vmatprep.subr.bf16.mxu0 %v6568
    %6715 = vmatpush1.bf16.msra.mxu0 %v6567
    %6716 = vmatprep.subr.bf16.mxu0 %v6572
    %6717 = vmatpush1.bf16.msra.mxu0 %v6571
    %6718 = vmatprep.subr.bf16.mxu0 %v6576
    %6719 = vmatpush1.bf16.msra.mxu0 %v6575
    %6720 = vmatprep.subr.bf16.mxu0 %v6580
    %6721 = vmatpush1.bf16.msra.mxu0 %v6579
    %6722 = vmatprep.subr.bf16.mxu0 %v6584
    %6723 = vmatpush1.bf16.msra.mxu0 %v6583
    %6724 = vmatprep.subr.bf16.mxu0 %v6588
    %6725 = vmatpush1.bf16.msra.mxu0 %v6587
    %6726 = vmatprep.mubr.bf16.mxu0 %v6268
    %6727 = vmatmul.mubr.bf16.gmra.mrb[0].mxu0 %v6267
    %v6728 = vpop.f32.mrb[0].mxu0
    %v6729 = vadd.f32 %v1124, %v6728
    %v6730 = vpop.f32.mrb[0].mxu0
    %v6731 = vadd.f32 %v1128, %v6730
    %v6732 = vpop.f32.mrb[0].mxu0
    %v6733 = vpop.f32.mrb[0].mxu0
    %6734 = vdwg.mxu0
    %v6735 = vsub.f32 0.0, %v6688
    %v6736 = vmul.f32 %v6735, 1.442695
    %v6737 = vpow.pop %v6736
    %v6738 = vadd.f32 %v6737, 1.0
    %v6739 = vrcp.pop %v6738
    %v6740 = vsub.f32 0.0, %v6690
    %v6741 = vmul.f32 %v6740, 1.442695
    %v6742 = vpow.pop %v6741
    %v6743 = vadd.f32 %v6742, 1.0
    %v6744 = vrcp.pop %v6743
    %v6745 = vtanh.pop %v6729
    %v6746 = vsub.f32 0.0, %v6731
    %v6747 = vmul.f32 %v6746, 1.442695
    %v6748 = vpow.pop %v6747
    %v6749 = vadd.f32 %v6748, 1.0
    %v6750 = vrcp.pop %v6749
    %v6751 = vmul.f32 %v6744, %v5953
    %v6752 = vmul.f32 %v6739, %v6745
    %v6753 = vadd.f32 %v6751, %v6752
    %v6754 = vtanh.pop %v6753
    %v6755 = vmul.f32 %v6750, %v6754
    %v6756 = vsel %vm6264, %v6755, %v5952
    %v6757 = vsel %vm6264, %v6753, %v5953
    %v6758 = vsel %vm6264, %v6755, 0.0
    %6759 = vst [vmem:[#allocation12 + $0x30] sm:$0xff] %v6758
    %vm6760 = vcmp.gt.s32.totalorder %v108, 7
    %v6761 = vld [vmem:[#allocation2 + $0xe0] sm:$0xff]
    %v6762 = vld [vmem:[#allocation2 + $0xe8] sm:$0xff]
    %v6763 = vld [vmem:[#allocation2 + $0xf0] sm:$0xff]
    %v6764 = vld [vmem:[#allocation2 + $0xf8] sm:$0xff]
    %v6765 = vld [vmem:[#allocation8] sm:$0xff]
    %v6766 = vld [vmem:[#allocation8 + $0x8] sm:$0xff]
    %v6767 = vld [vmem:[#allocation8 + $0x10] sm:$0xff]
    %v6768 = vld [vmem:[#allocation8 + $0x18] sm:$0xff]
    %v6769 = vld [vmem:[#allocation8 + $0x20] sm:$0xff]
    %v6770 = vld [vmem:[#allocation8 + $0x28] sm:$0xff]
    %v6771 = vld [vmem:[#allocation8 + $0x30] sm:$0xff]
    %v6772 = vld [vmem:[#allocation8 + $0x38] sm:$0xff]
    %v6773 = vld [vmem:[#allocation8 + $0x40] sm:$0xff]
    %v6774 = vld [vmem:[#allocation8 + $0x48] sm:$0xff]
    %v6775 = vld [vmem:[#allocation8 + $0x50] sm:$0xff]
    %v6776 = vld [vmem:[#allocation8 + $0x58] sm:$0xff]
    %v6777 = vld [vmem:[#allocation8 + $0x60] sm:$0xff]
    %v6778 = vld [vmem:[#allocation8 + $0x68] sm:$0xff]
    %v6779 = vld [vmem:[#allocation8 + $0x70] sm:$0xff]
    %v6780 = vld [vmem:[#allocation8 + $0x78] sm:$0xff]
    %v6781 = vld [vmem:[#allocation8 + $0x80] sm:$0xff]
    %v6782 = vld [vmem:[#allocation8 + $0x88] sm:$0xff]
    %v6783 = vld [vmem:[#allocation8 + $0x90] sm:$0xff]
    %v6784 = vld [vmem:[#allocation8 + $0x98] sm:$0xff]
    %v6785 = vld [vmem:[#allocation8 + $0xa0] sm:$0xff]
    %v6786 = vld [vmem:[#allocation8 + $0xa8] sm:$0xff]
    %v6787 = vld [vmem:[#allocation8 + $0xb0] sm:$0xff]
    %v6788 = vld [vmem:[#allocation8 + $0xb8] sm:$0xff]
    %v6789 = vld [vmem:[#allocation8 + $0xc0] sm:$0xff]
    %v6790 = vld [vmem:[#allocation8 + $0xc8] sm:$0xff]
    %v6791 = vld [vmem:[#allocation8 + $0xd0] sm:$0xff]
    %v6792 = vld [vmem:[#allocation8 + $0xd8] sm:$0xff]
    %v6793 = vld [vmem:[#allocation8 + $0xe0] sm:$0xff]
    %v6794 = vld [vmem:[#allocation8 + $0xe8] sm:$0xff]
    %v6795 = vld [vmem:[#allocation8 + $0xf0] sm:$0xff]
    %v6796 = vld [vmem:[#allocation8 + $0xf8] sm:$0xff]
    %v6829 = vunpack.c.l.b16 %v6765
    %v6830 = vunpack.c.h.b16 %v6765
    %v6831 = vunpack.c.l.b16 %v6766
    %v6832 = vunpack.c.h.b16 %v6766
    %v6833 = vunpack.c.l.b16 %v6767
    %v6834 = vunpack.c.h.b16 %v6767
    %v6835 = vunpack.c.l.b16 %v6768
    %v6836 = vunpack.c.h.b16 %v6768
    %v6837 = vunpack.c.l.b16 %v6769
    %v6838 = vunpack.c.h.b16 %v6769
    %v6839 = vunpack.c.l.b16 %v6770
    %v6840 = vunpack.c.h.b16 %v6770
    %v6841 = vunpack.c.l.b16 %v6771
    %v6842 = vunpack.c.h.b16 %v6771
    %v6843 = vunpack.c.l.b16 %v6772
    %v6844 = vunpack.c.h.b16 %v6772
    %v6845 = vunpack.c.l.b16 %v6773
    %v6846 = vunpack.c.h.b16 %v6773
    %v6847 = vunpack.c.l.b16 %v6774
    %v6848 = vunpack.c.h.b16 %v6774
    %v6849 = vunpack.c.l.b16 %v6775
    %v6850 = vunpack.c.h.b16 %v6775
    %v6851 = vunpack.c.l.b16 %v6776
    %v6852 = vunpack.c.h.b16 %v6776
    %v6853 = vunpack.c.l.b16 %v6777
    %v6854 = vunpack.c.h.b16 %v6777
    %v6855 = vunpack.c.l.b16 %v6778
    %v6856 = vunpack.c.h.b16 %v6778
    %v6857 = vunpack.c.l.b16 %v6779
    %v6858 = vunpack.c.h.b16 %v6779
    %v6859 = vunpack.c.l.b16 %v6780
    %v6860 = vunpack.c.h.b16 %v6780
    %v6861 = vunpack.c.l.b16 %v6781
    %v6862 = vunpack.c.h.b16 %v6781
    %v6863 = vunpack.c.l.b16 %v6782
    %v6864 = vunpack.c.h.b16 %v6782
    %v6865 = vunpack.c.l.b16 %v6783
    %v6866 = vunpack.c.h.b16 %v6783
    %v6867 = vunpack.c.l.b16 %v6784
    %v6868 = vunpack.c.h.b16 %v6784
    %v6869 = vunpack.c.l.b16 %v6785
    %v6870 = vunpack.c.h.b16 %v6785
    %v6871 = vunpack.c.l.b16 %v6786
    %v6872 = vunpack.c.h.b16 %v6786
    %v6873 = vunpack.c.l.b16 %v6787
    %v6874 = vunpack.c.h.b16 %v6787
    %v6875 = vunpack.c.l.b16 %v6788
    %v6876 = vunpack.c.h.b16 %v6788
    %v6877 = vunpack.c.l.b16 %v6789
    %v6878 = vunpack.c.h.b16 %v6789
    %v6879 = vunpack.c.l.b16 %v6790
    %v6880 = vunpack.c.h.b16 %v6790
    %v6881 = vunpack.c.l.b16 %v6791
    %v6882 = vunpack.c.h.b16 %v6791
    %v6883 = vunpack.c.l.b16 %v6792
    %v6884 = vunpack.c.h.b16 %v6792
    %v6885 = vunpack.c.l.b16 %v6793
    %v6886 = vunpack.c.h.b16 %v6793
    %v6887 = vunpack.c.l.b16 %v6794
    %v6888 = vunpack.c.h.b16 %v6794
    %v6889 = vunpack.c.l.b16 %v6795
    %v6890 = vunpack.c.h.b16 %v6795
    %v6891 = vunpack.c.l.b16 %v6796
    %v6892 = vunpack.c.h.b16 %v6796
    %v6893 = vpack.c.b16 %v6833, %v6829
    %v6894 = vpack.c.b16 %v6834, %v6830
    %v6895 = vpack.c.b16 %v6835, %v6831
    %v6896 = vpack.c.b16 %v6836, %v6832
    %v6897 = vpack.c.b16 %v6841, %v6837
    %v6898 = vpack.c.b16 %v6842, %v6838
    %v6899 = vpack.c.b16 %v6843, %v6839
    %v6900 = vpack.c.b16 %v6844, %v6840
    %v6901 = vpack.c.b16 %v6849, %v6845
    %v6902 = vpack.c.b16 %v6850, %v6846
    %v6903 = vpack.c.b16 %v6851, %v6847
    %v6904 = vpack.c.b16 %v6852, %v6848
    %v6905 = vpack.c.b16 %v6857, %v6853
    %v6906 = vpack.c.b16 %v6858, %v6854
    %v6907 = vpack.c.b16 %v6859, %v6855
    %v6908 = vpack.c.b16 %v6860, %v6856
    %v6909 = vpack.c.b16 %v6865, %v6861
    %v6910 = vpack.c.b16 %v6866, %v6862
    %v6911 = vpack.c.b16 %v6867, %v6863
    %v6912 = vpack.c.b16 %v6868, %v6864
    %v6913 = vpack.c.b16 %v6873, %v6869
    %v6914 = vpack.c.b16 %v6874, %v6870
    %v6915 = vpack.c.b16 %v6875, %v6871
    %v6916 = vpack.c.b16 %v6876, %v6872
    %v6917 = vpack.c.b16 %v6881, %v6877
    %v6918 = vpack.c.b16 %v6882, %v6878
    %v6919 = vpack.c.b16 %v6883, %v6879
    %v6920 = vpack.c.b16 %v6884, %v6880
    %v6921 = vpack.c.b16 %v6889, %v6885
    %v6922 = vpack.c.b16 %v6890, %v6886
    %v6923 = vpack.c.b16 %v6891, %v6887
    %v6924 = vpack.c.b16 %v6892, %v6888
    %6957 = vmatprep.subr.bf16.mxu0 %v6894
    %6958 = vmatpush1.bf16.msra.mxu0 %v6893
    %6959 = vmatprep.subr.bf16.mxu0 %v6898
    %6960 = vmatpush1.bf16.msra.mxu0 %v6897
    %6961 = vmatprep.subr.bf16.mxu0 %v6902
    %6962 = vmatpush1.bf16.msra.mxu0 %v6901
    %6963 = vmatprep.subr.bf16.mxu0 %v6906
    %6964 = vmatpush1.bf16.msra.mxu0 %v6905
    %6965 = vmatprep.subr.bf16.mxu0 %v6910
    %6966 = vmatpush1.bf16.msra.mxu0 %v6909
    %6967 = vmatprep.subr.bf16.mxu0 %v6914
    %6968 = vmatpush1.bf16.msra.mxu0 %v6913
    %6969 = vmatprep.subr.bf16.mxu0 %v6918
    %6970 = vmatpush1.bf16.msra.mxu0 %v6917
    %6971 = vmatprep.subr.bf16.mxu0 %v6922
    %6972 = vmatpush1.bf16.msra.mxu0 %v6921
    %6973 = vmatprep.subr.bf16.mxu0 0
    %6974 = vmatpush1.bf16.msra.mxu0 0
    %6975 = vmatprep.subr.bf16.mxu0 0
    %6976 = vmatpush1.bf16.msra.mxu0 0
    %6977 = vmatprep.subr.bf16.mxu0 0
    %6978 = vmatpush1.bf16.msra.mxu0 0
    %6979 = vmatprep.subr.bf16.mxu0 0
    %6980 = vmatpush1.bf16.msra.mxu0 0
    %6981 = vmatprep.subr.bf16.mxu0 0
    %6982 = vmatpush1.bf16.msra.mxu0 0
    %6983 = vmatprep.subr.bf16.mxu0 0
    %6984 = vmatpush1.bf16.msra.mxu0 0
    %6985 = vmatprep.subr.bf16.mxu0 0
    %6986 = vmatpush1.bf16.msra.mxu0 0
    %6987 = vmatprep.subr.bf16.mxu0 0
    %6988 = vmatpush1.bf16.msra.mxu0 0
    %6989 = vmatprep.mubr.bf16.mxu0 0
    %6990 = vmatmul.mubr.bf16.gmra.mrb[0].mxu0 %v6267
    %v6991 = vpop.f32.mrb[0].mxu0
    %v6992 = vadd.f32 0.0, %v6991
    %v6993 = vpop.f32.mrb[0].mxu0
    %v6994 = vadd.f32 0.0, %v6993
    %v6995 = vpop.f32.mrb[0].mxu0
    %v6996 = vpop.f32.mrb[0].mxu0
    %6997 = vdwg.mxu0
    %6998 = vmatprep.subr.bf16.mxu0 %v6896
    %6999 = vmatpush1.bf16.msra.mxu0 %v6895
    %7000 = vmatprep.subr.bf16.mxu0 %v6900
    %7001 = vmatpush1.bf16.msra.mxu0 %v6899
    %7002 = vmatprep.subr.bf16.mxu0 %v6904
    %7003 = vmatpush1.bf16.msra.mxu0 %v6903
    %7004 = vmatprep.subr.bf16.mxu0 %v6908
    %7005 = vmatpush1.bf16.msra.mxu0 %v6907
    %7006 = vmatprep.subr.bf16.mxu0 %v6912
    %7007 = vmatpush1.bf16.msra.mxu0 %v6911
    %7008 = vmatprep.subr.bf16.mxu0 %v6916
    %7009 = vmatpush1.bf16.msra.mxu0 %v6915
    %7010 = vmatprep.subr.bf16.mxu0 %v6920
    %7011 = vmatpush1.bf16.msra.mxu0 %v6919
    %7012 = vmatprep.subr.bf16.mxu0 %v6924
    %7013 = vmatpush1.bf16.msra.mxu0 %v6923
    %7014 = vmatprep.subr.bf16.mxu0 0
    %7015 = vmatpush1.bf16.msra.mxu0 0
    %7016 = vmatprep.subr.bf16.mxu0 0
    %7017 = vmatpush1.bf16.msra.mxu0 0
    %7018 = vmatprep.subr.bf16.mxu0 0
    %7019 = vmatpush1.bf16.msra.mxu0 0
    %7020 = vmatprep.subr.bf16.mxu0 0
    %7021 = vmatpush1.bf16.msra.mxu0 0
    %7022 = vmatprep.subr.bf16.mxu0 0
    %7023 = vmatpush1.bf16.msra.mxu0 0
    %7024 = vmatprep.subr.bf16.mxu0 0
    %7025 = vmatpush1.bf16.msra.mxu0 0
    %7026 = vmatprep.subr.bf16.mxu0 0
    %7027 = vmatpush1.bf16.msra.mxu0 0
    %7028 = vmatprep.subr.bf16.mxu0 0
    %7029 = vmatpush1.bf16.msra.mxu0 0
    %7030 = vmatprep.mubr.bf16.mxu0 0
    %7031 = vmatmul.mubr.bf16.gmra.mrb[0].mxu0 %v6267
    %v7032 = vpop.f32.mrb[0].mxu0
    %v7033 = vadd.f32 0.0, %v7032
    %v7034 = vpop.f32.mrb[0].mxu0
    %v7035 = vadd.f32 0.0, %v7034
    %v7036 = vpop.f32.mrb[0].mxu0
    %v7037 = vpop.f32.mrb[0].mxu0
    %7038 = vdwg.mxu0
    %v7039 = vadd.f32 %v6761, %v6992
    %v7040 = vadd.f32 %v6762, %v6994
    %v7041 = vadd.f32 %v6763, %v7033
    %v7042 = vadd.f32 %v6764, %v7035
    %v7043 = vsub.f32 0.0, %v7039
    %v7044 = vmul.f32 %v7043, 1.442695
    %v7045 = vpow.pop %v7044
    %v7046 = vadd.f32 %v7045, 1.0
    %v7047 = vrcp.pop %v7046
    %v7048 = vsub.f32 0.0, %v7040
    %v7049 = vmul.f32 %v7048, 1.442695
    %v7050 = vpow.pop %v7049
    %v7051 = vadd.f32 %v7050, 1.0
    %v7052 = vrcp.pop %v7051
    %v7053 = vtanh.pop %v7041
    %v7054 = vsub.f32 0.0, %v7042
    %v7055 = vmul.f32 %v7054, 1.442695
    %v7056 = vpow.pop %v7055
    %v7057 = vadd.f32 %v7056, 1.0
    %v7058 = vrcp.pop %v7057
    %v7059 = vmul.f32 %v7052, %v6266
    %v7060 = vmul.f32 %v7047, %v7053
    %v7061 = vadd.f32 %v7059, %v7060
    %v7062 = vtanh.pop %v7061
    %v7063 = vmul.f32 %v7058, %v7062
    %v7064 = vsel %vm6760, 1, 0
    %7065 = vset.pattern.permute.xlu0 0
    %7066 = vperm.xlu0 %7065, %v7064
    %v7067 = vpop.permute.xlu0 %7066
    %vm7068 = vcmp.eq.s32.totalorder %v7067, 1
    %v7069 = vsel %vm7068, %v7063, %v6265
    %v7070 = vsel %vm7068, %v7061, %v6266
    %v7071 = vpack.c.bf16 %v7069, %v7069
    %v7072 = vpack.c.bf16 %v6756, %v6756
    %v7073 = vld [vmem:[#allocation9] sm:$0xff]
    %v7074 = vld [vmem:[#allocation9 + $0x8] sm:$0xff]
    %v7075 = vld [vmem:[#allocation9 + $0x10] sm:$0xff]
    %v7076 = vld [vmem:[#allocation9 + $0x18] sm:$0xff]
    %v7077 = vld [vmem:[#allocation9 + $0x20] sm:$0xff]
    %v7078 = vld [vmem:[#allocation9 + $0x28] sm:$0xff]
    %v7079 = vld [vmem:[#allocation9 + $0x30] sm:$0xff]
    %v7080 = vld [vmem:[#allocation9 + $0x38] sm:$0xff]
    %v7081 = vld [vmem:[#allocation9 + $0x40] sm:$0xff]
    %v7082 = vld [vmem:[#allocation9 + $0x48] sm:$0xff]
    %v7083 = vld [vmem:[#allocation9 + $0x50] sm:$0xff]
    %v7084 = vld [vmem:[#allocation9 + $0x58] sm:$0xff]
    %v7085 = vld [vmem:[#allocation9 + $0x60] sm:$0xff]
    %v7086 = vld [vmem:[#allocation9 + $0x68] sm:$0xff]
    %v7087 = vld [vmem:[#allocation9 + $0x70] sm:$0xff]
    %v7088 = vld [vmem:[#allocation9 + $0x78] sm:$0xff]
    %v7089 = vld [vmem:[#allocation9 + $0x80] sm:$0xff]
    %v7090 = vld [vmem:[#allocation9 + $0x88] sm:$0xff]
    %v7091 = vld [vmem:[#allocation9 + $0x90] sm:$0xff]
    %v7092 = vld [vmem:[#allocation9 + $0x98] sm:$0xff]
    %v7093 = vld [vmem:[#allocation9 + $0xa0] sm:$0xff]
    %v7094 = vld [vmem:[#allocation9 + $0xa8] sm:$0xff]
    %v7095 = vld [vmem:[#allocation9 + $0xb0] sm:$0xff]
    %v7096 = vld [vmem:[#allocation9 + $0xb8] sm:$0xff]
    %v7097 = vld [vmem:[#allocation9 + $0xc0] sm:$0xff]
    %v7098 = vld [vmem:[#allocation9 + $0xc8] sm:$0xff]
    %v7099 = vld [vmem:[#allocation9 + $0xd0] sm:$0xff]
    %v7100 = vld [vmem:[#allocation9 + $0xd8] sm:$0xff]
    %v7101 = vld [vmem:[#allocation9 + $0xe0] sm:$0xff]
    %v7102 = vld [vmem:[#allocation9 + $0xe8] sm:$0xff]
    %v7103 = vld [vmem:[#allocation9 + $0xf0] sm:$0xff]
    %v7104 = vld [vmem:[#allocation9 + $0xf8] sm:$0xff]
    %v7105 = vld [vmem:[#allocation9 + $0x100] sm:$0xff]
    %v7106 = vld [vmem:[#allocation9 + $0x108] sm:$0xff]
    %v7107 = vld [vmem:[#allocation9 + $0x110] sm:$0xff]
    %v7108 = vld [vmem:[#allocation9 + $0x118] sm:$0xff]
    %v7109 = vld [vmem:[#allocation9 + $0x120] sm:$0xff]
    %v7110 = vld [vmem:[#allocation9 + $0x128] sm:$0xff]
    %v7111 = vld [vmem:[#allocation9 + $0x130] sm:$0xff]
    %v7112 = vld [vmem:[#allocation9 + $0x138] sm:$0xff]
    %v7113 = vld [vmem:[#allocation9 + $0x140] sm:$0xff]
    %v7114 = vld [vmem:[#allocation9 + $0x148] sm:$0xff]
    %v7115 = vld [vmem:[#allocation9 + $0x150] sm:$0xff]
    %v7116 = vld [vmem:[#allocation9 + $0x158] sm:$0xff]
    %v7117 = vld [vmem:[#allocation9 + $0x160] sm:$0xff]
    %v7118 = vld [vmem:[#allocation9 + $0x168] sm:$0xff]
    %v7119 = vld [vmem:[#allocation9 + $0x170] sm:$0xff]
    %v7120 = vld [vmem:[#allocation9 + $0x178] sm:$0xff]
    %v7121 = vld [vmem:[#allocation9 + $0x180] sm:$0xff]
    %v7122 = vld [vmem:[#allocation9 + $0x188] sm:$0xff]
    %v7123 = vld [vmem:[#allocation9 + $0x190] sm:$0xff]
    %v7124 = vld [vmem:[#allocation9 + $0x198] sm:$0xff]
    %v7125 = vld [vmem:[#allocation9 + $0x1a0] sm:$0xff]
    %v7126 = vld [vmem:[#allocation9 + $0x1a8] sm:$0xff]
    %v7127 = vld [vmem:[#allocation9 + $0x1b0] sm:$0xff]
    %v7128 = vld [vmem:[#allocation9 + $0x1b8] sm:$0xff]
    %v7129 = vld [vmem:[#allocation9 + $0x1c0] sm:$0xff]
    %v7130 = vld [vmem:[#allocation9 + $0x1c8] sm:$0xff]
    %v7131 = vld [vmem:[#allocation9 + $0x1d0] sm:$0xff]
    %v7132 = vld [vmem:[#allocation9 + $0x1d8] sm:$0xff]
    %v7133 = vld [vmem:[#allocation9 + $0x1e0] sm:$0xff]
    %v7134 = vld [vmem:[#allocation9 + $0x1e8] sm:$0xff]
    %v7135 = vld [vmem:[#allocation9 + $0x1f0] sm:$0xff]
    %v7136 = vld [vmem:[#allocation9 + $0x1f8] sm:$0xff]
    %v7201 = vunpack.c.l.b16 %v7073
    %v7202 = vunpack.c.h.b16 %v7073
    %v7203 = vunpack.c.l.b16 %v7074
    %v7204 = vunpack.c.h.b16 %v7074
    %v7205 = vunpack.c.l.b16 %v7075
    %v7206 = vunpack.c.h.b16 %v7075
    %v7207 = vunpack.c.l.b16 %v7076
    %v7208 = vunpack.c.h.b16 %v7076
    %v7209 = vunpack.c.l.b16 %v7077
    %v7210 = vunpack.c.h.b16 %v7077
    %v7211 = vunpack.c.l.b16 %v7078
    %v7212 = vunpack.c.h.b16 %v7078
    %v7213 = vunpack.c.l.b16 %v7079
    %v7214 = vunpack.c.h.b16 %v7079
    %v7215 = vunpack.c.l.b16 %v7080
    %v7216 = vunpack.c.h.b16 %v7080
    %v7217 = vunpack.c.l.b16 %v7081
    %v7218 = vunpack.c.h.b16 %v7081
    %v7219 = vunpack.c.l.b16 %v7082
    %v7220 = vunpack.c.h.b16 %v7082
    %v7221 = vunpack.c.l.b16 %v7083
    %v7222 = vunpack.c.h.b16 %v7083
    %v7223 = vunpack.c.l.b16 %v7084
    %v7224 = vunpack.c.h.b16 %v7084
    %v7225 = vunpack.c.l.b16 %v7085
    %v7226 = vunpack.c.h.b16 %v7085
    %v7227 = vunpack.c.l.b16 %v7086
    %v7228 = vunpack.c.h.b16 %v7086
    %v7229 = vunpack.c.l.b16 %v7087
    %v7230 = vunpack.c.h.b16 %v7087
    %v7231 = vunpack.c.l.b16 %v7088
    %v7232 = vunpack.c.h.b16 %v7088
    %v7233 = vunpack.c.l.b16 %v7089
    %v7234 = vunpack.c.h.b16 %v7089
    %v7235 = vunpack.c.l.b16 %v7090
    %v7236 = vunpack.c.h.b16 %v7090
    %v7237 = vunpack.c.l.b16 %v7091
    %v7238 = vunpack.c.h.b16 %v7091
    %v7239 = vunpack.c.l.b16 %v7092
    %v7240 = vunpack.c.h.b16 %v7092
    %v7241 = vunpack.c.l.b16 %v7093
    %v7242 = vunpack.c.h.b16 %v7093
    %v7243 = vunpack.c.l.b16 %v7094
    %v7244 = vunpack.c.h.b16 %v7094
    %v7245 = vunpack.c.l.b16 %v7095
    %v7246 = vunpack.c.h.b16 %v7095
    %v7247 = vunpack.c.l.b16 %v7096
    %v7248 = vunpack.c.h.b16 %v7096
    %v7249 = vunpack.c.l.b16 %v7097
    %v7250 = vunpack.c.h.b16 %v7097
    %v7251 = vunpack.c.l.b16 %v7098
    %v7252 = vunpack.c.h.b16 %v7098
    %v7253 = vunpack.c.l.b16 %v7099
    %v7254 = vunpack.c.h.b16 %v7099
    %v7255 = vunpack.c.l.b16 %v7100
    %v7256 = vunpack.c.h.b16 %v7100
    %v7257 = vunpack.c.l.b16 %v7101
    %v7258 = vunpack.c.h.b16 %v7101
    %v7259 = vunpack.c.l.b16 %v7102
    %v7260 = vunpack.c.h.b16 %v7102
    %v7261 = vunpack.c.l.b16 %v7103
    %v7262 = vunpack.c.h.b16 %v7103
    %v7263 = vunpack.c.l.b16 %v7104
    %v7264 = vunpack.c.h.b16 %v7104
    %v7265 = vunpack.c.l.b16 %v7105
    %v7266 = vunpack.c.h.b16 %v7105
    %v7267 = vunpack.c.l.b16 %v7106
    %v7268 = vunpack.c.h.b16 %v7106
    %v7269 = vunpack.c.l.b16 %v7107
    %v7270 = vunpack.c.h.b16 %v7107
    %v7271 = vunpack.c.l.b16 %v7108
    %v7272 = vunpack.c.h.b16 %v7108
    %v7273 = vunpack.c.l.b16 %v7109
    %v7274 = vunpack.c.h.b16 %v7109
    %v7275 = vunpack.c.l.b16 %v7110
    %v7276 = vunpack.c.h.b16 %v7110
    %v7277 = vunpack.c.l.b16 %v7111
    %v7278 = vunpack.c.h.b16 %v7111
    %v7279 = vunpack.c.l.b16 %v7112
    %v7280 = vunpack.c.h.b16 %v7112
    %v7281 = vunpack.c.l.b16 %v7113
    %v7282 = vunpack.c.h.b16 %v7113
    %v7283 = vunpack.c.l.b16 %v7114
    %v7284 = vunpack.c.h.b16 %v7114
    %v7285 = vunpack.c.l.b16 %v7115
    %v7286 = vunpack.c.h.b16 %v7115
    %v7287 = vunpack.c.l.b16 %v7116
    %v7288 = vunpack.c.h.b16 %v7116
    %v7289 = vunpack.c.l.b16 %v7117
    %v7290 = vunpack.c.h.b16 %v7117
    %v7291 = vunpack.c.l.b16 %v7118
    %v7292 = vunpack.c.h.b16 %v7118
    %v7293 = vunpack.c.l.b16 %v7119
    %v7294 = vunpack.c.h.b16 %v7119
    %v7295 = vunpack.c.l.b16 %v7120
    %v7296 = vunpack.c.h.b16 %v7120
    %v7297 = vunpack.c.l.b16 %v7121
    %v7298 = vunpack.c.h.b16 %v7121
    %v7299 = vunpack.c.l.b16 %v7122
    %v7300 = vunpack.c.h.b16 %v7122
    %v7301 = vunpack.c.l.b16 %v7123
    %v7302 = vunpack.c.h.b16 %v7123
    %v7303 = vunpack.c.l.b16 %v7124
    %v7304 = vunpack.c.h.b16 %v7124
    %v7305 = vunpack.c.l.b16 %v7125
    %v7306 = vunpack.c.h.b16 %v7125
    %v7307 = vunpack.c.l.b16 %v7126
    %v7308 = vunpack.c.h.b16 %v7126
    %v7309 = vunpack.c.l.b16 %v7127
    %v7310 = vunpack.c.h.b16 %v7127
    %v7311 = vunpack.c.l.b16 %v7128
    %v7312 = vunpack.c.h.b16 %v7128
    %v7313 = vunpack.c.l.b16 %v7129
    %v7314 = vunpack.c.h.b16 %v7129
    %v7315 = vunpack.c.l.b16 %v7130
    %v7316 = vunpack.c.h.b16 %v7130
    %v7317 = vunpack.c.l.b16 %v7131
    %v7318 = vunpack.c.h.b16 %v7131
    %v7319 = vunpack.c.l.b16 %v7132
    %v7320 = vunpack.c.h.b16 %v7132
    %v7321 = vunpack.c.l.b16 %v7133
    %v7322 = vunpack.c.h.b16 %v7133
    %v7323 = vunpack.c.l.b16 %v7134
    %v7324 = vunpack.c.h.b16 %v7134
    %v7325 = vunpack.c.l.b16 %v7135
    %v7326 = vunpack.c.h.b16 %v7135
    %v7327 = vunpack.c.l.b16 %v7136
    %v7328 = vunpack.c.h.b16 %v7136
    %v7329 = vpack.c.b16 %v7205, %v7201
    %v7330 = vpack.c.b16 %v7206, %v7202
    %v7331 = vpack.c.b16 %v7207, %v7203
    %v7332 = vpack.c.b16 %v7208, %v7204
    %v7333 = vpack.c.b16 %v7213, %v7209
    %v7334 = vpack.c.b16 %v7214, %v7210
    %v7335 = vpack.c.b16 %v7215, %v7211
    %v7336 = vpack.c.b16 %v7216, %v7212
    %v7337 = vpack.c.b16 %v7221, %v7217
    %v7338 = vpack.c.b16 %v7222, %v7218
    %v7339 = vpack.c.b16 %v7223, %v7219
    %v7340 = vpack.c.b16 %v7224, %v7220
    %v7341 = vpack.c.b16 %v7229, %v7225
    %v7342 = vpack.c.b16 %v7230, %v7226
    %v7343 = vpack.c.b16 %v7231, %v7227
    %v7344 = vpack.c.b16 %v7232, %v7228
    %v7345 = vpack.c.b16 %v7237, %v7233
    %v7346 = vpack.c.b16 %v7238, %v7234
    %v7347 = vpack.c.b16 %v7239, %v7235
    %v7348 = vpack.c.b16 %v7240, %v7236
    %v7349 = vpack.c.b16 %v7245, %v7241
    %v7350 = vpack.c.b16 %v7246, %v7242
    %v7351 = vpack.c.b16 %v7247, %v7243
    %v7352 = vpack.c.b16 %v7248, %v7244
    %v7353 = vpack.c.b16 %v7253, %v7249
    %v7354 = vpack.c.b16 %v7254, %v7250
    %v7355 = vpack.c.b16 %v7255, %v7251
    %v7356 = vpack.c.b16 %v7256, %v7252
    %v7357 = vpack.c.b16 %v7261, %v7257
    %v7358 = vpack.c.b16 %v7262, %v7258
    %v7359 = vpack.c.b16 %v7263, %v7259
    %v7360 = vpack.c.b16 %v7264, %v7260
    %v7361 = vpack.c.b16 %v7269, %v7265
    %v7362 = vpack.c.b16 %v7270, %v7266
    %v7363 = vpack.c.b16 %v7271, %v7267
    %v7364 = vpack.c.b16 %v7272, %v7268
    %v7365 = vpack.c.b16 %v7277, %v7273
    %v7366 = vpack.c.b16 %v7278, %v7274
    %v7367 = vpack.c.b16 %v7279, %v7275
    %v7368 = vpack.c.b16 %v7280, %v7276
    %v7369 = vpack.c.b16 %v7285, %v7281
    %v7370 = vpack.c.b16 %v7286, %v7282
    %v7371 = vpack.c.b16 %v7287, %v7283
    %v7372 = vpack.c.b16 %v7288, %v7284
    %v7373 = vpack.c.b16 %v7293, %v7289
    %v7374 = vpack.c.b16 %v7294, %v7290
    %v7375 = vpack.c.b16 %v7295, %v7291
    %v7376 = vpack.c.b16 %v7296, %v7292
    %v7377 = vpack.c.b16 %v7301, %v7297
    %v7378 = vpack.c.b16 %v7302, %v7298
    %v7379 = vpack.c.b16 %v7303, %v7299
    %v7380 = vpack.c.b16 %v7304, %v7300
    %v7381 = vpack.c.b16 %v7309, %v7305
    %v7382 = vpack.c.b16 %v7310, %v7306
    %v7383 = vpack.c.b16 %v7311, %v7307
    %v7384 = vpack.c.b16 %v7312, %v7308
    %v7385 = vpack.c.b16 %v7317, %v7313
    %v7386 = vpack.c.b16 %v7318, %v7314
    %v7387 = vpack.c.b16 %v7319, %v7315
    %v7388 = vpack.c.b16 %v7320, %v7316
    %v7389 = vpack.c.b16 %v7325, %v7321
    %v7390 = vpack.c.b16 %v7326, %v7322
    %v7391 = vpack.c.b16 %v7327, %v7323
    %v7392 = vpack.c.b16 %v7328, %v7324
    %7457 = vmatprep.subr.bf16.mxu0 %v7330
    %7458 = vmatpush1.bf16.msra.mxu0 %v7329
    %7459 = vmatprep.subr.bf16.mxu0 %v7334
    %7460 = vmatpush1.bf16.msra.mxu0 %v7333
    %7461 = vmatprep.subr.bf16.mxu0 %v7338
    %7462 = vmatpush1.bf16.msra.mxu0 %v7337
    %7463 = vmatprep.subr.bf16.mxu0 %v7342
    %7464 = vmatpush1.bf16.msra.mxu0 %v7341
    %7465 = vmatprep.subr.bf16.mxu0 %v7346
    %7466 = vmatpush1.bf16.msra.mxu0 %v7345
    %7467 = vmatprep.subr.bf16.mxu0 %v7350
    %7468 = vmatpush1.bf16.msra.mxu0 %v7349
    %7469 = vmatprep.subr.bf16.mxu0 %v7354
    %7470 = vmatpush1.bf16.msra.mxu0 %v7353
    %7471 = vmatprep.subr.bf16.mxu0 %v7358
    %7472 = vmatpush1.bf16.msra.mxu0 %v7357
    %7473 = vmatprep.subr.bf16.mxu0 %v7362
    %7474 = vmatpush1.bf16.msra.mxu0 %v7361
    %7475 = vmatprep.subr.bf16.mxu0 %v7366
    %7476 = vmatpush1.bf16.msra.mxu0 %v7365
    %7477 = vmatprep.subr.bf16.mxu0 %v7370
    %7478 = vmatpush1.bf16.msra.mxu0 %v7369
    %7479 = vmatprep.subr.bf16.mxu0 %v7374
    %7480 = vmatpush1.bf16.msra.mxu0 %v7373
    %7481 = vmatprep.subr.bf16.mxu0 %v7378
    %7482 = vmatpush1.bf16.msra.mxu0 %v7377
    %7483 = vmatprep.subr.bf16.mxu0 %v7382
    %7484 = vmatpush1.bf16.msra.mxu0 %v7381
    %7485 = vmatprep.subr.bf16.mxu0 %v7386
    %7486 = vmatpush1.bf16.msra.mxu0 %v7385
    %7487 = vmatprep.subr.bf16.mxu0 %v7390
    %7488 = vmatpush1.bf16.msra.mxu0 %v7389
    %7489 = vmatprep.mubr.bf16.mxu0 %v7072
    %7490 = vmatmul.mubr.bf16.gmra.mrb[0].mxu0 %v7071
    %v7491 = vpop.f32.mrb[0].mxu0
    %v7492 = vadd.f32 %v1116, %v7491
    %v7493 = vpop.f32.mrb[0].mxu0
    %v7494 = vadd.f32 %v1120, %v7493
    %v7495 = vpop.f32.mrb[0].mxu0
    %v7496 = vpop.f32.mrb[0].mxu0
    %7497 = vdwg.mxu0
    %7498 = vmatprep.subr.bf16.mxu0 %v7332
    %7499 = vmatpush1.bf16.msra.mxu0 %v7331
    %7500 = vmatprep.subr.bf16.mxu0 %v7336
    %7501 = vmatpush1.bf16.msra.mxu0 %v7335
    %7502 = vmatprep.subr.bf16.mxu0 %v7340
    %7503 = vmatpush1.bf16.msra.mxu0 %v7339
    %7504 = vmatprep.subr.bf16.mxu0 %v7344
    %7505 = vmatpush1.bf16.msra.mxu0 %v7343
    %7506 = vmatprep.subr.bf16.mxu0 %v7348
    %7507 = vmatpush1.bf16.msra.mxu0 %v7347
    %7508 = vmatprep.subr.bf16.mxu0 %v7352
    %7509 = vmatpush1.bf16.msra.mxu0 %v7351
    %7510 = vmatprep.subr.bf16.mxu0 %v7356
    %7511 = vmatpush1.bf16.msra.mxu0 %v7355
    %7512 = vmatprep.subr.bf16.mxu0 %v7360
    %7513 = vmatpush1.bf16.msra.mxu0 %v7359
    %7514 = vmatprep.subr.bf16.mxu0 %v7364
    %7515 = vmatpush1.bf16.msra.mxu0 %v7363
    %7516 = vmatprep.subr.bf16.mxu0 %v7368
    %7517 = vmatpush1.bf16.msra.mxu0 %v7367
    %7518 = vmatprep.subr.bf16.mxu0 %v7372
    %7519 = vmatpush1.bf16.msra.mxu0 %v7371
    %7520 = vmatprep.subr.bf16.mxu0 %v7376
    %7521 = vmatpush1.bf16.msra.mxu0 %v7375
    %7522 = vmatprep.subr.bf16.mxu0 %v7380
    %7523 = vmatpush1.bf16.msra.mxu0 %v7379
    %7524 = vmatprep.subr.bf16.mxu0 %v7384
    %7525 = vmatpush1.bf16.msra.mxu0 %v7383
    %7526 = vmatprep.subr.bf16.mxu0 %v7388
    %7527 = vmatpush1.bf16.msra.mxu0 %v7387
    %7528 = vmatprep.subr.bf16.mxu0 %v7392
    %7529 = vmatpush1.bf16.msra.mxu0 %v7391
    %7530 = vmatprep.mubr.bf16.mxu0 %v7072
    %7531 = vmatmul.mubr.bf16.gmra.mrb[0].mxu0 %v7071
    %v7532 = vpop.f32.mrb[0].mxu0
    %v7533 = vadd.f32 %v1124, %v7532
    %v7534 = vpop.f32.mrb[0].mxu0
    %v7535 = vadd.f32 %v1128, %v7534
    %v7536 = vpop.f32.mrb[0].mxu0
    %v7537 = vpop.f32.mrb[0].mxu0
    %7538 = vdwg.mxu0
    %v7539 = vsub.f32 0.0, %v7492
    %v7540 = vmul.f32 %v7539, 1.442695
    %v7541 = vpow.pop %v7540
    %v7542 = vadd.f32 %v7541, 1.0
    %v7543 = vrcp.pop %v7542
    %v7544 = vsub.f32 0.0, %v7494
    %v7545 = vmul.f32 %v7544, 1.442695
    %v7546 = vpow.pop %v7545
    %v7547 = vadd.f32 %v7546, 1.0
    %v7548 = vrcp.pop %v7547
    %v7549 = vtanh.pop %v7533
    %v7550 = vsub.f32 0.0, %v7535
    %v7551 = vmul.f32 %v7550, 1.442695
    %v7552 = vpow.pop %v7551
    %v7553 = vadd.f32 %v7552, 1.0
    %v7554 = vrcp.pop %v7553
    %v7555 = vmul.f32 %v7548, %v6757
    %v7556 = vmul.f32 %v7543, %v7549
    %v7557 = vadd.f32 %v7555, %v7556
    %v7558 = vtanh.pop %v7557
    %v7559 = vmul.f32 %v7554, %v7558
    %v7560 = vsel %vm7068, %v7559, %v6756
    %v7561 = vsel %vm7068, %v7557, %v6757
    %v7562 = vsel %vm7068, %v7559, 0.0
    %7563 = vst [vmem:[#allocation12 + $0x38] sm:$0xff] %v7562
    %7564 = vst [vmem:[#allocation15] sm:$0xff] %v7069
    %7565 = vst [vmem:[#allocation16] sm:$0xff] %v7070
    %s7566 = scalar_lea.vmem [#allocation15], 8
    %7567 = vst [vmem:[%s7566] sm:$0xff] %v7560
    %s7568 = scalar_lea.vmem [#allocation16], 8
    %7569 = vst [vmem:[%s7568] sm:$0xff] %v7561
    %v7570 = vld [vmem:[#allocation12] sm:$0xff]
    %v7571 = vld [vmem:[#allocation12 + $0x8] sm:$0xff]
    %v7572 = vld [vmem:[#allocation12 + $0x10] sm:$0xff]
    %v7573 = vld [vmem:[#allocation12 + $0x18] sm:$0xff]
    %v7574 = vld [vmem:[#allocation12 + $0x20] sm:$0xff]
    %v7575 = vld [vmem:[#allocation12 + $0x28] sm:$0xff]
    %v7576 = vld [vmem:[#allocation12 + $0x30] sm:$0xff]
    %v7577 = vld [vmem:[#allocation12 + $0x38] sm:$0xff]
    %v7578 = vpack.c.bf16 %v7571, %v7570
    %v7579 = vpack.c.bf16 %v7573, %v7572
    %v7580 = vpack.c.bf16 %v7575, %v7574
    %v7581 = vpack.c.bf16 %v7577, %v7576
    %v7582 = vld [vmem:[#allocation11] sm:$0xf]
    %v7583 = vld [vmem:[#allocation11 + $0x4] sm:$0xf]
    %v7584 = vld [vmem:[#allocation11 + $0x8] sm:$0xf]
    %v7585 = vld [vmem:[#allocation11 + $0xc] sm:$0xf]
    %v7586 = vld [vmem:[#allocation11 + $0x10] sm:$0xf]
    %v7587 = vld [vmem:[#allocation11 + $0x14] sm:$0xf]
    %v7588 = vld [vmem:[#allocation11 + $0x18] sm:$0xf]
    %v7589 = vld [vmem:[#allocation11 + $0x1c] sm:$0xf]
    %v7590 = vld [vmem:[#allocation11 + $0x20] sm:$0xf]
    %v7591 = vld [vmem:[#allocation11 + $0x24] sm:$0xf]
    %v7592 = vld [vmem:[#allocation11 + $0x28] sm:$0xf]
    %v7593 = vld [vmem:[#allocation11 + $0x2c] sm:$0xf]
    %v7594 = vld [vmem:[#allocation11 + $0x30] sm:$0xf]
    %v7595 = vld [vmem:[#allocation11 + $0x34] sm:$0xf]
    %v7596 = vld [vmem:[#allocation11 + $0x38] sm:$0xf]
    %v7597 = vld [vmem:[#allocation11 + $0x3c] sm:$0xf]
    %v7598 = vld [vmem:[%s8] sm:$0x1]
    %v7600 = vlaneseq
    %v7601 = vshrl.u32 %v7600, 7
    %v7602 = vsub.s32 0, %v7601
    %v7603 = vrot.slane %v7598, %v7602
    %v7621 = vunpack.c.l.b16 %v7582
    %v7622 = vunpack.c.l.b16 %v7583
    %v7623 = vunpack.c.l.b16 %v7584
    %v7624 = vunpack.c.l.b16 %v7585
    %v7625 = vunpack.c.l.b16 %v7586
    %v7626 = vunpack.c.l.b16 %v7587
    %v7627 = vunpack.c.l.b16 %v7588
    %v7628 = vunpack.c.l.b16 %v7589
    %v7629 = vunpack.c.l.b16 %v7590
    %v7630 = vunpack.c.l.b16 %v7591
    %v7631 = vunpack.c.l.b16 %v7592
    %v7632 = vunpack.c.l.b16 %v7593
    %v7633 = vunpack.c.l.b16 %v7594
    %v7634 = vunpack.c.l.b16 %v7595
    %v7635 = vunpack.c.l.b16 %v7596
    %v7636 = vunpack.c.l.b16 %v7597
    %v7637 = vpack.c.b16 %v7622, %v7621
    %v7638 = vpack.c.b16 %v7624, %v7623
    %v7639 = vpack.c.b16 %v7626, %v7625
    %v7640 = vpack.c.b16 %v7628, %v7627
    %v7641 = vpack.c.b16 %v7630, %v7629
    %v7642 = vpack.c.b16 %v7632, %v7631
    %v7643 = vpack.c.b16 %v7634, %v7633
    %v7644 = vpack.c.b16 %v7636, %v7635
    %7653 = vmatprep.subr.bf16.mxu0 0
    %7654 = vmatpush1.bf16.msra.mxu0 %v7637
    %7655 = vmatprep.subr.bf16.mxu0 0
    %7656 = vmatpush1.bf16.msra.mxu0 %v7638
    %7657 = vmatprep.subr.bf16.mxu0 0
    %7658 = vmatpush1.bf16.msra.mxu0 %v7639
    %7659 = vmatprep.subr.bf16.mxu0 0
    %7660 = vmatpush1.bf16.msra.mxu0 %v7640
    %7661 = vmatprep.subr.bf16.mxu0 0
    %7662 = vmatpush1.bf16.msra.mxu0 %v7641
    %7663 = vmatprep.subr.bf16.mxu0 0
    %7664 = vmatpush1.bf16.msra.mxu0 %v7642
    %7665 = vmatprep.subr.bf16.mxu0 0
    %7666 = vmatpush1.bf16.msra.mxu0 %v7643
    %7667 = vmatprep.subr.bf16.mxu0 0
    %7668 = vmatpush1.bf16.msra.mxu0 %v7644
    %7669 = vmatprep.subr.bf16.mxu0 0
    %7670 = vmatpush1.bf16.msra.mxu0 0
    %7671 = vmatprep.subr.bf16.mxu0 0
    %7672 = vmatpush1.bf16.msra.mxu0 0
    %7673 = vmatprep.subr.bf16.mxu0 0
    %7674 = vmatpush1.bf16.msra.mxu0 0
    %7675 = vmatprep.subr.bf16.mxu0 0
    %7676 = vmatpush1.bf16.msra.mxu0 0
    %7677 = vmatprep.subr.bf16.mxu0 0
    %7678 = vmatpush1.bf16.msra.mxu0 0
    %7679 = vmatprep.subr.bf16.mxu0 0
    %7680 = vmatpush1.bf16.msra.mxu0 0
    %7681 = vmatprep.subr.bf16.mxu0 0
    %7682 = vmatpush1.bf16.msra.mxu0 0
    %7683 = vmatprep.subr.bf16.mxu0 0
    %7684 = vmatpush1.bf16.msra.mxu0 0
    %7685 = vmatprep.mubr.bf16.mxu0 0
    %7686 = vmatmul.mubr.bf16.gmra.mrb[0].mxu0 %v7578
    %v7687 = vpop.f32.mrb[0].mxu0
    %v7688 = vadd.f32 %v7603, %v7687
    %v7689 = vpop.f32.mrb[0].mxu0
    %v7690 = vpop.f32.mrb[0].mxu0
    %v7691 = vadd.f32 %v7603, %v7690
    %v7692 = vpop.f32.mrb[0].mxu0
    %7693 = vmatprep.mubr.bf16.mxu0 0
    %7694 = vmatmul.mubr.bf16.gmra.mrb[0].mxu0 %v7579
    %v7695 = vpop.f32.mrb[0].mxu0
    %v7696 = vadd.f32 %v7603, %v7695
    %v7697 = vpop.f32.mrb[0].mxu0
    %v7698 = vpop.f32.mrb[0].mxu0
    %v7699 = vadd.f32 %v7603, %v7698
    %v7700 = vpop.f32.mrb[0].mxu0
    %7701 = vmatprep.mubr.bf16.mxu0 0
    %7702 = vmatmul.mubr.bf16.gmra.mrb[0].mxu0 %v7580
    %v7703 = vpop.f32.mrb[0].mxu0
    %v7704 = vadd.f32 %v7603, %v7703
    %v7705 = vpop.f32.mrb[0].mxu0
    %v7706 = vpop.f32.mrb[0].mxu0
    %v7707 = vadd.f32 %v7603, %v7706
    %v7708 = vpop.f32.mrb[0].mxu0
    %7709 = vmatprep.mubr.bf16.mxu0 0
    %7710 = vmatmul.mubr.bf16.gmra.mrb[0].mxu0 %v7581
    %v7711 = vpop.f32.mrb[0].mxu0
    %v7712 = vadd.f32 %v7603, %v7711
    %v7713 = vpop.f32.mrb[0].mxu0
    %v7714 = vpop.f32.mrb[0].mxu0
    %v7715 = vadd.f32 %v7603, %v7714
    %v7716 = vpop.f32.mrb[0].mxu0
    %7717 = vdwg.mxu0
    %7718 = vst [vmem:[#allocation13] sm:$0xff] %v7688
    %7719 = vst [vmem:[#allocation13 + $0x8] sm:$0xff] %v7691
    %7720 = vst [vmem:[#allocation13 + $0x10] sm:$0xff] %v7696
    %7721 = vst [vmem:[#allocation13 + $0x18] sm:$0xff] %v7699
    %7722 = vst [vmem:[#allocation13 + $0x20] sm:$0xff] %v7704
    %7723 = vst [vmem:[#allocation13 + $0x28] sm:$0xff] %v7707
    %7724 = vst [vmem:[#allocation13 + $0x30] sm:$0xff] %v7712
    %7725 = vst [vmem:[#allocation13 + $0x38] sm:$0xff] %v7715
    // Predicated region
    $region58: #{tpu_custom_call.1} parent=1 // pred_check
      _
    $region59: #{tpu_custom_call.1} parent=1 // pred_check_branch
      %7727 = sbr.rel (0) target = $region61
    $region60: #{tpu_custom_call.1} parent=1 // pred_region
      %s7729 = ssub.s32 1024, 1024
      %7730 = vsyncadd [#allocation5], %s7729
      %s7731 = sshll.u32 [#allocation12], 4
      %s7732 = int_to_ptr.vmem [resolvable:$true] %s7731
      %7737 = dma.vmem_to_hbm [thread:$0]  %s7732, 1024, %s9, [#allocation5], 128, 128, 8
    $region61: #{tpu_custom_call.1} parent=1 // pred_fallthru
      _
    // Predicated region
    $region62: #{tpu_custom_call.1} parent=1 // pred_check
      _
    $region63: #{tpu_custom_call.1} parent=1 // pred_check_branch
      %7739 = sbr.rel (0) target = $region65
    $region64: #{tpu_custom_call.1} parent=1 // pred_region
      %s7741 = ssub.s32 1024, 1024
      %7742 = vsyncadd [#allocation14], %s7741
      %s7743 = sshll.u32 [#allocation13], 4
      %s7744 = int_to_ptr.vmem [resolvable:$true] %s7743
      %7749 = dma.vmem_to_hbm [thread:$0]  %s7744, 1024, %s10, [#allocation14], 128, 128, 8
    $region65: #{tpu_custom_call.1} parent=1 // pred_fallthru
      _
    // Predicated region
    $region66: #{tpu_custom_call.1} parent=1 // pred_check
      _
    $region67: #{tpu_custom_call.1} parent=1 // pred_check_branch
      %7751 = sbr.rel (0) target = $region69
    $region68: #{tpu_custom_call.1} parent=1 // pred_region
      %s7753 = ssub.s32 256, 256
      %7754 = vsyncadd [#allocation14], %s7753
      %s7755 = sshll.u32 [#allocation15], 4
      %s7756 = int_to_ptr.vmem [resolvable:$true] %s7755
      %7761 = dma.vmem_to_hbm [thread:$0]  %s7756, 256, %s11, [#allocation14], 128, 128, 8
    $region69: #{tpu_custom_call.1} parent=1 // pred_fallthru
      _
    // Predicated region
    $region70: #{tpu_custom_call.1} parent=1 // pred_check
      _
    $region71: #{tpu_custom_call.1} parent=1 // pred_check_branch
      %7763 = sbr.rel (0) target = $region73
    $region72: #{tpu_custom_call.1} parent=1 // pred_region
      %s7765 = ssub.s32 256, 256
      %7766 = vsyncadd [#allocation17], %s7765
      %s7767 = sshll.u32 [#allocation16], 4
      %s7768 = int_to_ptr.vmem [resolvable:$true] %s7767
      %7773 = dma.vmem_to_hbm [thread:$0]  %s7768, 256, %s12, [#allocation17], 128, 128, 8
    $region73: #{tpu_custom_call.1} parent=1 // pred_fallthru
      _
    // Predicated region
    $region74: #{tpu_custom_call.1} parent=1 // pred_check
      _
    $region75: #{tpu_custom_call.1} parent=1 // pred_check_branch
      %7775 = sbr.rel (0) target = $region77
    $region76: #{tpu_custom_call.1} parent=1 // pred_region
      %7776 = dma.done [#allocation5], 1024
    $region77: #{tpu_custom_call.1} parent=1 // pred_fallthru
      _
    // Predicated region
    $region78: #{tpu_custom_call.1} parent=1 // pred_check
      _
    $region79: #{tpu_custom_call.1} parent=1 // pred_check_branch
      %7778 = sbr.rel (0) target = $region81
    $region80: #{tpu_custom_call.1} parent=1 // pred_region
      %7779 = dma.done [#allocation14], 1024
    $region81: #{tpu_custom_call.1} parent=1 // pred_fallthru
      _
    // Predicated region
    $region82: #{tpu_custom_call.1} parent=1 // pred_check
      _
    $region83: #{tpu_custom_call.1} parent=1 // pred_check_branch
      %7781 = sbr.rel (0) target = $region85
    $region84: #{tpu_custom_call.1} parent=1 // pred_region
      %7782 = dma.done [#allocation14], 256
    $region85: #{tpu_custom_call.1} parent=1 // pred_fallthru
      _
    // Predicated region
    $region86: #{tpu_custom_call.1} parent=1 // pred_check
      _
    $region87: #{tpu_custom_call.1} parent=1 // pred_check_branch
      %7784 = sbr.rel (0) target = $region89
    $region88: #{tpu_custom_call.1} parent=1 // pred_region
      %7785 = dma.done [#allocation17], 256
    $region89: #{tpu_custom_call.1} parent=1 // pred_fallthru
      _
    %7786 = vsyncpa [#allocation4], 1
    %7787 = vsyncpa [#allocation7], 1
    %7788 = vsyncpa [#allocation10], 1
    %7789 = vsyncpa [#allocation5], 1
    %7790 = vsyncpa [#allocation14], 1
    %7791 = vsyncpa [#allocation17], 1

</llo_original>
